<compile_context>
chip_gen: v7x
topology: tpu7x:2x2x1
jax: 0.10.0
libtpu: 0.0.40
codegen_flags: <defaults>
</compile_context>

<pallas_src>
import jax
import jax.numpy as jnp
from jax.experimental import pallas as pl
from jax.experimental.pallas import tpu as pltpu


N_CLASSES = 2
OUT_PAD = 128          # lane-dense output slab; first N_CLASSES lanes are valid
NEG = -1e30            # bias for padded class columns -> exp underflows to 0


def _make_kernel(tb, seq):
    """Build the kernel for a tile of `tb` sentences of length `seq`."""

    def kernel(ids_ref, emb_hbm, w1_ref, b1_ref, w2_ref, b2_ref,
               out_ref, gath_ref, sem):
        # ids_ref : SMEM (B_pad*seq,) int32   (scalar prefetch)
        # emb_hbm : HBM  (vocab, emb_pad) f32 (never copied wholesale)
        # w1_ref  : VMEM (emb_pad, hidden) f32   (resident: constant index_map)
        # b1_ref  : VMEM (1, hidden) f32
        # w2_ref  : VMEM (hidden, OUT_PAD) f32
        # b2_ref  : VMEM (1, OUT_PAD) f32        (padded cols = -1e30)
        # out_ref : VMEM (tb, OUT_PAD) f32
        # gath_ref: VMEM (seq, tb, emb_pad) f32 scratch for gathered rows
        # sem     : single DMA semaphore shared by all gather copies
        base = pl.program_id(0) * (tb * seq)

        # 1) Gather only the needed embedding rows HBM -> VMEM.  All tb*seq small
        #    DMAs are issued up front (they overlap), then all are waited.
        copies = []
        for b in range(tb):
            for s in range(seq):
                tok = ids_ref[base + b * seq + s]          # scalar from SMEM
                cp = pltpu.make_async_copy(
                    emb_hbm.at[pl.ds(tok, 1), :],          # (1, emb_pad) row
                    gath_ref.at[s, pl.ds(b, 1), :],        # (1, emb_pad) slot
                    sem)
                cp.start()
                copies.append(cp)
        for cp in copies:
            cp.wait()

        # 2) Mean over the sequence axis (leading dim -> cheap VPU adds).
        avg = jnp.sum(gath_ref[...], axis=0) * (1.0 / float(seq))   # (tb, emb_pad)

        # 3) Hidden layer + ReLU (batched MXU matmul, f32 accumulation).
        h = jnp.dot(avg, w1_ref[...], preferred_element_type=jnp.float32) + b1_ref[...]
        h = jnp.maximum(h, 0.0)

        # 4) Output layer; padded class columns get 0 from the matmul + NEG bias.
        logits = jnp.dot(h, w2_ref[...], preferred_element_type=jnp.float32) + b2_ref[...]

        # 5) Numerically stable log-softmax over the lane axis (exact for the
        #    real classes: padded lanes contribute exp(~-1e30) == 0).
        m = jnp.max(logits, axis=1, keepdims=True)
        shifted = logits - m
        lse = jnp.log(jnp.sum(jnp.exp(shifted), axis=1, keepdims=True))
        out_ref[...] = shifted - lse            # lane-dense (tb, 128) store

    return kernel


def neuralnet_forward(ids, emb_table, w1, b1, w2, b2, *, tb=8):
    """Batched NeuralNet forward.

    ids       : (B, seq) int32 token indices (one sentence per row)
    emb_table : (vocab, 50) f32 embedding weights
    w1        : (50, hidden) f32   (= PyTorch hidden_layer.weight.T)
    b1        : (1, hidden)  f32
    w2        : (hidden, 2)  f32   (= PyTorch linear.weight.T)
    b2        : (1, 2)       f32
    returns   : (B, 2) f32 log-probabilities (row i == module.forward(ids[i]))
    """
    B, seq = ids.shape
    vocab, emb_dim = emb_table.shape
    hidden = w1.shape[1]
    emb_pad = ((emb_dim + 127) // 128) * 128

    # ---- wrapper-level padding / packing (layout plumbing, no extra compute) ----
    emb_p = jnp.zeros((vocab, emb_pad), jnp.float32).at[:, :emb_dim].set(emb_table)
    w1_p = jnp.zeros((emb_pad, hidden), jnp.float32).at[:emb_dim, :].set(w1)
    b1_p = jnp.asarray(b1, jnp.float32).reshape(1, hidden)
    w2_p = jnp.zeros((hidden, OUT_PAD), jnp.float32).at[:, :N_CLASSES].set(w2)
    b2_p = jnp.full((1, OUT_PAD), NEG, jnp.float32).at[:, :N_CLASSES].set(
        jnp.asarray(b2, jnp.float32).reshape(1, N_CLASSES))

    # Clamp untrusted token ids (no bounds check on the in-kernel gather),
    # pad the batch to a multiple of tb, and flatten ids for 1-D SMEM prefetch.
    ids = jnp.clip(ids.astype(jnp.int32), 0, vocab - 1)
    b_pad = ((B + tb - 1) // tb) * tb
    if b_pad != B:
        ids = jnp.pad(ids, ((0, b_pad - B), (0, 0)))
    ids_flat = ids.reshape(-1)

    num_tiles = b_pad // tb
    kernel = _make_kernel(tb, seq)

    out = pl.pallas_call(
        kernel,
        out_shape=jax.ShapeDtypeStruct((b_pad, OUT_PAD), jnp.float32),
        grid_spec=pltpu.PrefetchScalarGridSpec(
            num_scalar_prefetch=1,                 # ids -> SMEM
            grid=(num_tiles,),
            in_specs=[
                pl.BlockSpec(memory_space=pl.ANY),                       # emb table stays in HBM
                pl.BlockSpec((emb_pad, hidden), lambda i, ids: (0, 0)),  # w1 (VMEM-resident)
                pl.BlockSpec((1, hidden), lambda i, ids: (0, 0)),        # b1
                pl.BlockSpec((hidden, OUT_PAD), lambda i, ids: (0, 0)),  # w2
                pl.BlockSpec((1, OUT_PAD), lambda i, ids: (0, 0)),       # b2
            ],
            out_specs=pl.BlockSpec((tb, OUT_PAD), lambda i, ids: (i, 0)),
            scratch_shapes=[
                pltpu.VMEM((seq, tb, emb_pad), jnp.float32),   # gathered rows
                pltpu.SemaphoreType.DMA,                       # shared gather sem
            ],
        ),
        compiler_params=pltpu.CompilerParams(
            dimension_semantics=("parallel",)),    # batch tiles independent -> v7x megacore
    )(ids_flat, emb_p, w1_p, b1_p, w2_p, b2_p)

    return out[:B, :N_CLASSES]


def reference_forward(ids, emb_table, w1, b1, w2, b2):
    """Pure-JAX reference mirroring the PyTorch module, vmapped over the batch."""
    out = emb_table[ids]                        # (B, seq, emb)
    out = jnp.mean(out, axis=1)                 # (B, emb)
    out = jnp.maximum(out @ w1 + b1, 0.0)       # (B, hidden)
    out = out @ w2 + b2                         # (B, 2)
    return jax.nn.log_softmax(out, axis=1)


if __name__ == "__main__":
    # Small deterministic setup consistent with the module:
    #   nn.Embedding(vocab, 50), hidden_dim=32, 2 classes; 16 sentences of 8 tokens.
    vocab, emb_dim, hidden_dim, n_classes = 100, 50, 32, 2
    batch, seq_len = 16, 8

    key = jax.random.PRNGKey(0)
    k_emb, k_w1, k_b1, k_w2, k_b2, k_ids = jax.random.split(key, 6)

    emb_table = jax.random.normal(k_emb, (vocab, emb_dim), jnp.float32) * 0.1
    # Weights stored as (in, out) = transpose of PyTorch's (out, in) layout.
    w1 = jax.random.normal(k_w1, (emb_dim, hidden_dim), jnp.float32) * 0.1
    b1 = jax.random.normal(k_b1, (1, hidden_dim), jnp.float32) * 0.01
    w2 = jax.random.normal(k_w2, (hidden_dim, n_classes), jnp.float32) * 0.1
    b2 = jax.random.normal(k_b2, (1, n_classes), jnp.float32) * 0.01

    ids = jax.random.randint(k_ids, (batch, seq_len), 0, vocab, jnp.int32)

    out = neuralnet_forward(ids, emb_table, w1, b1, w2, b2)
    out = jax.block_until_ready(out)

    ref = reference_forward(ids, emb_table, w1, b1, w2, b2)
    assert out.shape == (batch, n_classes), out.shape
    assert jnp.allclose(out, ref, atol=2e-5, rtol=2e-5), (out, ref)
    # log-softmax sanity: per-row probabilities sum to 1
    assert jnp.allclose(jnp.sum(jnp.exp(out), axis=1), 1.0, atol=1e-5)

    print("KERNEL_OK")
</pallas_src>

<mosaic_0001>
module attributes {stable_mosaic.version = 11 : i64} {
  func.func @kernel(%arg0: i32, %arg1: memref<128xi32, #tpu.memory_space<smem>>, %arg2: memref<100x128xf32, #tpu.memory_space<any>>, %arg3: memref<128x32xf32, #tpu.memory_space<vmem>>, %arg4: memref<1x32xf32, #tpu.memory_space<vmem>>, %arg5: memref<32x128xf32, #tpu.memory_space<vmem>>, %arg6: memref<1x128xf32, #tpu.memory_space<vmem>>, %arg7: memref<8x128xf32, #tpu.memory_space<vmem>>, %arg8: memref<8x8x128xf32, #tpu.memory_space<vmem>>, %arg9: memref<!tpu.dma_semaphore, #tpu.memory_space<semaphore_mem>>) attributes {dimension_semantics = [#tpu.dimension_semantics<parallel>], iteration_bounds = array<i64: 2>, scalar_prefetch = 1 : i64, scratch_operands = 2 : i64, tpu.core_type = #tpu.core_type<tc>, window_params = [{}, {pipeline_mode = #tpu.pipeline_mode<synchronous>, transform_indices = @transform_1, window_bounds = array<i64: 128, 32>}, {pipeline_mode = #tpu.pipeline_mode<synchronous>, transform_indices = @transform_2, window_bounds = array<i64: 1, 32>}, {pipeline_mode = #tpu.pipeline_mode<synchronous>, transform_indices = @transform_3, window_bounds = array<i64: 32, 128>}, {pipeline_mode = #tpu.pipeline_mode<synchronous>, transform_indices = @transform_4, window_bounds = array<i64: 1, 128>}, {transform_indices = @transform_5, window_bounds = array<i64: 8, 128>}]} {
    %c64_i32 = arith.constant 64 : i32
    %0 = arith.muli %arg0, %c64_i32 : i32
    %c0_i32 = arith.constant 0 : i32
    %1 = arith.addi %0, %c0_i32 : i32
    %c0_i32_0 = arith.constant 0 : i32
    %2 = arith.addi %1, %c0_i32_0 : i32
    %3 = arith.index_cast %2 : i32 to index
    %4 = memref.load %arg1[%3] : memref<128xi32, #tpu.memory_space<smem>>
    %c0_i32_1 = arith.constant 0 : i32
    %c0_i32_2 = arith.constant 0 : i32
    %5 = tpu.memref_slice %arg2[%4, %c0_i32_2] : memref<100x128xf32, #tpu.memory_space<any>> -> memref<1x128xf32, #tpu.memory_space<any>>
    %c0_i32_3 = arith.constant 0 : i32
    %c0_i32_4 = arith.constant 0 : i32
    %6 = tpu.memref_slice %arg8[%c0_i32_1, %c0_i32_3, %c0_i32_4] : memref<8x8x128xf32, #tpu.memory_space<vmem>> -> memref<1x1x128xf32, #tpu.memory_space<vmem>>
    %7 = tpu.memref_squeeze %6 : memref<1x1x128xf32, #tpu.memory_space<vmem>> -> memref<1x128xf32, #tpu.memory_space<vmem>>
    tpu.enqueue_dma source(%5 : memref<1x128xf32, #tpu.memory_space<any>>) target(%7 : memref<1x128xf32, #tpu.memory_space<vmem>>) target_semaphore(%arg9 : memref<!tpu.dma_semaphore, #tpu.memory_space<semaphore_mem>>)
    %c0_i32_5 = arith.constant 0 : i32
    %8 = arith.addi %0, %c0_i32_5 : i32
    %c1_i32 = arith.constant 1 : i32
    %9 = arith.addi %8, %c1_i32 : i32
    %10 = arith.index_cast %9 : i32 to index
    %11 = memref.load %arg1[%10] : memref<128xi32, #tpu.memory_space<smem>>
    %c1_i32_6 = arith.constant 1 : i32
    %c0_i32_7 = arith.constant 0 : i32
    %12 = tpu.memref_slice %arg2[%11, %c0_i32_7] : memref<100x128xf32, #tpu.memory_space<any>> -> memref<1x128xf32, #tpu.memory_space<any>>
    %c0_i32_8 = arith.constant 0 : i32
    %c0_i32_9 = arith.constant 0 : i32
    %13 = tpu.memref_slice %arg8[%c1_i32_6, %c0_i32_8, %c0_i32_9] : memref<8x8x128xf32, #tpu.memory_space<vmem>> -> memref<1x1x128xf32, #tpu.memory_space<vmem>>
    %14 = tpu.memref_squeeze %13 : memref<1x1x128xf32, #tpu.memory_space<vmem>> -> memref<1x128xf32, #tpu.memory_space<vmem>>
    tpu.enqueue_dma source(%12 : memref<1x128xf32, #tpu.memory_space<any>>) target(%14 : memref<1x128xf32, #tpu.memory_space<vmem>>) target_semaphore(%arg9 : memref<!tpu.dma_semaphore, #tpu.memory_space<semaphore_mem>>)
    %c0_i32_10 = arith.constant 0 : i32
    %15 = arith.addi %0, %c0_i32_10 : i32
    %c2_i32 = arith.constant 2 : i32
    %16 = arith.addi %15, %c2_i32 : i32
    %17 = arith.index_cast %16 : i32 to index
    %18 = memref.load %arg1[%17] : memref<128xi32, #tpu.memory_space<smem>>
    %c2_i32_11 = arith.constant 2 : i32
    %c0_i32_12 = arith.constant 0 : i32
    %19 = tpu.memref_slice %arg2[%18, %c0_i32_12] : memref<100x128xf32, #tpu.memory_space<any>> -> memref<1x128xf32, #tpu.memory_space<any>>
    %c0_i32_13 = arith.constant 0 : i32
    %c0_i32_14 = arith.constant 0 : i32
    %20 = tpu.memref_slice %arg8[%c2_i32_11, %c0_i32_13, %c0_i32_14] : memref<8x8x128xf32, #tpu.memory_space<vmem>> -> memref<1x1x128xf32, #tpu.memory_space<vmem>>
    %21 = tpu.memref_squeeze %20 : memref<1x1x128xf32, #tpu.memory_space<vmem>> -> memref<1x128xf32, #tpu.memory_space<vmem>>
    tpu.enqueue_dma source(%19 : memref<1x128xf32, #tpu.memory_space<any>>) target(%21 : memref<1x128xf32, #tpu.memory_space<vmem>>) target_semaphore(%arg9 : memref<!tpu.dma_semaphore, #tpu.memory_space<semaphore_mem>>)
    %c0_i32_15 = arith.constant 0 : i32
    %22 = arith.addi %0, %c0_i32_15 : i32
    %c3_i32 = arith.constant 3 : i32
    %23 = arith.addi %22, %c3_i32 : i32
    %24 = arith.index_cast %23 : i32 to index
    %25 = memref.load %arg1[%24] : memref<128xi32, #tpu.memory_space<smem>>
    %c3_i32_16 = arith.constant 3 : i32
    %c0_i32_17 = arith.constant 0 : i32
    %26 = tpu.memref_slice %arg2[%25, %c0_i32_17] : memref<100x128xf32, #tpu.memory_space<any>> -> memref<1x128xf32, #tpu.memory_space<any>>
    %c0_i32_18 = arith.constant 0 : i32
    %c0_i32_19 = arith.constant 0 : i32
    %27 = tpu.memref_slice %arg8[%c3_i32_16, %c0_i32_18, %c0_i32_19] : memref<8x8x128xf32, #tpu.memory_space<vmem>> -> memref<1x1x128xf32, #tpu.memory_space<vmem>>
    %28 = tpu.memref_squeeze %27 : memref<1x1x128xf32, #tpu.memory_space<vmem>> -> memref<1x128xf32, #tpu.memory_space<vmem>>
    tpu.enqueue_dma source(%26 : memref<1x128xf32, #tpu.memory_space<any>>) target(%28 : memref<1x128xf32, #tpu.memory_space<vmem>>) target_semaphore(%arg9 : memref<!tpu.dma_semaphore, #tpu.memory_space<semaphore_mem>>)
    %c0_i32_20 = arith.constant 0 : i32
    %29 = arith.addi %0, %c0_i32_20 : i32
    %c4_i32 = arith.constant 4 : i32
    %30 = arith.addi %29, %c4_i32 : i32
    %31 = arith.index_cast %30 : i32 to index
    %32 = memref.load %arg1[%31] : memref<128xi32, #tpu.memory_space<smem>>
    %c4_i32_21 = arith.constant 4 : i32
    %c0_i32_22 = arith.constant 0 : i32
    %33 = tpu.memref_slice %arg2[%32, %c0_i32_22] : memref<100x128xf32, #tpu.memory_space<any>> -> memref<1x128xf32, #tpu.memory_space<any>>
    %c0_i32_23 = arith.constant 0 : i32
    %c0_i32_24 = arith.constant 0 : i32
    %34 = tpu.memref_slice %arg8[%c4_i32_21, %c0_i32_23, %c0_i32_24] : memref<8x8x128xf32, #tpu.memory_space<vmem>> -> memref<1x1x128xf32, #tpu.memory_space<vmem>>
    %35 = tpu.memref_squeeze %34 : memref<1x1x128xf32, #tpu.memory_space<vmem>> -> memref<1x128xf32, #tpu.memory_space<vmem>>
    tpu.enqueue_dma source(%33 : memref<1x128xf32, #tpu.memory_space<any>>) target(%35 : memref<1x128xf32, #tpu.memory_space<vmem>>) target_semaphore(%arg9 : memref<!tpu.dma_semaphore, #tpu.memory_space<semaphore_mem>>)
    %c0_i32_25 = arith.constant 0 : i32
    %36 = arith.addi %0, %c0_i32_25 : i32
    %c5_i32 = arith.constant 5 : i32
    %37 = arith.addi %36, %c5_i32 : i32
    %38 = arith.index_cast %37 : i32 to index
    %39 = memref.load %arg1[%38] : memref<128xi32, #tpu.memory_space<smem>>
    %c5_i32_26 = arith.constant 5 : i32
    %c0_i32_27 = arith.constant 0 : i32
    %40 = tpu.memref_slice %arg2[%39, %c0_i32_27] : memref<100x128xf32, #tpu.memory_space<any>> -> memref<1x128xf32, #tpu.memory_space<any>>
    %c0_i32_28 = arith.constant 0 : i32
    %c0_i32_29 = arith.constant 0 : i32
    %41 = tpu.memref_slice %arg8[%c5_i32_26, %c0_i32_28, %c0_i32_29] : memref<8x8x128xf32, #tpu.memory_space<vmem>> -> memref<1x1x128xf32, #tpu.memory_space<vmem>>
    %42 = tpu.memref_squeeze %41 : memref<1x1x128xf32, #tpu.memory_space<vmem>> -> memref<1x128xf32, #tpu.memory_space<vmem>>
    tpu.enqueue_dma source(%40 : memref<1x128xf32, #tpu.memory_space<any>>) target(%42 : memref<1x128xf32, #tpu.memory_space<vmem>>) target_semaphore(%arg9 : memref<!tpu.dma_semaphore, #tpu.memory_space<semaphore_mem>>)
    %c0_i32_30 = arith.constant 0 : i32
    %43 = arith.addi %0, %c0_i32_30 : i32
    %c6_i32 = arith.constant 6 : i32
    %44 = arith.addi %43, %c6_i32 : i32
    %45 = arith.index_cast %44 : i32 to index
    %46 = memref.load %arg1[%45] : memref<128xi32, #tpu.memory_space<smem>>
    %c6_i32_31 = arith.constant 6 : i32
    %c0_i32_32 = arith.constant 0 : i32
    %47 = tpu.memref_slice %arg2[%46, %c0_i32_32] : memref<100x128xf32, #tpu.memory_space<any>> -> memref<1x128xf32, #tpu.memory_space<any>>
    %c0_i32_33 = arith.constant 0 : i32
    %c0_i32_34 = arith.constant 0 : i32
    %48 = tpu.memref_slice %arg8[%c6_i32_31, %c0_i32_33, %c0_i32_34] : memref<8x8x128xf32, #tpu.memory_space<vmem>> -> memref<1x1x128xf32, #tpu.memory_space<vmem>>
    %49 = tpu.memref_squeeze %48 : memref<1x1x128xf32, #tpu.memory_space<vmem>> -> memref<1x128xf32, #tpu.memory_space<vmem>>
    tpu.enqueue_dma source(%47 : memref<1x128xf32, #tpu.memory_space<any>>) target(%49 : memref<1x128xf32, #tpu.memory_space<vmem>>) target_semaphore(%arg9 : memref<!tpu.dma_semaphore, #tpu.memory_space<semaphore_mem>>)
    %c0_i32_35 = arith.constant 0 : i32
    %50 = arith.addi %0, %c0_i32_35 : i32
    %c7_i32 = arith.constant 7 : i32
    %51 = arith.addi %50, %c7_i32 : i32
    %52 = arith.index_cast %51 : i32 to index
    %53 = memref.load %arg1[%52] : memref<128xi32, #tpu.memory_space<smem>>
    %c7_i32_36 = arith.constant 7 : i32
    %c0_i32_37 = arith.constant 0 : i32
    %54 = tpu.memref_slice %arg2[%53, %c0_i32_37] : memref<100x128xf32, #tpu.memory_space<any>> -> memref<1x128xf32, #tpu.memory_space<any>>
    %c0_i32_38 = arith.constant 0 : i32
    %c0_i32_39 = arith.constant 0 : i32
    %55 = tpu.memref_slice %arg8[%c7_i32_36, %c0_i32_38, %c0_i32_39] : memref<8x8x128xf32, #tpu.memory_space<vmem>> -> memref<1x1x128xf32, #tpu.memory_space<vmem>>
    %56 = tpu.memref_squeeze %55 : memref<1x1x128xf32, #tpu.memory_space<vmem>> -> memref<1x128xf32, #tpu.memory_space<vmem>>
    tpu.enqueue_dma source(%54 : memref<1x128xf32, #tpu.memory_space<any>>) target(%56 : memref<1x128xf32, #tpu.memory_space<vmem>>) target_semaphore(%arg9 : memref<!tpu.dma_semaphore, #tpu.memory_space<semaphore_mem>>)
    %c8_i32 = arith.constant 8 : i32
    %57 = arith.addi %0, %c8_i32 : i32
    %c0_i32_40 = arith.constant 0 : i32
    %58 = arith.addi %57, %c0_i32_40 : i32
    %59 = arith.index_cast %58 : i32 to index
    %60 = memref.load %arg1[%59] : memref<128xi32, #tpu.memory_space<smem>>
    %c0_i32_41 = arith.constant 0 : i32
    %c0_i32_42 = arith.constant 0 : i32
    %61 = tpu.memref_slice %arg2[%60, %c0_i32_42] : memref<100x128xf32, #tpu.memory_space<any>> -> memref<1x128xf32, #tpu.memory_space<any>>
    %c1_i32_43 = arith.constant 1 : i32
    %c0_i32_44 = arith.constant 0 : i32
    %62 = tpu.memref_slice %arg8[%c0_i32_41, %c1_i32_43, %c0_i32_44] : memref<8x8x128xf32, #tpu.memory_space<vmem>> -> memref<1x1x128xf32, #tpu.memory_space<vmem>>
    %63 = tpu.memref_squeeze %62 : memref<1x1x128xf32, #tpu.memory_space<vmem>> -> memref<1x128xf32, #tpu.memory_space<vmem>>
    tpu.enqueue_dma source(%61 : memref<1x128xf32, #tpu.memory_space<any>>) target(%63 : memref<1x128xf32, #tpu.memory_space<vmem>>) target_semaphore(%arg9 : memref<!tpu.dma_semaphore, #tpu.memory_space<semaphore_mem>>)
    %c8_i32_45 = arith.constant 8 : i32
    %64 = arith.addi %0, %c8_i32_45 : i32
    %c1_i32_46 = arith.constant 1 : i32
    %65 = arith.addi %64, %c1_i32_46 : i32
    %66 = arith.index_cast %65 : i32 to index
    %67 = memref.load %arg1[%66] : memref<128xi32, #tpu.memory_space<smem>>
    %c1_i32_47 = arith.constant 1 : i32
    %c0_i32_48 = arith.constant 0 : i32
    %68 = tpu.memref_slice %arg2[%67, %c0_i32_48] : memref<100x128xf32, #tpu.memory_space<any>> -> memref<1x128xf32, #tpu.memory_space<any>>
    %c1_i32_49 = arith.constant 1 : i32
    %c0_i32_50 = arith.constant 0 : i32
    %69 = tpu.memref_slice %arg8[%c1_i32_47, %c1_i32_49, %c0_i32_50] : memref<8x8x128xf32, #tpu.memory_space<vmem>> -> memref<1x1x128xf32, #tpu.memory_space<vmem>>
    %70 = tpu.memref_squeeze %69 : memref<1x1x128xf32, #tpu.memory_space<vmem>> -> memref<1x128xf32, #tpu.memory_space<vmem>>
    tpu.enqueue_dma source(%68 : memref<1x128xf32, #tpu.memory_space<any>>) target(%70 : memref<1x128xf32, #tpu.memory_space<vmem>>) target_semaphore(%arg9 : memref<!tpu.dma_semaphore, #tpu.memory_space<semaphore_mem>>)
    %c8_i32_51 = arith.constant 8 : i32
    %71 = arith.addi %0, %c8_i32_51 : i32
    %c2_i32_52 = arith.constant 2 : i32
    %72 = arith.addi %71, %c2_i32_52 : i32
    %73 = arith.index_cast %72 : i32 to index
    %74 = memref.load %arg1[%73] : memref<128xi32, #tpu.memory_space<smem>>
    %c2_i32_53 = arith.constant 2 : i32
    %c0_i32_54 = arith.constant 0 : i32
    %75 = tpu.memref_slice %arg2[%74, %c0_i32_54] : memref<100x128xf32, #tpu.memory_space<any>> -> memref<1x128xf32, #tpu.memory_space<any>>
    %c1_i32_55 = arith.constant 1 : i32
    %c0_i32_56 = arith.constant 0 : i32
    %76 = tpu.memref_slice %arg8[%c2_i32_53, %c1_i32_55, %c0_i32_56] : memref<8x8x128xf32, #tpu.memory_space<vmem>> -> memref<1x1x128xf32, #tpu.memory_space<vmem>>
    %77 = tpu.memref_squeeze %76 : memref<1x1x128xf32, #tpu.memory_space<vmem>> -> memref<1x128xf32, #tpu.memory_space<vmem>>
    tpu.enqueue_dma source(%75 : memref<1x128xf32, #tpu.memory_space<any>>) target(%77 : memref<1x128xf32, #tpu.memory_space<vmem>>) target_semaphore(%arg9 : memref<!tpu.dma_semaphore, #tpu.memory_space<semaphore_mem>>)
    %c8_i32_57 = arith.constant 8 : i32
    %78 = arith.addi %0, %c8_i32_57 : i32
    %c3_i32_58 = arith.constant 3 : i32
    %79 = arith.addi %78, %c3_i32_58 : i32
    %80 = arith.index_cast %79 : i32 to index
    %81 = memref.load %arg1[%80] : memref<128xi32, #tpu.memory_space<smem>>
    %c3_i32_59 = arith.constant 3 : i32
    %c0_i32_60 = arith.constant 0 : i32
    %82 = tpu.memref_slice %arg2[%81, %c0_i32_60] : memref<100x128xf32, #tpu.memory_space<any>> -> memref<1x128xf32, #tpu.memory_space<any>>
    %c1_i32_61 = arith.constant 1 : i32
    %c0_i32_62 = arith.constant 0 : i32
    %83 = tpu.memref_slice %arg8[%c3_i32_59, %c1_i32_61, %c0_i32_62] : memref<8x8x128xf32, #tpu.memory_space<vmem>> -> memref<1x1x128xf32, #tpu.memory_space<vmem>>
    %84 = tpu.memref_squeeze %83 : memref<1x1x128xf32, #tpu.memory_space<vmem>> -> memref<1x128xf32, #tpu.memory_space<vmem>>
    tpu.enqueue_dma source(%82 : memref<1x128xf32, #tpu.memory_space<any>>) target(%84 : memref<1x128xf32, #tpu.memory_space<vmem>>) target_semaphore(%arg9 : memref<!tpu.dma_semaphore, #tpu.memory_space<semaphore_mem>>)
    %c8_i32_63 = arith.constant 8 : i32
    %85 = arith.addi %0, %c8_i32_63 : i32
    %c4_i32_64 = arith.constant 4 : i32
    %86 = arith.addi %85, %c4_i32_64 : i32
    %87 = arith.index_cast %86 : i32 to index
    %88 = memref.load %arg1[%87] : memref<128xi32, #tpu.memory_space<smem>>
    %c4_i32_65 = arith.constant 4 : i32
    %c0_i32_66 = arith.constant 0 : i32
    %89 = tpu.memref_slice %arg2[%88, %c0_i32_66] : memref<100x128xf32, #tpu.memory_space<any>> -> memref<1x128xf32, #tpu.memory_space<any>>
    %c1_i32_67 = arith.constant 1 : i32
    %c0_i32_68 = arith.constant 0 : i32
    %90 = tpu.memref_slice %arg8[%c4_i32_65, %c1_i32_67, %c0_i32_68] : memref<8x8x128xf32, #tpu.memory_space<vmem>> -> memref<1x1x128xf32, #tpu.memory_space<vmem>>
    %91 = tpu.memref_squeeze %90 : memref<1x1x128xf32, #tpu.memory_space<vmem>> -> memref<1x128xf32, #tpu.memory_space<vmem>>
    tpu.enqueue_dma source(%89 : memref<1x128xf32, #tpu.memory_space<any>>) target(%91 : memref<1x128xf32, #tpu.memory_space<vmem>>) target_semaphore(%arg9 : memref<!tpu.dma_semaphore, #tpu.memory_space<semaphore_mem>>)
    %c8_i32_69 = arith.constant 8 : i32
    %92 = arith.addi %0, %c8_i32_69 : i32
    %c5_i32_70 = arith.constant 5 : i32
    %93 = arith.addi %92, %c5_i32_70 : i32
    %94 = arith.index_cast %93 : i32 to index
    %95 = memref.load %arg1[%94] : memref<128xi32, #tpu.memory_space<smem>>
    %c5_i32_71 = arith.constant 5 : i32
    %c0_i32_72 = arith.constant 0 : i32
    %96 = tpu.memref_slice %arg2[%95, %c0_i32_72] : memref<100x128xf32, #tpu.memory_space<any>> -> memref<1x128xf32, #tpu.memory_space<any>>
    %c1_i32_73 = arith.constant 1 : i32
    %c0_i32_74 = arith.constant 0 : i32
    %97 = tpu.memref_slice %arg8[%c5_i32_71, %c1_i32_73, %c0_i32_74] : memref<8x8x128xf32, #tpu.memory_space<vmem>> -> memref<1x1x128xf32, #tpu.memory_space<vmem>>
    %98 = tpu.memref_squeeze %97 : memref<1x1x128xf32, #tpu.memory_space<vmem>> -> memref<1x128xf32, #tpu.memory_space<vmem>>
    tpu.enqueue_dma source(%96 : memref<1x128xf32, #tpu.memory_space<any>>) target(%98 : memref<1x128xf32, #tpu.memory_space<vmem>>) target_semaphore(%arg9 : memref<!tpu.dma_semaphore, #tpu.memory_space<semaphore_mem>>)
    %c8_i32_75 = arith.constant 8 : i32
    %99 = arith.addi %0, %c8_i32_75 : i32
    %c6_i32_76 = arith.constant 6 : i32
    %100 = arith.addi %99, %c6_i32_76 : i32
    %101 = arith.index_cast %100 : i32 to index
    %102 = memref.load %arg1[%101] : memref<128xi32, #tpu.memory_space<smem>>
    %c6_i32_77 = arith.constant 6 : i32
    %c0_i32_78 = arith.constant 0 : i32
    %103 = tpu.memref_slice %arg2[%102, %c0_i32_78] : memref<100x128xf32, #tpu.memory_space<any>> -> memref<1x128xf32, #tpu.memory_space<any>>
    %c1_i32_79 = arith.constant 1 : i32
    %c0_i32_80 = arith.constant 0 : i32
    %104 = tpu.memref_slice %arg8[%c6_i32_77, %c1_i32_79, %c0_i32_80] : memref<8x8x128xf32, #tpu.memory_space<vmem>> -> memref<1x1x128xf32, #tpu.memory_space<vmem>>
    %105 = tpu.memref_squeeze %104 : memref<1x1x128xf32, #tpu.memory_space<vmem>> -> memref<1x128xf32, #tpu.memory_space<vmem>>
    tpu.enqueue_dma source(%103 : memref<1x128xf32, #tpu.memory_space<any>>) target(%105 : memref<1x128xf32, #tpu.memory_space<vmem>>) target_semaphore(%arg9 : memref<!tpu.dma_semaphore, #tpu.memory_space<semaphore_mem>>)
    %c8_i32_81 = arith.constant 8 : i32
    %106 = arith.addi %0, %c8_i32_81 : i32
    %c7_i32_82 = arith.constant 7 : i32
    %107 = arith.addi %106, %c7_i32_82 : i32
    %108 = arith.index_cast %107 : i32 to index
    %109 = memref.load %arg1[%108] : memref<128xi32, #tpu.memory_space<smem>>
    %c7_i32_83 = arith.constant 7 : i32
    %c0_i32_84 = arith.constant 0 : i32
    %110 = tpu.memref_slice %arg2[%109, %c0_i32_84] : memref<100x128xf32, #tpu.memory_space<any>> -> memref<1x128xf32, #tpu.memory_space<any>>
    %c1_i32_85 = arith.constant 1 : i32
    %c0_i32_86 = arith.constant 0 : i32
    %111 = tpu.memref_slice %arg8[%c7_i32_83, %c1_i32_85, %c0_i32_86] : memref<8x8x128xf32, #tpu.memory_space<vmem>> -> memref<1x1x128xf32, #tpu.memory_space<vmem>>
    %112 = tpu.memref_squeeze %111 : memref<1x1x128xf32, #tpu.memory_space<vmem>> -> memref<1x128xf32, #tpu.memory_space<vmem>>
    tpu.enqueue_dma source(%110 : memref<1x128xf32, #tpu.memory_space<any>>) target(%112 : memref<1x128xf32, #tpu.memory_space<vmem>>) target_semaphore(%arg9 : memref<!tpu.dma_semaphore, #tpu.memory_space<semaphore_mem>>)
    %c16_i32 = arith.constant 16 : i32
    %113 = arith.addi %0, %c16_i32 : i32
    %c0_i32_87 = arith.constant 0 : i32
    %114 = arith.addi %113, %c0_i32_87 : i32
    %115 = arith.index_cast %114 : i32 to index
    %116 = memref.load %arg1[%115] : memref<128xi32, #tpu.memory_space<smem>>
    %c0_i32_88 = arith.constant 0 : i32
    %c0_i32_89 = arith.constant 0 : i32
    %117 = tpu.memref_slice %arg2[%116, %c0_i32_89] : memref<100x128xf32, #tpu.memory_space<any>> -> memref<1x128xf32, #tpu.memory_space<any>>
    %c2_i32_90 = arith.constant 2 : i32
    %c0_i32_91 = arith.constant 0 : i32
    %118 = tpu.memref_slice %arg8[%c0_i32_88, %c2_i32_90, %c0_i32_91] : memref<8x8x128xf32, #tpu.memory_space<vmem>> -> memref<1x1x128xf32, #tpu.memory_space<vmem>>
    %119 = tpu.memref_squeeze %118 : memref<1x1x128xf32, #tpu.memory_space<vmem>> -> memref<1x128xf32, #tpu.memory_space<vmem>>
    tpu.enqueue_dma source(%117 : memref<1x128xf32, #tpu.memory_space<any>>) target(%119 : memref<1x128xf32, #tpu.memory_space<vmem>>) target_semaphore(%arg9 : memref<!tpu.dma_semaphore, #tpu.memory_space<semaphore_mem>>)
    %c16_i32_92 = arith.constant 16 : i32
    %120 = arith.addi %0, %c16_i32_92 : i32
    %c1_i32_93 = arith.constant 1 : i32
    %121 = arith.addi %120, %c1_i32_93 : i32
    %122 = arith.index_cast %121 : i32 to index
    %123 = memref.load %arg1[%122] : memref<128xi32, #tpu.memory_space<smem>>
    %c1_i32_94 = arith.constant 1 : i32
    %c0_i32_95 = arith.constant 0 : i32
    %124 = tpu.memref_slice %arg2[%123, %c0_i32_95] : memref<100x128xf32, #tpu.memory_space<any>> -> memref<1x128xf32, #tpu.memory_space<any>>
    %c2_i32_96 = arith.constant 2 : i32
    %c0_i32_97 = arith.constant 0 : i32
    %125 = tpu.memref_slice %arg8[%c1_i32_94, %c2_i32_96, %c0_i32_97] : memref<8x8x128xf32, #tpu.memory_space<vmem>> -> memref<1x1x128xf32, #tpu.memory_space<vmem>>
    %126 = tpu.memref_squeeze %125 : memref<1x1x128xf32, #tpu.memory_space<vmem>> -> memref<1x128xf32, #tpu.memory_space<vmem>>
    tpu.enqueue_dma source(%124 : memref<1x128xf32, #tpu.memory_space<any>>) target(%126 : memref<1x128xf32, #tpu.memory_space<vmem>>) target_semaphore(%arg9 : memref<!tpu.dma_semaphore, #tpu.memory_space<semaphore_mem>>)
    %c16_i32_98 = arith.constant 16 : i32
    %127 = arith.addi %0, %c16_i32_98 : i32
    %c2_i32_99 = arith.constant 2 : i32
    %128 = arith.addi %127, %c2_i32_99 : i32
    %129 = arith.index_cast %128 : i32 to index
    %130 = memref.load %arg1[%129] : memref<128xi32, #tpu.memory_space<smem>>
    %c2_i32_100 = arith.constant 2 : i32
    %c0_i32_101 = arith.constant 0 : i32
    %131 = tpu.memref_slice %arg2[%130, %c0_i32_101] : memref<100x128xf32, #tpu.memory_space<any>> -> memref<1x128xf32, #tpu.memory_space<any>>
    %c2_i32_102 = arith.constant 2 : i32
    %c0_i32_103 = arith.constant 0 : i32
    %132 = tpu.memref_slice %arg8[%c2_i32_100, %c2_i32_102, %c0_i32_103] : memref<8x8x128xf32, #tpu.memory_space<vmem>> -> memref<1x1x128xf32, #tpu.memory_space<vmem>>
    %133 = tpu.memref_squeeze %132 : memref<1x1x128xf32, #tpu.memory_space<vmem>> -> memref<1x128xf32, #tpu.memory_space<vmem>>
    tpu.enqueue_dma source(%131 : memref<1x128xf32, #tpu.memory_space<any>>) target(%133 : memref<1x128xf32, #tpu.memory_space<vmem>>) target_semaphore(%arg9 : memref<!tpu.dma_semaphore, #tpu.memory_space<semaphore_mem>>)
    %c16_i32_104 = arith.constant 16 : i32
    %134 = arith.addi %0, %c16_i32_104 : i32
    %c3_i32_105 = arith.constant 3 : i32
    %135 = arith.addi %134, %c3_i32_105 : i32
    %136 = arith.index_cast %135 : i32 to index
    %137 = memref.load %arg1[%136] : memref<128xi32, #tpu.memory_space<smem>>
    %c3_i32_106 = arith.constant 3 : i32
    %c0_i32_107 = arith.constant 0 : i32
    %138 = tpu.memref_slice %arg2[%137, %c0_i32_107] : memref<100x128xf32, #tpu.memory_space<any>> -> memref<1x128xf32, #tpu.memory_space<any>>
    %c2_i32_108 = arith.constant 2 : i32
    %c0_i32_109 = arith.constant 0 : i32
    %139 = tpu.memref_slice %arg8[%c3_i32_106, %c2_i32_108, %c0_i32_109] : memref<8x8x128xf32, #tpu.memory_space<vmem>> -> memref<1x1x128xf32, #tpu.memory_space<vmem>>
    %140 = tpu.memref_squeeze %139 : memref<1x1x128xf32, #tpu.memory_space<vmem>> -> memref<1x128xf32, #tpu.memory_space<vmem>>
    tpu.enqueue_dma source(%138 : memref<1x128xf32, #tpu.memory_space<any>>) target(%140 : memref<1x128xf32, #tpu.memory_space<vmem>>) target_semaphore(%arg9 : memref<!tpu.dma_semaphore, #tpu.memory_space<semaphore_mem>>)
    %c16_i32_110 = arith.constant 16 : i32
    %141 = arith.addi %0, %c16_i32_110 : i32
    %c4_i32_111 = arith.constant 4 : i32
    %142 = arith.addi %141, %c4_i32_111 : i32
    %143 = arith.index_cast %142 : i32 to index
    %144 = memref.load %arg1[%143] : memref<128xi32, #tpu.memory_space<smem>>
    %c4_i32_112 = arith.constant 4 : i32
    %c0_i32_113 = arith.constant 0 : i32
    %145 = tpu.memref_slice %arg2[%144, %c0_i32_113] : memref<100x128xf32, #tpu.memory_space<any>> -> memref<1x128xf32, #tpu.memory_space<any>>
    %c2_i32_114 = arith.constant 2 : i32
    %c0_i32_115 = arith.constant 0 : i32
    %146 = tpu.memref_slice %arg8[%c4_i32_112, %c2_i32_114, %c0_i32_115] : memref<8x8x128xf32, #tpu.memory_space<vmem>> -> memref<1x1x128xf32, #tpu.memory_space<vmem>>
    %147 = tpu.memref_squeeze %146 : memref<1x1x128xf32, #tpu.memory_space<vmem>> -> memref<1x128xf32, #tpu.memory_space<vmem>>
    tpu.enqueue_dma source(%145 : memref<1x128xf32, #tpu.memory_space<any>>) target(%147 : memref<1x128xf32, #tpu.memory_space<vmem>>) target_semaphore(%arg9 : memref<!tpu.dma_semaphore, #tpu.memory_space<semaphore_mem>>)
    %c16_i32_116 = arith.constant 16 : i32
    %148 = arith.addi %0, %c16_i32_116 : i32
    %c5_i32_117 = arith.constant 5 : i32
    %149 = arith.addi %148, %c5_i32_117 : i32
    %150 = arith.index_cast %149 : i32 to index
    %151 = memref.load %arg1[%150] : memref<128xi32, #tpu.memory_space<smem>>
    %c5_i32_118 = arith.constant 5 : i32
    %c0_i32_119 = arith.constant 0 : i32
    %152 = tpu.memref_slice %arg2[%151, %c0_i32_119] : memref<100x128xf32, #tpu.memory_space<any>> -> memref<1x128xf32, #tpu.memory_space<any>>
    %c2_i32_120 = arith.constant 2 : i32
    %c0_i32_121 = arith.constant 0 : i32
    %153 = tpu.memref_slice %arg8[%c5_i32_118, %c2_i32_120, %c0_i32_121] : memref<8x8x128xf32, #tpu.memory_space<vmem>> -> memref<1x1x128xf32, #tpu.memory_space<vmem>>
    %154 = tpu.memref_squeeze %153 : memref<1x1x128xf32, #tpu.memory_space<vmem>> -> memref<1x128xf32, #tpu.memory_space<vmem>>
    tpu.enqueue_dma source(%152 : memref<1x128xf32, #tpu.memory_space<any>>) target(%154 : memref<1x128xf32, #tpu.memory_space<vmem>>) target_semaphore(%arg9 : memref<!tpu.dma_semaphore, #tpu.memory_space<semaphore_mem>>)
    %c16_i32_122 = arith.constant 16 : i32
    %155 = arith.addi %0, %c16_i32_122 : i32
    %c6_i32_123 = arith.constant 6 : i32
    %156 = arith.addi %155, %c6_i32_123 : i32
    %157 = arith.index_cast %156 : i32 to index
    %158 = memref.load %arg1[%157] : memref<128xi32, #tpu.memory_space<smem>>
    %c6_i32_124 = arith.constant 6 : i32
    %c0_i32_125 = arith.constant 0 : i32
    %159 = tpu.memref_slice %arg2[%158, %c0_i32_125] : memref<100x128xf32, #tpu.memory_space<any>> -> memref<1x128xf32, #tpu.memory_space<any>>
    %c2_i32_126 = arith.constant 2 : i32
    %c0_i32_127 = arith.constant 0 : i32
    %160 = tpu.memref_slice %arg8[%c6_i32_124, %c2_i32_126, %c0_i32_127] : memref<8x8x128xf32, #tpu.memory_space<vmem>> -> memref<1x1x128xf32, #tpu.memory_space<vmem>>
    %161 = tpu.memref_squeeze %160 : memref<1x1x128xf32, #tpu.memory_space<vmem>> -> memref<1x128xf32, #tpu.memory_space<vmem>>
    tpu.enqueue_dma source(%159 : memref<1x128xf32, #tpu.memory_space<any>>) target(%161 : memref<1x128xf32, #tpu.memory_space<vmem>>) target_semaphore(%arg9 : memref<!tpu.dma_semaphore, #tpu.memory_space<semaphore_mem>>)
    %c16_i32_128 = arith.constant 16 : i32
    %162 = arith.addi %0, %c16_i32_128 : i32
    %c7_i32_129 = arith.constant 7 : i32
    %163 = arith.addi %162, %c7_i32_129 : i32
    %164 = arith.index_cast %163 : i32 to index
    %165 = memref.load %arg1[%164] : memref<128xi32, #tpu.memory_space<smem>>
    %c7_i32_130 = arith.constant 7 : i32
    %c0_i32_131 = arith.constant 0 : i32
    %166 = tpu.memref_slice %arg2[%165, %c0_i32_131] : memref<100x128xf32, #tpu.memory_space<any>> -> memref<1x128xf32, #tpu.memory_space<any>>
    %c2_i32_132 = arith.constant 2 : i32
    %c0_i32_133 = arith.constant 0 : i32
    %167 = tpu.memref_slice %arg8[%c7_i32_130, %c2_i32_132, %c0_i32_133] : memref<8x8x128xf32, #tpu.memory_space<vmem>> -> memref<1x1x128xf32, #tpu.memory_space<vmem>>
    %168 = tpu.memref_squeeze %167 : memref<1x1x128xf32, #tpu.memory_space<vmem>> -> memref<1x128xf32, #tpu.memory_space<vmem>>
    tpu.enqueue_dma source(%166 : memref<1x128xf32, #tpu.memory_space<any>>) target(%168 : memref<1x128xf32, #tpu.memory_space<vmem>>) target_semaphore(%arg9 : memref<!tpu.dma_semaphore, #tpu.memory_space<semaphore_mem>>)
    %c24_i32 = arith.constant 24 : i32
    %169 = arith.addi %0, %c24_i32 : i32
    %c0_i32_134 = arith.constant 0 : i32
    %170 = arith.addi %169, %c0_i32_134 : i32
    %171 = arith.index_cast %170 : i32 to index
    %172 = memref.load %arg1[%171] : memref<128xi32, #tpu.memory_space<smem>>
    %c0_i32_135 = arith.constant 0 : i32
    %c0_i32_136 = arith.constant 0 : i32
    %173 = tpu.memref_slice %arg2[%172, %c0_i32_136] : memref<100x128xf32, #tpu.memory_space<any>> -> memref<1x128xf32, #tpu.memory_space<any>>
    %c3_i32_137 = arith.constant 3 : i32
    %c0_i32_138 = arith.constant 0 : i32
    %174 = tpu.memref_slice %arg8[%c0_i32_135, %c3_i32_137, %c0_i32_138] : memref<8x8x128xf32, #tpu.memory_space<vmem>> -> memref<1x1x128xf32, #tpu.memory_space<vmem>>
    %175 = tpu.memref_squeeze %174 : memref<1x1x128xf32, #tpu.memory_space<vmem>> -> memref<1x128xf32, #tpu.memory_space<vmem>>
    tpu.enqueue_dma source(%173 : memref<1x128xf32, #tpu.memory_space<any>>) target(%175 : memref<1x128xf32, #tpu.memory_space<vmem>>) target_semaphore(%arg9 : memref<!tpu.dma_semaphore, #tpu.memory_space<semaphore_mem>>)
    %c24_i32_139 = arith.constant 24 : i32
    %176 = arith.addi %0, %c24_i32_139 : i32
    %c1_i32_140 = arith.constant 1 : i32
    %177 = arith.addi %176, %c1_i32_140 : i32
    %178 = arith.index_cast %177 : i32 to index
    %179 = memref.load %arg1[%178] : memref<128xi32, #tpu.memory_space<smem>>
    %c1_i32_141 = arith.constant 1 : i32
    %c0_i32_142 = arith.constant 0 : i32
    %180 = tpu.memref_slice %arg2[%179, %c0_i32_142] : memref<100x128xf32, #tpu.memory_space<any>> -> memref<1x128xf32, #tpu.memory_space<any>>
    %c3_i32_143 = arith.constant 3 : i32
    %c0_i32_144 = arith.constant 0 : i32
    %181 = tpu.memref_slice %arg8[%c1_i32_141, %c3_i32_143, %c0_i32_144] : memref<8x8x128xf32, #tpu.memory_space<vmem>> -> memref<1x1x128xf32, #tpu.memory_space<vmem>>
    %182 = tpu.memref_squeeze %181 : memref<1x1x128xf32, #tpu.memory_space<vmem>> -> memref<1x128xf32, #tpu.memory_space<vmem>>
    tpu.enqueue_dma source(%180 : memref<1x128xf32, #tpu.memory_space<any>>) target(%182 : memref<1x128xf32, #tpu.memory_space<vmem>>) target_semaphore(%arg9 : memref<!tpu.dma_semaphore, #tpu.memory_space<semaphore_mem>>)
    %c24_i32_145 = arith.constant 24 : i32
    %183 = arith.addi %0, %c24_i32_145 : i32
    %c2_i32_146 = arith.constant 2 : i32
    %184 = arith.addi %183, %c2_i32_146 : i32
    %185 = arith.index_cast %184 : i32 to index
    %186 = memref.load %arg1[%185] : memref<128xi32, #tpu.memory_space<smem>>
    %c2_i32_147 = arith.constant 2 : i32
    %c0_i32_148 = arith.constant 0 : i32
    %187 = tpu.memref_slice %arg2[%186, %c0_i32_148] : memref<100x128xf32, #tpu.memory_space<any>> -> memref<1x128xf32, #tpu.memory_space<any>>
    %c3_i32_149 = arith.constant 3 : i32
    %c0_i32_150 = arith.constant 0 : i32
    %188 = tpu.memref_slice %arg8[%c2_i32_147, %c3_i32_149, %c0_i32_150] : memref<8x8x128xf32, #tpu.memory_space<vmem>> -> memref<1x1x128xf32, #tpu.memory_space<vmem>>
    %189 = tpu.memref_squeeze %188 : memref<1x1x128xf32, #tpu.memory_space<vmem>> -> memref<1x128xf32, #tpu.memory_space<vmem>>
    tpu.enqueue_dma source(%187 : memref<1x128xf32, #tpu.memory_space<any>>) target(%189 : memref<1x128xf32, #tpu.memory_space<vmem>>) target_semaphore(%arg9 : memref<!tpu.dma_semaphore, #tpu.memory_space<semaphore_mem>>)
    %c24_i32_151 = arith.constant 24 : i32
    %190 = arith.addi %0, %c24_i32_151 : i32
    %c3_i32_152 = arith.constant 3 : i32
    %191 = arith.addi %190, %c3_i32_152 : i32
    %192 = arith.index_cast %191 : i32 to index
    %193 = memref.load %arg1[%192] : memref<128xi32, #tpu.memory_space<smem>>
    %c3_i32_153 = arith.constant 3 : i32
    %c0_i32_154 = arith.constant 0 : i32
    %194 = tpu.memref_slice %arg2[%193, %c0_i32_154] : memref<100x128xf32, #tpu.memory_space<any>> -> memref<1x128xf32, #tpu.memory_space<any>>
    %c3_i32_155 = arith.constant 3 : i32
    %c0_i32_156 = arith.constant 0 : i32
    %195 = tpu.memref_slice %arg8[%c3_i32_153, %c3_i32_155, %c0_i32_156] : memref<8x8x128xf32, #tpu.memory_space<vmem>> -> memref<1x1x128xf32, #tpu.memory_space<vmem>>
    %196 = tpu.memref_squeeze %195 : memref<1x1x128xf32, #tpu.memory_space<vmem>> -> memref<1x128xf32, #tpu.memory_space<vmem>>
    tpu.enqueue_dma source(%194 : memref<1x128xf32, #tpu.memory_space<any>>) target(%196 : memref<1x128xf32, #tpu.memory_space<vmem>>) target_semaphore(%arg9 : memref<!tpu.dma_semaphore, #tpu.memory_space<semaphore_mem>>)
    %c24_i32_157 = arith.constant 24 : i32
    %197 = arith.addi %0, %c24_i32_157 : i32
    %c4_i32_158 = arith.constant 4 : i32
    %198 = arith.addi %197, %c4_i32_158 : i32
    %199 = arith.index_cast %198 : i32 to index
    %200 = memref.load %arg1[%199] : memref<128xi32, #tpu.memory_space<smem>>
    %c4_i32_159 = arith.constant 4 : i32
    %c0_i32_160 = arith.constant 0 : i32
    %201 = tpu.memref_slice %arg2[%200, %c0_i32_160] : memref<100x128xf32, #tpu.memory_space<any>> -> memref<1x128xf32, #tpu.memory_space<any>>
    %c3_i32_161 = arith.constant 3 : i32
    %c0_i32_162 = arith.constant 0 : i32
    %202 = tpu.memref_slice %arg8[%c4_i32_159, %c3_i32_161, %c0_i32_162] : memref<8x8x128xf32, #tpu.memory_space<vmem>> -> memref<1x1x128xf32, #tpu.memory_space<vmem>>
    %203 = tpu.memref_squeeze %202 : memref<1x1x128xf32, #tpu.memory_space<vmem>> -> memref<1x128xf32, #tpu.memory_space<vmem>>
    tpu.enqueue_dma source(%201 : memref<1x128xf32, #tpu.memory_space<any>>) target(%203 : memref<1x128xf32, #tpu.memory_space<vmem>>) target_semaphore(%arg9 : memref<!tpu.dma_semaphore, #tpu.memory_space<semaphore_mem>>)
    %c24_i32_163 = arith.constant 24 : i32
    %204 = arith.addi %0, %c24_i32_163 : i32
    %c5_i32_164 = arith.constant 5 : i32
    %205 = arith.addi %204, %c5_i32_164 : i32
    %206 = arith.index_cast %205 : i32 to index
    %207 = memref.load %arg1[%206] : memref<128xi32, #tpu.memory_space<smem>>
    %c5_i32_165 = arith.constant 5 : i32
    %c0_i32_166 = arith.constant 0 : i32
    %208 = tpu.memref_slice %arg2[%207, %c0_i32_166] : memref<100x128xf32, #tpu.memory_space<any>> -> memref<1x128xf32, #tpu.memory_space<any>>
    %c3_i32_167 = arith.constant 3 : i32
    %c0_i32_168 = arith.constant 0 : i32
    %209 = tpu.memref_slice %arg8[%c5_i32_165, %c3_i32_167, %c0_i32_168] : memref<8x8x128xf32, #tpu.memory_space<vmem>> -> memref<1x1x128xf32, #tpu.memory_space<vmem>>
    %210 = tpu.memref_squeeze %209 : memref<1x1x128xf32, #tpu.memory_space<vmem>> -> memref<1x128xf32, #tpu.memory_space<vmem>>
    tpu.enqueue_dma source(%208 : memref<1x128xf32, #tpu.memory_space<any>>) target(%210 : memref<1x128xf32, #tpu.memory_space<vmem>>) target_semaphore(%arg9 : memref<!tpu.dma_semaphore, #tpu.memory_space<semaphore_mem>>)
    %c24_i32_169 = arith.constant 24 : i32
    %211 = arith.addi %0, %c24_i32_169 : i32
    %c6_i32_170 = arith.constant 6 : i32
    %212 = arith.addi %211, %c6_i32_170 : i32
    %213 = arith.index_cast %212 : i32 to index
    %214 = memref.load %arg1[%213] : memref<128xi32, #tpu.memory_space<smem>>
    %c6_i32_171 = arith.constant 6 : i32
    %c0_i32_172 = arith.constant 0 : i32
    %215 = tpu.memref_slice %arg2[%214, %c0_i32_172] : memref<100x128xf32, #tpu.memory_space<any>> -> memref<1x128xf32, #tpu.memory_space<any>>
    %c3_i32_173 = arith.constant 3 : i32
    %c0_i32_174 = arith.constant 0 : i32
    %216 = tpu.memref_slice %arg8[%c6_i32_171, %c3_i32_173, %c0_i32_174] : memref<8x8x128xf32, #tpu.memory_space<vmem>> -> memref<1x1x128xf32, #tpu.memory_space<vmem>>
    %217 = tpu.memref_squeeze %216 : memref<1x1x128xf32, #tpu.memory_space<vmem>> -> memref<1x128xf32, #tpu.memory_space<vmem>>
    tpu.enqueue_dma source(%215 : memref<1x128xf32, #tpu.memory_space<any>>) target(%217 : memref<1x128xf32, #tpu.memory_space<vmem>>) target_semaphore(%arg9 : memref<!tpu.dma_semaphore, #tpu.memory_space<semaphore_mem>>)
    %c24_i32_175 = arith.constant 24 : i32
    %218 = arith.addi %0, %c24_i32_175 : i32
    %c7_i32_176 = arith.constant 7 : i32
    %219 = arith.addi %218, %c7_i32_176 : i32
    %220 = arith.index_cast %219 : i32 to index
    %221 = memref.load %arg1[%220] : memref<128xi32, #tpu.memory_space<smem>>
    %c7_i32_177 = arith.constant 7 : i32
    %c0_i32_178 = arith.constant 0 : i32
    %222 = tpu.memref_slice %arg2[%221, %c0_i32_178] : memref<100x128xf32, #tpu.memory_space<any>> -> memref<1x128xf32, #tpu.memory_space<any>>
    %c3_i32_179 = arith.constant 3 : i32
    %c0_i32_180 = arith.constant 0 : i32
    %223 = tpu.memref_slice %arg8[%c7_i32_177, %c3_i32_179, %c0_i32_180] : memref<8x8x128xf32, #tpu.memory_space<vmem>> -> memref<1x1x128xf32, #tpu.memory_space<vmem>>
    %224 = tpu.memref_squeeze %223 : memref<1x1x128xf32, #tpu.memory_space<vmem>> -> memref<1x128xf32, #tpu.memory_space<vmem>>
    tpu.enqueue_dma source(%222 : memref<1x128xf32, #tpu.memory_space<any>>) target(%224 : memref<1x128xf32, #tpu.memory_space<vmem>>) target_semaphore(%arg9 : memref<!tpu.dma_semaphore, #tpu.memory_space<semaphore_mem>>)
    %c32_i32 = arith.constant 32 : i32
    %225 = arith.addi %0, %c32_i32 : i32
    %c0_i32_181 = arith.constant 0 : i32
    %226 = arith.addi %225, %c0_i32_181 : i32
    %227 = arith.index_cast %226 : i32 to index
    %228 = memref.load %arg1[%227] : memref<128xi32, #tpu.memory_space<smem>>
    %c0_i32_182 = arith.constant 0 : i32
    %c0_i32_183 = arith.constant 0 : i32
    %229 = tpu.memref_slice %arg2[%228, %c0_i32_183] : memref<100x128xf32, #tpu.memory_space<any>> -> memref<1x128xf32, #tpu.memory_space<any>>
    %c4_i32_184 = arith.constant 4 : i32
    %c0_i32_185 = arith.constant 0 : i32
    %230 = tpu.memref_slice %arg8[%c0_i32_182, %c4_i32_184, %c0_i32_185] : memref<8x8x128xf32, #tpu.memory_space<vmem>> -> memref<1x1x128xf32, #tpu.memory_space<vmem>>
    %231 = tpu.memref_squeeze %230 : memref<1x1x128xf32, #tpu.memory_space<vmem>> -> memref<1x128xf32, #tpu.memory_space<vmem>>
    tpu.enqueue_dma source(%229 : memref<1x128xf32, #tpu.memory_space<any>>) target(%231 : memref<1x128xf32, #tpu.memory_space<vmem>>) target_semaphore(%arg9 : memref<!tpu.dma_semaphore, #tpu.memory_space<semaphore_mem>>)
    %c32_i32_186 = arith.constant 32 : i32
    %232 = arith.addi %0, %c32_i32_186 : i32
    %c1_i32_187 = arith.constant 1 : i32
    %233 = arith.addi %232, %c1_i32_187 : i32
    %234 = arith.index_cast %233 : i32 to index
    %235 = memref.load %arg1[%234] : memref<128xi32, #tpu.memory_space<smem>>
    %c1_i32_188 = arith.constant 1 : i32
    %c0_i32_189 = arith.constant 0 : i32
    %236 = tpu.memref_slice %arg2[%235, %c0_i32_189] : memref<100x128xf32, #tpu.memory_space<any>> -> memref<1x128xf32, #tpu.memory_space<any>>
    %c4_i32_190 = arith.constant 4 : i32
    %c0_i32_191 = arith.constant 0 : i32
    %237 = tpu.memref_slice %arg8[%c1_i32_188, %c4_i32_190, %c0_i32_191] : memref<8x8x128xf32, #tpu.memory_space<vmem>> -> memref<1x1x128xf32, #tpu.memory_space<vmem>>
    %238 = tpu.memref_squeeze %237 : memref<1x1x128xf32, #tpu.memory_space<vmem>> -> memref<1x128xf32, #tpu.memory_space<vmem>>
    tpu.enqueue_dma source(%236 : memref<1x128xf32, #tpu.memory_space<any>>) target(%238 : memref<1x128xf32, #tpu.memory_space<vmem>>) target_semaphore(%arg9 : memref<!tpu.dma_semaphore, #tpu.memory_space<semaphore_mem>>)
    %c32_i32_192 = arith.constant 32 : i32
    %239 = arith.addi %0, %c32_i32_192 : i32
    %c2_i32_193 = arith.constant 2 : i32
    %240 = arith.addi %239, %c2_i32_193 : i32
    %241 = arith.index_cast %240 : i32 to index
    %242 = memref.load %arg1[%241] : memref<128xi32, #tpu.memory_space<smem>>
    %c2_i32_194 = arith.constant 2 : i32
    %c0_i32_195 = arith.constant 0 : i32
    %243 = tpu.memref_slice %arg2[%242, %c0_i32_195] : memref<100x128xf32, #tpu.memory_space<any>> -> memref<1x128xf32, #tpu.memory_space<any>>
    %c4_i32_196 = arith.constant 4 : i32
    %c0_i32_197 = arith.constant 0 : i32
    %244 = tpu.memref_slice %arg8[%c2_i32_194, %c4_i32_196, %c0_i32_197] : memref<8x8x128xf32, #tpu.memory_space<vmem>> -> memref<1x1x128xf32, #tpu.memory_space<vmem>>
    %245 = tpu.memref_squeeze %244 : memref<1x1x128xf32, #tpu.memory_space<vmem>> -> memref<1x128xf32, #tpu.memory_space<vmem>>
    tpu.enqueue_dma source(%243 : memref<1x128xf32, #tpu.memory_space<any>>) target(%245 : memref<1x128xf32, #tpu.memory_space<vmem>>) target_semaphore(%arg9 : memref<!tpu.dma_semaphore, #tpu.memory_space<semaphore_mem>>)
    %c32_i32_198 = arith.constant 32 : i32
    %246 = arith.addi %0, %c32_i32_198 : i32
    %c3_i32_199 = arith.constant 3 : i32
    %247 = arith.addi %246, %c3_i32_199 : i32
    %248 = arith.index_cast %247 : i32 to index
    %249 = memref.load %arg1[%248] : memref<128xi32, #tpu.memory_space<smem>>
    %c3_i32_200 = arith.constant 3 : i32
    %c0_i32_201 = arith.constant 0 : i32
    %250 = tpu.memref_slice %arg2[%249, %c0_i32_201] : memref<100x128xf32, #tpu.memory_space<any>> -> memref<1x128xf32, #tpu.memory_space<any>>
    %c4_i32_202 = arith.constant 4 : i32
    %c0_i32_203 = arith.constant 0 : i32
    %251 = tpu.memref_slice %arg8[%c3_i32_200, %c4_i32_202, %c0_i32_203] : memref<8x8x128xf32, #tpu.memory_space<vmem>> -> memref<1x1x128xf32, #tpu.memory_space<vmem>>
    %252 = tpu.memref_squeeze %251 : memref<1x1x128xf32, #tpu.memory_space<vmem>> -> memref<1x128xf32, #tpu.memory_space<vmem>>
    tpu.enqueue_dma source(%250 : memref<1x128xf32, #tpu.memory_space<any>>) target(%252 : memref<1x128xf32, #tpu.memory_space<vmem>>) target_semaphore(%arg9 : memref<!tpu.dma_semaphore, #tpu.memory_space<semaphore_mem>>)
    %c32_i32_204 = arith.constant 32 : i32
    %253 = arith.addi %0, %c32_i32_204 : i32
    %c4_i32_205 = arith.constant 4 : i32
    %254 = arith.addi %253, %c4_i32_205 : i32
    %255 = arith.index_cast %254 : i32 to index
    %256 = memref.load %arg1[%255] : memref<128xi32, #tpu.memory_space<smem>>
    %c4_i32_206 = arith.constant 4 : i32
    %c0_i32_207 = arith.constant 0 : i32
    %257 = tpu.memref_slice %arg2[%256, %c0_i32_207] : memref<100x128xf32, #tpu.memory_space<any>> -> memref<1x128xf32, #tpu.memory_space<any>>
    %c4_i32_208 = arith.constant 4 : i32
    %c0_i32_209 = arith.constant 0 : i32
    %258 = tpu.memref_slice %arg8[%c4_i32_206, %c4_i32_208, %c0_i32_209] : memref<8x8x128xf32, #tpu.memory_space<vmem>> -> memref<1x1x128xf32, #tpu.memory_space<vmem>>
    %259 = tpu.memref_squeeze %258 : memref<1x1x128xf32, #tpu.memory_space<vmem>> -> memref<1x128xf32, #tpu.memory_space<vmem>>
    tpu.enqueue_dma source(%257 : memref<1x128xf32, #tpu.memory_space<any>>) target(%259 : memref<1x128xf32, #tpu.memory_space<vmem>>) target_semaphore(%arg9 : memref<!tpu.dma_semaphore, #tpu.memory_space<semaphore_mem>>)
    %c32_i32_210 = arith.constant 32 : i32
    %260 = arith.addi %0, %c32_i32_210 : i32
    %c5_i32_211 = arith.constant 5 : i32
    %261 = arith.addi %260, %c5_i32_211 : i32
    %262 = arith.index_cast %261 : i32 to index
    %263 = memref.load %arg1[%262] : memref<128xi32, #tpu.memory_space<smem>>
    %c5_i32_212 = arith.constant 5 : i32
    %c0_i32_213 = arith.constant 0 : i32
    %264 = tpu.memref_slice %arg2[%263, %c0_i32_213] : memref<100x128xf32, #tpu.memory_space<any>> -> memref<1x128xf32, #tpu.memory_space<any>>
    %c4_i32_214 = arith.constant 4 : i32
    %c0_i32_215 = arith.constant 0 : i32
    %265 = tpu.memref_slice %arg8[%c5_i32_212, %c4_i32_214, %c0_i32_215] : memref<8x8x128xf32, #tpu.memory_space<vmem>> -> memref<1x1x128xf32, #tpu.memory_space<vmem>>
    %266 = tpu.memref_squeeze %265 : memref<1x1x128xf32, #tpu.memory_space<vmem>> -> memref<1x128xf32, #tpu.memory_space<vmem>>
    tpu.enqueue_dma source(%264 : memref<1x128xf32, #tpu.memory_space<any>>) target(%266 : memref<1x128xf32, #tpu.memory_space<vmem>>) target_semaphore(%arg9 : memref<!tpu.dma_semaphore, #tpu.memory_space<semaphore_mem>>)
    %c32_i32_216 = arith.constant 32 : i32
    %267 = arith.addi %0, %c32_i32_216 : i32
    %c6_i32_217 = arith.constant 6 : i32
    %268 = arith.addi %267, %c6_i32_217 : i32
    %269 = arith.index_cast %268 : i32 to index
    %270 = memref.load %arg1[%269] : memref<128xi32, #tpu.memory_space<smem>>
    %c6_i32_218 = arith.constant 6 : i32
    %c0_i32_219 = arith.constant 0 : i32
    %271 = tpu.memref_slice %arg2[%270, %c0_i32_219] : memref<100x128xf32, #tpu.memory_space<any>> -> memref<1x128xf32, #tpu.memory_space<any>>
    %c4_i32_220 = arith.constant 4 : i32
    %c0_i32_221 = arith.constant 0 : i32
    %272 = tpu.memref_slice %arg8[%c6_i32_218, %c4_i32_220, %c0_i32_221] : memref<8x8x128xf32, #tpu.memory_space<vmem>> -> memref<1x1x128xf32, #tpu.memory_space<vmem>>
    %273 = tpu.memref_squeeze %272 : memref<1x1x128xf32, #tpu.memory_space<vmem>> -> memref<1x128xf32, #tpu.memory_space<vmem>>
    tpu.enqueue_dma source(%271 : memref<1x128xf32, #tpu.memory_space<any>>) target(%273 : memref<1x128xf32, #tpu.memory_space<vmem>>) target_semaphore(%arg9 : memref<!tpu.dma_semaphore, #tpu.memory_space<semaphore_mem>>)
    %c32_i32_222 = arith.constant 32 : i32
    %274 = arith.addi %0, %c32_i32_222 : i32
    %c7_i32_223 = arith.constant 7 : i32
    %275 = arith.addi %274, %c7_i32_223 : i32
    %276 = arith.index_cast %275 : i32 to index
    %277 = memref.load %arg1[%276] : memref<128xi32, #tpu.memory_space<smem>>
    %c7_i32_224 = arith.constant 7 : i32
    %c0_i32_225 = arith.constant 0 : i32
    %278 = tpu.memref_slice %arg2[%277, %c0_i32_225] : memref<100x128xf32, #tpu.memory_space<any>> -> memref<1x128xf32, #tpu.memory_space<any>>
    %c4_i32_226 = arith.constant 4 : i32
    %c0_i32_227 = arith.constant 0 : i32
    %279 = tpu.memref_slice %arg8[%c7_i32_224, %c4_i32_226, %c0_i32_227] : memref<8x8x128xf32, #tpu.memory_space<vmem>> -> memref<1x1x128xf32, #tpu.memory_space<vmem>>
    %280 = tpu.memref_squeeze %279 : memref<1x1x128xf32, #tpu.memory_space<vmem>> -> memref<1x128xf32, #tpu.memory_space<vmem>>
    tpu.enqueue_dma source(%278 : memref<1x128xf32, #tpu.memory_space<any>>) target(%280 : memref<1x128xf32, #tpu.memory_space<vmem>>) target_semaphore(%arg9 : memref<!tpu.dma_semaphore, #tpu.memory_space<semaphore_mem>>)
    %c40_i32 = arith.constant 40 : i32
    %281 = arith.addi %0, %c40_i32 : i32
    %c0_i32_228 = arith.constant 0 : i32
    %282 = arith.addi %281, %c0_i32_228 : i32
    %283 = arith.index_cast %282 : i32 to index
    %284 = memref.load %arg1[%283] : memref<128xi32, #tpu.memory_space<smem>>
    %c0_i32_229 = arith.constant 0 : i32
    %c0_i32_230 = arith.constant 0 : i32
    %285 = tpu.memref_slice %arg2[%284, %c0_i32_230] : memref<100x128xf32, #tpu.memory_space<any>> -> memref<1x128xf32, #tpu.memory_space<any>>
    %c5_i32_231 = arith.constant 5 : i32
    %c0_i32_232 = arith.constant 0 : i32
    %286 = tpu.memref_slice %arg8[%c0_i32_229, %c5_i32_231, %c0_i32_232] : memref<8x8x128xf32, #tpu.memory_space<vmem>> -> memref<1x1x128xf32, #tpu.memory_space<vmem>>
    %287 = tpu.memref_squeeze %286 : memref<1x1x128xf32, #tpu.memory_space<vmem>> -> memref<1x128xf32, #tpu.memory_space<vmem>>
    tpu.enqueue_dma source(%285 : memref<1x128xf32, #tpu.memory_space<any>>) target(%287 : memref<1x128xf32, #tpu.memory_space<vmem>>) target_semaphore(%arg9 : memref<!tpu.dma_semaphore, #tpu.memory_space<semaphore_mem>>)
    %c40_i32_233 = arith.constant 40 : i32
    %288 = arith.addi %0, %c40_i32_233 : i32
    %c1_i32_234 = arith.constant 1 : i32
    %289 = arith.addi %288, %c1_i32_234 : i32
    %290 = arith.index_cast %289 : i32 to index
    %291 = memref.load %arg1[%290] : memref<128xi32, #tpu.memory_space<smem>>
    %c1_i32_235 = arith.constant 1 : i32
    %c0_i32_236 = arith.constant 0 : i32
    %292 = tpu.memref_slice %arg2[%291, %c0_i32_236] : memref<100x128xf32, #tpu.memory_space<any>> -> memref<1x128xf32, #tpu.memory_space<any>>
    %c5_i32_237 = arith.constant 5 : i32
    %c0_i32_238 = arith.constant 0 : i32
    %293 = tpu.memref_slice %arg8[%c1_i32_235, %c5_i32_237, %c0_i32_238] : memref<8x8x128xf32, #tpu.memory_space<vmem>> -> memref<1x1x128xf32, #tpu.memory_space<vmem>>
    %294 = tpu.memref_squeeze %293 : memref<1x1x128xf32, #tpu.memory_space<vmem>> -> memref<1x128xf32, #tpu.memory_space<vmem>>
    tpu.enqueue_dma source(%292 : memref<1x128xf32, #tpu.memory_space<any>>) target(%294 : memref<1x128xf32, #tpu.memory_space<vmem>>) target_semaphore(%arg9 : memref<!tpu.dma_semaphore, #tpu.memory_space<semaphore_mem>>)
    %c40_i32_239 = arith.constant 40 : i32
    %295 = arith.addi %0, %c40_i32_239 : i32
    %c2_i32_240 = arith.constant 2 : i32
    %296 = arith.addi %295, %c2_i32_240 : i32
    %297 = arith.index_cast %296 : i32 to index
    %298 = memref.load %arg1[%297] : memref<128xi32, #tpu.memory_space<smem>>
    %c2_i32_241 = arith.constant 2 : i32
    %c0_i32_242 = arith.constant 0 : i32
    %299 = tpu.memref_slice %arg2[%298, %c0_i32_242] : memref<100x128xf32, #tpu.memory_space<any>> -> memref<1x128xf32, #tpu.memory_space<any>>
    %c5_i32_243 = arith.constant 5 : i32
    %c0_i32_244 = arith.constant 0 : i32
    %300 = tpu.memref_slice %arg8[%c2_i32_241, %c5_i32_243, %c0_i32_244] : memref<8x8x128xf32, #tpu.memory_space<vmem>> -> memref<1x1x128xf32, #tpu.memory_space<vmem>>
    %301 = tpu.memref_squeeze %300 : memref<1x1x128xf32, #tpu.memory_space<vmem>> -> memref<1x128xf32, #tpu.memory_space<vmem>>
    tpu.enqueue_dma source(%299 : memref<1x128xf32, #tpu.memory_space<any>>) target(%301 : memref<1x128xf32, #tpu.memory_space<vmem>>) target_semaphore(%arg9 : memref<!tpu.dma_semaphore, #tpu.memory_space<semaphore_mem>>)
    %c40_i32_245 = arith.constant 40 : i32
    %302 = arith.addi %0, %c40_i32_245 : i32
    %c3_i32_246 = arith.constant 3 : i32
    %303 = arith.addi %302, %c3_i32_246 : i32
    %304 = arith.index_cast %303 : i32 to index
    %305 = memref.load %arg1[%304] : memref<128xi32, #tpu.memory_space<smem>>
    %c3_i32_247 = arith.constant 3 : i32
    %c0_i32_248 = arith.constant 0 : i32
    %306 = tpu.memref_slice %arg2[%305, %c0_i32_248] : memref<100x128xf32, #tpu.memory_space<any>> -> memref<1x128xf32, #tpu.memory_space<any>>
    %c5_i32_249 = arith.constant 5 : i32
    %c0_i32_250 = arith.constant 0 : i32
    %307 = tpu.memref_slice %arg8[%c3_i32_247, %c5_i32_249, %c0_i32_250] : memref<8x8x128xf32, #tpu.memory_space<vmem>> -> memref<1x1x128xf32, #tpu.memory_space<vmem>>
    %308 = tpu.memref_squeeze %307 : memref<1x1x128xf32, #tpu.memory_space<vmem>> -> memref<1x128xf32, #tpu.memory_space<vmem>>
    tpu.enqueue_dma source(%306 : memref<1x128xf32, #tpu.memory_space<any>>) target(%308 : memref<1x128xf32, #tpu.memory_space<vmem>>) target_semaphore(%arg9 : memref<!tpu.dma_semaphore, #tpu.memory_space<semaphore_mem>>)
    %c40_i32_251 = arith.constant 40 : i32
    %309 = arith.addi %0, %c40_i32_251 : i32
    %c4_i32_252 = arith.constant 4 : i32
    %310 = arith.addi %309, %c4_i32_252 : i32
    %311 = arith.index_cast %310 : i32 to index
    %312 = memref.load %arg1[%311] : memref<128xi32, #tpu.memory_space<smem>>
    %c4_i32_253 = arith.constant 4 : i32
    %c0_i32_254 = arith.constant 0 : i32
    %313 = tpu.memref_slice %arg2[%312, %c0_i32_254] : memref<100x128xf32, #tpu.memory_space<any>> -> memref<1x128xf32, #tpu.memory_space<any>>
    %c5_i32_255 = arith.constant 5 : i32
    %c0_i32_256 = arith.constant 0 : i32
    %314 = tpu.memref_slice %arg8[%c4_i32_253, %c5_i32_255, %c0_i32_256] : memref<8x8x128xf32, #tpu.memory_space<vmem>> -> memref<1x1x128xf32, #tpu.memory_space<vmem>>
    %315 = tpu.memref_squeeze %314 : memref<1x1x128xf32, #tpu.memory_space<vmem>> -> memref<1x128xf32, #tpu.memory_space<vmem>>
    tpu.enqueue_dma source(%313 : memref<1x128xf32, #tpu.memory_space<any>>) target(%315 : memref<1x128xf32, #tpu.memory_space<vmem>>) target_semaphore(%arg9 : memref<!tpu.dma_semaphore, #tpu.memory_space<semaphore_mem>>)
    %c40_i32_257 = arith.constant 40 : i32
    %316 = arith.addi %0, %c40_i32_257 : i32
    %c5_i32_258 = arith.constant 5 : i32
    %317 = arith.addi %316, %c5_i32_258 : i32
    %318 = arith.index_cast %317 : i32 to index
    %319 = memref.load %arg1[%318] : memref<128xi32, #tpu.memory_space<smem>>
    %c5_i32_259 = arith.constant 5 : i32
    %c0_i32_260 = arith.constant 0 : i32
    %320 = tpu.memref_slice %arg2[%319, %c0_i32_260] : memref<100x128xf32, #tpu.memory_space<any>> -> memref<1x128xf32, #tpu.memory_space<any>>
    %c5_i32_261 = arith.constant 5 : i32
    %c0_i32_262 = arith.constant 0 : i32
    %321 = tpu.memref_slice %arg8[%c5_i32_259, %c5_i32_261, %c0_i32_262] : memref<8x8x128xf32, #tpu.memory_space<vmem>> -> memref<1x1x128xf32, #tpu.memory_space<vmem>>
    %322 = tpu.memref_squeeze %321 : memref<1x1x128xf32, #tpu.memory_space<vmem>> -> memref<1x128xf32, #tpu.memory_space<vmem>>
    tpu.enqueue_dma source(%320 : memref<1x128xf32, #tpu.memory_space<any>>) target(%322 : memref<1x128xf32, #tpu.memory_space<vmem>>) target_semaphore(%arg9 : memref<!tpu.dma_semaphore, #tpu.memory_space<semaphore_mem>>)
    %c40_i32_263 = arith.constant 40 : i32
    %323 = arith.addi %0, %c40_i32_263 : i32
    %c6_i32_264 = arith.constant 6 : i32
    %324 = arith.addi %323, %c6_i32_264 : i32
    %325 = arith.index_cast %324 : i32 to index
    %326 = memref.load %arg1[%325] : memref<128xi32, #tpu.memory_space<smem>>
    %c6_i32_265 = arith.constant 6 : i32
    %c0_i32_266 = arith.constant 0 : i32
    %327 = tpu.memref_slice %arg2[%326, %c0_i32_266] : memref<100x128xf32, #tpu.memory_space<any>> -> memref<1x128xf32, #tpu.memory_space<any>>
    %c5_i32_267 = arith.constant 5 : i32
    %c0_i32_268 = arith.constant 0 : i32
    %328 = tpu.memref_slice %arg8[%c6_i32_265, %c5_i32_267, %c0_i32_268] : memref<8x8x128xf32, #tpu.memory_space<vmem>> -> memref<1x1x128xf32, #tpu.memory_space<vmem>>
    %329 = tpu.memref_squeeze %328 : memref<1x1x128xf32, #tpu.memory_space<vmem>> -> memref<1x128xf32, #tpu.memory_space<vmem>>
    tpu.enqueue_dma source(%327 : memref<1x128xf32, #tpu.memory_space<any>>) target(%329 : memref<1x128xf32, #tpu.memory_space<vmem>>) target_semaphore(%arg9 : memref<!tpu.dma_semaphore, #tpu.memory_space<semaphore_mem>>)
    %c40_i32_269 = arith.constant 40 : i32
    %330 = arith.addi %0, %c40_i32_269 : i32
    %c7_i32_270 = arith.constant 7 : i32
    %331 = arith.addi %330, %c7_i32_270 : i32
    %332 = arith.index_cast %331 : i32 to index
    %333 = memref.load %arg1[%332] : memref<128xi32, #tpu.memory_space<smem>>
    %c7_i32_271 = arith.constant 7 : i32
    %c0_i32_272 = arith.constant 0 : i32
    %334 = tpu.memref_slice %arg2[%333, %c0_i32_272] : memref<100x128xf32, #tpu.memory_space<any>> -> memref<1x128xf32, #tpu.memory_space<any>>
    %c5_i32_273 = arith.constant 5 : i32
    %c0_i32_274 = arith.constant 0 : i32
    %335 = tpu.memref_slice %arg8[%c7_i32_271, %c5_i32_273, %c0_i32_274] : memref<8x8x128xf32, #tpu.memory_space<vmem>> -> memref<1x1x128xf32, #tpu.memory_space<vmem>>
    %336 = tpu.memref_squeeze %335 : memref<1x1x128xf32, #tpu.memory_space<vmem>> -> memref<1x128xf32, #tpu.memory_space<vmem>>
    tpu.enqueue_dma source(%334 : memref<1x128xf32, #tpu.memory_space<any>>) target(%336 : memref<1x128xf32, #tpu.memory_space<vmem>>) target_semaphore(%arg9 : memref<!tpu.dma_semaphore, #tpu.memory_space<semaphore_mem>>)
    %c48_i32 = arith.constant 48 : i32
    %337 = arith.addi %0, %c48_i32 : i32
    %c0_i32_275 = arith.constant 0 : i32
    %338 = arith.addi %337, %c0_i32_275 : i32
    %339 = arith.index_cast %338 : i32 to index
    %340 = memref.load %arg1[%339] : memref<128xi32, #tpu.memory_space<smem>>
    %c0_i32_276 = arith.constant 0 : i32
    %c0_i32_277 = arith.constant 0 : i32
    %341 = tpu.memref_slice %arg2[%340, %c0_i32_277] : memref<100x128xf32, #tpu.memory_space<any>> -> memref<1x128xf32, #tpu.memory_space<any>>
    %c6_i32_278 = arith.constant 6 : i32
    %c0_i32_279 = arith.constant 0 : i32
    %342 = tpu.memref_slice %arg8[%c0_i32_276, %c6_i32_278, %c0_i32_279] : memref<8x8x128xf32, #tpu.memory_space<vmem>> -> memref<1x1x128xf32, #tpu.memory_space<vmem>>
    %343 = tpu.memref_squeeze %342 : memref<1x1x128xf32, #tpu.memory_space<vmem>> -> memref<1x128xf32, #tpu.memory_space<vmem>>
    tpu.enqueue_dma source(%341 : memref<1x128xf32, #tpu.memory_space<any>>) target(%343 : memref<1x128xf32, #tpu.memory_space<vmem>>) target_semaphore(%arg9 : memref<!tpu.dma_semaphore, #tpu.memory_space<semaphore_mem>>)
    %c48_i32_280 = arith.constant 48 : i32
    %344 = arith.addi %0, %c48_i32_280 : i32
    %c1_i32_281 = arith.constant 1 : i32
    %345 = arith.addi %344, %c1_i32_281 : i32
    %346 = arith.index_cast %345 : i32 to index
    %347 = memref.load %arg1[%346] : memref<128xi32, #tpu.memory_space<smem>>
    %c1_i32_282 = arith.constant 1 : i32
    %c0_i32_283 = arith.constant 0 : i32
    %348 = tpu.memref_slice %arg2[%347, %c0_i32_283] : memref<100x128xf32, #tpu.memory_space<any>> -> memref<1x128xf32, #tpu.memory_space<any>>
    %c6_i32_284 = arith.constant 6 : i32
    %c0_i32_285 = arith.constant 0 : i32
    %349 = tpu.memref_slice %arg8[%c1_i32_282, %c6_i32_284, %c0_i32_285] : memref<8x8x128xf32, #tpu.memory_space<vmem>> -> memref<1x1x128xf32, #tpu.memory_space<vmem>>
    %350 = tpu.memref_squeeze %349 : memref<1x1x128xf32, #tpu.memory_space<vmem>> -> memref<1x128xf32, #tpu.memory_space<vmem>>
    tpu.enqueue_dma source(%348 : memref<1x128xf32, #tpu.memory_space<any>>) target(%350 : memref<1x128xf32, #tpu.memory_space<vmem>>) target_semaphore(%arg9 : memref<!tpu.dma_semaphore, #tpu.memory_space<semaphore_mem>>)
    %c48_i32_286 = arith.constant 48 : i32
    %351 = arith.addi %0, %c48_i32_286 : i32
    %c2_i32_287 = arith.constant 2 : i32
    %352 = arith.addi %351, %c2_i32_287 : i32
    %353 = arith.index_cast %352 : i32 to index
    %354 = memref.load %arg1[%353] : memref<128xi32, #tpu.memory_space<smem>>
    %c2_i32_288 = arith.constant 2 : i32
    %c0_i32_289 = arith.constant 0 : i32
    %355 = tpu.memref_slice %arg2[%354, %c0_i32_289] : memref<100x128xf32, #tpu.memory_space<any>> -> memref<1x128xf32, #tpu.memory_space<any>>
    %c6_i32_290 = arith.constant 6 : i32
    %c0_i32_291 = arith.constant 0 : i32
    %356 = tpu.memref_slice %arg8[%c2_i32_288, %c6_i32_290, %c0_i32_291] : memref<8x8x128xf32, #tpu.memory_space<vmem>> -> memref<1x1x128xf32, #tpu.memory_space<vmem>>
    %357 = tpu.memref_squeeze %356 : memref<1x1x128xf32, #tpu.memory_space<vmem>> -> memref<1x128xf32, #tpu.memory_space<vmem>>
    tpu.enqueue_dma source(%355 : memref<1x128xf32, #tpu.memory_space<any>>) target(%357 : memref<1x128xf32, #tpu.memory_space<vmem>>) target_semaphore(%arg9 : memref<!tpu.dma_semaphore, #tpu.memory_space<semaphore_mem>>)
    %c48_i32_292 = arith.constant 48 : i32
    %358 = arith.addi %0, %c48_i32_292 : i32
    %c3_i32_293 = arith.constant 3 : i32
    %359 = arith.addi %358, %c3_i32_293 : i32
    %360 = arith.index_cast %359 : i32 to index
    %361 = memref.load %arg1[%360] : memref<128xi32, #tpu.memory_space<smem>>
    %c3_i32_294 = arith.constant 3 : i32
    %c0_i32_295 = arith.constant 0 : i32
    %362 = tpu.memref_slice %arg2[%361, %c0_i32_295] : memref<100x128xf32, #tpu.memory_space<any>> -> memref<1x128xf32, #tpu.memory_space<any>>
    %c6_i32_296 = arith.constant 6 : i32
    %c0_i32_297 = arith.constant 0 : i32
    %363 = tpu.memref_slice %arg8[%c3_i32_294, %c6_i32_296, %c0_i32_297] : memref<8x8x128xf32, #tpu.memory_space<vmem>> -> memref<1x1x128xf32, #tpu.memory_space<vmem>>
    %364 = tpu.memref_squeeze %363 : memref<1x1x128xf32, #tpu.memory_space<vmem>> -> memref<1x128xf32, #tpu.memory_space<vmem>>
    tpu.enqueue_dma source(%362 : memref<1x128xf32, #tpu.memory_space<any>>) target(%364 : memref<1x128xf32, #tpu.memory_space<vmem>>) target_semaphore(%arg9 : memref<!tpu.dma_semaphore, #tpu.memory_space<semaphore_mem>>)
    %c48_i32_298 = arith.constant 48 : i32
    %365 = arith.addi %0, %c48_i32_298 : i32
    %c4_i32_299 = arith.constant 4 : i32
    %366 = arith.addi %365, %c4_i32_299 : i32
    %367 = arith.index_cast %366 : i32 to index
    %368 = memref.load %arg1[%367] : memref<128xi32, #tpu.memory_space<smem>>
    %c4_i32_300 = arith.constant 4 : i32
    %c0_i32_301 = arith.constant 0 : i32
    %369 = tpu.memref_slice %arg2[%368, %c0_i32_301] : memref<100x128xf32, #tpu.memory_space<any>> -> memref<1x128xf32, #tpu.memory_space<any>>
    %c6_i32_302 = arith.constant 6 : i32
    %c0_i32_303 = arith.constant 0 : i32
    %370 = tpu.memref_slice %arg8[%c4_i32_300, %c6_i32_302, %c0_i32_303] : memref<8x8x128xf32, #tpu.memory_space<vmem>> -> memref<1x1x128xf32, #tpu.memory_space<vmem>>
    %371 = tpu.memref_squeeze %370 : memref<1x1x128xf32, #tpu.memory_space<vmem>> -> memref<1x128xf32, #tpu.memory_space<vmem>>
    tpu.enqueue_dma source(%369 : memref<1x128xf32, #tpu.memory_space<any>>) target(%371 : memref<1x128xf32, #tpu.memory_space<vmem>>) target_semaphore(%arg9 : memref<!tpu.dma_semaphore, #tpu.memory_space<semaphore_mem>>)
    %c48_i32_304 = arith.constant 48 : i32
    %372 = arith.addi %0, %c48_i32_304 : i32
    %c5_i32_305 = arith.constant 5 : i32
    %373 = arith.addi %372, %c5_i32_305 : i32
    %374 = arith.index_cast %373 : i32 to index
    %375 = memref.load %arg1[%374] : memref<128xi32, #tpu.memory_space<smem>>
    %c5_i32_306 = arith.constant 5 : i32
    %c0_i32_307 = arith.constant 0 : i32
    %376 = tpu.memref_slice %arg2[%375, %c0_i32_307] : memref<100x128xf32, #tpu.memory_space<any>> -> memref<1x128xf32, #tpu.memory_space<any>>
    %c6_i32_308 = arith.constant 6 : i32
    %c0_i32_309 = arith.constant 0 : i32
    %377 = tpu.memref_slice %arg8[%c5_i32_306, %c6_i32_308, %c0_i32_309] : memref<8x8x128xf32, #tpu.memory_space<vmem>> -> memref<1x1x128xf32, #tpu.memory_space<vmem>>
    %378 = tpu.memref_squeeze %377 : memref<1x1x128xf32, #tpu.memory_space<vmem>> -> memref<1x128xf32, #tpu.memory_space<vmem>>
    tpu.enqueue_dma source(%376 : memref<1x128xf32, #tpu.memory_space<any>>) target(%378 : memref<1x128xf32, #tpu.memory_space<vmem>>) target_semaphore(%arg9 : memref<!tpu.dma_semaphore, #tpu.memory_space<semaphore_mem>>)
    %c48_i32_310 = arith.constant 48 : i32
    %379 = arith.addi %0, %c48_i32_310 : i32
    %c6_i32_311 = arith.constant 6 : i32
    %380 = arith.addi %379, %c6_i32_311 : i32
    %381 = arith.index_cast %380 : i32 to index
    %382 = memref.load %arg1[%381] : memref<128xi32, #tpu.memory_space<smem>>
    %c6_i32_312 = arith.constant 6 : i32
    %c0_i32_313 = arith.constant 0 : i32
    %383 = tpu.memref_slice %arg2[%382, %c0_i32_313] : memref<100x128xf32, #tpu.memory_space<any>> -> memref<1x128xf32, #tpu.memory_space<any>>
    %c6_i32_314 = arith.constant 6 : i32
    %c0_i32_315 = arith.constant 0 : i32
    %384 = tpu.memref_slice %arg8[%c6_i32_312, %c6_i32_314, %c0_i32_315] : memref<8x8x128xf32, #tpu.memory_space<vmem>> -> memref<1x1x128xf32, #tpu.memory_space<vmem>>
    %385 = tpu.memref_squeeze %384 : memref<1x1x128xf32, #tpu.memory_space<vmem>> -> memref<1x128xf32, #tpu.memory_space<vmem>>
    tpu.enqueue_dma source(%383 : memref<1x128xf32, #tpu.memory_space<any>>) target(%385 : memref<1x128xf32, #tpu.memory_space<vmem>>) target_semaphore(%arg9 : memref<!tpu.dma_semaphore, #tpu.memory_space<semaphore_mem>>)
    %c48_i32_316 = arith.constant 48 : i32
    %386 = arith.addi %0, %c48_i32_316 : i32
    %c7_i32_317 = arith.constant 7 : i32
    %387 = arith.addi %386, %c7_i32_317 : i32
    %388 = arith.index_cast %387 : i32 to index
    %389 = memref.load %arg1[%388] : memref<128xi32, #tpu.memory_space<smem>>
    %c7_i32_318 = arith.constant 7 : i32
    %c0_i32_319 = arith.constant 0 : i32
    %390 = tpu.memref_slice %arg2[%389, %c0_i32_319] : memref<100x128xf32, #tpu.memory_space<any>> -> memref<1x128xf32, #tpu.memory_space<any>>
    %c6_i32_320 = arith.constant 6 : i32
    %c0_i32_321 = arith.constant 0 : i32
    %391 = tpu.memref_slice %arg8[%c7_i32_318, %c6_i32_320, %c0_i32_321] : memref<8x8x128xf32, #tpu.memory_space<vmem>> -> memref<1x1x128xf32, #tpu.memory_space<vmem>>
    %392 = tpu.memref_squeeze %391 : memref<1x1x128xf32, #tpu.memory_space<vmem>> -> memref<1x128xf32, #tpu.memory_space<vmem>>
    tpu.enqueue_dma source(%390 : memref<1x128xf32, #tpu.memory_space<any>>) target(%392 : memref<1x128xf32, #tpu.memory_space<vmem>>) target_semaphore(%arg9 : memref<!tpu.dma_semaphore, #tpu.memory_space<semaphore_mem>>)
    %c56_i32 = arith.constant 56 : i32
    %393 = arith.addi %0, %c56_i32 : i32
    %c0_i32_322 = arith.constant 0 : i32
    %394 = arith.addi %393, %c0_i32_322 : i32
    %395 = arith.index_cast %394 : i32 to index
    %396 = memref.load %arg1[%395] : memref<128xi32, #tpu.memory_space<smem>>
    %c0_i32_323 = arith.constant 0 : i32
    %c0_i32_324 = arith.constant 0 : i32
    %397 = tpu.memref_slice %arg2[%396, %c0_i32_324] : memref<100x128xf32, #tpu.memory_space<any>> -> memref<1x128xf32, #tpu.memory_space<any>>
    %c7_i32_325 = arith.constant 7 : i32
    %c0_i32_326 = arith.constant 0 : i32
    %398 = tpu.memref_slice %arg8[%c0_i32_323, %c7_i32_325, %c0_i32_326] : memref<8x8x128xf32, #tpu.memory_space<vmem>> -> memref<1x1x128xf32, #tpu.memory_space<vmem>>
    %399 = tpu.memref_squeeze %398 : memref<1x1x128xf32, #tpu.memory_space<vmem>> -> memref<1x128xf32, #tpu.memory_space<vmem>>
    tpu.enqueue_dma source(%397 : memref<1x128xf32, #tpu.memory_space<any>>) target(%399 : memref<1x128xf32, #tpu.memory_space<vmem>>) target_semaphore(%arg9 : memref<!tpu.dma_semaphore, #tpu.memory_space<semaphore_mem>>)
    %c56_i32_327 = arith.constant 56 : i32
    %400 = arith.addi %0, %c56_i32_327 : i32
    %c1_i32_328 = arith.constant 1 : i32
    %401 = arith.addi %400, %c1_i32_328 : i32
    %402 = arith.index_cast %401 : i32 to index
    %403 = memref.load %arg1[%402] : memref<128xi32, #tpu.memory_space<smem>>
    %c1_i32_329 = arith.constant 1 : i32
    %c0_i32_330 = arith.constant 0 : i32
    %404 = tpu.memref_slice %arg2[%403, %c0_i32_330] : memref<100x128xf32, #tpu.memory_space<any>> -> memref<1x128xf32, #tpu.memory_space<any>>
    %c7_i32_331 = arith.constant 7 : i32
    %c0_i32_332 = arith.constant 0 : i32
    %405 = tpu.memref_slice %arg8[%c1_i32_329, %c7_i32_331, %c0_i32_332] : memref<8x8x128xf32, #tpu.memory_space<vmem>> -> memref<1x1x128xf32, #tpu.memory_space<vmem>>
    %406 = tpu.memref_squeeze %405 : memref<1x1x128xf32, #tpu.memory_space<vmem>> -> memref<1x128xf32, #tpu.memory_space<vmem>>
    tpu.enqueue_dma source(%404 : memref<1x128xf32, #tpu.memory_space<any>>) target(%406 : memref<1x128xf32, #tpu.memory_space<vmem>>) target_semaphore(%arg9 : memref<!tpu.dma_semaphore, #tpu.memory_space<semaphore_mem>>)
    %c56_i32_333 = arith.constant 56 : i32
    %407 = arith.addi %0, %c56_i32_333 : i32
    %c2_i32_334 = arith.constant 2 : i32
    %408 = arith.addi %407, %c2_i32_334 : i32
    %409 = arith.index_cast %408 : i32 to index
    %410 = memref.load %arg1[%409] : memref<128xi32, #tpu.memory_space<smem>>
    %c2_i32_335 = arith.constant 2 : i32
    %c0_i32_336 = arith.constant 0 : i32
    %411 = tpu.memref_slice %arg2[%410, %c0_i32_336] : memref<100x128xf32, #tpu.memory_space<any>> -> memref<1x128xf32, #tpu.memory_space<any>>
    %c7_i32_337 = arith.constant 7 : i32
    %c0_i32_338 = arith.constant 0 : i32
    %412 = tpu.memref_slice %arg8[%c2_i32_335, %c7_i32_337, %c0_i32_338] : memref<8x8x128xf32, #tpu.memory_space<vmem>> -> memref<1x1x128xf32, #tpu.memory_space<vmem>>
    %413 = tpu.memref_squeeze %412 : memref<1x1x128xf32, #tpu.memory_space<vmem>> -> memref<1x128xf32, #tpu.memory_space<vmem>>
    tpu.enqueue_dma source(%411 : memref<1x128xf32, #tpu.memory_space<any>>) target(%413 : memref<1x128xf32, #tpu.memory_space<vmem>>) target_semaphore(%arg9 : memref<!tpu.dma_semaphore, #tpu.memory_space<semaphore_mem>>)
    %c56_i32_339 = arith.constant 56 : i32
    %414 = arith.addi %0, %c56_i32_339 : i32
    %c3_i32_340 = arith.constant 3 : i32
    %415 = arith.addi %414, %c3_i32_340 : i32
    %416 = arith.index_cast %415 : i32 to index
    %417 = memref.load %arg1[%416] : memref<128xi32, #tpu.memory_space<smem>>
    %c3_i32_341 = arith.constant 3 : i32
    %c0_i32_342 = arith.constant 0 : i32
    %418 = tpu.memref_slice %arg2[%417, %c0_i32_342] : memref<100x128xf32, #tpu.memory_space<any>> -> memref<1x128xf32, #tpu.memory_space<any>>
    %c7_i32_343 = arith.constant 7 : i32
    %c0_i32_344 = arith.constant 0 : i32
    %419 = tpu.memref_slice %arg8[%c3_i32_341, %c7_i32_343, %c0_i32_344] : memref<8x8x128xf32, #tpu.memory_space<vmem>> -> memref<1x1x128xf32, #tpu.memory_space<vmem>>
    %420 = tpu.memref_squeeze %419 : memref<1x1x128xf32, #tpu.memory_space<vmem>> -> memref<1x128xf32, #tpu.memory_space<vmem>>
    tpu.enqueue_dma source(%418 : memref<1x128xf32, #tpu.memory_space<any>>) target(%420 : memref<1x128xf32, #tpu.memory_space<vmem>>) target_semaphore(%arg9 : memref<!tpu.dma_semaphore, #tpu.memory_space<semaphore_mem>>)
    %c56_i32_345 = arith.constant 56 : i32
    %421 = arith.addi %0, %c56_i32_345 : i32
    %c4_i32_346 = arith.constant 4 : i32
    %422 = arith.addi %421, %c4_i32_346 : i32
    %423 = arith.index_cast %422 : i32 to index
    %424 = memref.load %arg1[%423] : memref<128xi32, #tpu.memory_space<smem>>
    %c4_i32_347 = arith.constant 4 : i32
    %c0_i32_348 = arith.constant 0 : i32
    %425 = tpu.memref_slice %arg2[%424, %c0_i32_348] : memref<100x128xf32, #tpu.memory_space<any>> -> memref<1x128xf32, #tpu.memory_space<any>>
    %c7_i32_349 = arith.constant 7 : i32
    %c0_i32_350 = arith.constant 0 : i32
    %426 = tpu.memref_slice %arg8[%c4_i32_347, %c7_i32_349, %c0_i32_350] : memref<8x8x128xf32, #tpu.memory_space<vmem>> -> memref<1x1x128xf32, #tpu.memory_space<vmem>>
    %427 = tpu.memref_squeeze %426 : memref<1x1x128xf32, #tpu.memory_space<vmem>> -> memref<1x128xf32, #tpu.memory_space<vmem>>
    tpu.enqueue_dma source(%425 : memref<1x128xf32, #tpu.memory_space<any>>) target(%427 : memref<1x128xf32, #tpu.memory_space<vmem>>) target_semaphore(%arg9 : memref<!tpu.dma_semaphore, #tpu.memory_space<semaphore_mem>>)
    %c56_i32_351 = arith.constant 56 : i32
    %428 = arith.addi %0, %c56_i32_351 : i32
    %c5_i32_352 = arith.constant 5 : i32
    %429 = arith.addi %428, %c5_i32_352 : i32
    %430 = arith.index_cast %429 : i32 to index
    %431 = memref.load %arg1[%430] : memref<128xi32, #tpu.memory_space<smem>>
    %c5_i32_353 = arith.constant 5 : i32
    %c0_i32_354 = arith.constant 0 : i32
    %432 = tpu.memref_slice %arg2[%431, %c0_i32_354] : memref<100x128xf32, #tpu.memory_space<any>> -> memref<1x128xf32, #tpu.memory_space<any>>
    %c7_i32_355 = arith.constant 7 : i32
    %c0_i32_356 = arith.constant 0 : i32
    %433 = tpu.memref_slice %arg8[%c5_i32_353, %c7_i32_355, %c0_i32_356] : memref<8x8x128xf32, #tpu.memory_space<vmem>> -> memref<1x1x128xf32, #tpu.memory_space<vmem>>
    %434 = tpu.memref_squeeze %433 : memref<1x1x128xf32, #tpu.memory_space<vmem>> -> memref<1x128xf32, #tpu.memory_space<vmem>>
    tpu.enqueue_dma source(%432 : memref<1x128xf32, #tpu.memory_space<any>>) target(%434 : memref<1x128xf32, #tpu.memory_space<vmem>>) target_semaphore(%arg9 : memref<!tpu.dma_semaphore, #tpu.memory_space<semaphore_mem>>)
    %c56_i32_357 = arith.constant 56 : i32
    %435 = arith.addi %0, %c56_i32_357 : i32
    %c6_i32_358 = arith.constant 6 : i32
    %436 = arith.addi %435, %c6_i32_358 : i32
    %437 = arith.index_cast %436 : i32 to index
    %438 = memref.load %arg1[%437] : memref<128xi32, #tpu.memory_space<smem>>
    %c6_i32_359 = arith.constant 6 : i32
    %c0_i32_360 = arith.constant 0 : i32
    %439 = tpu.memref_slice %arg2[%438, %c0_i32_360] : memref<100x128xf32, #tpu.memory_space<any>> -> memref<1x128xf32, #tpu.memory_space<any>>
    %c7_i32_361 = arith.constant 7 : i32
    %c0_i32_362 = arith.constant 0 : i32
    %440 = tpu.memref_slice %arg8[%c6_i32_359, %c7_i32_361, %c0_i32_362] : memref<8x8x128xf32, #tpu.memory_space<vmem>> -> memref<1x1x128xf32, #tpu.memory_space<vmem>>
    %441 = tpu.memref_squeeze %440 : memref<1x1x128xf32, #tpu.memory_space<vmem>> -> memref<1x128xf32, #tpu.memory_space<vmem>>
    tpu.enqueue_dma source(%439 : memref<1x128xf32, #tpu.memory_space<any>>) target(%441 : memref<1x128xf32, #tpu.memory_space<vmem>>) target_semaphore(%arg9 : memref<!tpu.dma_semaphore, #tpu.memory_space<semaphore_mem>>)
    %c56_i32_363 = arith.constant 56 : i32
    %442 = arith.addi %0, %c56_i32_363 : i32
    %c7_i32_364 = arith.constant 7 : i32
    %443 = arith.addi %442, %c7_i32_364 : i32
    %444 = arith.index_cast %443 : i32 to index
    %445 = memref.load %arg1[%444] : memref<128xi32, #tpu.memory_space<smem>>
    %c7_i32_365 = arith.constant 7 : i32
    %c0_i32_366 = arith.constant 0 : i32
    %446 = tpu.memref_slice %arg2[%445, %c0_i32_366] : memref<100x128xf32, #tpu.memory_space<any>> -> memref<1x128xf32, #tpu.memory_space<any>>
    %c7_i32_367 = arith.constant 7 : i32
    %c0_i32_368 = arith.constant 0 : i32
    %447 = tpu.memref_slice %arg8[%c7_i32_365, %c7_i32_367, %c0_i32_368] : memref<8x8x128xf32, #tpu.memory_space<vmem>> -> memref<1x1x128xf32, #tpu.memory_space<vmem>>
    %448 = tpu.memref_squeeze %447 : memref<1x1x128xf32, #tpu.memory_space<vmem>> -> memref<1x128xf32, #tpu.memory_space<vmem>>
    tpu.enqueue_dma source(%446 : memref<1x128xf32, #tpu.memory_space<any>>) target(%448 : memref<1x128xf32, #tpu.memory_space<vmem>>) target_semaphore(%arg9 : memref<!tpu.dma_semaphore, #tpu.memory_space<semaphore_mem>>)
    %c0_i32_369 = arith.constant 0 : i32
    %c0_i32_370 = arith.constant 0 : i32
    %449 = tpu.memref_slice %arg2[%4, %c0_i32_370] : memref<100x128xf32, #tpu.memory_space<any>> -> memref<1x128xf32, #tpu.memory_space<any>>
    %c0_i32_371 = arith.constant 0 : i32
    %c0_i32_372 = arith.constant 0 : i32
    %450 = tpu.memref_slice %arg8[%c0_i32_369, %c0_i32_371, %c0_i32_372] : memref<8x8x128xf32, #tpu.memory_space<vmem>> -> memref<1x1x128xf32, #tpu.memory_space<vmem>>
    %451 = tpu.memref_squeeze %450 : memref<1x1x128xf32, #tpu.memory_space<vmem>> -> memref<1x128xf32, #tpu.memory_space<vmem>>
    tpu.wait_dma2 semaphore(%arg9 : memref<!tpu.dma_semaphore, #tpu.memory_space<semaphore_mem>>) src(%449 : memref<1x128xf32, #tpu.memory_space<any>>) dst(%451 : memref<1x128xf32, #tpu.memory_space<vmem>>)
    %c1_i32_373 = arith.constant 1 : i32
    %c0_i32_374 = arith.constant 0 : i32
    %452 = tpu.memref_slice %arg2[%11, %c0_i32_374] : memref<100x128xf32, #tpu.memory_space<any>> -> memref<1x128xf32, #tpu.memory_space<any>>
    %c0_i32_375 = arith.constant 0 : i32
    %c0_i32_376 = arith.constant 0 : i32
    %453 = tpu.memref_slice %arg8[%c1_i32_373, %c0_i32_375, %c0_i32_376] : memref<8x8x128xf32, #tpu.memory_space<vmem>> -> memref<1x1x128xf32, #tpu.memory_space<vmem>>
    %454 = tpu.memref_squeeze %453 : memref<1x1x128xf32, #tpu.memory_space<vmem>> -> memref<1x128xf32, #tpu.memory_space<vmem>>
    tpu.wait_dma2 semaphore(%arg9 : memref<!tpu.dma_semaphore, #tpu.memory_space<semaphore_mem>>) src(%452 : memref<1x128xf32, #tpu.memory_space<any>>) dst(%454 : memref<1x128xf32, #tpu.memory_space<vmem>>)
    %c2_i32_377 = arith.constant 2 : i32
    %c0_i32_378 = arith.constant 0 : i32
    %455 = tpu.memref_slice %arg2[%18, %c0_i32_378] : memref<100x128xf32, #tpu.memory_space<any>> -> memref<1x128xf32, #tpu.memory_space<any>>
    %c0_i32_379 = arith.constant 0 : i32
    %c0_i32_380 = arith.constant 0 : i32
    %456 = tpu.memref_slice %arg8[%c2_i32_377, %c0_i32_379, %c0_i32_380] : memref<8x8x128xf32, #tpu.memory_space<vmem>> -> memref<1x1x128xf32, #tpu.memory_space<vmem>>
    %457 = tpu.memref_squeeze %456 : memref<1x1x128xf32, #tpu.memory_space<vmem>> -> memref<1x128xf32, #tpu.memory_space<vmem>>
    tpu.wait_dma2 semaphore(%arg9 : memref<!tpu.dma_semaphore, #tpu.memory_space<semaphore_mem>>) src(%455 : memref<1x128xf32, #tpu.memory_space<any>>) dst(%457 : memref<1x128xf32, #tpu.memory_space<vmem>>)
    %c3_i32_381 = arith.constant 3 : i32
    %c0_i32_382 = arith.constant 0 : i32
    %458 = tpu.memref_slice %arg2[%25, %c0_i32_382] : memref<100x128xf32, #tpu.memory_space<any>> -> memref<1x128xf32, #tpu.memory_space<any>>
    %c0_i32_383 = arith.constant 0 : i32
    %c0_i32_384 = arith.constant 0 : i32
    %459 = tpu.memref_slice %arg8[%c3_i32_381, %c0_i32_383, %c0_i32_384] : memref<8x8x128xf32, #tpu.memory_space<vmem>> -> memref<1x1x128xf32, #tpu.memory_space<vmem>>
    %460 = tpu.memref_squeeze %459 : memref<1x1x128xf32, #tpu.memory_space<vmem>> -> memref<1x128xf32, #tpu.memory_space<vmem>>
    tpu.wait_dma2 semaphore(%arg9 : memref<!tpu.dma_semaphore, #tpu.memory_space<semaphore_mem>>) src(%458 : memref<1x128xf32, #tpu.memory_space<any>>) dst(%460 : memref<1x128xf32, #tpu.memory_space<vmem>>)
    %c4_i32_385 = arith.constant 4 : i32
    %c0_i32_386 = arith.constant 0 : i32
    %461 = tpu.memref_slice %arg2[%32, %c0_i32_386] : memref<100x128xf32, #tpu.memory_space<any>> -> memref<1x128xf32, #tpu.memory_space<any>>
    %c0_i32_387 = arith.constant 0 : i32
    %c0_i32_388 = arith.constant 0 : i32
    %462 = tpu.memref_slice %arg8[%c4_i32_385, %c0_i32_387, %c0_i32_388] : memref<8x8x128xf32, #tpu.memory_space<vmem>> -> memref<1x1x128xf32, #tpu.memory_space<vmem>>
    %463 = tpu.memref_squeeze %462 : memref<1x1x128xf32, #tpu.memory_space<vmem>> -> memref<1x128xf32, #tpu.memory_space<vmem>>
    tpu.wait_dma2 semaphore(%arg9 : memref<!tpu.dma_semaphore, #tpu.memory_space<semaphore_mem>>) src(%461 : memref<1x128xf32, #tpu.memory_space<any>>) dst(%463 : memref<1x128xf32, #tpu.memory_space<vmem>>)
    %c5_i32_389 = arith.constant 5 : i32
    %c0_i32_390 = arith.constant 0 : i32
    %464 = tpu.memref_slice %arg2[%39, %c0_i32_390] : memref<100x128xf32, #tpu.memory_space<any>> -> memref<1x128xf32, #tpu.memory_space<any>>
    %c0_i32_391 = arith.constant 0 : i32
    %c0_i32_392 = arith.constant 0 : i32
    %465 = tpu.memref_slice %arg8[%c5_i32_389, %c0_i32_391, %c0_i32_392] : memref<8x8x128xf32, #tpu.memory_space<vmem>> -> memref<1x1x128xf32, #tpu.memory_space<vmem>>
    %466 = tpu.memref_squeeze %465 : memref<1x1x128xf32, #tpu.memory_space<vmem>> -> memref<1x128xf32, #tpu.memory_space<vmem>>
    tpu.wait_dma2 semaphore(%arg9 : memref<!tpu.dma_semaphore, #tpu.memory_space<semaphore_mem>>) src(%464 : memref<1x128xf32, #tpu.memory_space<any>>) dst(%466 : memref<1x128xf32, #tpu.memory_space<vmem>>)
    %c6_i32_393 = arith.constant 6 : i32
    %c0_i32_394 = arith.constant 0 : i32
    %467 = tpu.memref_slice %arg2[%46, %c0_i32_394] : memref<100x128xf32, #tpu.memory_space<any>> -> memref<1x128xf32, #tpu.memory_space<any>>
    %c0_i32_395 = arith.constant 0 : i32
    %c0_i32_396 = arith.constant 0 : i32
    %468 = tpu.memref_slice %arg8[%c6_i32_393, %c0_i32_395, %c0_i32_396] : memref<8x8x128xf32, #tpu.memory_space<vmem>> -> memref<1x1x128xf32, #tpu.memory_space<vmem>>
    %469 = tpu.memref_squeeze %468 : memref<1x1x128xf32, #tpu.memory_space<vmem>> -> memref<1x128xf32, #tpu.memory_space<vmem>>
    tpu.wait_dma2 semaphore(%arg9 : memref<!tpu.dma_semaphore, #tpu.memory_space<semaphore_mem>>) src(%467 : memref<1x128xf32, #tpu.memory_space<any>>) dst(%469 : memref<1x128xf32, #tpu.memory_space<vmem>>)
    %c7_i32_397 = arith.constant 7 : i32
    %c0_i32_398 = arith.constant 0 : i32
    %470 = tpu.memref_slice %arg2[%53, %c0_i32_398] : memref<100x128xf32, #tpu.memory_space<any>> -> memref<1x128xf32, #tpu.memory_space<any>>
    %c0_i32_399 = arith.constant 0 : i32
    %c0_i32_400 = arith.constant 0 : i32
    %471 = tpu.memref_slice %arg8[%c7_i32_397, %c0_i32_399, %c0_i32_400] : memref<8x8x128xf32, #tpu.memory_space<vmem>> -> memref<1x1x128xf32, #tpu.memory_space<vmem>>
    %472 = tpu.memref_squeeze %471 : memref<1x1x128xf32, #tpu.memory_space<vmem>> -> memref<1x128xf32, #tpu.memory_space<vmem>>
    tpu.wait_dma2 semaphore(%arg9 : memref<!tpu.dma_semaphore, #tpu.memory_space<semaphore_mem>>) src(%470 : memref<1x128xf32, #tpu.memory_space<any>>) dst(%472 : memref<1x128xf32, #tpu.memory_space<vmem>>)
    %c0_i32_401 = arith.constant 0 : i32
    %c0_i32_402 = arith.constant 0 : i32
    %473 = tpu.memref_slice %arg2[%60, %c0_i32_402] : memref<100x128xf32, #tpu.memory_space<any>> -> memref<1x128xf32, #tpu.memory_space<any>>
    %c1_i32_403 = arith.constant 1 : i32
    %c0_i32_404 = arith.constant 0 : i32
    %474 = tpu.memref_slice %arg8[%c0_i32_401, %c1_i32_403, %c0_i32_404] : memref<8x8x128xf32, #tpu.memory_space<vmem>> -> memref<1x1x128xf32, #tpu.memory_space<vmem>>
    %475 = tpu.memref_squeeze %474 : memref<1x1x128xf32, #tpu.memory_space<vmem>> -> memref<1x128xf32, #tpu.memory_space<vmem>>
    tpu.wait_dma2 semaphore(%arg9 : memref<!tpu.dma_semaphore, #tpu.memory_space<semaphore_mem>>) src(%473 : memref<1x128xf32, #tpu.memory_space<any>>) dst(%475 : memref<1x128xf32, #tpu.memory_space<vmem>>)
    %c1_i32_405 = arith.constant 1 : i32
    %c0_i32_406 = arith.constant 0 : i32
    %476 = tpu.memref_slice %arg2[%67, %c0_i32_406] : memref<100x128xf32, #tpu.memory_space<any>> -> memref<1x128xf32, #tpu.memory_space<any>>
    %c1_i32_407 = arith.constant 1 : i32
    %c0_i32_408 = arith.constant 0 : i32
    %477 = tpu.memref_slice %arg8[%c1_i32_405, %c1_i32_407, %c0_i32_408] : memref<8x8x128xf32, #tpu.memory_space<vmem>> -> memref<1x1x128xf32, #tpu.memory_space<vmem>>
    %478 = tpu.memref_squeeze %477 : memref<1x1x128xf32, #tpu.memory_space<vmem>> -> memref<1x128xf32, #tpu.memory_space<vmem>>
    tpu.wait_dma2 semaphore(%arg9 : memref<!tpu.dma_semaphore, #tpu.memory_space<semaphore_mem>>) src(%476 : memref<1x128xf32, #tpu.memory_space<any>>) dst(%478 : memref<1x128xf32, #tpu.memory_space<vmem>>)
    %c2_i32_409 = arith.constant 2 : i32
    %c0_i32_410 = arith.constant 0 : i32
    %479 = tpu.memref_slice %arg2[%74, %c0_i32_410] : memref<100x128xf32, #tpu.memory_space<any>> -> memref<1x128xf32, #tpu.memory_space<any>>
    %c1_i32_411 = arith.constant 1 : i32
    %c0_i32_412 = arith.constant 0 : i32
    %480 = tpu.memref_slice %arg8[%c2_i32_409, %c1_i32_411, %c0_i32_412] : memref<8x8x128xf32, #tpu.memory_space<vmem>> -> memref<1x1x128xf32, #tpu.memory_space<vmem>>
    %481 = tpu.memref_squeeze %480 : memref<1x1x128xf32, #tpu.memory_space<vmem>> -> memref<1x128xf32, #tpu.memory_space<vmem>>
    tpu.wait_dma2 semaphore(%arg9 : memref<!tpu.dma_semaphore, #tpu.memory_space<semaphore_mem>>) src(%479 : memref<1x128xf32, #tpu.memory_space<any>>) dst(%481 : memref<1x128xf32, #tpu.memory_space<vmem>>)
    %c3_i32_413 = arith.constant 3 : i32
    %c0_i32_414 = arith.constant 0 : i32
    %482 = tpu.memref_slice %arg2[%81, %c0_i32_414] : memref<100x128xf32, #tpu.memory_space<any>> -> memref<1x128xf32, #tpu.memory_space<any>>
    %c1_i32_415 = arith.constant 1 : i32
    %c0_i32_416 = arith.constant 0 : i32
    %483 = tpu.memref_slice %arg8[%c3_i32_413, %c1_i32_415, %c0_i32_416] : memref<8x8x128xf32, #tpu.memory_space<vmem>> -> memref<1x1x128xf32, #tpu.memory_space<vmem>>
    %484 = tpu.memref_squeeze %483 : memref<1x1x128xf32, #tpu.memory_space<vmem>> -> memref<1x128xf32, #tpu.memory_space<vmem>>
    tpu.wait_dma2 semaphore(%arg9 : memref<!tpu.dma_semaphore, #tpu.memory_space<semaphore_mem>>) src(%482 : memref<1x128xf32, #tpu.memory_space<any>>) dst(%484 : memref<1x128xf32, #tpu.memory_space<vmem>>)
    %c4_i32_417 = arith.constant 4 : i32
    %c0_i32_418 = arith.constant 0 : i32
    %485 = tpu.memref_slice %arg2[%88, %c0_i32_418] : memref<100x128xf32, #tpu.memory_space<any>> -> memref<1x128xf32, #tpu.memory_space<any>>
    %c1_i32_419 = arith.constant 1 : i32
    %c0_i32_420 = arith.constant 0 : i32
    %486 = tpu.memref_slice %arg8[%c4_i32_417, %c1_i32_419, %c0_i32_420] : memref<8x8x128xf32, #tpu.memory_space<vmem>> -> memref<1x1x128xf32, #tpu.memory_space<vmem>>
    %487 = tpu.memref_squeeze %486 : memref<1x1x128xf32, #tpu.memory_space<vmem>> -> memref<1x128xf32, #tpu.memory_space<vmem>>
    tpu.wait_dma2 semaphore(%arg9 : memref<!tpu.dma_semaphore, #tpu.memory_space<semaphore_mem>>) src(%485 : memref<1x128xf32, #tpu.memory_space<any>>) dst(%487 : memref<1x128xf32, #tpu.memory_space<vmem>>)
    %c5_i32_421 = arith.constant 5 : i32
    %c0_i32_422 = arith.constant 0 : i32
    %488 = tpu.memref_slice %arg2[%95, %c0_i32_422] : memref<100x128xf32, #tpu.memory_space<any>> -> memref<1x128xf32, #tpu.memory_space<any>>
    %c1_i32_423 = arith.constant 1 : i32
    %c0_i32_424 = arith.constant 0 : i32
    %489 = tpu.memref_slice %arg8[%c5_i32_421, %c1_i32_423, %c0_i32_424] : memref<8x8x128xf32, #tpu.memory_space<vmem>> -> memref<1x1x128xf32, #tpu.memory_space<vmem>>
    %490 = tpu.memref_squeeze %489 : memref<1x1x128xf32, #tpu.memory_space<vmem>> -> memref<1x128xf32, #tpu.memory_space<vmem>>
    tpu.wait_dma2 semaphore(%arg9 : memref<!tpu.dma_semaphore, #tpu.memory_space<semaphore_mem>>) src(%488 : memref<1x128xf32, #tpu.memory_space<any>>) dst(%490 : memref<1x128xf32, #tpu.memory_space<vmem>>)
    %c6_i32_425 = arith.constant 6 : i32
    %c0_i32_426 = arith.constant 0 : i32
    %491 = tpu.memref_slice %arg2[%102, %c0_i32_426] : memref<100x128xf32, #tpu.memory_space<any>> -> memref<1x128xf32, #tpu.memory_space<any>>
    %c1_i32_427 = arith.constant 1 : i32
    %c0_i32_428 = arith.constant 0 : i32
    %492 = tpu.memref_slice %arg8[%c6_i32_425, %c1_i32_427, %c0_i32_428] : memref<8x8x128xf32, #tpu.memory_space<vmem>> -> memref<1x1x128xf32, #tpu.memory_space<vmem>>
    %493 = tpu.memref_squeeze %492 : memref<1x1x128xf32, #tpu.memory_space<vmem>> -> memref<1x128xf32, #tpu.memory_space<vmem>>
    tpu.wait_dma2 semaphore(%arg9 : memref<!tpu.dma_semaphore, #tpu.memory_space<semaphore_mem>>) src(%491 : memref<1x128xf32, #tpu.memory_space<any>>) dst(%493 : memref<1x128xf32, #tpu.memory_space<vmem>>)
    %c7_i32_429 = arith.constant 7 : i32
    %c0_i32_430 = arith.constant 0 : i32
    %494 = tpu.memref_slice %arg2[%109, %c0_i32_430] : memref<100x128xf32, #tpu.memory_space<any>> -> memref<1x128xf32, #tpu.memory_space<any>>
    %c1_i32_431 = arith.constant 1 : i32
    %c0_i32_432 = arith.constant 0 : i32
    %495 = tpu.memref_slice %arg8[%c7_i32_429, %c1_i32_431, %c0_i32_432] : memref<8x8x128xf32, #tpu.memory_space<vmem>> -> memref<1x1x128xf32, #tpu.memory_space<vmem>>
    %496 = tpu.memref_squeeze %495 : memref<1x1x128xf32, #tpu.memory_space<vmem>> -> memref<1x128xf32, #tpu.memory_space<vmem>>
    tpu.wait_dma2 semaphore(%arg9 : memref<!tpu.dma_semaphore, #tpu.memory_space<semaphore_mem>>) src(%494 : memref<1x128xf32, #tpu.memory_space<any>>) dst(%496 : memref<1x128xf32, #tpu.memory_space<vmem>>)
    %c0_i32_433 = arith.constant 0 : i32
    %c0_i32_434 = arith.constant 0 : i32
    %497 = tpu.memref_slice %arg2[%116, %c0_i32_434] : memref<100x128xf32, #tpu.memory_space<any>> -> memref<1x128xf32, #tpu.memory_space<any>>
    %c2_i32_435 = arith.constant 2 : i32
    %c0_i32_436 = arith.constant 0 : i32
    %498 = tpu.memref_slice %arg8[%c0_i32_433, %c2_i32_435, %c0_i32_436] : memref<8x8x128xf32, #tpu.memory_space<vmem>> -> memref<1x1x128xf32, #tpu.memory_space<vmem>>
    %499 = tpu.memref_squeeze %498 : memref<1x1x128xf32, #tpu.memory_space<vmem>> -> memref<1x128xf32, #tpu.memory_space<vmem>>
    tpu.wait_dma2 semaphore(%arg9 : memref<!tpu.dma_semaphore, #tpu.memory_space<semaphore_mem>>) src(%497 : memref<1x128xf32, #tpu.memory_space<any>>) dst(%499 : memref<1x128xf32, #tpu.memory_space<vmem>>)
    %c1_i32_437 = arith.constant 1 : i32
    %c0_i32_438 = arith.constant 0 : i32
    %500 = tpu.memref_slice %arg2[%123, %c0_i32_438] : memref<100x128xf32, #tpu.memory_space<any>> -> memref<1x128xf32, #tpu.memory_space<any>>
    %c2_i32_439 = arith.constant 2 : i32
    %c0_i32_440 = arith.constant 0 : i32
    %501 = tpu.memref_slice %arg8[%c1_i32_437, %c2_i32_439, %c0_i32_440] : memref<8x8x128xf32, #tpu.memory_space<vmem>> -> memref<1x1x128xf32, #tpu.memory_space<vmem>>
    %502 = tpu.memref_squeeze %501 : memref<1x1x128xf32, #tpu.memory_space<vmem>> -> memref<1x128xf32, #tpu.memory_space<vmem>>
    tpu.wait_dma2 semaphore(%arg9 : memref<!tpu.dma_semaphore, #tpu.memory_space<semaphore_mem>>) src(%500 : memref<1x128xf32, #tpu.memory_space<any>>) dst(%502 : memref<1x128xf32, #tpu.memory_space<vmem>>)
    %c2_i32_441 = arith.constant 2 : i32
    %c0_i32_442 = arith.constant 0 : i32
    %503 = tpu.memref_slice %arg2[%130, %c0_i32_442] : memref<100x128xf32, #tpu.memory_space<any>> -> memref<1x128xf32, #tpu.memory_space<any>>
    %c2_i32_443 = arith.constant 2 : i32
    %c0_i32_444 = arith.constant 0 : i32
    %504 = tpu.memref_slice %arg8[%c2_i32_441, %c2_i32_443, %c0_i32_444] : memref<8x8x128xf32, #tpu.memory_space<vmem>> -> memref<1x1x128xf32, #tpu.memory_space<vmem>>
    %505 = tpu.memref_squeeze %504 : memref<1x1x128xf32, #tpu.memory_space<vmem>> -> memref<1x128xf32, #tpu.memory_space<vmem>>
    tpu.wait_dma2 semaphore(%arg9 : memref<!tpu.dma_semaphore, #tpu.memory_space<semaphore_mem>>) src(%503 : memref<1x128xf32, #tpu.memory_space<any>>) dst(%505 : memref<1x128xf32, #tpu.memory_space<vmem>>)
    %c3_i32_445 = arith.constant 3 : i32
    %c0_i32_446 = arith.constant 0 : i32
    %506 = tpu.memref_slice %arg2[%137, %c0_i32_446] : memref<100x128xf32, #tpu.memory_space<any>> -> memref<1x128xf32, #tpu.memory_space<any>>
    %c2_i32_447 = arith.constant 2 : i32
    %c0_i32_448 = arith.constant 0 : i32
    %507 = tpu.memref_slice %arg8[%c3_i32_445, %c2_i32_447, %c0_i32_448] : memref<8x8x128xf32, #tpu.memory_space<vmem>> -> memref<1x1x128xf32, #tpu.memory_space<vmem>>
    %508 = tpu.memref_squeeze %507 : memref<1x1x128xf32, #tpu.memory_space<vmem>> -> memref<1x128xf32, #tpu.memory_space<vmem>>
    tpu.wait_dma2 semaphore(%arg9 : memref<!tpu.dma_semaphore, #tpu.memory_space<semaphore_mem>>) src(%506 : memref<1x128xf32, #tpu.memory_space<any>>) dst(%508 : memref<1x128xf32, #tpu.memory_space<vmem>>)
    %c4_i32_449 = arith.constant 4 : i32
    %c0_i32_450 = arith.constant 0 : i32
    %509 = tpu.memref_slice %arg2[%144, %c0_i32_450] : memref<100x128xf32, #tpu.memory_space<any>> -> memref<1x128xf32, #tpu.memory_space<any>>
    %c2_i32_451 = arith.constant 2 : i32
    %c0_i32_452 = arith.constant 0 : i32
    %510 = tpu.memref_slice %arg8[%c4_i32_449, %c2_i32_451, %c0_i32_452] : memref<8x8x128xf32, #tpu.memory_space<vmem>> -> memref<1x1x128xf32, #tpu.memory_space<vmem>>
    %511 = tpu.memref_squeeze %510 : memref<1x1x128xf32, #tpu.memory_space<vmem>> -> memref<1x128xf32, #tpu.memory_space<vmem>>
    tpu.wait_dma2 semaphore(%arg9 : memref<!tpu.dma_semaphore, #tpu.memory_space<semaphore_mem>>) src(%509 : memref<1x128xf32, #tpu.memory_space<any>>) dst(%511 : memref<1x128xf32, #tpu.memory_space<vmem>>)
    %c5_i32_453 = arith.constant 5 : i32
    %c0_i32_454 = arith.constant 0 : i32
    %512 = tpu.memref_slice %arg2[%151, %c0_i32_454] : memref<100x128xf32, #tpu.memory_space<any>> -> memref<1x128xf32, #tpu.memory_space<any>>
    %c2_i32_455 = arith.constant 2 : i32
    %c0_i32_456 = arith.constant 0 : i32
    %513 = tpu.memref_slice %arg8[%c5_i32_453, %c2_i32_455, %c0_i32_456] : memref<8x8x128xf32, #tpu.memory_space<vmem>> -> memref<1x1x128xf32, #tpu.memory_space<vmem>>
    %514 = tpu.memref_squeeze %513 : memref<1x1x128xf32, #tpu.memory_space<vmem>> -> memref<1x128xf32, #tpu.memory_space<vmem>>
    tpu.wait_dma2 semaphore(%arg9 : memref<!tpu.dma_semaphore, #tpu.memory_space<semaphore_mem>>) src(%512 : memref<1x128xf32, #tpu.memory_space<any>>) dst(%514 : memref<1x128xf32, #tpu.memory_space<vmem>>)
    %c6_i32_457 = arith.constant 6 : i32
    %c0_i32_458 = arith.constant 0 : i32
    %515 = tpu.memref_slice %arg2[%158, %c0_i32_458] : memref<100x128xf32, #tpu.memory_space<any>> -> memref<1x128xf32, #tpu.memory_space<any>>
    %c2_i32_459 = arith.constant 2 : i32
    %c0_i32_460 = arith.constant 0 : i32
    %516 = tpu.memref_slice %arg8[%c6_i32_457, %c2_i32_459, %c0_i32_460] : memref<8x8x128xf32, #tpu.memory_space<vmem>> -> memref<1x1x128xf32, #tpu.memory_space<vmem>>
    %517 = tpu.memref_squeeze %516 : memref<1x1x128xf32, #tpu.memory_space<vmem>> -> memref<1x128xf32, #tpu.memory_space<vmem>>
    tpu.wait_dma2 semaphore(%arg9 : memref<!tpu.dma_semaphore, #tpu.memory_space<semaphore_mem>>) src(%515 : memref<1x128xf32, #tpu.memory_space<any>>) dst(%517 : memref<1x128xf32, #tpu.memory_space<vmem>>)
    %c7_i32_461 = arith.constant 7 : i32
    %c0_i32_462 = arith.constant 0 : i32
    %518 = tpu.memref_slice %arg2[%165, %c0_i32_462] : memref<100x128xf32, #tpu.memory_space<any>> -> memref<1x128xf32, #tpu.memory_space<any>>
    %c2_i32_463 = arith.constant 2 : i32
    %c0_i32_464 = arith.constant 0 : i32
    %519 = tpu.memref_slice %arg8[%c7_i32_461, %c2_i32_463, %c0_i32_464] : memref<8x8x128xf32, #tpu.memory_space<vmem>> -> memref<1x1x128xf32, #tpu.memory_space<vmem>>
    %520 = tpu.memref_squeeze %519 : memref<1x1x128xf32, #tpu.memory_space<vmem>> -> memref<1x128xf32, #tpu.memory_space<vmem>>
    tpu.wait_dma2 semaphore(%arg9 : memref<!tpu.dma_semaphore, #tpu.memory_space<semaphore_mem>>) src(%518 : memref<1x128xf32, #tpu.memory_space<any>>) dst(%520 : memref<1x128xf32, #tpu.memory_space<vmem>>)
    %c0_i32_465 = arith.constant 0 : i32
    %c0_i32_466 = arith.constant 0 : i32
    %521 = tpu.memref_slice %arg2[%172, %c0_i32_466] : memref<100x128xf32, #tpu.memory_space<any>> -> memref<1x128xf32, #tpu.memory_space<any>>
    %c3_i32_467 = arith.constant 3 : i32
    %c0_i32_468 = arith.constant 0 : i32
    %522 = tpu.memref_slice %arg8[%c0_i32_465, %c3_i32_467, %c0_i32_468] : memref<8x8x128xf32, #tpu.memory_space<vmem>> -> memref<1x1x128xf32, #tpu.memory_space<vmem>>
    %523 = tpu.memref_squeeze %522 : memref<1x1x128xf32, #tpu.memory_space<vmem>> -> memref<1x128xf32, #tpu.memory_space<vmem>>
    tpu.wait_dma2 semaphore(%arg9 : memref<!tpu.dma_semaphore, #tpu.memory_space<semaphore_mem>>) src(%521 : memref<1x128xf32, #tpu.memory_space<any>>) dst(%523 : memref<1x128xf32, #tpu.memory_space<vmem>>)
    %c1_i32_469 = arith.constant 1 : i32
    %c0_i32_470 = arith.constant 0 : i32
    %524 = tpu.memref_slice %arg2[%179, %c0_i32_470] : memref<100x128xf32, #tpu.memory_space<any>> -> memref<1x128xf32, #tpu.memory_space<any>>
    %c3_i32_471 = arith.constant 3 : i32
    %c0_i32_472 = arith.constant 0 : i32
    %525 = tpu.memref_slice %arg8[%c1_i32_469, %c3_i32_471, %c0_i32_472] : memref<8x8x128xf32, #tpu.memory_space<vmem>> -> memref<1x1x128xf32, #tpu.memory_space<vmem>>
    %526 = tpu.memref_squeeze %525 : memref<1x1x128xf32, #tpu.memory_space<vmem>> -> memref<1x128xf32, #tpu.memory_space<vmem>>
    tpu.wait_dma2 semaphore(%arg9 : memref<!tpu.dma_semaphore, #tpu.memory_space<semaphore_mem>>) src(%524 : memref<1x128xf32, #tpu.memory_space<any>>) dst(%526 : memref<1x128xf32, #tpu.memory_space<vmem>>)
    %c2_i32_473 = arith.constant 2 : i32
    %c0_i32_474 = arith.constant 0 : i32
    %527 = tpu.memref_slice %arg2[%186, %c0_i32_474] : memref<100x128xf32, #tpu.memory_space<any>> -> memref<1x128xf32, #tpu.memory_space<any>>
    %c3_i32_475 = arith.constant 3 : i32
    %c0_i32_476 = arith.constant 0 : i32
    %528 = tpu.memref_slice %arg8[%c2_i32_473, %c3_i32_475, %c0_i32_476] : memref<8x8x128xf32, #tpu.memory_space<vmem>> -> memref<1x1x128xf32, #tpu.memory_space<vmem>>
    %529 = tpu.memref_squeeze %528 : memref<1x1x128xf32, #tpu.memory_space<vmem>> -> memref<1x128xf32, #tpu.memory_space<vmem>>
    tpu.wait_dma2 semaphore(%arg9 : memref<!tpu.dma_semaphore, #tpu.memory_space<semaphore_mem>>) src(%527 : memref<1x128xf32, #tpu.memory_space<any>>) dst(%529 : memref<1x128xf32, #tpu.memory_space<vmem>>)
    %c3_i32_477 = arith.constant 3 : i32
    %c0_i32_478 = arith.constant 0 : i32
    %530 = tpu.memref_slice %arg2[%193, %c0_i32_478] : memref<100x128xf32, #tpu.memory_space<any>> -> memref<1x128xf32, #tpu.memory_space<any>>
    %c3_i32_479 = arith.constant 3 : i32
    %c0_i32_480 = arith.constant 0 : i32
    %531 = tpu.memref_slice %arg8[%c3_i32_477, %c3_i32_479, %c0_i32_480] : memref<8x8x128xf32, #tpu.memory_space<vmem>> -> memref<1x1x128xf32, #tpu.memory_space<vmem>>
    %532 = tpu.memref_squeeze %531 : memref<1x1x128xf32, #tpu.memory_space<vmem>> -> memref<1x128xf32, #tpu.memory_space<vmem>>
    tpu.wait_dma2 semaphore(%arg9 : memref<!tpu.dma_semaphore, #tpu.memory_space<semaphore_mem>>) src(%530 : memref<1x128xf32, #tpu.memory_space<any>>) dst(%532 : memref<1x128xf32, #tpu.memory_space<vmem>>)
    %c4_i32_481 = arith.constant 4 : i32
    %c0_i32_482 = arith.constant 0 : i32
    %533 = tpu.memref_slice %arg2[%200, %c0_i32_482] : memref<100x128xf32, #tpu.memory_space<any>> -> memref<1x128xf32, #tpu.memory_space<any>>
    %c3_i32_483 = arith.constant 3 : i32
    %c0_i32_484 = arith.constant 0 : i32
    %534 = tpu.memref_slice %arg8[%c4_i32_481, %c3_i32_483, %c0_i32_484] : memref<8x8x128xf32, #tpu.memory_space<vmem>> -> memref<1x1x128xf32, #tpu.memory_space<vmem>>
    %535 = tpu.memref_squeeze %534 : memref<1x1x128xf32, #tpu.memory_space<vmem>> -> memref<1x128xf32, #tpu.memory_space<vmem>>
    tpu.wait_dma2 semaphore(%arg9 : memref<!tpu.dma_semaphore, #tpu.memory_space<semaphore_mem>>) src(%533 : memref<1x128xf32, #tpu.memory_space<any>>) dst(%535 : memref<1x128xf32, #tpu.memory_space<vmem>>)
    %c5_i32_485 = arith.constant 5 : i32
    %c0_i32_486 = arith.constant 0 : i32
    %536 = tpu.memref_slice %arg2[%207, %c0_i32_486] : memref<100x128xf32, #tpu.memory_space<any>> -> memref<1x128xf32, #tpu.memory_space<any>>
    %c3_i32_487 = arith.constant 3 : i32
    %c0_i32_488 = arith.constant 0 : i32
    %537 = tpu.memref_slice %arg8[%c5_i32_485, %c3_i32_487, %c0_i32_488] : memref<8x8x128xf32, #tpu.memory_space<vmem>> -> memref<1x1x128xf32, #tpu.memory_space<vmem>>
    %538 = tpu.memref_squeeze %537 : memref<1x1x128xf32, #tpu.memory_space<vmem>> -> memref<1x128xf32, #tpu.memory_space<vmem>>
    tpu.wait_dma2 semaphore(%arg9 : memref<!tpu.dma_semaphore, #tpu.memory_space<semaphore_mem>>) src(%536 : memref<1x128xf32, #tpu.memory_space<any>>) dst(%538 : memref<1x128xf32, #tpu.memory_space<vmem>>)
    %c6_i32_489 = arith.constant 6 : i32
    %c0_i32_490 = arith.constant 0 : i32
    %539 = tpu.memref_slice %arg2[%214, %c0_i32_490] : memref<100x128xf32, #tpu.memory_space<any>> -> memref<1x128xf32, #tpu.memory_space<any>>
    %c3_i32_491 = arith.constant 3 : i32
    %c0_i32_492 = arith.constant 0 : i32
    %540 = tpu.memref_slice %arg8[%c6_i32_489, %c3_i32_491, %c0_i32_492] : memref<8x8x128xf32, #tpu.memory_space<vmem>> -> memref<1x1x128xf32, #tpu.memory_space<vmem>>
    %541 = tpu.memref_squeeze %540 : memref<1x1x128xf32, #tpu.memory_space<vmem>> -> memref<1x128xf32, #tpu.memory_space<vmem>>
    tpu.wait_dma2 semaphore(%arg9 : memref<!tpu.dma_semaphore, #tpu.memory_space<semaphore_mem>>) src(%539 : memref<1x128xf32, #tpu.memory_space<any>>) dst(%541 : memref<1x128xf32, #tpu.memory_space<vmem>>)
    %c7_i32_493 = arith.constant 7 : i32
    %c0_i32_494 = arith.constant 0 : i32
    %542 = tpu.memref_slice %arg2[%221, %c0_i32_494] : memref<100x128xf32, #tpu.memory_space<any>> -> memref<1x128xf32, #tpu.memory_space<any>>
    %c3_i32_495 = arith.constant 3 : i32
    %c0_i32_496 = arith.constant 0 : i32
    %543 = tpu.memref_slice %arg8[%c7_i32_493, %c3_i32_495, %c0_i32_496] : memref<8x8x128xf32, #tpu.memory_space<vmem>> -> memref<1x1x128xf32, #tpu.memory_space<vmem>>
    %544 = tpu.memref_squeeze %543 : memref<1x1x128xf32, #tpu.memory_space<vmem>> -> memref<1x128xf32, #tpu.memory_space<vmem>>
    tpu.wait_dma2 semaphore(%arg9 : memref<!tpu.dma_semaphore, #tpu.memory_space<semaphore_mem>>) src(%542 : memref<1x128xf32, #tpu.memory_space<any>>) dst(%544 : memref<1x128xf32, #tpu.memory_space<vmem>>)
    %c0_i32_497 = arith.constant 0 : i32
    %c0_i32_498 = arith.constant 0 : i32
    %545 = tpu.memref_slice %arg2[%228, %c0_i32_498] : memref<100x128xf32, #tpu.memory_space<any>> -> memref<1x128xf32, #tpu.memory_space<any>>
    %c4_i32_499 = arith.constant 4 : i32
    %c0_i32_500 = arith.constant 0 : i32
    %546 = tpu.memref_slice %arg8[%c0_i32_497, %c4_i32_499, %c0_i32_500] : memref<8x8x128xf32, #tpu.memory_space<vmem>> -> memref<1x1x128xf32, #tpu.memory_space<vmem>>
    %547 = tpu.memref_squeeze %546 : memref<1x1x128xf32, #tpu.memory_space<vmem>> -> memref<1x128xf32, #tpu.memory_space<vmem>>
    tpu.wait_dma2 semaphore(%arg9 : memref<!tpu.dma_semaphore, #tpu.memory_space<semaphore_mem>>) src(%545 : memref<1x128xf32, #tpu.memory_space<any>>) dst(%547 : memref<1x128xf32, #tpu.memory_space<vmem>>)
    %c1_i32_501 = arith.constant 1 : i32
    %c0_i32_502 = arith.constant 0 : i32
    %548 = tpu.memref_slice %arg2[%235, %c0_i32_502] : memref<100x128xf32, #tpu.memory_space<any>> -> memref<1x128xf32, #tpu.memory_space<any>>
    %c4_i32_503 = arith.constant 4 : i32
    %c0_i32_504 = arith.constant 0 : i32
    %549 = tpu.memref_slice %arg8[%c1_i32_501, %c4_i32_503, %c0_i32_504] : memref<8x8x128xf32, #tpu.memory_space<vmem>> -> memref<1x1x128xf32, #tpu.memory_space<vmem>>
    %550 = tpu.memref_squeeze %549 : memref<1x1x128xf32, #tpu.memory_space<vmem>> -> memref<1x128xf32, #tpu.memory_space<vmem>>
    tpu.wait_dma2 semaphore(%arg9 : memref<!tpu.dma_semaphore, #tpu.memory_space<semaphore_mem>>) src(%548 : memref<1x128xf32, #tpu.memory_space<any>>) dst(%550 : memref<1x128xf32, #tpu.memory_space<vmem>>)
    %c2_i32_505 = arith.constant 2 : i32
    %c0_i32_506 = arith.constant 0 : i32
    %551 = tpu.memref_slice %arg2[%242, %c0_i32_506] : memref<100x128xf32, #tpu.memory_space<any>> -> memref<1x128xf32, #tpu.memory_space<any>>
    %c4_i32_507 = arith.constant 4 : i32
    %c0_i32_508 = arith.constant 0 : i32
    %552 = tpu.memref_slice %arg8[%c2_i32_505, %c4_i32_507, %c0_i32_508] : memref<8x8x128xf32, #tpu.memory_space<vmem>> -> memref<1x1x128xf32, #tpu.memory_space<vmem>>
    %553 = tpu.memref_squeeze %552 : memref<1x1x128xf32, #tpu.memory_space<vmem>> -> memref<1x128xf32, #tpu.memory_space<vmem>>
    tpu.wait_dma2 semaphore(%arg9 : memref<!tpu.dma_semaphore, #tpu.memory_space<semaphore_mem>>) src(%551 : memref<1x128xf32, #tpu.memory_space<any>>) dst(%553 : memref<1x128xf32, #tpu.memory_space<vmem>>)
    %c3_i32_509 = arith.constant 3 : i32
    %c0_i32_510 = arith.constant 0 : i32
    %554 = tpu.memref_slice %arg2[%249, %c0_i32_510] : memref<100x128xf32, #tpu.memory_space<any>> -> memref<1x128xf32, #tpu.memory_space<any>>
    %c4_i32_511 = arith.constant 4 : i32
    %c0_i32_512 = arith.constant 0 : i32
    %555 = tpu.memref_slice %arg8[%c3_i32_509, %c4_i32_511, %c0_i32_512] : memref<8x8x128xf32, #tpu.memory_space<vmem>> -> memref<1x1x128xf32, #tpu.memory_space<vmem>>
    %556 = tpu.memref_squeeze %555 : memref<1x1x128xf32, #tpu.memory_space<vmem>> -> memref<1x128xf32, #tpu.memory_space<vmem>>
    tpu.wait_dma2 semaphore(%arg9 : memref<!tpu.dma_semaphore, #tpu.memory_space<semaphore_mem>>) src(%554 : memref<1x128xf32, #tpu.memory_space<any>>) dst(%556 : memref<1x128xf32, #tpu.memory_space<vmem>>)
    %c4_i32_513 = arith.constant 4 : i32
    %c0_i32_514 = arith.constant 0 : i32
    %557 = tpu.memref_slice %arg2[%256, %c0_i32_514] : memref<100x128xf32, #tpu.memory_space<any>> -> memref<1x128xf32, #tpu.memory_space<any>>
    %c4_i32_515 = arith.constant 4 : i32
    %c0_i32_516 = arith.constant 0 : i32
    %558 = tpu.memref_slice %arg8[%c4_i32_513, %c4_i32_515, %c0_i32_516] : memref<8x8x128xf32, #tpu.memory_space<vmem>> -> memref<1x1x128xf32, #tpu.memory_space<vmem>>
    %559 = tpu.memref_squeeze %558 : memref<1x1x128xf32, #tpu.memory_space<vmem>> -> memref<1x128xf32, #tpu.memory_space<vmem>>
    tpu.wait_dma2 semaphore(%arg9 : memref<!tpu.dma_semaphore, #tpu.memory_space<semaphore_mem>>) src(%557 : memref<1x128xf32, #tpu.memory_space<any>>) dst(%559 : memref<1x128xf32, #tpu.memory_space<vmem>>)
    %c5_i32_517 = arith.constant 5 : i32
    %c0_i32_518 = arith.constant 0 : i32
    %560 = tpu.memref_slice %arg2[%263, %c0_i32_518] : memref<100x128xf32, #tpu.memory_space<any>> -> memref<1x128xf32, #tpu.memory_space<any>>
    %c4_i32_519 = arith.constant 4 : i32
    %c0_i32_520 = arith.constant 0 : i32
    %561 = tpu.memref_slice %arg8[%c5_i32_517, %c4_i32_519, %c0_i32_520] : memref<8x8x128xf32, #tpu.memory_space<vmem>> -> memref<1x1x128xf32, #tpu.memory_space<vmem>>
    %562 = tpu.memref_squeeze %561 : memref<1x1x128xf32, #tpu.memory_space<vmem>> -> memref<1x128xf32, #tpu.memory_space<vmem>>
    tpu.wait_dma2 semaphore(%arg9 : memref<!tpu.dma_semaphore, #tpu.memory_space<semaphore_mem>>) src(%560 : memref<1x128xf32, #tpu.memory_space<any>>) dst(%562 : memref<1x128xf32, #tpu.memory_space<vmem>>)
    %c6_i32_521 = arith.constant 6 : i32
    %c0_i32_522 = arith.constant 0 : i32
    %563 = tpu.memref_slice %arg2[%270, %c0_i32_522] : memref<100x128xf32, #tpu.memory_space<any>> -> memref<1x128xf32, #tpu.memory_space<any>>
    %c4_i32_523 = arith.constant 4 : i32
    %c0_i32_524 = arith.constant 0 : i32
    %564 = tpu.memref_slice %arg8[%c6_i32_521, %c4_i32_523, %c0_i32_524] : memref<8x8x128xf32, #tpu.memory_space<vmem>> -> memref<1x1x128xf32, #tpu.memory_space<vmem>>
    %565 = tpu.memref_squeeze %564 : memref<1x1x128xf32, #tpu.memory_space<vmem>> -> memref<1x128xf32, #tpu.memory_space<vmem>>
    tpu.wait_dma2 semaphore(%arg9 : memref<!tpu.dma_semaphore, #tpu.memory_space<semaphore_mem>>) src(%563 : memref<1x128xf32, #tpu.memory_space<any>>) dst(%565 : memref<1x128xf32, #tpu.memory_space<vmem>>)
    %c7_i32_525 = arith.constant 7 : i32
    %c0_i32_526 = arith.constant 0 : i32
    %566 = tpu.memref_slice %arg2[%277, %c0_i32_526] : memref<100x128xf32, #tpu.memory_space<any>> -> memref<1x128xf32, #tpu.memory_space<any>>
    %c4_i32_527 = arith.constant 4 : i32
    %c0_i32_528 = arith.constant 0 : i32
    %567 = tpu.memref_slice %arg8[%c7_i32_525, %c4_i32_527, %c0_i32_528] : memref<8x8x128xf32, #tpu.memory_space<vmem>> -> memref<1x1x128xf32, #tpu.memory_space<vmem>>
    %568 = tpu.memref_squeeze %567 : memref<1x1x128xf32, #tpu.memory_space<vmem>> -> memref<1x128xf32, #tpu.memory_space<vmem>>
    tpu.wait_dma2 semaphore(%arg9 : memref<!tpu.dma_semaphore, #tpu.memory_space<semaphore_mem>>) src(%566 : memref<1x128xf32, #tpu.memory_space<any>>) dst(%568 : memref<1x128xf32, #tpu.memory_space<vmem>>)
    %c0_i32_529 = arith.constant 0 : i32
    %c0_i32_530 = arith.constant 0 : i32
    %569 = tpu.memref_slice %arg2[%284, %c0_i32_530] : memref<100x128xf32, #tpu.memory_space<any>> -> memref<1x128xf32, #tpu.memory_space<any>>
    %c5_i32_531 = arith.constant 5 : i32
    %c0_i32_532 = arith.constant 0 : i32
    %570 = tpu.memref_slice %arg8[%c0_i32_529, %c5_i32_531, %c0_i32_532] : memref<8x8x128xf32, #tpu.memory_space<vmem>> -> memref<1x1x128xf32, #tpu.memory_space<vmem>>
    %571 = tpu.memref_squeeze %570 : memref<1x1x128xf32, #tpu.memory_space<vmem>> -> memref<1x128xf32, #tpu.memory_space<vmem>>
    tpu.wait_dma2 semaphore(%arg9 : memref<!tpu.dma_semaphore, #tpu.memory_space<semaphore_mem>>) src(%569 : memref<1x128xf32, #tpu.memory_space<any>>) dst(%571 : memref<1x128xf32, #tpu.memory_space<vmem>>)
    %c1_i32_533 = arith.constant 1 : i32
    %c0_i32_534 = arith.constant 0 : i32
    %572 = tpu.memref_slice %arg2[%291, %c0_i32_534] : memref<100x128xf32, #tpu.memory_space<any>> -> memref<1x128xf32, #tpu.memory_space<any>>
    %c5_i32_535 = arith.constant 5 : i32
    %c0_i32_536 = arith.constant 0 : i32
    %573 = tpu.memref_slice %arg8[%c1_i32_533, %c5_i32_535, %c0_i32_536] : memref<8x8x128xf32, #tpu.memory_space<vmem>> -> memref<1x1x128xf32, #tpu.memory_space<vmem>>
    %574 = tpu.memref_squeeze %573 : memref<1x1x128xf32, #tpu.memory_space<vmem>> -> memref<1x128xf32, #tpu.memory_space<vmem>>
    tpu.wait_dma2 semaphore(%arg9 : memref<!tpu.dma_semaphore, #tpu.memory_space<semaphore_mem>>) src(%572 : memref<1x128xf32, #tpu.memory_space<any>>) dst(%574 : memref<1x128xf32, #tpu.memory_space<vmem>>)
    %c2_i32_537 = arith.constant 2 : i32
    %c0_i32_538 = arith.constant 0 : i32
    %575 = tpu.memref_slice %arg2[%298, %c0_i32_538] : memref<100x128xf32, #tpu.memory_space<any>> -> memref<1x128xf32, #tpu.memory_space<any>>
    %c5_i32_539 = arith.constant 5 : i32
    %c0_i32_540 = arith.constant 0 : i32
    %576 = tpu.memref_slice %arg8[%c2_i32_537, %c5_i32_539, %c0_i32_540] : memref<8x8x128xf32, #tpu.memory_space<vmem>> -> memref<1x1x128xf32, #tpu.memory_space<vmem>>
    %577 = tpu.memref_squeeze %576 : memref<1x1x128xf32, #tpu.memory_space<vmem>> -> memref<1x128xf32, #tpu.memory_space<vmem>>
    tpu.wait_dma2 semaphore(%arg9 : memref<!tpu.dma_semaphore, #tpu.memory_space<semaphore_mem>>) src(%575 : memref<1x128xf32, #tpu.memory_space<any>>) dst(%577 : memref<1x128xf32, #tpu.memory_space<vmem>>)
    %c3_i32_541 = arith.constant 3 : i32
    %c0_i32_542 = arith.constant 0 : i32
    %578 = tpu.memref_slice %arg2[%305, %c0_i32_542] : memref<100x128xf32, #tpu.memory_space<any>> -> memref<1x128xf32, #tpu.memory_space<any>>
    %c5_i32_543 = arith.constant 5 : i32
    %c0_i32_544 = arith.constant 0 : i32
    %579 = tpu.memref_slice %arg8[%c3_i32_541, %c5_i32_543, %c0_i32_544] : memref<8x8x128xf32, #tpu.memory_space<vmem>> -> memref<1x1x128xf32, #tpu.memory_space<vmem>>
    %580 = tpu.memref_squeeze %579 : memref<1x1x128xf32, #tpu.memory_space<vmem>> -> memref<1x128xf32, #tpu.memory_space<vmem>>
    tpu.wait_dma2 semaphore(%arg9 : memref<!tpu.dma_semaphore, #tpu.memory_space<semaphore_mem>>) src(%578 : memref<1x128xf32, #tpu.memory_space<any>>) dst(%580 : memref<1x128xf32, #tpu.memory_space<vmem>>)
    %c4_i32_545 = arith.constant 4 : i32
    %c0_i32_546 = arith.constant 0 : i32
    %581 = tpu.memref_slice %arg2[%312, %c0_i32_546] : memref<100x128xf32, #tpu.memory_space<any>> -> memref<1x128xf32, #tpu.memory_space<any>>
    %c5_i32_547 = arith.constant 5 : i32
    %c0_i32_548 = arith.constant 0 : i32
    %582 = tpu.memref_slice %arg8[%c4_i32_545, %c5_i32_547, %c0_i32_548] : memref<8x8x128xf32, #tpu.memory_space<vmem>> -> memref<1x1x128xf32, #tpu.memory_space<vmem>>
    %583 = tpu.memref_squeeze %582 : memref<1x1x128xf32, #tpu.memory_space<vmem>> -> memref<1x128xf32, #tpu.memory_space<vmem>>
    tpu.wait_dma2 semaphore(%arg9 : memref<!tpu.dma_semaphore, #tpu.memory_space<semaphore_mem>>) src(%581 : memref<1x128xf32, #tpu.memory_space<any>>) dst(%583 : memref<1x128xf32, #tpu.memory_space<vmem>>)
    %c5_i32_549 = arith.constant 5 : i32
    %c0_i32_550 = arith.constant 0 : i32
    %584 = tpu.memref_slice %arg2[%319, %c0_i32_550] : memref<100x128xf32, #tpu.memory_space<any>> -> memref<1x128xf32, #tpu.memory_space<any>>
    %c5_i32_551 = arith.constant 5 : i32
    %c0_i32_552 = arith.constant 0 : i32
    %585 = tpu.memref_slice %arg8[%c5_i32_549, %c5_i32_551, %c0_i32_552] : memref<8x8x128xf32, #tpu.memory_space<vmem>> -> memref<1x1x128xf32, #tpu.memory_space<vmem>>
    %586 = tpu.memref_squeeze %585 : memref<1x1x128xf32, #tpu.memory_space<vmem>> -> memref<1x128xf32, #tpu.memory_space<vmem>>
    tpu.wait_dma2 semaphore(%arg9 : memref<!tpu.dma_semaphore, #tpu.memory_space<semaphore_mem>>) src(%584 : memref<1x128xf32, #tpu.memory_space<any>>) dst(%586 : memref<1x128xf32, #tpu.memory_space<vmem>>)
    %c6_i32_553 = arith.constant 6 : i32
    %c0_i32_554 = arith.constant 0 : i32
    %587 = tpu.memref_slice %arg2[%326, %c0_i32_554] : memref<100x128xf32, #tpu.memory_space<any>> -> memref<1x128xf32, #tpu.memory_space<any>>
    %c5_i32_555 = arith.constant 5 : i32
    %c0_i32_556 = arith.constant 0 : i32
    %588 = tpu.memref_slice %arg8[%c6_i32_553, %c5_i32_555, %c0_i32_556] : memref<8x8x128xf32, #tpu.memory_space<vmem>> -> memref<1x1x128xf32, #tpu.memory_space<vmem>>
    %589 = tpu.memref_squeeze %588 : memref<1x1x128xf32, #tpu.memory_space<vmem>> -> memref<1x128xf32, #tpu.memory_space<vmem>>
    tpu.wait_dma2 semaphore(%arg9 : memref<!tpu.dma_semaphore, #tpu.memory_space<semaphore_mem>>) src(%587 : memref<1x128xf32, #tpu.memory_space<any>>) dst(%589 : memref<1x128xf32, #tpu.memory_space<vmem>>)
    %c7_i32_557 = arith.constant 7 : i32
    %c0_i32_558 = arith.constant 0 : i32
    %590 = tpu.memref_slice %arg2[%333, %c0_i32_558] : memref<100x128xf32, #tpu.memory_space<any>> -> memref<1x128xf32, #tpu.memory_space<any>>
    %c5_i32_559 = arith.constant 5 : i32
    %c0_i32_560 = arith.constant 0 : i32
    %591 = tpu.memref_slice %arg8[%c7_i32_557, %c5_i32_559, %c0_i32_560] : memref<8x8x128xf32, #tpu.memory_space<vmem>> -> memref<1x1x128xf32, #tpu.memory_space<vmem>>
    %592 = tpu.memref_squeeze %591 : memref<1x1x128xf32, #tpu.memory_space<vmem>> -> memref<1x128xf32, #tpu.memory_space<vmem>>
    tpu.wait_dma2 semaphore(%arg9 : memref<!tpu.dma_semaphore, #tpu.memory_space<semaphore_mem>>) src(%590 : memref<1x128xf32, #tpu.memory_space<any>>) dst(%592 : memref<1x128xf32, #tpu.memory_space<vmem>>)
    %c0_i32_561 = arith.constant 0 : i32
    %c0_i32_562 = arith.constant 0 : i32
    %593 = tpu.memref_slice %arg2[%340, %c0_i32_562] : memref<100x128xf32, #tpu.memory_space<any>> -> memref<1x128xf32, #tpu.memory_space<any>>
    %c6_i32_563 = arith.constant 6 : i32
    %c0_i32_564 = arith.constant 0 : i32
    %594 = tpu.memref_slice %arg8[%c0_i32_561, %c6_i32_563, %c0_i32_564] : memref<8x8x128xf32, #tpu.memory_space<vmem>> -> memref<1x1x128xf32, #tpu.memory_space<vmem>>
    %595 = tpu.memref_squeeze %594 : memref<1x1x128xf32, #tpu.memory_space<vmem>> -> memref<1x128xf32, #tpu.memory_space<vmem>>
    tpu.wait_dma2 semaphore(%arg9 : memref<!tpu.dma_semaphore, #tpu.memory_space<semaphore_mem>>) src(%593 : memref<1x128xf32, #tpu.memory_space<any>>) dst(%595 : memref<1x128xf32, #tpu.memory_space<vmem>>)
    %c1_i32_565 = arith.constant 1 : i32
    %c0_i32_566 = arith.constant 0 : i32
    %596 = tpu.memref_slice %arg2[%347, %c0_i32_566] : memref<100x128xf32, #tpu.memory_space<any>> -> memref<1x128xf32, #tpu.memory_space<any>>
    %c6_i32_567 = arith.constant 6 : i32
    %c0_i32_568 = arith.constant 0 : i32
    %597 = tpu.memref_slice %arg8[%c1_i32_565, %c6_i32_567, %c0_i32_568] : memref<8x8x128xf32, #tpu.memory_space<vmem>> -> memref<1x1x128xf32, #tpu.memory_space<vmem>>
    %598 = tpu.memref_squeeze %597 : memref<1x1x128xf32, #tpu.memory_space<vmem>> -> memref<1x128xf32, #tpu.memory_space<vmem>>
    tpu.wait_dma2 semaphore(%arg9 : memref<!tpu.dma_semaphore, #tpu.memory_space<semaphore_mem>>) src(%596 : memref<1x128xf32, #tpu.memory_space<any>>) dst(%598 : memref<1x128xf32, #tpu.memory_space<vmem>>)
    %c2_i32_569 = arith.constant 2 : i32
    %c0_i32_570 = arith.constant 0 : i32
    %599 = tpu.memref_slice %arg2[%354, %c0_i32_570] : memref<100x128xf32, #tpu.memory_space<any>> -> memref<1x128xf32, #tpu.memory_space<any>>
    %c6_i32_571 = arith.constant 6 : i32
    %c0_i32_572 = arith.constant 0 : i32
    %600 = tpu.memref_slice %arg8[%c2_i32_569, %c6_i32_571, %c0_i32_572] : memref<8x8x128xf32, #tpu.memory_space<vmem>> -> memref<1x1x128xf32, #tpu.memory_space<vmem>>
    %601 = tpu.memref_squeeze %600 : memref<1x1x128xf32, #tpu.memory_space<vmem>> -> memref<1x128xf32, #tpu.memory_space<vmem>>
    tpu.wait_dma2 semaphore(%arg9 : memref<!tpu.dma_semaphore, #tpu.memory_space<semaphore_mem>>) src(%599 : memref<1x128xf32, #tpu.memory_space<any>>) dst(%601 : memref<1x128xf32, #tpu.memory_space<vmem>>)
    %c3_i32_573 = arith.constant 3 : i32
    %c0_i32_574 = arith.constant 0 : i32
    %602 = tpu.memref_slice %arg2[%361, %c0_i32_574] : memref<100x128xf32, #tpu.memory_space<any>> -> memref<1x128xf32, #tpu.memory_space<any>>
    %c6_i32_575 = arith.constant 6 : i32
    %c0_i32_576 = arith.constant 0 : i32
    %603 = tpu.memref_slice %arg8[%c3_i32_573, %c6_i32_575, %c0_i32_576] : memref<8x8x128xf32, #tpu.memory_space<vmem>> -> memref<1x1x128xf32, #tpu.memory_space<vmem>>
    %604 = tpu.memref_squeeze %603 : memref<1x1x128xf32, #tpu.memory_space<vmem>> -> memref<1x128xf32, #tpu.memory_space<vmem>>
    tpu.wait_dma2 semaphore(%arg9 : memref<!tpu.dma_semaphore, #tpu.memory_space<semaphore_mem>>) src(%602 : memref<1x128xf32, #tpu.memory_space<any>>) dst(%604 : memref<1x128xf32, #tpu.memory_space<vmem>>)
    %c4_i32_577 = arith.constant 4 : i32
    %c0_i32_578 = arith.constant 0 : i32
    %605 = tpu.memref_slice %arg2[%368, %c0_i32_578] : memref<100x128xf32, #tpu.memory_space<any>> -> memref<1x128xf32, #tpu.memory_space<any>>
    %c6_i32_579 = arith.constant 6 : i32
    %c0_i32_580 = arith.constant 0 : i32
    %606 = tpu.memref_slice %arg8[%c4_i32_577, %c6_i32_579, %c0_i32_580] : memref<8x8x128xf32, #tpu.memory_space<vmem>> -> memref<1x1x128xf32, #tpu.memory_space<vmem>>
    %607 = tpu.memref_squeeze %606 : memref<1x1x128xf32, #tpu.memory_space<vmem>> -> memref<1x128xf32, #tpu.memory_space<vmem>>
    tpu.wait_dma2 semaphore(%arg9 : memref<!tpu.dma_semaphore, #tpu.memory_space<semaphore_mem>>) src(%605 : memref<1x128xf32, #tpu.memory_space<any>>) dst(%607 : memref<1x128xf32, #tpu.memory_space<vmem>>)
    %c5_i32_581 = arith.constant 5 : i32
    %c0_i32_582 = arith.constant 0 : i32
    %608 = tpu.memref_slice %arg2[%375, %c0_i32_582] : memref<100x128xf32, #tpu.memory_space<any>> -> memref<1x128xf32, #tpu.memory_space<any>>
    %c6_i32_583 = arith.constant 6 : i32
    %c0_i32_584 = arith.constant 0 : i32
    %609 = tpu.memref_slice %arg8[%c5_i32_581, %c6_i32_583, %c0_i32_584] : memref<8x8x128xf32, #tpu.memory_space<vmem>> -> memref<1x1x128xf32, #tpu.memory_space<vmem>>
    %610 = tpu.memref_squeeze %609 : memref<1x1x128xf32, #tpu.memory_space<vmem>> -> memref<1x128xf32, #tpu.memory_space<vmem>>
    tpu.wait_dma2 semaphore(%arg9 : memref<!tpu.dma_semaphore, #tpu.memory_space<semaphore_mem>>) src(%608 : memref<1x128xf32, #tpu.memory_space<any>>) dst(%610 : memref<1x128xf32, #tpu.memory_space<vmem>>)
    %c6_i32_585 = arith.constant 6 : i32
    %c0_i32_586 = arith.constant 0 : i32
    %611 = tpu.memref_slice %arg2[%382, %c0_i32_586] : memref<100x128xf32, #tpu.memory_space<any>> -> memref<1x128xf32, #tpu.memory_space<any>>
    %c6_i32_587 = arith.constant 6 : i32
    %c0_i32_588 = arith.constant 0 : i32
    %612 = tpu.memref_slice %arg8[%c6_i32_585, %c6_i32_587, %c0_i32_588] : memref<8x8x128xf32, #tpu.memory_space<vmem>> -> memref<1x1x128xf32, #tpu.memory_space<vmem>>
    %613 = tpu.memref_squeeze %612 : memref<1x1x128xf32, #tpu.memory_space<vmem>> -> memref<1x128xf32, #tpu.memory_space<vmem>>
    tpu.wait_dma2 semaphore(%arg9 : memref<!tpu.dma_semaphore, #tpu.memory_space<semaphore_mem>>) src(%611 : memref<1x128xf32, #tpu.memory_space<any>>) dst(%613 : memref<1x128xf32, #tpu.memory_space<vmem>>)
    %c7_i32_589 = arith.constant 7 : i32
    %c0_i32_590 = arith.constant 0 : i32
    %614 = tpu.memref_slice %arg2[%389, %c0_i32_590] : memref<100x128xf32, #tpu.memory_space<any>> -> memref<1x128xf32, #tpu.memory_space<any>>
    %c6_i32_591 = arith.constant 6 : i32
    %c0_i32_592 = arith.constant 0 : i32
    %615 = tpu.memref_slice %arg8[%c7_i32_589, %c6_i32_591, %c0_i32_592] : memref<8x8x128xf32, #tpu.memory_space<vmem>> -> memref<1x1x128xf32, #tpu.memory_space<vmem>>
    %616 = tpu.memref_squeeze %615 : memref<1x1x128xf32, #tpu.memory_space<vmem>> -> memref<1x128xf32, #tpu.memory_space<vmem>>
    tpu.wait_dma2 semaphore(%arg9 : memref<!tpu.dma_semaphore, #tpu.memory_space<semaphore_mem>>) src(%614 : memref<1x128xf32, #tpu.memory_space<any>>) dst(%616 : memref<1x128xf32, #tpu.memory_space<vmem>>)
    %c0_i32_593 = arith.constant 0 : i32
    %c0_i32_594 = arith.constant 0 : i32
    %617 = tpu.memref_slice %arg2[%396, %c0_i32_594] : memref<100x128xf32, #tpu.memory_space<any>> -> memref<1x128xf32, #tpu.memory_space<any>>
    %c7_i32_595 = arith.constant 7 : i32
    %c0_i32_596 = arith.constant 0 : i32
    %618 = tpu.memref_slice %arg8[%c0_i32_593, %c7_i32_595, %c0_i32_596] : memref<8x8x128xf32, #tpu.memory_space<vmem>> -> memref<1x1x128xf32, #tpu.memory_space<vmem>>
    %619 = tpu.memref_squeeze %618 : memref<1x1x128xf32, #tpu.memory_space<vmem>> -> memref<1x128xf32, #tpu.memory_space<vmem>>
    tpu.wait_dma2 semaphore(%arg9 : memref<!tpu.dma_semaphore, #tpu.memory_space<semaphore_mem>>) src(%617 : memref<1x128xf32, #tpu.memory_space<any>>) dst(%619 : memref<1x128xf32, #tpu.memory_space<vmem>>)
    %c1_i32_597 = arith.constant 1 : i32
    %c0_i32_598 = arith.constant 0 : i32
    %620 = tpu.memref_slice %arg2[%403, %c0_i32_598] : memref<100x128xf32, #tpu.memory_space<any>> -> memref<1x128xf32, #tpu.memory_space<any>>
    %c7_i32_599 = arith.constant 7 : i32
    %c0_i32_600 = arith.constant 0 : i32
    %621 = tpu.memref_slice %arg8[%c1_i32_597, %c7_i32_599, %c0_i32_600] : memref<8x8x128xf32, #tpu.memory_space<vmem>> -> memref<1x1x128xf32, #tpu.memory_space<vmem>>
    %622 = tpu.memref_squeeze %621 : memref<1x1x128xf32, #tpu.memory_space<vmem>> -> memref<1x128xf32, #tpu.memory_space<vmem>>
    tpu.wait_dma2 semaphore(%arg9 : memref<!tpu.dma_semaphore, #tpu.memory_space<semaphore_mem>>) src(%620 : memref<1x128xf32, #tpu.memory_space<any>>) dst(%622 : memref<1x128xf32, #tpu.memory_space<vmem>>)
    %c2_i32_601 = arith.constant 2 : i32
    %c0_i32_602 = arith.constant 0 : i32
    %623 = tpu.memref_slice %arg2[%410, %c0_i32_602] : memref<100x128xf32, #tpu.memory_space<any>> -> memref<1x128xf32, #tpu.memory_space<any>>
    %c7_i32_603 = arith.constant 7 : i32
    %c0_i32_604 = arith.constant 0 : i32
    %624 = tpu.memref_slice %arg8[%c2_i32_601, %c7_i32_603, %c0_i32_604] : memref<8x8x128xf32, #tpu.memory_space<vmem>> -> memref<1x1x128xf32, #tpu.memory_space<vmem>>
    %625 = tpu.memref_squeeze %624 : memref<1x1x128xf32, #tpu.memory_space<vmem>> -> memref<1x128xf32, #tpu.memory_space<vmem>>
    tpu.wait_dma2 semaphore(%arg9 : memref<!tpu.dma_semaphore, #tpu.memory_space<semaphore_mem>>) src(%623 : memref<1x128xf32, #tpu.memory_space<any>>) dst(%625 : memref<1x128xf32, #tpu.memory_space<vmem>>)
    %c3_i32_605 = arith.constant 3 : i32
    %c0_i32_606 = arith.constant 0 : i32
    %626 = tpu.memref_slice %arg2[%417, %c0_i32_606] : memref<100x128xf32, #tpu.memory_space<any>> -> memref<1x128xf32, #tpu.memory_space<any>>
    %c7_i32_607 = arith.constant 7 : i32
    %c0_i32_608 = arith.constant 0 : i32
    %627 = tpu.memref_slice %arg8[%c3_i32_605, %c7_i32_607, %c0_i32_608] : memref<8x8x128xf32, #tpu.memory_space<vmem>> -> memref<1x1x128xf32, #tpu.memory_space<vmem>>
    %628 = tpu.memref_squeeze %627 : memref<1x1x128xf32, #tpu.memory_space<vmem>> -> memref<1x128xf32, #tpu.memory_space<vmem>>
    tpu.wait_dma2 semaphore(%arg9 : memref<!tpu.dma_semaphore, #tpu.memory_space<semaphore_mem>>) src(%626 : memref<1x128xf32, #tpu.memory_space<any>>) dst(%628 : memref<1x128xf32, #tpu.memory_space<vmem>>)
    %c4_i32_609 = arith.constant 4 : i32
    %c0_i32_610 = arith.constant 0 : i32
    %629 = tpu.memref_slice %arg2[%424, %c0_i32_610] : memref<100x128xf32, #tpu.memory_space<any>> -> memref<1x128xf32, #tpu.memory_space<any>>
    %c7_i32_611 = arith.constant 7 : i32
    %c0_i32_612 = arith.constant 0 : i32
    %630 = tpu.memref_slice %arg8[%c4_i32_609, %c7_i32_611, %c0_i32_612] : memref<8x8x128xf32, #tpu.memory_space<vmem>> -> memref<1x1x128xf32, #tpu.memory_space<vmem>>
    %631 = tpu.memref_squeeze %630 : memref<1x1x128xf32, #tpu.memory_space<vmem>> -> memref<1x128xf32, #tpu.memory_space<vmem>>
    tpu.wait_dma2 semaphore(%arg9 : memref<!tpu.dma_semaphore, #tpu.memory_space<semaphore_mem>>) src(%629 : memref<1x128xf32, #tpu.memory_space<any>>) dst(%631 : memref<1x128xf32, #tpu.memory_space<vmem>>)
    %c5_i32_613 = arith.constant 5 : i32
    %c0_i32_614 = arith.constant 0 : i32
    %632 = tpu.memref_slice %arg2[%431, %c0_i32_614] : memref<100x128xf32, #tpu.memory_space<any>> -> memref<1x128xf32, #tpu.memory_space<any>>
    %c7_i32_615 = arith.constant 7 : i32
    %c0_i32_616 = arith.constant 0 : i32
    %633 = tpu.memref_slice %arg8[%c5_i32_613, %c7_i32_615, %c0_i32_616] : memref<8x8x128xf32, #tpu.memory_space<vmem>> -> memref<1x1x128xf32, #tpu.memory_space<vmem>>
    %634 = tpu.memref_squeeze %633 : memref<1x1x128xf32, #tpu.memory_space<vmem>> -> memref<1x128xf32, #tpu.memory_space<vmem>>
    tpu.wait_dma2 semaphore(%arg9 : memref<!tpu.dma_semaphore, #tpu.memory_space<semaphore_mem>>) src(%632 : memref<1x128xf32, #tpu.memory_space<any>>) dst(%634 : memref<1x128xf32, #tpu.memory_space<vmem>>)
    %c6_i32_617 = arith.constant 6 : i32
    %c0_i32_618 = arith.constant 0 : i32
    %635 = tpu.memref_slice %arg2[%438, %c0_i32_618] : memref<100x128xf32, #tpu.memory_space<any>> -> memref<1x128xf32, #tpu.memory_space<any>>
    %c7_i32_619 = arith.constant 7 : i32
    %c0_i32_620 = arith.constant 0 : i32
    %636 = tpu.memref_slice %arg8[%c6_i32_617, %c7_i32_619, %c0_i32_620] : memref<8x8x128xf32, #tpu.memory_space<vmem>> -> memref<1x1x128xf32, #tpu.memory_space<vmem>>
    %637 = tpu.memref_squeeze %636 : memref<1x1x128xf32, #tpu.memory_space<vmem>> -> memref<1x128xf32, #tpu.memory_space<vmem>>
    tpu.wait_dma2 semaphore(%arg9 : memref<!tpu.dma_semaphore, #tpu.memory_space<semaphore_mem>>) src(%635 : memref<1x128xf32, #tpu.memory_space<any>>) dst(%637 : memref<1x128xf32, #tpu.memory_space<vmem>>)
    %c7_i32_621 = arith.constant 7 : i32
    %c0_i32_622 = arith.constant 0 : i32
    %638 = tpu.memref_slice %arg2[%445, %c0_i32_622] : memref<100x128xf32, #tpu.memory_space<any>> -> memref<1x128xf32, #tpu.memory_space<any>>
    %c7_i32_623 = arith.constant 7 : i32
    %c0_i32_624 = arith.constant 0 : i32
    %639 = tpu.memref_slice %arg8[%c7_i32_621, %c7_i32_623, %c0_i32_624] : memref<8x8x128xf32, #tpu.memory_space<vmem>> -> memref<1x1x128xf32, #tpu.memory_space<vmem>>
    %640 = tpu.memref_squeeze %639 : memref<1x1x128xf32, #tpu.memory_space<vmem>> -> memref<1x128xf32, #tpu.memory_space<vmem>>
    tpu.wait_dma2 semaphore(%arg9 : memref<!tpu.dma_semaphore, #tpu.memory_space<semaphore_mem>>) src(%638 : memref<1x128xf32, #tpu.memory_space<any>>) dst(%640 : memref<1x128xf32, #tpu.memory_space<vmem>>)
    %c0 = arith.constant 0 : index
    %c0_625 = arith.constant 0 : index
    %c0_626 = arith.constant 0 : index
    %641 = vector.load %arg8[%c0, %c0_625, %c0_626] : memref<8x8x128xf32, #tpu.memory_space<vmem>>, vector<8x8x128xf32>
    %cst = arith.constant dense<0.000000e+00> : vector<8x128xf32>
    %642 = vector.multi_reduction <add>, %641, %cst [0] : vector<8x8x128xf32> to vector<8x128xf32>
    %cst_627 = arith.constant 1.250000e-01 : f32
    %643 = vector.broadcast %cst_627 : f32 to vector<8x128xf32>
    %644 = arith.mulf %642, %643 : vector<8x128xf32>
    %c0_628 = arith.constant 0 : index
    %c0_629 = arith.constant 0 : index
    %645 = vector.load %arg3[%c0_628, %c0_629] : memref<128x32xf32, #tpu.memory_space<vmem>>, vector<128x32xf32>
    %cst_630 = arith.constant dense<0.000000e+00> : vector<8x32xf32>
    %646 = tpu.matmul %644, %645, %cst_630 {dimension_numbers = #tpu.dot_dimension_numbers<[1], [0], [0], [1], [0, 0, 1, 1], [], []>} : vector<8x128xf32>, vector<128x32xf32>, vector<8x32xf32> -> vector<8x32xf32>
    %c0_631 = arith.constant 0 : index
    %c0_632 = arith.constant 0 : index
    %647 = vector.load %arg4[%c0_631, %c0_632] : memref<1x32xf32, #tpu.memory_space<vmem>>, vector<1x32xf32>
    %648 = vector.broadcast %647 : vector<1x32xf32> to vector<8x32xf32>
    %649 = arith.addf %646, %648 : vector<8x32xf32>
    %cst_633 = arith.constant 0.000000e+00 : f32
    %650 = vector.broadcast %cst_633 : f32 to vector<8x32xf32>
    %651 = arith.maximumf %649, %650 : vector<8x32xf32>
    %c0_634 = arith.constant 0 : index
    %c0_635 = arith.constant 0 : index
    %652 = vector.load %arg5[%c0_634, %c0_635] : memref<32x128xf32, #tpu.memory_space<vmem>>, vector<32x128xf32>
    %cst_636 = arith.constant dense<0.000000e+00> : vector<8x128xf32>
    %653 = tpu.matmul %651, %652, %cst_636 {dimension_numbers = #tpu.dot_dimension_numbers<[1], [0], [0], [1], [0, 0, 1, 1], [], []>} : vector<8x32xf32>, vector<32x128xf32>, vector<8x128xf32> -> vector<8x128xf32>
    %c0_637 = arith.constant 0 : index
    %c0_638 = arith.constant 0 : index
    %654 = vector.load %arg6[%c0_637, %c0_638] : memref<1x128xf32, #tpu.memory_space<vmem>>, vector<1x128xf32>
    %655 = vector.broadcast %654 : vector<1x128xf32> to vector<8x128xf32>
    %656 = arith.addf %653, %655 : vector<8x128xf32>
    %cst_639 = arith.constant dense<0xFF800000> : vector<8xf32>
    %657 = vector.multi_reduction <maximumf>, %656, %cst_639 [1] : vector<8x128xf32> to vector<8xf32>
    %658 = vector.shape_cast %657 : vector<8xf32> to vector<8x1xf32>
    %659 = vector.broadcast %658 : vector<8x1xf32> to vector<8x128xf32>
    %660 = arith.subf %656, %659 : vector<8x128xf32>
    %661 = math.exp %660 : vector<8x128xf32>
    %cst_640 = arith.constant dense<0.000000e+00> : vector<8xf32>
    %662 = vector.multi_reduction <add>, %661, %cst_640 [1] : vector<8x128xf32> to vector<8xf32>
    %663 = vector.shape_cast %662 : vector<8xf32> to vector<8x1xf32>
    %664 = math.log %663 : vector<8x1xf32>
    %665 = vector.broadcast %664 : vector<8x1xf32> to vector<8x128xf32>
    %666 = arith.subf %660, %665 : vector<8x128xf32>
    %c0_641 = arith.constant 0 : index
    %c0_642 = arith.constant 0 : index
    %667 = vector.load %arg7[%c0_641, %c0_642] : memref<8x128xf32, #tpu.memory_space<vmem>>, vector<8x128xf32>
    tpu.vector_store %arg7[%c0_641, %c0_642], %666 {strides = array<i32>} : memref<8x128xf32, #tpu.memory_space<vmem>>, vector<8x128xf32>,
    return
  }
  func.func @transform_1(%arg0: i32, %arg1: memref<128xi32, #tpu.memory_space<smem>>) -> (i32, i32) {
    %c0_i32 = arith.constant 0 : i32
    %c0_i32_0 = arith.constant 0 : i32
    %c0_i32_1 = arith.constant 0 : i32
    return %c0_i32, %c0_i32_0 : i32, i32
  }
  func.func @transform_2(%arg0: i32, %arg1: memref<128xi32, #tpu.memory_space<smem>>) -> (i32, i32) {
    %c0_i32 = arith.constant 0 : i32
    %c0_i32_0 = arith.constant 0 : i32
    %c0_i32_1 = arith.constant 0 : i32
    return %c0_i32, %c0_i32_0 : i32, i32
  }
  func.func @transform_3(%arg0: i32, %arg1: memref<128xi32, #tpu.memory_space<smem>>) -> (i32, i32) {
    %c0_i32 = arith.constant 0 : i32
    %c0_i32_0 = arith.constant 0 : i32
    %c0_i32_1 = arith.constant 0 : i32
    return %c0_i32, %c0_i32_0 : i32, i32
  }
  func.func @transform_4(%arg0: i32, %arg1: memref<128xi32, #tpu.memory_space<smem>>) -> (i32, i32) {
    %c0_i32 = arith.constant 0 : i32
    %c0_i32_0 = arith.constant 0 : i32
    %c0_i32_1 = arith.constant 0 : i32
    return %c0_i32, %c0_i32_0 : i32, i32
  }
  func.func @transform_5(%arg0: i32, %arg1: memref<128xi32, #tpu.memory_space<smem>>) -> (i32, i32) {
    %c0_i32 = arith.constant 0 : i32
    %c0_i32_0 = arith.constant 0 : i32
    return %arg0, %c0_i32 : i32, i32
  }
}

</mosaic_0001>

<llo_original>
// kernel: tpu_custom_call.1
$region0: #{tpu_custom_call.1}
  #allocation0 [shape = 'u32[]', space=smem, size = 0x4, offset = 0x4, fixed_abs, tag = 'smem constant byte address 0x4 - core index']
  #allocation1 [shape = 'u32[144,128]{1,0:T(1,128)}', space=vmem, size = 0x12000, scoped, tag = 'internal scratch']
  #allocation2 [shape = 'f32[8,8,128]{2,1,0:T(8,128)}', space=vmem, size = 0x8000, scoped, tag = 'scratch operand']
  #allocation3 [shape = 's32[1]{0}', space=sflag, size = 0x4, scoped, tag = 'scratch operand']
  #allocation4 [shape = 's32[1]{0}', space=sflag, size = 0x4, scoped, tag = 'scoped memory for tpu_custom_call.1']
  #allocation5 [shape = 'u8[512]{0}', space=smem, size = 0x200, scoped, tag = 'prefetched SMEM operand 0']
  #allocation8 [shape = 's32[]', space=sflag, size = 0x4, offset = 0, fixed_abs, tag = 'sflag constant byte address 0x0 - dummy sync flag']
  #allocation9 [shape = 's32[]', space=sflag, size = 0x4, offset = 0, fixed_abs, tag = 'sflag constant byte address 0x0 - dummy sync flag']
  #allocation10 [shape = 's32[]', space=sflag, size = 0x4, offset = 0, fixed_abs, tag = 'sflag constant byte address 0x0 - dummy sync flag']
  #allocation11 [shape = 's32[]', space=sflag, size = 0x4, offset = 0, fixed_abs, tag = 'sflag constant byte address 0x0 - dummy sync flag']
  #allocation12 [shape = 's32[]', space=sflag, size = 0x4, offset = 0, fixed_abs, tag = 'sflag constant byte address 0x0 - dummy sync flag']
  #allocation13 [shape = 's32[]', space=sflag, size = 0x4, offset = 0, fixed_abs, tag = 'sflag constant byte address 0x0 - dummy sync flag']
  #allocation14 [shape = 's32[]', space=sflag, size = 0x4, offset = 0, fixed_abs, tag = 'sflag constant byte address 0x0 - dummy sync flag']
  #allocation15 [shape = 's32[]', space=sflag, size = 0x4, offset = 0, fixed_abs, tag = 'sflag constant byte address 0x0 - dummy sync flag']
  #allocation16 [shape = 's32[]', space=sflag, size = 0x4, offset = 0, fixed_abs, tag = 'sflag constant byte address 0x0 - dummy sync flag']
  #allocation17 [shape = 's32[]', space=sflag, size = 0x4, offset = 0, fixed_abs, tag = 'sflag constant byte address 0x0 - dummy sync flag']
  #allocation18 [shape = 's32[]', space=sflag, size = 0x4, offset = 0, fixed_abs, tag = 'sflag constant byte address 0x0 - dummy sync flag']
  #allocation19 [shape = 's32[]', space=sflag, size = 0x4, offset = 0, fixed_abs, tag = 'sflag constant byte address 0x0 - dummy sync flag']
  #allocation20 [shape = 's32[]', space=sflag, size = 0x4, offset = 0, fixed_abs, tag = 'sflag constant byte address 0x0 - dummy sync flag']
  #allocation21 [shape = 's32[]', space=sflag, size = 0x4, offset = 0, fixed_abs, tag = 'sflag constant byte address 0x0 - dummy sync flag']
  #allocation22 [shape = 's32[]', space=sflag, size = 0x4, offset = 0, fixed_abs, tag = 'sflag constant byte address 0x0 - dummy sync flag']
  #allocation23 [shape = 's32[]', space=sflag, size = 0x4, offset = 0, fixed_abs, tag = 'sflag constant byte address 0x0 - dummy sync flag']
  #allocation24 [shape = 's32[]', space=sflag, size = 0x4, offset = 0, fixed_abs, tag = 'sflag constant byte address 0x0 - dummy sync flag']
  #allocation25 [shape = 's32[]', space=sflag, size = 0x4, offset = 0, fixed_abs, tag = 'sflag constant byte address 0x0 - dummy sync flag']
  #allocation26 [shape = 's32[]', space=sflag, size = 0x4, offset = 0, fixed_abs, tag = 'sflag constant byte address 0x0 - dummy sync flag']
  #allocation27 [shape = 's32[]', space=sflag, size = 0x4, offset = 0, fixed_abs, tag = 'sflag constant byte address 0x0 - dummy sync flag']
  #allocation28 [shape = 's32[]', space=sflag, size = 0x4, offset = 0, fixed_abs, tag = 'sflag constant byte address 0x0 - dummy sync flag']
  #allocation29 [shape = 's32[]', space=sflag, size = 0x4, offset = 0, fixed_abs, tag = 'sflag constant byte address 0x0 - dummy sync flag']
  #allocation30 [shape = 's32[]', space=sflag, size = 0x4, offset = 0, fixed_abs, tag = 'sflag constant byte address 0x0 - dummy sync flag']
  #allocation31 [shape = 's32[]', space=sflag, size = 0x4, offset = 0, fixed_abs, tag = 'sflag constant byte address 0x0 - dummy sync flag']
  #allocation32 [shape = 's32[]', space=sflag, size = 0x4, offset = 0, fixed_abs, tag = 'sflag constant byte address 0x0 - dummy sync flag']
  #allocation33 [shape = 's32[]', space=sflag, size = 0x4, offset = 0, fixed_abs, tag = 'sflag constant byte address 0x0 - dummy sync flag']
  #allocation34 [shape = 's32[]', space=sflag, size = 0x4, offset = 0, fixed_abs, tag = 'sflag constant byte address 0x0 - dummy sync flag']
  #allocation35 [shape = 's32[]', space=sflag, size = 0x4, offset = 0, fixed_abs, tag = 'sflag constant byte address 0x0 - dummy sync flag']
  #allocation36 [shape = 's32[]', space=sflag, size = 0x4, offset = 0, fixed_abs, tag = 'sflag constant byte address 0x0 - dummy sync flag']
  #allocation37 [shape = 's32[]', space=sflag, size = 0x4, offset = 0, fixed_abs, tag = 'sflag constant byte address 0x0 - dummy sync flag']
  #allocation38 [shape = 's32[]', space=sflag, size = 0x4, offset = 0, fixed_abs, tag = 'sflag constant byte address 0x0 - dummy sync flag']
  #allocation39 [shape = 's32[]', space=sflag, size = 0x4, offset = 0, fixed_abs, tag = 'sflag constant byte address 0x0 - dummy sync flag']
  #allocation40 [shape = 's32[]', space=sflag, size = 0x4, offset = 0, fixed_abs, tag = 'sflag constant byte address 0x0 - dummy sync flag']
  #allocation41 [shape = 's32[]', space=sflag, size = 0x4, offset = 0, fixed_abs, tag = 'sflag constant byte address 0x0 - dummy sync flag']
  #allocation42 [shape = 's32[]', space=sflag, size = 0x4, offset = 0, fixed_abs, tag = 'sflag constant byte address 0x0 - dummy sync flag']
  #allocation43 [shape = 's32[]', space=sflag, size = 0x4, offset = 0, fixed_abs, tag = 'sflag constant byte address 0x0 - dummy sync flag']
  #allocation44 [shape = 's32[]', space=sflag, size = 0x4, offset = 0, fixed_abs, tag = 'sflag constant byte address 0x0 - dummy sync flag']
  #allocation45 [shape = 's32[]', space=sflag, size = 0x4, offset = 0, fixed_abs, tag = 'sflag constant byte address 0x0 - dummy sync flag']
  #allocation46 [shape = 's32[]', space=sflag, size = 0x4, offset = 0, fixed_abs, tag = 'sflag constant byte address 0x0 - dummy sync flag']
  #allocation47 [shape = 's32[]', space=sflag, size = 0x4, offset = 0, fixed_abs, tag = 'sflag constant byte address 0x0 - dummy sync flag']
  #allocation48 [shape = 's32[]', space=sflag, size = 0x4, offset = 0, fixed_abs, tag = 'sflag constant byte address 0x0 - dummy sync flag']
  #allocation49 [shape = 's32[]', space=sflag, size = 0x4, offset = 0, fixed_abs, tag = 'sflag constant byte address 0x0 - dummy sync flag']
  #allocation50 [shape = 's32[]', space=sflag, size = 0x4, offset = 0, fixed_abs, tag = 'sflag constant byte address 0x0 - dummy sync flag']
  #allocation51 [shape = 's32[]', space=sflag, size = 0x4, offset = 0, fixed_abs, tag = 'sflag constant byte address 0x0 - dummy sync flag']
  #allocation52 [shape = 's32[]', space=sflag, size = 0x4, offset = 0, fixed_abs, tag = 'sflag constant byte address 0x0 - dummy sync flag']
  #allocation53 [shape = 's32[]', space=sflag, size = 0x4, offset = 0, fixed_abs, tag = 'sflag constant byte address 0x0 - dummy sync flag']
  #allocation54 [shape = 's32[]', space=sflag, size = 0x4, offset = 0, fixed_abs, tag = 'sflag constant byte address 0x0 - dummy sync flag']
  #allocation55 [shape = 's32[]', space=sflag, size = 0x4, offset = 0, fixed_abs, tag = 'sflag constant byte address 0x0 - dummy sync flag']
  #allocation56 [shape = 's32[]', space=sflag, size = 0x4, offset = 0, fixed_abs, tag = 'sflag constant byte address 0x0 - dummy sync flag']
  #allocation57 [shape = 's32[]', space=sflag, size = 0x4, offset = 0, fixed_abs, tag = 'sflag constant byte address 0x0 - dummy sync flag']
  #allocation58 [shape = 's32[]', space=sflag, size = 0x4, offset = 0, fixed_abs, tag = 'sflag constant byte address 0x0 - dummy sync flag']
  #allocation59 [shape = 's32[]', space=sflag, size = 0x4, offset = 0, fixed_abs, tag = 'sflag constant byte address 0x0 - dummy sync flag']
  #allocation60 [shape = 's32[]', space=sflag, size = 0x4, offset = 0, fixed_abs, tag = 'sflag constant byte address 0x0 - dummy sync flag']
  #allocation61 [shape = 's32[]', space=sflag, size = 0x4, offset = 0, fixed_abs, tag = 'sflag constant byte address 0x0 - dummy sync flag']
  #allocation62 [shape = 's32[]', space=sflag, size = 0x4, offset = 0, fixed_abs, tag = 'sflag constant byte address 0x0 - dummy sync flag']
  #allocation63 [shape = 's32[]', space=sflag, size = 0x4, offset = 0, fixed_abs, tag = 'sflag constant byte address 0x0 - dummy sync flag']
  #allocation64 [shape = 's32[]', space=sflag, size = 0x4, offset = 0, fixed_abs, tag = 'sflag constant byte address 0x0 - dummy sync flag']
  #allocation65 [shape = 's32[]', space=sflag, size = 0x4, offset = 0, fixed_abs, tag = 'sflag constant byte address 0x0 - dummy sync flag']
  #allocation66 [shape = 's32[]', space=sflag, size = 0x4, offset = 0, fixed_abs, tag = 'sflag constant byte address 0x0 - dummy sync flag']
  #allocation67 [shape = 's32[]', space=sflag, size = 0x4, offset = 0, fixed_abs, tag = 'sflag constant byte address 0x0 - dummy sync flag']
  #allocation68 [shape = 's32[]', space=sflag, size = 0x4, offset = 0, fixed_abs, tag = 'sflag constant byte address 0x0 - dummy sync flag']
  #allocation69 [shape = 's32[]', space=sflag, size = 0x4, offset = 0, fixed_abs, tag = 'sflag constant byte address 0x0 - dummy sync flag']
  #allocation70 [shape = 's32[]', space=sflag, size = 0x4, offset = 0, fixed_abs, tag = 'sflag constant byte address 0x0 - dummy sync flag']
  #allocation71 [shape = 's32[]', space=sflag, size = 0x4, offset = 0, fixed_abs, tag = 'sflag constant byte address 0x0 - dummy sync flag']
  %s0 = inlined_call_operand.vmem [shape: s32[128], index: 0, kind: input, shape index: {}]
  %s1 = inlined_call_operand.vmem [shape: f32[100,128], index: 1, kind: input, shape index: {}]
  %s2 = inlined_call_operand.vmem [shape: f32[128,32], index: 2, kind: input, shape index: {}]
  %s3 = inlined_call_operand.vmem [shape: f32[1,32], index: 3, kind: input, shape index: {}]
  %s4 = inlined_call_operand.vmem [shape: f32[32,128], index: 4, kind: input, shape index: {}]
  %s5 = inlined_call_operand.vmem [shape: f32[1,128], index: 5, kind: input, shape index: {}]
  %s6 = inlined_call_operand.hbm [shape: f32[16,128], index: 6, kind: output, shape index: {}]
  %s7 = sld [smem:[#allocation0]]
  $region1969: #{tpu_custom_call.1} parent=0
    _
  %s9 = ssub.s32 1, %s7
  %s10 = scalar_select 0, %s9, %s7
  %s11 = sshll.u32 %s0, 4
  %s12 = int_to_ptr.vmem [resolvable:$true] %s11
  %14 = dma.vmem_to_smem %s12, 16, [#allocation5], [#allocation4]
  %15 = dma.done [#allocation4], 16
  %16 = sfence
  $region1: #{tpu_custom_call.1} parent=0
    #allocation6 [shape = 'u8[8192]{0}', space=vmem, size = 0x2000, scoped, tag = 'output window, operand 0']
    #allocation7 [shape = 's32[2]{0}', space=sflag, size = 0x8, scoped, tag = 'scoped memory for tpu_custom_call.1']
    %17 = vsyncpa [#allocation7], 0
    %s18 = scalar_lea.sflag [#allocation7], 1
    %19 = vsyncpa %s18, 0
    loop: start=0, step=1, limit=4
    $region2: #{tpu_custom_call.1} parent=1 // loop_pre_header
      _
    $region3: #{tpu_custom_call.1} parent=1 // loop_header
      %s21 = sphi 0, %s25
      %p22 = scmp.ge.s32.totalorder %s21, 4
      %s29 = sphi 0, %s29
      %s31 = sphi 0, %s29
      %s32 = sphi 0, %s31
      %s46 = sphi 0, %s32
      %s50 = sphi 0, %s50
      %s52 = sphi 0, %s50
      %s53 = sphi 0, %s52
      %s67 = sphi 0, %s53
      %s71 = sphi 0, %s71
      %s73 = sphi 0, %s71
      %s74 = sphi 0, %s73
      %s88 = sphi 0, %s74
      %s92 = sphi 0, %s92
      %s94 = sphi 0, %s92
      %s95 = sphi 0, %s94
      %s109 = sphi 0, %s95
      %s115 = sphi 0, %s117
      %s118 = sphi 0, %s115
      %s119 = sphi 0, %s118
      %s135 = sphi 0, %s119
    $region4: #{tpu_custom_call.1} parent=1 // loop_header_branch
      %24 = sbr.rel (%p22) target = $region8
    $region5: #{tpu_custom_call.1} parent=1 // loop_body
      %s26 = ssub.s32 %s21, 1
      %s27 = ssub.s32 %s21, 2
      %s28 = sadd.s32 %s21, 1
      %s30 = sadd.s32 %s29, 1
      %p33 = scmp.eq.s32.totalorder %s21, 1
      %p34 = scmp.ne.s32.totalorder %s29, %s31
      %p35 = scmp.eq.s32.totalorder %s21, 0
      %p36 = por %p34, %p35
      %p37 = scmp.ne.s32.totalorder %s29, %s31
      %p38 = scmp.eq.s32.totalorder %s26, 1
      %p39 = por %p37, %p38
      %p40 = scmp.ne.s32.totalorder %s31, %s32
      %p41 = scmp.eq.s32.totalorder %s26, 0
      %p42 = por %p40, %p41
      %p43 = scmp.ne.s32.totalorder %s31, %s32
      %p44 = scmp.eq.s32.totalorder %s27, 1
      %p45 = por %p43, %p44
      %p47 = scmp.ne.s32.totalorder %s32, %s46
      %p48 = scmp.eq.s32.totalorder %s27, 0
      %p49 = por %p47, %p48
      %s51 = sadd.s32 %s50, 1
      %p54 = scmp.eq.s32.totalorder %s21, 1
      %p55 = scmp.ne.s32.totalorder %s50, %s52
      %p56 = scmp.eq.s32.totalorder %s21, 0
      %p57 = por %p55, %p56
      %p58 = scmp.ne.s32.totalorder %s50, %s52
      %p59 = scmp.eq.s32.totalorder %s26, 1
      %p60 = por %p58, %p59
      %p61 = scmp.ne.s32.totalorder %s52, %s53
      %p62 = scmp.eq.s32.totalorder %s26, 0
      %p63 = por %p61, %p62
      %p64 = scmp.ne.s32.totalorder %s52, %s53
      %p65 = scmp.eq.s32.totalorder %s27, 1
      %p66 = por %p64, %p65
      %p68 = scmp.ne.s32.totalorder %s53, %s67
      %p69 = scmp.eq.s32.totalorder %s27, 0
      %p70 = por %p68, %p69
      %s72 = sadd.s32 %s71, 1
      %p75 = scmp.eq.s32.totalorder %s21, 1
      %p76 = scmp.ne.s32.totalorder %s71, %s73
      %p77 = scmp.eq.s32.totalorder %s21, 0
      %p78 = por %p76, %p77
      %p79 = scmp.ne.s32.totalorder %s71, %s73
      %p80 = scmp.eq.s32.totalorder %s26, 1
      %p81 = por %p79, %p80
      %p82 = scmp.ne.s32.totalorder %s73, %s74
      %p83 = scmp.eq.s32.totalorder %s26, 0
      %p84 = por %p82, %p83
      %p85 = scmp.ne.s32.totalorder %s73, %s74
      %p86 = scmp.eq.s32.totalorder %s27, 1
      %p87 = por %p85, %p86
      %p89 = scmp.ne.s32.totalorder %s74, %s88
      %p90 = scmp.eq.s32.totalorder %s27, 0
      %p91 = por %p89, %p90
      %s93 = sadd.s32 %s92, 1
      %p96 = scmp.eq.s32.totalorder %s21, 1
      %p97 = scmp.ne.s32.totalorder %s92, %s94
      %p98 = scmp.eq.s32.totalorder %s21, 0
      %p99 = por %p97, %p98
      %p100 = scmp.ne.s32.totalorder %s92, %s94
      %p101 = scmp.eq.s32.totalorder %s26, 1
      %p102 = por %p100, %p101
      %p103 = scmp.ne.s32.totalorder %s94, %s95
      %p104 = scmp.eq.s32.totalorder %s26, 0
      %p105 = por %p103, %p104
      %p106 = scmp.ne.s32.totalorder %s94, %s95
      %p107 = scmp.eq.s32.totalorder %s27, 1
      %p108 = por %p106, %p107
      %p110 = scmp.ne.s32.totalorder %s95, %s109
      %p111 = scmp.eq.s32.totalorder %s27, 0
      %p112 = por %p110, %p111
      %s113 = ssub.s32 %s21, %s28
      %p114 = scmp.eq.s32.totalorder %s113, 0
      %s116 = sadd.s32 %s115, 1
      %s117 = scalar_select %p114, %s115, %s116
      %p120 = pneg %p114
      %p121 = scmp.eq.s32.totalorder %s21, 1
      %p122 = por %p120, %p121
      %p123 = scmp.ne.s32.totalorder %s115, %s118
      %p124 = scmp.eq.s32.totalorder %s21, 0
      %p125 = por %p123, %p124
      %p126 = scmp.ne.s32.totalorder %s115, %s118
      %p127 = scmp.eq.s32.totalorder %s26, 1
      %p128 = por %p126, %p127
      %p129 = scmp.ne.s32.totalorder %s118, %s119
      %p130 = scmp.eq.s32.totalorder %s26, 0
      %p131 = por %p129, %p130
      %p132 = scmp.ne.s32.totalorder %s118, %s119
      %p133 = scmp.eq.s32.totalorder %s27, 1
      %p134 = por %p132, %p133
      %p136 = scmp.ne.s32.totalorder %s119, %s135
      %p137 = scmp.eq.s32.totalorder %s27, 0
      %p138 = por %p136, %p137
      %p139 = scmp.le.s32.totalorder 1, %s21
      %p140 = scmp.lt.s32.totalorder %s21, 3
      %p141 = pnand %p139, %p140
      %p142 = pneg %p141
      // Predicated region
      $region9: #{tpu_custom_call.1} parent=5 // pred_check
        _
      $region10: #{tpu_custom_call.1} parent=5 // pred_check_branch
        %144 = sbr.rel (%p141) target = $region12
      $region11: #{tpu_custom_call.1} parent=5 // pred_region
        %s145 = ssub.s32 %s21, 1
        // Predicated region
        $region13: #{tpu_custom_call.1} parent=11 // pred_check
          %p146 = pneg %p42
        $region14: #{tpu_custom_call.1} parent=11 // pred_check_branch
          %148 = sbr.rel (%p146) target = $region16
        $region15: #{tpu_custom_call.1} parent=11 // pred_region
          _
        $region16: #{tpu_custom_call.1} parent=11 // pred_fallthru
          _
        // Predicated region
        $region17: #{tpu_custom_call.1} parent=11 // pred_check
          %p149 = pneg %p63
        $region18: #{tpu_custom_call.1} parent=11 // pred_check_branch
          %151 = sbr.rel (%p149) target = $region20
        $region19: #{tpu_custom_call.1} parent=11 // pred_region
          _
        $region20: #{tpu_custom_call.1} parent=11 // pred_fallthru
          _
        // Predicated region
        $region21: #{tpu_custom_call.1} parent=11 // pred_check
          %p152 = pneg %p84
        $region22: #{tpu_custom_call.1} parent=11 // pred_check_branch
          %154 = sbr.rel (%p152) target = $region24
        $region23: #{tpu_custom_call.1} parent=11 // pred_region
          _
        $region24: #{tpu_custom_call.1} parent=11 // pred_fallthru
          _
        // Predicated region
        $region25: #{tpu_custom_call.1} parent=11 // pred_check
          %p155 = pneg %p105
        $region26: #{tpu_custom_call.1} parent=11 // pred_check_branch
          %157 = sbr.rel (%p155) target = $region28
        $region27: #{tpu_custom_call.1} parent=11 // pred_region
          _
        $region28: #{tpu_custom_call.1} parent=11 // pred_fallthru
          _
      $region12: #{tpu_custom_call.1} parent=5 // pred_fallthru
        _
      %p158 = scmp.lt.s32.totalorder %s21, 2
      // Predicated region
      $region29: #{tpu_custom_call.1} parent=5 // pred_check
        %p159 = pneg %p158
      $region30: #{tpu_custom_call.1} parent=5 // pred_check_branch
        %161 = sbr.rel (%p159) target = $region32
      $region31: #{tpu_custom_call.1} parent=5 // pred_region
        _
      $region32: #{tpu_custom_call.1} parent=5 // pred_fallthru
        _
      %p162 = scmp.le.s32.totalorder 1, %s21
      %p163 = scmp.lt.s32.totalorder %s21, 3
      %p164 = pnand %p162, %p163
      %p165 = pneg %p164
      // Predicated region
      $region33: #{tpu_custom_call.1} parent=5 // pred_check
        _
      $region34: #{tpu_custom_call.1} parent=5 // pred_check_branch
        %167 = sbr.rel (%p164) target = $region36
      $region35: #{tpu_custom_call.1} parent=5 // pred_region
        %s168 = ssub.s32 %s21, 1
        %p169 = pneg %p42
        %p170 = pneg %p39
        %p171 = pneg %p63
        %p172 = pneg %p60
        %p173 = pneg %p84
        %p174 = pneg %p81
        %p175 = pneg %p105
        %p176 = pneg %p102
        %p177 = pneg %p131
        %p178 = pneg %p128
        %s179 = sand.u32 %s118, 1
        %s180 = scalar_lea.sflag [#allocation7], %s179
        %s181 = sand.u32 %s118, 1
        %s182 = smul.addr %s181, 8
        %s183 = scalar_lea.vmem [#allocation6], %s182
        %s184 = smul.u32 %s26, 64
        %s185 = sld [smem:[#allocation5 + %s184]]
        %s186 = scalar_lea.vmem %s1, %s185
        %p188 = scmp.lt.u32.totalorder 1, 8
        %p189 = pneg %p188
        // Predicated region
        $region37: #{tpu_custom_call.1} parent=35 // pred_check
          _
        $region38: #{tpu_custom_call.1} parent=35 // pred_check_branch
          %191 = sbr.rel (%p188) target = $region40
        $region39: #{tpu_custom_call.1} parent=35 // pred_region
          %s206 = sand.u32 1, 7
          %p207 = scmp.eq.s32.totalorder %s206, 0
          %p208 = pneg %p207
          // Predicated region
          $region52: #{tpu_custom_call.1} parent=39 // pred_check
            _
          $region53: #{tpu_custom_call.1} parent=39 // pred_check_branch
            %210 = sbr.rel (%p207) target = $region55
          $region54: #{tpu_custom_call.1} parent=39 // pred_region
            %s211 = sand.u32 1, 7
            %s212 = ssub.s32 1, %s211
            %s213 = scalar_lea.vmem %s186, %s212
            %s214 = ssub.s32 1, %s211
            %s215 = scalar_lea.vmem [#allocation2], %s214
            %s216 = sshllo.u32 0, %s211
            loop: start=0, step=1, limit=1
            $region56: #{tpu_custom_call.1} parent=54 // loop_pre_header
              _
            $region57: #{tpu_custom_call.1} parent=54 // loop_header
              %s218 = sphi 0, %s222
              %p219 = scmp.ge.s32.totalorder %s218, 1
              %s223 = sphi %s213, %s213
              %s224 = sphi %s215, %s215
            $region58: #{tpu_custom_call.1} parent=54 // loop_header_branch
              %221 = sbr.rel (%p219) target = $region62
            $region59: #{tpu_custom_call.1} parent=54 // loop_body
              %v225 = vld [vmem:[%s223] sm:%s216]
              %226 = vst [vmem:[%s224] sm:%s216] %v225
            $region60: #{tpu_custom_call.1} parent=54 // loop_footer
              %s222 = sadd.s32 1, %s218
            $region61: #{tpu_custom_call.1} parent=54 // loop_footer_branch
              %217 = sbr.rel target = $region57
            $region62: #{tpu_custom_call.1} parent=54 // loop_exit
              _
          $region55: #{tpu_custom_call.1} parent=39 // pred_fallthru
            _
        $region40: #{tpu_custom_call.1} parent=35 // pred_fallthru
          _
        // Predicated region
        $region41: #{tpu_custom_call.1} parent=35 // pred_check
          %p192 = pneg %p188
        $region42: #{tpu_custom_call.1} parent=35 // pred_check_branch
          %194 = sbr.rel (%p192) target = $region44
        $region43: #{tpu_custom_call.1} parent=35 // pred_region
          %s195 = sshllo.u32 0, 1
          loop: start=0, step=1, limit=1
          $region45: #{tpu_custom_call.1} parent=43 // loop_pre_header
            _
          $region46: #{tpu_custom_call.1} parent=43 // loop_header
            %s197 = sphi 0, %s201
            %p198 = scmp.ge.s32.totalorder %s197, 1
            %s202 = sphi %s186, %s186
            %s203 = sphi [#allocation2], [#allocation2]
          $region47: #{tpu_custom_call.1} parent=43 // loop_header_branch
            %200 = sbr.rel (%p198) target = $region51
          $region48: #{tpu_custom_call.1} parent=43 // loop_body
            %v204 = vld [vmem:[%s202] sm:%s195]
            %205 = vst [vmem:[%s203] sm:%s195] %v204
          $region49: #{tpu_custom_call.1} parent=43 // loop_footer
            %s201 = sadd.s32 1, %s197
          $region50: #{tpu_custom_call.1} parent=43 // loop_footer_branch
            %196 = sbr.rel target = $region46
          $region51: #{tpu_custom_call.1} parent=43 // loop_exit
            _
        $region44: #{tpu_custom_call.1} parent=35 // pred_fallthru
          _
        // Predicated region
        $region63: #{tpu_custom_call.1} parent=35 // pred_check
          _
        $region64: #{tpu_custom_call.1} parent=35 // pred_check_branch
          %229 = sbr.rel (0) target = $region66
        $region65: #{tpu_custom_call.1} parent=35 // pred_region
          %230 = vsyncadd [#allocation3], 16
        $region66: #{tpu_custom_call.1} parent=35 // pred_fallthru
          _
        %s231 = sadd.s32 %s184, 1
        %s232 = sld [smem:[#allocation5 + %s231]]
        %s233 = scalar_lea.vmem %s1, %s232
        %s234 = scalar_lea.vmem [#allocation2], 8
        %p236 = scmp.lt.u32.totalorder 1, 8
        %p237 = pneg %p236
        // Predicated region
        $region67: #{tpu_custom_call.1} parent=35 // pred_check
          _
        $region68: #{tpu_custom_call.1} parent=35 // pred_check_branch
          %239 = sbr.rel (%p236) target = $region70
        $region69: #{tpu_custom_call.1} parent=35 // pred_region
          %s254 = sand.u32 1, 7
          %p255 = scmp.eq.s32.totalorder %s254, 0
          %p256 = pneg %p255
          // Predicated region
          $region82: #{tpu_custom_call.1} parent=69 // pred_check
            _
          $region83: #{tpu_custom_call.1} parent=69 // pred_check_branch
            %258 = sbr.rel (%p255) target = $region85
          $region84: #{tpu_custom_call.1} parent=69 // pred_region
            %s259 = sand.u32 1, 7
            %s260 = ssub.s32 1, %s259
            %s261 = scalar_lea.vmem %s233, %s260
            %s262 = ssub.s32 1, %s259
            %s263 = scalar_lea.vmem %s234, %s262 [#allocation2]
            %s264 = sshllo.u32 0, %s259
            loop: start=0, step=1, limit=1
            $region86: #{tpu_custom_call.1} parent=84 // loop_pre_header
              _
            $region87: #{tpu_custom_call.1} parent=84 // loop_header
              %s266 = sphi 0, %s270
              %p267 = scmp.ge.s32.totalorder %s266, 1
              %s271 = sphi %s261, %s261
              %s272 = sphi %s263, %s263
            $region88: #{tpu_custom_call.1} parent=84 // loop_header_branch
              %269 = sbr.rel (%p267) target = $region92
            $region89: #{tpu_custom_call.1} parent=84 // loop_body
              %v273 = vld [vmem:[%s271] sm:%s264]
              %274 = vst [vmem:[%s272] sm:%s264] %v273
            $region90: #{tpu_custom_call.1} parent=84 // loop_footer
              %s270 = sadd.s32 1, %s266
            $region91: #{tpu_custom_call.1} parent=84 // loop_footer_branch
              %265 = sbr.rel target = $region87
            $region92: #{tpu_custom_call.1} parent=84 // loop_exit
              _
          $region85: #{tpu_custom_call.1} parent=69 // pred_fallthru
            _
        $region70: #{tpu_custom_call.1} parent=35 // pred_fallthru
          _
        // Predicated region
        $region71: #{tpu_custom_call.1} parent=35 // pred_check
          %p240 = pneg %p236
        $region72: #{tpu_custom_call.1} parent=35 // pred_check_branch
          %242 = sbr.rel (%p240) target = $region74
        $region73: #{tpu_custom_call.1} parent=35 // pred_region
          %s243 = sshllo.u32 0, 1
          loop: start=0, step=1, limit=1
          $region75: #{tpu_custom_call.1} parent=73 // loop_pre_header
            _
          $region76: #{tpu_custom_call.1} parent=73 // loop_header
            %s245 = sphi 0, %s249
            %p246 = scmp.ge.s32.totalorder %s245, 1
            %s250 = sphi %s233, %s233
            %s251 = sphi %s234, %s234
          $region77: #{tpu_custom_call.1} parent=73 // loop_header_branch
            %248 = sbr.rel (%p246) target = $region81
          $region78: #{tpu_custom_call.1} parent=73 // loop_body
            %v252 = vld [vmem:[%s250] sm:%s243]
            %253 = vst [vmem:[%s251] sm:%s243] %v252
          $region79: #{tpu_custom_call.1} parent=73 // loop_footer
            %s249 = sadd.s32 1, %s245
          $region80: #{tpu_custom_call.1} parent=73 // loop_footer_branch
            %244 = sbr.rel target = $region76
          $region81: #{tpu_custom_call.1} parent=73 // loop_exit
            _
        $region74: #{tpu_custom_call.1} parent=35 // pred_fallthru
          _
        // Predicated region
        $region93: #{tpu_custom_call.1} parent=35 // pred_check
          _
        $region94: #{tpu_custom_call.1} parent=35 // pred_check_branch
          %277 = sbr.rel (0) target = $region96
        $region95: #{tpu_custom_call.1} parent=35 // pred_region
          %278 = vsyncadd [#allocation3], 16
        $region96: #{tpu_custom_call.1} parent=35 // pred_fallthru
          _
        %s279 = sadd.s32 %s184, 2
        %s280 = sld [smem:[#allocation5 + %s279]]
        %s281 = scalar_lea.vmem %s1, %s280
        %s282 = scalar_lea.vmem [#allocation2], 16
        %p284 = scmp.lt.u32.totalorder 1, 8
        %p285 = pneg %p284
        // Predicated region
        $region97: #{tpu_custom_call.1} parent=35 // pred_check
          _
        $region98: #{tpu_custom_call.1} parent=35 // pred_check_branch
          %287 = sbr.rel (%p284) target = $region100
        $region99: #{tpu_custom_call.1} parent=35 // pred_region
          %s302 = sand.u32 1, 7
          %p303 = scmp.eq.s32.totalorder %s302, 0
          %p304 = pneg %p303
          // Predicated region
          $region112: #{tpu_custom_call.1} parent=99 // pred_check
            _
          $region113: #{tpu_custom_call.1} parent=99 // pred_check_branch
            %306 = sbr.rel (%p303) target = $region115
          $region114: #{tpu_custom_call.1} parent=99 // pred_region
            %s307 = sand.u32 1, 7
            %s308 = ssub.s32 1, %s307
            %s309 = scalar_lea.vmem %s281, %s308
            %s310 = ssub.s32 1, %s307
            %s311 = scalar_lea.vmem %s282, %s310 [#allocation2]
            %s312 = sshllo.u32 0, %s307
            loop: start=0, step=1, limit=1
            $region116: #{tpu_custom_call.1} parent=114 // loop_pre_header
              _
            $region117: #{tpu_custom_call.1} parent=114 // loop_header
              %s314 = sphi 0, %s318
              %p315 = scmp.ge.s32.totalorder %s314, 1
              %s319 = sphi %s309, %s309
              %s320 = sphi %s311, %s311
            $region118: #{tpu_custom_call.1} parent=114 // loop_header_branch
              %317 = sbr.rel (%p315) target = $region122
            $region119: #{tpu_custom_call.1} parent=114 // loop_body
              %v321 = vld [vmem:[%s319] sm:%s312]
              %322 = vst [vmem:[%s320] sm:%s312] %v321
            $region120: #{tpu_custom_call.1} parent=114 // loop_footer
              %s318 = sadd.s32 1, %s314
            $region121: #{tpu_custom_call.1} parent=114 // loop_footer_branch
              %313 = sbr.rel target = $region117
            $region122: #{tpu_custom_call.1} parent=114 // loop_exit
              _
          $region115: #{tpu_custom_call.1} parent=99 // pred_fallthru
            _
        $region100: #{tpu_custom_call.1} parent=35 // pred_fallthru
          _
        // Predicated region
        $region101: #{tpu_custom_call.1} parent=35 // pred_check
          %p288 = pneg %p284
        $region102: #{tpu_custom_call.1} parent=35 // pred_check_branch
          %290 = sbr.rel (%p288) target = $region104
        $region103: #{tpu_custom_call.1} parent=35 // pred_region
          %s291 = sshllo.u32 0, 1
          loop: start=0, step=1, limit=1
          $region105: #{tpu_custom_call.1} parent=103 // loop_pre_header
            _
          $region106: #{tpu_custom_call.1} parent=103 // loop_header
            %s293 = sphi 0, %s297
            %p294 = scmp.ge.s32.totalorder %s293, 1
            %s298 = sphi %s281, %s281
            %s299 = sphi %s282, %s282
          $region107: #{tpu_custom_call.1} parent=103 // loop_header_branch
            %296 = sbr.rel (%p294) target = $region111
          $region108: #{tpu_custom_call.1} parent=103 // loop_body
            %v300 = vld [vmem:[%s298] sm:%s291]
            %301 = vst [vmem:[%s299] sm:%s291] %v300
          $region109: #{tpu_custom_call.1} parent=103 // loop_footer
            %s297 = sadd.s32 1, %s293
          $region110: #{tpu_custom_call.1} parent=103 // loop_footer_branch
            %292 = sbr.rel target = $region106
          $region111: #{tpu_custom_call.1} parent=103 // loop_exit
            _
        $region104: #{tpu_custom_call.1} parent=35 // pred_fallthru
          _
        // Predicated region
        $region123: #{tpu_custom_call.1} parent=35 // pred_check
          _
        $region124: #{tpu_custom_call.1} parent=35 // pred_check_branch
          %325 = sbr.rel (0) target = $region126
        $region125: #{tpu_custom_call.1} parent=35 // pred_region
          %326 = vsyncadd [#allocation3], 16
        $region126: #{tpu_custom_call.1} parent=35 // pred_fallthru
          _
        %s327 = sadd.s32 %s184, 3
        %s328 = sld [smem:[#allocation5 + %s327]]
        %s329 = scalar_lea.vmem %s1, %s328
        %s330 = scalar_lea.vmem [#allocation2], 24
        %p332 = scmp.lt.u32.totalorder 1, 8
        %p333 = pneg %p332
        // Predicated region
        $region127: #{tpu_custom_call.1} parent=35 // pred_check
          _
        $region128: #{tpu_custom_call.1} parent=35 // pred_check_branch
          %335 = sbr.rel (%p332) target = $region130
        $region129: #{tpu_custom_call.1} parent=35 // pred_region
          %s350 = sand.u32 1, 7
          %p351 = scmp.eq.s32.totalorder %s350, 0
          %p352 = pneg %p351
          // Predicated region
          $region142: #{tpu_custom_call.1} parent=129 // pred_check
            _
          $region143: #{tpu_custom_call.1} parent=129 // pred_check_branch
            %354 = sbr.rel (%p351) target = $region145
          $region144: #{tpu_custom_call.1} parent=129 // pred_region
            %s355 = sand.u32 1, 7
            %s356 = ssub.s32 1, %s355
            %s357 = scalar_lea.vmem %s329, %s356
            %s358 = ssub.s32 1, %s355
            %s359 = scalar_lea.vmem %s330, %s358 [#allocation2]
            %s360 = sshllo.u32 0, %s355
            loop: start=0, step=1, limit=1
            $region146: #{tpu_custom_call.1} parent=144 // loop_pre_header
              _
            $region147: #{tpu_custom_call.1} parent=144 // loop_header
              %s362 = sphi 0, %s366
              %p363 = scmp.ge.s32.totalorder %s362, 1
              %s367 = sphi %s357, %s357
              %s368 = sphi %s359, %s359
            $region148: #{tpu_custom_call.1} parent=144 // loop_header_branch
              %365 = sbr.rel (%p363) target = $region152
            $region149: #{tpu_custom_call.1} parent=144 // loop_body
              %v369 = vld [vmem:[%s367] sm:%s360]
              %370 = vst [vmem:[%s368] sm:%s360] %v369
            $region150: #{tpu_custom_call.1} parent=144 // loop_footer
              %s366 = sadd.s32 1, %s362
            $region151: #{tpu_custom_call.1} parent=144 // loop_footer_branch
              %361 = sbr.rel target = $region147
            $region152: #{tpu_custom_call.1} parent=144 // loop_exit
              _
          $region145: #{tpu_custom_call.1} parent=129 // pred_fallthru
            _
        $region130: #{tpu_custom_call.1} parent=35 // pred_fallthru
          _
        // Predicated region
        $region131: #{tpu_custom_call.1} parent=35 // pred_check
          %p336 = pneg %p332
        $region132: #{tpu_custom_call.1} parent=35 // pred_check_branch
          %338 = sbr.rel (%p336) target = $region134
        $region133: #{tpu_custom_call.1} parent=35 // pred_region
          %s339 = sshllo.u32 0, 1
          loop: start=0, step=1, limit=1
          $region135: #{tpu_custom_call.1} parent=133 // loop_pre_header
            _
          $region136: #{tpu_custom_call.1} parent=133 // loop_header
            %s341 = sphi 0, %s345
            %p342 = scmp.ge.s32.totalorder %s341, 1
            %s346 = sphi %s329, %s329
            %s347 = sphi %s330, %s330
          $region137: #{tpu_custom_call.1} parent=133 // loop_header_branch
            %344 = sbr.rel (%p342) target = $region141
          $region138: #{tpu_custom_call.1} parent=133 // loop_body
            %v348 = vld [vmem:[%s346] sm:%s339]
            %349 = vst [vmem:[%s347] sm:%s339] %v348
          $region139: #{tpu_custom_call.1} parent=133 // loop_footer
            %s345 = sadd.s32 1, %s341
          $region140: #{tpu_custom_call.1} parent=133 // loop_footer_branch
            %340 = sbr.rel target = $region136
          $region141: #{tpu_custom_call.1} parent=133 // loop_exit
            _
        $region134: #{tpu_custom_call.1} parent=35 // pred_fallthru
          _
        // Predicated region
        $region153: #{tpu_custom_call.1} parent=35 // pred_check
          _
        $region154: #{tpu_custom_call.1} parent=35 // pred_check_branch
          %373 = sbr.rel (0) target = $region156
        $region155: #{tpu_custom_call.1} parent=35 // pred_region
          %374 = vsyncadd [#allocation3], 16
        $region156: #{tpu_custom_call.1} parent=35 // pred_fallthru
          _
        %s375 = sadd.s32 %s184, 4
        %s376 = sld [smem:[#allocation5 + %s375]]
        %s377 = scalar_lea.vmem %s1, %s376
        %s378 = scalar_lea.vmem [#allocation2], 32
        %p380 = scmp.lt.u32.totalorder 1, 8
        %p381 = pneg %p380
        // Predicated region
        $region157: #{tpu_custom_call.1} parent=35 // pred_check
          _
        $region158: #{tpu_custom_call.1} parent=35 // pred_check_branch
          %383 = sbr.rel (%p380) target = $region160
        $region159: #{tpu_custom_call.1} parent=35 // pred_region
          %s398 = sand.u32 1, 7
          %p399 = scmp.eq.s32.totalorder %s398, 0
          %p400 = pneg %p399
          // Predicated region
          $region172: #{tpu_custom_call.1} parent=159 // pred_check
            _
          $region173: #{tpu_custom_call.1} parent=159 // pred_check_branch
            %402 = sbr.rel (%p399) target = $region175
          $region174: #{tpu_custom_call.1} parent=159 // pred_region
            %s403 = sand.u32 1, 7
            %s404 = ssub.s32 1, %s403
            %s405 = scalar_lea.vmem %s377, %s404
            %s406 = ssub.s32 1, %s403
            %s407 = scalar_lea.vmem %s378, %s406 [#allocation2]
            %s408 = sshllo.u32 0, %s403
            loop: start=0, step=1, limit=1
            $region176: #{tpu_custom_call.1} parent=174 // loop_pre_header
              _
            $region177: #{tpu_custom_call.1} parent=174 // loop_header
              %s410 = sphi 0, %s414
              %p411 = scmp.ge.s32.totalorder %s410, 1
              %s415 = sphi %s405, %s405
              %s416 = sphi %s407, %s407
            $region178: #{tpu_custom_call.1} parent=174 // loop_header_branch
              %413 = sbr.rel (%p411) target = $region182
            $region179: #{tpu_custom_call.1} parent=174 // loop_body
              %v417 = vld [vmem:[%s415] sm:%s408]
              %418 = vst [vmem:[%s416] sm:%s408] %v417
            $region180: #{tpu_custom_call.1} parent=174 // loop_footer
              %s414 = sadd.s32 1, %s410
            $region181: #{tpu_custom_call.1} parent=174 // loop_footer_branch
              %409 = sbr.rel target = $region177
            $region182: #{tpu_custom_call.1} parent=174 // loop_exit
              _
          $region175: #{tpu_custom_call.1} parent=159 // pred_fallthru
            _
        $region160: #{tpu_custom_call.1} parent=35 // pred_fallthru
          _
        // Predicated region
        $region161: #{tpu_custom_call.1} parent=35 // pred_check
          %p384 = pneg %p380
        $region162: #{tpu_custom_call.1} parent=35 // pred_check_branch
          %386 = sbr.rel (%p384) target = $region164
        $region163: #{tpu_custom_call.1} parent=35 // pred_region
          %s387 = sshllo.u32 0, 1
          loop: start=0, step=1, limit=1
          $region165: #{tpu_custom_call.1} parent=163 // loop_pre_header
            _
          $region166: #{tpu_custom_call.1} parent=163 // loop_header
            %s389 = sphi 0, %s393
            %p390 = scmp.ge.s32.totalorder %s389, 1
            %s394 = sphi %s377, %s377
            %s395 = sphi %s378, %s378
          $region167: #{tpu_custom_call.1} parent=163 // loop_header_branch
            %392 = sbr.rel (%p390) target = $region171
          $region168: #{tpu_custom_call.1} parent=163 // loop_body
            %v396 = vld [vmem:[%s394] sm:%s387]
            %397 = vst [vmem:[%s395] sm:%s387] %v396
          $region169: #{tpu_custom_call.1} parent=163 // loop_footer
            %s393 = sadd.s32 1, %s389
          $region170: #{tpu_custom_call.1} parent=163 // loop_footer_branch
            %388 = sbr.rel target = $region166
          $region171: #{tpu_custom_call.1} parent=163 // loop_exit
            _
        $region164: #{tpu_custom_call.1} parent=35 // pred_fallthru
          _
        // Predicated region
        $region183: #{tpu_custom_call.1} parent=35 // pred_check
          _
        $region184: #{tpu_custom_call.1} parent=35 // pred_check_branch
          %421 = sbr.rel (0) target = $region186
        $region185: #{tpu_custom_call.1} parent=35 // pred_region
          %422 = vsyncadd [#allocation3], 16
        $region186: #{tpu_custom_call.1} parent=35 // pred_fallthru
          _
        %s423 = sadd.s32 %s184, 5
        %s424 = sld [smem:[#allocation5 + %s423]]
        %s425 = scalar_lea.vmem %s1, %s424
        %s426 = scalar_lea.vmem [#allocation2], 40
        %p428 = scmp.lt.u32.totalorder 1, 8
        %p429 = pneg %p428
        // Predicated region
        $region187: #{tpu_custom_call.1} parent=35 // pred_check
          _
        $region188: #{tpu_custom_call.1} parent=35 // pred_check_branch
          %431 = sbr.rel (%p428) target = $region190
        $region189: #{tpu_custom_call.1} parent=35 // pred_region
          %s446 = sand.u32 1, 7
          %p447 = scmp.eq.s32.totalorder %s446, 0
          %p448 = pneg %p447
          // Predicated region
          $region202: #{tpu_custom_call.1} parent=189 // pred_check
            _
          $region203: #{tpu_custom_call.1} parent=189 // pred_check_branch
            %450 = sbr.rel (%p447) target = $region205
          $region204: #{tpu_custom_call.1} parent=189 // pred_region
            %s451 = sand.u32 1, 7
            %s452 = ssub.s32 1, %s451
            %s453 = scalar_lea.vmem %s425, %s452
            %s454 = ssub.s32 1, %s451
            %s455 = scalar_lea.vmem %s426, %s454 [#allocation2]
            %s456 = sshllo.u32 0, %s451
            loop: start=0, step=1, limit=1
            $region206: #{tpu_custom_call.1} parent=204 // loop_pre_header
              _
            $region207: #{tpu_custom_call.1} parent=204 // loop_header
              %s458 = sphi 0, %s462
              %p459 = scmp.ge.s32.totalorder %s458, 1
              %s463 = sphi %s453, %s453
              %s464 = sphi %s455, %s455
            $region208: #{tpu_custom_call.1} parent=204 // loop_header_branch
              %461 = sbr.rel (%p459) target = $region212
            $region209: #{tpu_custom_call.1} parent=204 // loop_body
              %v465 = vld [vmem:[%s463] sm:%s456]
              %466 = vst [vmem:[%s464] sm:%s456] %v465
            $region210: #{tpu_custom_call.1} parent=204 // loop_footer
              %s462 = sadd.s32 1, %s458
            $region211: #{tpu_custom_call.1} parent=204 // loop_footer_branch
              %457 = sbr.rel target = $region207
            $region212: #{tpu_custom_call.1} parent=204 // loop_exit
              _
          $region205: #{tpu_custom_call.1} parent=189 // pred_fallthru
            _
        $region190: #{tpu_custom_call.1} parent=35 // pred_fallthru
          _
        // Predicated region
        $region191: #{tpu_custom_call.1} parent=35 // pred_check
          %p432 = pneg %p428
        $region192: #{tpu_custom_call.1} parent=35 // pred_check_branch
          %434 = sbr.rel (%p432) target = $region194
        $region193: #{tpu_custom_call.1} parent=35 // pred_region
          %s435 = sshllo.u32 0, 1
          loop: start=0, step=1, limit=1
          $region195: #{tpu_custom_call.1} parent=193 // loop_pre_header
            _
          $region196: #{tpu_custom_call.1} parent=193 // loop_header
            %s437 = sphi 0, %s441
            %p438 = scmp.ge.s32.totalorder %s437, 1
            %s442 = sphi %s425, %s425
            %s443 = sphi %s426, %s426
          $region197: #{tpu_custom_call.1} parent=193 // loop_header_branch
            %440 = sbr.rel (%p438) target = $region201
          $region198: #{tpu_custom_call.1} parent=193 // loop_body
            %v444 = vld [vmem:[%s442] sm:%s435]
            %445 = vst [vmem:[%s443] sm:%s435] %v444
          $region199: #{tpu_custom_call.1} parent=193 // loop_footer
            %s441 = sadd.s32 1, %s437
          $region200: #{tpu_custom_call.1} parent=193 // loop_footer_branch
            %436 = sbr.rel target = $region196
          $region201: #{tpu_custom_call.1} parent=193 // loop_exit
            _
        $region194: #{tpu_custom_call.1} parent=35 // pred_fallthru
          _
        // Predicated region
        $region213: #{tpu_custom_call.1} parent=35 // pred_check
          _
        $region214: #{tpu_custom_call.1} parent=35 // pred_check_branch
          %469 = sbr.rel (0) target = $region216
        $region215: #{tpu_custom_call.1} parent=35 // pred_region
          %470 = vsyncadd [#allocation3], 16
        $region216: #{tpu_custom_call.1} parent=35 // pred_fallthru
          _
        %s471 = sadd.s32 %s184, 6
        %s472 = sld [smem:[#allocation5 + %s471]]
        %s473 = scalar_lea.vmem %s1, %s472
        %s474 = scalar_lea.vmem [#allocation2], 48
        %p476 = scmp.lt.u32.totalorder 1, 8
        %p477 = pneg %p476
        // Predicated region
        $region217: #{tpu_custom_call.1} parent=35 // pred_check
          _
        $region218: #{tpu_custom_call.1} parent=35 // pred_check_branch
          %479 = sbr.rel (%p476) target = $region220
        $region219: #{tpu_custom_call.1} parent=35 // pred_region
          %s494 = sand.u32 1, 7
          %p495 = scmp.eq.s32.totalorder %s494, 0
          %p496 = pneg %p495
          // Predicated region
          $region232: #{tpu_custom_call.1} parent=219 // pred_check
            _
          $region233: #{tpu_custom_call.1} parent=219 // pred_check_branch
            %498 = sbr.rel (%p495) target = $region235
          $region234: #{tpu_custom_call.1} parent=219 // pred_region
            %s499 = sand.u32 1, 7
            %s500 = ssub.s32 1, %s499
            %s501 = scalar_lea.vmem %s473, %s500
            %s502 = ssub.s32 1, %s499
            %s503 = scalar_lea.vmem %s474, %s502 [#allocation2]
            %s504 = sshllo.u32 0, %s499
            loop: start=0, step=1, limit=1
            $region236: #{tpu_custom_call.1} parent=234 // loop_pre_header
              _
            $region237: #{tpu_custom_call.1} parent=234 // loop_header
              %s506 = sphi 0, %s510
              %p507 = scmp.ge.s32.totalorder %s506, 1
              %s511 = sphi %s501, %s501
              %s512 = sphi %s503, %s503
            $region238: #{tpu_custom_call.1} parent=234 // loop_header_branch
              %509 = sbr.rel (%p507) target = $region242
            $region239: #{tpu_custom_call.1} parent=234 // loop_body
              %v513 = vld [vmem:[%s511] sm:%s504]
              %514 = vst [vmem:[%s512] sm:%s504] %v513
            $region240: #{tpu_custom_call.1} parent=234 // loop_footer
              %s510 = sadd.s32 1, %s506
            $region241: #{tpu_custom_call.1} parent=234 // loop_footer_branch
              %505 = sbr.rel target = $region237
            $region242: #{tpu_custom_call.1} parent=234 // loop_exit
              _
          $region235: #{tpu_custom_call.1} parent=219 // pred_fallthru
            _
        $region220: #{tpu_custom_call.1} parent=35 // pred_fallthru
          _
        // Predicated region
        $region221: #{tpu_custom_call.1} parent=35 // pred_check
          %p480 = pneg %p476
        $region222: #{tpu_custom_call.1} parent=35 // pred_check_branch
          %482 = sbr.rel (%p480) target = $region224
        $region223: #{tpu_custom_call.1} parent=35 // pred_region
          %s483 = sshllo.u32 0, 1
          loop: start=0, step=1, limit=1
          $region225: #{tpu_custom_call.1} parent=223 // loop_pre_header
            _
          $region226: #{tpu_custom_call.1} parent=223 // loop_header
            %s485 = sphi 0, %s489
            %p486 = scmp.ge.s32.totalorder %s485, 1
            %s490 = sphi %s473, %s473
            %s491 = sphi %s474, %s474
          $region227: #{tpu_custom_call.1} parent=223 // loop_header_branch
            %488 = sbr.rel (%p486) target = $region231
          $region228: #{tpu_custom_call.1} parent=223 // loop_body
            %v492 = vld [vmem:[%s490] sm:%s483]
            %493 = vst [vmem:[%s491] sm:%s483] %v492
          $region229: #{tpu_custom_call.1} parent=223 // loop_footer
            %s489 = sadd.s32 1, %s485
          $region230: #{tpu_custom_call.1} parent=223 // loop_footer_branch
            %484 = sbr.rel target = $region226
          $region231: #{tpu_custom_call.1} parent=223 // loop_exit
            _
        $region224: #{tpu_custom_call.1} parent=35 // pred_fallthru
          _
        // Predicated region
        $region243: #{tpu_custom_call.1} parent=35 // pred_check
          _
        $region244: #{tpu_custom_call.1} parent=35 // pred_check_branch
          %517 = sbr.rel (0) target = $region246
        $region245: #{tpu_custom_call.1} parent=35 // pred_region
          %518 = vsyncadd [#allocation3], 16
        $region246: #{tpu_custom_call.1} parent=35 // pred_fallthru
          _
        %s519 = sadd.s32 %s184, 7
        %s520 = sld [smem:[#allocation5 + %s519]]
        %s521 = scalar_lea.vmem %s1, %s520
        %s522 = scalar_lea.vmem [#allocation2], 56
        %p524 = scmp.lt.u32.totalorder 1, 8
        %p525 = pneg %p524
        // Predicated region
        $region247: #{tpu_custom_call.1} parent=35 // pred_check
          _
        $region248: #{tpu_custom_call.1} parent=35 // pred_check_branch
          %527 = sbr.rel (%p524) target = $region250
        $region249: #{tpu_custom_call.1} parent=35 // pred_region
          %s542 = sand.u32 1, 7
          %p543 = scmp.eq.s32.totalorder %s542, 0
          %p544 = pneg %p543
          // Predicated region
          $region262: #{tpu_custom_call.1} parent=249 // pred_check
            _
          $region263: #{tpu_custom_call.1} parent=249 // pred_check_branch
            %546 = sbr.rel (%p543) target = $region265
          $region264: #{tpu_custom_call.1} parent=249 // pred_region
            %s547 = sand.u32 1, 7
            %s548 = ssub.s32 1, %s547
            %s549 = scalar_lea.vmem %s521, %s548
            %s550 = ssub.s32 1, %s547
            %s551 = scalar_lea.vmem %s522, %s550 [#allocation2]
            %s552 = sshllo.u32 0, %s547
            loop: start=0, step=1, limit=1
            $region266: #{tpu_custom_call.1} parent=264 // loop_pre_header
              _
            $region267: #{tpu_custom_call.1} parent=264 // loop_header
              %s554 = sphi 0, %s558
              %p555 = scmp.ge.s32.totalorder %s554, 1
              %s559 = sphi %s549, %s549
              %s560 = sphi %s551, %s551
            $region268: #{tpu_custom_call.1} parent=264 // loop_header_branch
              %557 = sbr.rel (%p555) target = $region272
            $region269: #{tpu_custom_call.1} parent=264 // loop_body
              %v561 = vld [vmem:[%s559] sm:%s552]
              %562 = vst [vmem:[%s560] sm:%s552] %v561
            $region270: #{tpu_custom_call.1} parent=264 // loop_footer
              %s558 = sadd.s32 1, %s554
            $region271: #{tpu_custom_call.1} parent=264 // loop_footer_branch
              %553 = sbr.rel target = $region267
            $region272: #{tpu_custom_call.1} parent=264 // loop_exit
              _
          $region265: #{tpu_custom_call.1} parent=249 // pred_fallthru
            _
        $region250: #{tpu_custom_call.1} parent=35 // pred_fallthru
          _
        // Predicated region
        $region251: #{tpu_custom_call.1} parent=35 // pred_check
          %p528 = pneg %p524
        $region252: #{tpu_custom_call.1} parent=35 // pred_check_branch
          %530 = sbr.rel (%p528) target = $region254
        $region253: #{tpu_custom_call.1} parent=35 // pred_region
          %s531 = sshllo.u32 0, 1
          loop: start=0, step=1, limit=1
          $region255: #{tpu_custom_call.1} parent=253 // loop_pre_header
            _
          $region256: #{tpu_custom_call.1} parent=253 // loop_header
            %s533 = sphi 0, %s537
            %p534 = scmp.ge.s32.totalorder %s533, 1
            %s538 = sphi %s521, %s521
            %s539 = sphi %s522, %s522
          $region257: #{tpu_custom_call.1} parent=253 // loop_header_branch
            %536 = sbr.rel (%p534) target = $region261
          $region258: #{tpu_custom_call.1} parent=253 // loop_body
            %v540 = vld [vmem:[%s538] sm:%s531]
            %541 = vst [vmem:[%s539] sm:%s531] %v540
          $region259: #{tpu_custom_call.1} parent=253 // loop_footer
            %s537 = sadd.s32 1, %s533
          $region260: #{tpu_custom_call.1} parent=253 // loop_footer_branch
            %532 = sbr.rel target = $region256
          $region261: #{tpu_custom_call.1} parent=253 // loop_exit
            _
        $region254: #{tpu_custom_call.1} parent=35 // pred_fallthru
          _
        // Predicated region
        $region273: #{tpu_custom_call.1} parent=35 // pred_check
          _
        $region274: #{tpu_custom_call.1} parent=35 // pred_check_branch
          %565 = sbr.rel (0) target = $region276
        $region275: #{tpu_custom_call.1} parent=35 // pred_region
          %566 = vsyncadd [#allocation3], 16
        $region276: #{tpu_custom_call.1} parent=35 // pred_fallthru
          _
        %s567 = sadd.s32 %s184, 8
        %s568 = sld [smem:[#allocation5 + %s567]]
        %s569 = scalar_lea.vmem %s1, %s568
        %s570 = scalar_lea.vmem [#allocation2], 1
        %p572 = scmp.lt.u32.totalorder 1, 8
        %p573 = pneg %p572
        // Predicated region
        $region277: #{tpu_custom_call.1} parent=35 // pred_check
          _
        $region278: #{tpu_custom_call.1} parent=35 // pred_check_branch
          %575 = sbr.rel (%p572) target = $region280
        $region279: #{tpu_custom_call.1} parent=35 // pred_region
          %s590 = sand.u32 1, 7
          %p591 = scmp.eq.s32.totalorder %s590, 0
          %p592 = pneg %p591
          // Predicated region
          $region292: #{tpu_custom_call.1} parent=279 // pred_check
            _
          $region293: #{tpu_custom_call.1} parent=279 // pred_check_branch
            %594 = sbr.rel (%p591) target = $region295
          $region294: #{tpu_custom_call.1} parent=279 // pred_region
            %s595 = sand.u32 1, 7
            %s596 = ssub.s32 1, %s595
            %s597 = scalar_lea.vmem %s569, %s596
            %s598 = ssub.s32 1, %s595
            %s599 = scalar_lea.vmem %s570, %s598 [#allocation2]
            %s600 = sshllo.u32 0, %s595
            loop: start=0, step=1, limit=1
            $region296: #{tpu_custom_call.1} parent=294 // loop_pre_header
              _
            $region297: #{tpu_custom_call.1} parent=294 // loop_header
              %s602 = sphi 0, %s606
              %p603 = scmp.ge.s32.totalorder %s602, 1
              %s607 = sphi %s597, %s597
              %s608 = sphi %s599, %s599
            $region298: #{tpu_custom_call.1} parent=294 // loop_header_branch
              %605 = sbr.rel (%p603) target = $region302
            $region299: #{tpu_custom_call.1} parent=294 // loop_body
              %v609 = vld [vmem:[%s607] sm:%s600]
              %610 = vst [vmem:[%s608] sm:%s600] %v609
            $region300: #{tpu_custom_call.1} parent=294 // loop_footer
              %s606 = sadd.s32 1, %s602
            $region301: #{tpu_custom_call.1} parent=294 // loop_footer_branch
              %601 = sbr.rel target = $region297
            $region302: #{tpu_custom_call.1} parent=294 // loop_exit
              _
          $region295: #{tpu_custom_call.1} parent=279 // pred_fallthru
            _
        $region280: #{tpu_custom_call.1} parent=35 // pred_fallthru
          _
        // Predicated region
        $region281: #{tpu_custom_call.1} parent=35 // pred_check
          %p576 = pneg %p572
        $region282: #{tpu_custom_call.1} parent=35 // pred_check_branch
          %578 = sbr.rel (%p576) target = $region284
        $region283: #{tpu_custom_call.1} parent=35 // pred_region
          %s579 = sshllo.u32 0, 1
          loop: start=0, step=1, limit=1
          $region285: #{tpu_custom_call.1} parent=283 // loop_pre_header
            _
          $region286: #{tpu_custom_call.1} parent=283 // loop_header
            %s581 = sphi 0, %s585
            %p582 = scmp.ge.s32.totalorder %s581, 1
            %s586 = sphi %s569, %s569
            %s587 = sphi %s570, %s570
          $region287: #{tpu_custom_call.1} parent=283 // loop_header_branch
            %584 = sbr.rel (%p582) target = $region291
          $region288: #{tpu_custom_call.1} parent=283 // loop_body
            %v588 = vld [vmem:[%s586] sm:%s579]
            %589 = vst [vmem:[%s587] sm:%s579] %v588
          $region289: #{tpu_custom_call.1} parent=283 // loop_footer
            %s585 = sadd.s32 1, %s581
          $region290: #{tpu_custom_call.1} parent=283 // loop_footer_branch
            %580 = sbr.rel target = $region286
          $region291: #{tpu_custom_call.1} parent=283 // loop_exit
            _
        $region284: #{tpu_custom_call.1} parent=35 // pred_fallthru
          _
        // Predicated region
        $region303: #{tpu_custom_call.1} parent=35 // pred_check
          _
        $region304: #{tpu_custom_call.1} parent=35 // pred_check_branch
          %613 = sbr.rel (0) target = $region306
        $region305: #{tpu_custom_call.1} parent=35 // pred_region
          %614 = vsyncadd [#allocation3], 16
        $region306: #{tpu_custom_call.1} parent=35 // pred_fallthru
          _
        %s615 = sadd.s32 %s184, 9
        %s616 = sld [smem:[#allocation5 + %s615]]
        %s617 = scalar_lea.vmem %s1, %s616
        %s618 = scalar_lea.vmem [#allocation2], 9
        %p620 = scmp.lt.u32.totalorder 1, 8
        %p621 = pneg %p620
        // Predicated region
        $region307: #{tpu_custom_call.1} parent=35 // pred_check
          _
        $region308: #{tpu_custom_call.1} parent=35 // pred_check_branch
          %623 = sbr.rel (%p620) target = $region310
        $region309: #{tpu_custom_call.1} parent=35 // pred_region
          %s638 = sand.u32 1, 7
          %p639 = scmp.eq.s32.totalorder %s638, 0
          %p640 = pneg %p639
          // Predicated region
          $region322: #{tpu_custom_call.1} parent=309 // pred_check
            _
          $region323: #{tpu_custom_call.1} parent=309 // pred_check_branch
            %642 = sbr.rel (%p639) target = $region325
          $region324: #{tpu_custom_call.1} parent=309 // pred_region
            %s643 = sand.u32 1, 7
            %s644 = ssub.s32 1, %s643
            %s645 = scalar_lea.vmem %s617, %s644
            %s646 = ssub.s32 1, %s643
            %s647 = scalar_lea.vmem %s618, %s646 [#allocation2]
            %s648 = sshllo.u32 0, %s643
            loop: start=0, step=1, limit=1
            $region326: #{tpu_custom_call.1} parent=324 // loop_pre_header
              _
            $region327: #{tpu_custom_call.1} parent=324 // loop_header
              %s650 = sphi 0, %s654
              %p651 = scmp.ge.s32.totalorder %s650, 1
              %s655 = sphi %s645, %s645
              %s656 = sphi %s647, %s647
            $region328: #{tpu_custom_call.1} parent=324 // loop_header_branch
              %653 = sbr.rel (%p651) target = $region332
            $region329: #{tpu_custom_call.1} parent=324 // loop_body
              %v657 = vld [vmem:[%s655] sm:%s648]
              %658 = vst [vmem:[%s656] sm:%s648] %v657
            $region330: #{tpu_custom_call.1} parent=324 // loop_footer
              %s654 = sadd.s32 1, %s650
            $region331: #{tpu_custom_call.1} parent=324 // loop_footer_branch
              %649 = sbr.rel target = $region327
            $region332: #{tpu_custom_call.1} parent=324 // loop_exit
              _
          $region325: #{tpu_custom_call.1} parent=309 // pred_fallthru
            _
        $region310: #{tpu_custom_call.1} parent=35 // pred_fallthru
          _
        // Predicated region
        $region311: #{tpu_custom_call.1} parent=35 // pred_check
          %p624 = pneg %p620
        $region312: #{tpu_custom_call.1} parent=35 // pred_check_branch
          %626 = sbr.rel (%p624) target = $region314
        $region313: #{tpu_custom_call.1} parent=35 // pred_region
          %s627 = sshllo.u32 0, 1
          loop: start=0, step=1, limit=1
          $region315: #{tpu_custom_call.1} parent=313 // loop_pre_header
            _
          $region316: #{tpu_custom_call.1} parent=313 // loop_header
            %s629 = sphi 0, %s633
            %p630 = scmp.ge.s32.totalorder %s629, 1
            %s634 = sphi %s617, %s617
            %s635 = sphi %s618, %s618
          $region317: #{tpu_custom_call.1} parent=313 // loop_header_branch
            %632 = sbr.rel (%p630) target = $region321
          $region318: #{tpu_custom_call.1} parent=313 // loop_body
            %v636 = vld [vmem:[%s634] sm:%s627]
            %637 = vst [vmem:[%s635] sm:%s627] %v636
          $region319: #{tpu_custom_call.1} parent=313 // loop_footer
            %s633 = sadd.s32 1, %s629
          $region320: #{tpu_custom_call.1} parent=313 // loop_footer_branch
            %628 = sbr.rel target = $region316
          $region321: #{tpu_custom_call.1} parent=313 // loop_exit
            _
        $region314: #{tpu_custom_call.1} parent=35 // pred_fallthru
          _
        // Predicated region
        $region333: #{tpu_custom_call.1} parent=35 // pred_check
          _
        $region334: #{tpu_custom_call.1} parent=35 // pred_check_branch
          %661 = sbr.rel (0) target = $region336
        $region335: #{tpu_custom_call.1} parent=35 // pred_region
          %662 = vsyncadd [#allocation3], 16
        $region336: #{tpu_custom_call.1} parent=35 // pred_fallthru
          _
        %s663 = sadd.s32 %s184, 10
        %s664 = sld [smem:[#allocation5 + %s663]]
        %s665 = scalar_lea.vmem %s1, %s664
        %s666 = scalar_lea.vmem [#allocation2], 17
        %p668 = scmp.lt.u32.totalorder 1, 8
        %p669 = pneg %p668
        // Predicated region
        $region337: #{tpu_custom_call.1} parent=35 // pred_check
          _
        $region338: #{tpu_custom_call.1} parent=35 // pred_check_branch
          %671 = sbr.rel (%p668) target = $region340
        $region339: #{tpu_custom_call.1} parent=35 // pred_region
          %s686 = sand.u32 1, 7
          %p687 = scmp.eq.s32.totalorder %s686, 0
          %p688 = pneg %p687
          // Predicated region
          $region352: #{tpu_custom_call.1} parent=339 // pred_check
            _
          $region353: #{tpu_custom_call.1} parent=339 // pred_check_branch
            %690 = sbr.rel (%p687) target = $region355
          $region354: #{tpu_custom_call.1} parent=339 // pred_region
            %s691 = sand.u32 1, 7
            %s692 = ssub.s32 1, %s691
            %s693 = scalar_lea.vmem %s665, %s692
            %s694 = ssub.s32 1, %s691
            %s695 = scalar_lea.vmem %s666, %s694 [#allocation2]
            %s696 = sshllo.u32 0, %s691
            loop: start=0, step=1, limit=1
            $region356: #{tpu_custom_call.1} parent=354 // loop_pre_header
              _
            $region357: #{tpu_custom_call.1} parent=354 // loop_header
              %s698 = sphi 0, %s702
              %p699 = scmp.ge.s32.totalorder %s698, 1
              %s703 = sphi %s693, %s693
              %s704 = sphi %s695, %s695
            $region358: #{tpu_custom_call.1} parent=354 // loop_header_branch
              %701 = sbr.rel (%p699) target = $region362
            $region359: #{tpu_custom_call.1} parent=354 // loop_body
              %v705 = vld [vmem:[%s703] sm:%s696]
              %706 = vst [vmem:[%s704] sm:%s696] %v705
            $region360: #{tpu_custom_call.1} parent=354 // loop_footer
              %s702 = sadd.s32 1, %s698
            $region361: #{tpu_custom_call.1} parent=354 // loop_footer_branch
              %697 = sbr.rel target = $region357
            $region362: #{tpu_custom_call.1} parent=354 // loop_exit
              _
          $region355: #{tpu_custom_call.1} parent=339 // pred_fallthru
            _
        $region340: #{tpu_custom_call.1} parent=35 // pred_fallthru
          _
        // Predicated region
        $region341: #{tpu_custom_call.1} parent=35 // pred_check
          %p672 = pneg %p668
        $region342: #{tpu_custom_call.1} parent=35 // pred_check_branch
          %674 = sbr.rel (%p672) target = $region344
        $region343: #{tpu_custom_call.1} parent=35 // pred_region
          %s675 = sshllo.u32 0, 1
          loop: start=0, step=1, limit=1
          $region345: #{tpu_custom_call.1} parent=343 // loop_pre_header
            _
          $region346: #{tpu_custom_call.1} parent=343 // loop_header
            %s677 = sphi 0, %s681
            %p678 = scmp.ge.s32.totalorder %s677, 1
            %s682 = sphi %s665, %s665
            %s683 = sphi %s666, %s666
          $region347: #{tpu_custom_call.1} parent=343 // loop_header_branch
            %680 = sbr.rel (%p678) target = $region351
          $region348: #{tpu_custom_call.1} parent=343 // loop_body
            %v684 = vld [vmem:[%s682] sm:%s675]
            %685 = vst [vmem:[%s683] sm:%s675] %v684
          $region349: #{tpu_custom_call.1} parent=343 // loop_footer
            %s681 = sadd.s32 1, %s677
          $region350: #{tpu_custom_call.1} parent=343 // loop_footer_branch
            %676 = sbr.rel target = $region346
          $region351: #{tpu_custom_call.1} parent=343 // loop_exit
            _
        $region344: #{tpu_custom_call.1} parent=35 // pred_fallthru
          _
        // Predicated region
        $region363: #{tpu_custom_call.1} parent=35 // pred_check
          _
        $region364: #{tpu_custom_call.1} parent=35 // pred_check_branch
          %709 = sbr.rel (0) target = $region366
        $region365: #{tpu_custom_call.1} parent=35 // pred_region
          %710 = vsyncadd [#allocation3], 16
        $region366: #{tpu_custom_call.1} parent=35 // pred_fallthru
          _
        %s711 = sadd.s32 %s184, 11
        %s712 = sld [smem:[#allocation5 + %s711]]
        %s713 = scalar_lea.vmem %s1, %s712
        %s714 = scalar_lea.vmem [#allocation2], 25
        %p716 = scmp.lt.u32.totalorder 1, 8
        %p717 = pneg %p716
        // Predicated region
        $region367: #{tpu_custom_call.1} parent=35 // pred_check
          _
        $region368: #{tpu_custom_call.1} parent=35 // pred_check_branch
          %719 = sbr.rel (%p716) target = $region370
        $region369: #{tpu_custom_call.1} parent=35 // pred_region
          %s734 = sand.u32 1, 7
          %p735 = scmp.eq.s32.totalorder %s734, 0
          %p736 = pneg %p735
          // Predicated region
          $region382: #{tpu_custom_call.1} parent=369 // pred_check
            _
          $region383: #{tpu_custom_call.1} parent=369 // pred_check_branch
            %738 = sbr.rel (%p735) target = $region385
          $region384: #{tpu_custom_call.1} parent=369 // pred_region
            %s739 = sand.u32 1, 7
            %s740 = ssub.s32 1, %s739
            %s741 = scalar_lea.vmem %s713, %s740
            %s742 = ssub.s32 1, %s739
            %s743 = scalar_lea.vmem %s714, %s742 [#allocation2]
            %s744 = sshllo.u32 0, %s739
            loop: start=0, step=1, limit=1
            $region386: #{tpu_custom_call.1} parent=384 // loop_pre_header
              _
            $region387: #{tpu_custom_call.1} parent=384 // loop_header
              %s746 = sphi 0, %s750
              %p747 = scmp.ge.s32.totalorder %s746, 1
              %s751 = sphi %s741, %s741
              %s752 = sphi %s743, %s743
            $region388: #{tpu_custom_call.1} parent=384 // loop_header_branch
              %749 = sbr.rel (%p747) target = $region392
            $region389: #{tpu_custom_call.1} parent=384 // loop_body
              %v753 = vld [vmem:[%s751] sm:%s744]
              %754 = vst [vmem:[%s752] sm:%s744] %v753
            $region390: #{tpu_custom_call.1} parent=384 // loop_footer
              %s750 = sadd.s32 1, %s746
            $region391: #{tpu_custom_call.1} parent=384 // loop_footer_branch
              %745 = sbr.rel target = $region387
            $region392: #{tpu_custom_call.1} parent=384 // loop_exit
              _
          $region385: #{tpu_custom_call.1} parent=369 // pred_fallthru
            _
        $region370: #{tpu_custom_call.1} parent=35 // pred_fallthru
          _
        // Predicated region
        $region371: #{tpu_custom_call.1} parent=35 // pred_check
          %p720 = pneg %p716
        $region372: #{tpu_custom_call.1} parent=35 // pred_check_branch
          %722 = sbr.rel (%p720) target = $region374
        $region373: #{tpu_custom_call.1} parent=35 // pred_region
          %s723 = sshllo.u32 0, 1
          loop: start=0, step=1, limit=1
          $region375: #{tpu_custom_call.1} parent=373 // loop_pre_header
            _
          $region376: #{tpu_custom_call.1} parent=373 // loop_header
            %s725 = sphi 0, %s729
            %p726 = scmp.ge.s32.totalorder %s725, 1
            %s730 = sphi %s713, %s713
            %s731 = sphi %s714, %s714
          $region377: #{tpu_custom_call.1} parent=373 // loop_header_branch
            %728 = sbr.rel (%p726) target = $region381
          $region378: #{tpu_custom_call.1} parent=373 // loop_body
            %v732 = vld [vmem:[%s730] sm:%s723]
            %733 = vst [vmem:[%s731] sm:%s723] %v732
          $region379: #{tpu_custom_call.1} parent=373 // loop_footer
            %s729 = sadd.s32 1, %s725
          $region380: #{tpu_custom_call.1} parent=373 // loop_footer_branch
            %724 = sbr.rel target = $region376
          $region381: #{tpu_custom_call.1} parent=373 // loop_exit
            _
        $region374: #{tpu_custom_call.1} parent=35 // pred_fallthru
          _
        // Predicated region
        $region393: #{tpu_custom_call.1} parent=35 // pred_check
          _
        $region394: #{tpu_custom_call.1} parent=35 // pred_check_branch
          %757 = sbr.rel (0) target = $region396
        $region395: #{tpu_custom_call.1} parent=35 // pred_region
          %758 = vsyncadd [#allocation3], 16
        $region396: #{tpu_custom_call.1} parent=35 // pred_fallthru
          _
        %s759 = sadd.s32 %s184, 12
        %s760 = sld [smem:[#allocation5 + %s759]]
        %s761 = scalar_lea.vmem %s1, %s760
        %s762 = scalar_lea.vmem [#allocation2], 33
        %p764 = scmp.lt.u32.totalorder 1, 8
        %p765 = pneg %p764
        // Predicated region
        $region397: #{tpu_custom_call.1} parent=35 // pred_check
          _
        $region398: #{tpu_custom_call.1} parent=35 // pred_check_branch
          %767 = sbr.rel (%p764) target = $region400
        $region399: #{tpu_custom_call.1} parent=35 // pred_region
          %s782 = sand.u32 1, 7
          %p783 = scmp.eq.s32.totalorder %s782, 0
          %p784 = pneg %p783
          // Predicated region
          $region412: #{tpu_custom_call.1} parent=399 // pred_check
            _
          $region413: #{tpu_custom_call.1} parent=399 // pred_check_branch
            %786 = sbr.rel (%p783) target = $region415
          $region414: #{tpu_custom_call.1} parent=399 // pred_region
            %s787 = sand.u32 1, 7
            %s788 = ssub.s32 1, %s787
            %s789 = scalar_lea.vmem %s761, %s788
            %s790 = ssub.s32 1, %s787
            %s791 = scalar_lea.vmem %s762, %s790 [#allocation2]
            %s792 = sshllo.u32 0, %s787
            loop: start=0, step=1, limit=1
            $region416: #{tpu_custom_call.1} parent=414 // loop_pre_header
              _
            $region417: #{tpu_custom_call.1} parent=414 // loop_header
              %s794 = sphi 0, %s798
              %p795 = scmp.ge.s32.totalorder %s794, 1
              %s799 = sphi %s789, %s789
              %s800 = sphi %s791, %s791
            $region418: #{tpu_custom_call.1} parent=414 // loop_header_branch
              %797 = sbr.rel (%p795) target = $region422
            $region419: #{tpu_custom_call.1} parent=414 // loop_body
              %v801 = vld [vmem:[%s799] sm:%s792]
              %802 = vst [vmem:[%s800] sm:%s792] %v801
            $region420: #{tpu_custom_call.1} parent=414 // loop_footer
              %s798 = sadd.s32 1, %s794
            $region421: #{tpu_custom_call.1} parent=414 // loop_footer_branch
              %793 = sbr.rel target = $region417
            $region422: #{tpu_custom_call.1} parent=414 // loop_exit
              _
          $region415: #{tpu_custom_call.1} parent=399 // pred_fallthru
            _
        $region400: #{tpu_custom_call.1} parent=35 // pred_fallthru
          _
        // Predicated region
        $region401: #{tpu_custom_call.1} parent=35 // pred_check
          %p768 = pneg %p764
        $region402: #{tpu_custom_call.1} parent=35 // pred_check_branch
          %770 = sbr.rel (%p768) target = $region404
        $region403: #{tpu_custom_call.1} parent=35 // pred_region
          %s771 = sshllo.u32 0, 1
          loop: start=0, step=1, limit=1
          $region405: #{tpu_custom_call.1} parent=403 // loop_pre_header
            _
          $region406: #{tpu_custom_call.1} parent=403 // loop_header
            %s773 = sphi 0, %s777
            %p774 = scmp.ge.s32.totalorder %s773, 1
            %s778 = sphi %s761, %s761
            %s779 = sphi %s762, %s762
          $region407: #{tpu_custom_call.1} parent=403 // loop_header_branch
            %776 = sbr.rel (%p774) target = $region411
          $region408: #{tpu_custom_call.1} parent=403 // loop_body
            %v780 = vld [vmem:[%s778] sm:%s771]
            %781 = vst [vmem:[%s779] sm:%s771] %v780
          $region409: #{tpu_custom_call.1} parent=403 // loop_footer
            %s777 = sadd.s32 1, %s773
          $region410: #{tpu_custom_call.1} parent=403 // loop_footer_branch
            %772 = sbr.rel target = $region406
          $region411: #{tpu_custom_call.1} parent=403 // loop_exit
            _
        $region404: #{tpu_custom_call.1} parent=35 // pred_fallthru
          _
        // Predicated region
        $region423: #{tpu_custom_call.1} parent=35 // pred_check
          _
        $region424: #{tpu_custom_call.1} parent=35 // pred_check_branch
          %805 = sbr.rel (0) target = $region426
        $region425: #{tpu_custom_call.1} parent=35 // pred_region
          %806 = vsyncadd [#allocation3], 16
        $region426: #{tpu_custom_call.1} parent=35 // pred_fallthru
          _
        %s807 = sadd.s32 %s184, 13
        %s808 = sld [smem:[#allocation5 + %s807]]
        %s809 = scalar_lea.vmem %s1, %s808
        %s810 = scalar_lea.vmem [#allocation2], 41
        %p812 = scmp.lt.u32.totalorder 1, 8
        %p813 = pneg %p812
        // Predicated region
        $region427: #{tpu_custom_call.1} parent=35 // pred_check
          _
        $region428: #{tpu_custom_call.1} parent=35 // pred_check_branch
          %815 = sbr.rel (%p812) target = $region430
        $region429: #{tpu_custom_call.1} parent=35 // pred_region
          %s830 = sand.u32 1, 7
          %p831 = scmp.eq.s32.totalorder %s830, 0
          %p832 = pneg %p831
          // Predicated region
          $region442: #{tpu_custom_call.1} parent=429 // pred_check
            _
          $region443: #{tpu_custom_call.1} parent=429 // pred_check_branch
            %834 = sbr.rel (%p831) target = $region445
          $region444: #{tpu_custom_call.1} parent=429 // pred_region
            %s835 = sand.u32 1, 7
            %s836 = ssub.s32 1, %s835
            %s837 = scalar_lea.vmem %s809, %s836
            %s838 = ssub.s32 1, %s835
            %s839 = scalar_lea.vmem %s810, %s838 [#allocation2]
            %s840 = sshllo.u32 0, %s835
            loop: start=0, step=1, limit=1
            $region446: #{tpu_custom_call.1} parent=444 // loop_pre_header
              _
            $region447: #{tpu_custom_call.1} parent=444 // loop_header
              %s842 = sphi 0, %s846
              %p843 = scmp.ge.s32.totalorder %s842, 1
              %s847 = sphi %s837, %s837
              %s848 = sphi %s839, %s839
            $region448: #{tpu_custom_call.1} parent=444 // loop_header_branch
              %845 = sbr.rel (%p843) target = $region452
            $region449: #{tpu_custom_call.1} parent=444 // loop_body
              %v849 = vld [vmem:[%s847] sm:%s840]
              %850 = vst [vmem:[%s848] sm:%s840] %v849
            $region450: #{tpu_custom_call.1} parent=444 // loop_footer
              %s846 = sadd.s32 1, %s842
            $region451: #{tpu_custom_call.1} parent=444 // loop_footer_branch
              %841 = sbr.rel target = $region447
            $region452: #{tpu_custom_call.1} parent=444 // loop_exit
              _
          $region445: #{tpu_custom_call.1} parent=429 // pred_fallthru
            _
        $region430: #{tpu_custom_call.1} parent=35 // pred_fallthru
          _
        // Predicated region
        $region431: #{tpu_custom_call.1} parent=35 // pred_check
          %p816 = pneg %p812
        $region432: #{tpu_custom_call.1} parent=35 // pred_check_branch
          %818 = sbr.rel (%p816) target = $region434
        $region433: #{tpu_custom_call.1} parent=35 // pred_region
          %s819 = sshllo.u32 0, 1
          loop: start=0, step=1, limit=1
          $region435: #{tpu_custom_call.1} parent=433 // loop_pre_header
            _
          $region436: #{tpu_custom_call.1} parent=433 // loop_header
            %s821 = sphi 0, %s825
            %p822 = scmp.ge.s32.totalorder %s821, 1
            %s826 = sphi %s809, %s809
            %s827 = sphi %s810, %s810
          $region437: #{tpu_custom_call.1} parent=433 // loop_header_branch
            %824 = sbr.rel (%p822) target = $region441
          $region438: #{tpu_custom_call.1} parent=433 // loop_body
            %v828 = vld [vmem:[%s826] sm:%s819]
            %829 = vst [vmem:[%s827] sm:%s819] %v828
          $region439: #{tpu_custom_call.1} parent=433 // loop_footer
            %s825 = sadd.s32 1, %s821
          $region440: #{tpu_custom_call.1} parent=433 // loop_footer_branch
            %820 = sbr.rel target = $region436
          $region441: #{tpu_custom_call.1} parent=433 // loop_exit
            _
        $region434: #{tpu_custom_call.1} parent=35 // pred_fallthru
          _
        // Predicated region
        $region453: #{tpu_custom_call.1} parent=35 // pred_check
          _
        $region454: #{tpu_custom_call.1} parent=35 // pred_check_branch
          %853 = sbr.rel (0) target = $region456
        $region455: #{tpu_custom_call.1} parent=35 // pred_region
          %854 = vsyncadd [#allocation3], 16
        $region456: #{tpu_custom_call.1} parent=35 // pred_fallthru
          _
        %s855 = sadd.s32 %s184, 14
        %s856 = sld [smem:[#allocation5 + %s855]]
        %s857 = scalar_lea.vmem %s1, %s856
        %s858 = scalar_lea.vmem [#allocation2], 49
        %p860 = scmp.lt.u32.totalorder 1, 8
        %p861 = pneg %p860
        // Predicated region
        $region457: #{tpu_custom_call.1} parent=35 // pred_check
          _
        $region458: #{tpu_custom_call.1} parent=35 // pred_check_branch
          %863 = sbr.rel (%p860) target = $region460
        $region459: #{tpu_custom_call.1} parent=35 // pred_region
          %s878 = sand.u32 1, 7
          %p879 = scmp.eq.s32.totalorder %s878, 0
          %p880 = pneg %p879
          // Predicated region
          $region472: #{tpu_custom_call.1} parent=459 // pred_check
            _
          $region473: #{tpu_custom_call.1} parent=459 // pred_check_branch
            %882 = sbr.rel (%p879) target = $region475
          $region474: #{tpu_custom_call.1} parent=459 // pred_region
            %s883 = sand.u32 1, 7
            %s884 = ssub.s32 1, %s883
            %s885 = scalar_lea.vmem %s857, %s884
            %s886 = ssub.s32 1, %s883
            %s887 = scalar_lea.vmem %s858, %s886 [#allocation2]
            %s888 = sshllo.u32 0, %s883
            loop: start=0, step=1, limit=1
            $region476: #{tpu_custom_call.1} parent=474 // loop_pre_header
              _
            $region477: #{tpu_custom_call.1} parent=474 // loop_header
              %s890 = sphi 0, %s894
              %p891 = scmp.ge.s32.totalorder %s890, 1
              %s895 = sphi %s885, %s885
              %s896 = sphi %s887, %s887
            $region478: #{tpu_custom_call.1} parent=474 // loop_header_branch
              %893 = sbr.rel (%p891) target = $region482
            $region479: #{tpu_custom_call.1} parent=474 // loop_body
              %v897 = vld [vmem:[%s895] sm:%s888]
              %898 = vst [vmem:[%s896] sm:%s888] %v897
            $region480: #{tpu_custom_call.1} parent=474 // loop_footer
              %s894 = sadd.s32 1, %s890
            $region481: #{tpu_custom_call.1} parent=474 // loop_footer_branch
              %889 = sbr.rel target = $region477
            $region482: #{tpu_custom_call.1} parent=474 // loop_exit
              _
          $region475: #{tpu_custom_call.1} parent=459 // pred_fallthru
            _
        $region460: #{tpu_custom_call.1} parent=35 // pred_fallthru
          _
        // Predicated region
        $region461: #{tpu_custom_call.1} parent=35 // pred_check
          %p864 = pneg %p860
        $region462: #{tpu_custom_call.1} parent=35 // pred_check_branch
          %866 = sbr.rel (%p864) target = $region464
        $region463: #{tpu_custom_call.1} parent=35 // pred_region
          %s867 = sshllo.u32 0, 1
          loop: start=0, step=1, limit=1
          $region465: #{tpu_custom_call.1} parent=463 // loop_pre_header
            _
          $region466: #{tpu_custom_call.1} parent=463 // loop_header
            %s869 = sphi 0, %s873
            %p870 = scmp.ge.s32.totalorder %s869, 1
            %s874 = sphi %s857, %s857
            %s875 = sphi %s858, %s858
          $region467: #{tpu_custom_call.1} parent=463 // loop_header_branch
            %872 = sbr.rel (%p870) target = $region471
          $region468: #{tpu_custom_call.1} parent=463 // loop_body
            %v876 = vld [vmem:[%s874] sm:%s867]
            %877 = vst [vmem:[%s875] sm:%s867] %v876
          $region469: #{tpu_custom_call.1} parent=463 // loop_footer
            %s873 = sadd.s32 1, %s869
          $region470: #{tpu_custom_call.1} parent=463 // loop_footer_branch
            %868 = sbr.rel target = $region466
          $region471: #{tpu_custom_call.1} parent=463 // loop_exit
            _
        $region464: #{tpu_custom_call.1} parent=35 // pred_fallthru
          _
        // Predicated region
        $region483: #{tpu_custom_call.1} parent=35 // pred_check
          _
        $region484: #{tpu_custom_call.1} parent=35 // pred_check_branch
          %901 = sbr.rel (0) target = $region486
        $region485: #{tpu_custom_call.1} parent=35 // pred_region
          %902 = vsyncadd [#allocation3], 16
        $region486: #{tpu_custom_call.1} parent=35 // pred_fallthru
          _
        %s903 = sadd.s32 %s184, 15
        %s904 = sld [smem:[#allocation5 + %s903]]
        %s905 = scalar_lea.vmem %s1, %s904
        %s906 = scalar_lea.vmem [#allocation2], 57
        %p908 = scmp.lt.u32.totalorder 1, 8
        %p909 = pneg %p908
        // Predicated region
        $region487: #{tpu_custom_call.1} parent=35 // pred_check
          _
        $region488: #{tpu_custom_call.1} parent=35 // pred_check_branch
          %911 = sbr.rel (%p908) target = $region490
        $region489: #{tpu_custom_call.1} parent=35 // pred_region
          %s926 = sand.u32 1, 7
          %p927 = scmp.eq.s32.totalorder %s926, 0
          %p928 = pneg %p927
          // Predicated region
          $region502: #{tpu_custom_call.1} parent=489 // pred_check
            _
          $region503: #{tpu_custom_call.1} parent=489 // pred_check_branch
            %930 = sbr.rel (%p927) target = $region505
          $region504: #{tpu_custom_call.1} parent=489 // pred_region
            %s931 = sand.u32 1, 7
            %s932 = ssub.s32 1, %s931
            %s933 = scalar_lea.vmem %s905, %s932
            %s934 = ssub.s32 1, %s931
            %s935 = scalar_lea.vmem %s906, %s934 [#allocation2]
            %s936 = sshllo.u32 0, %s931
            loop: start=0, step=1, limit=1
            $region506: #{tpu_custom_call.1} parent=504 // loop_pre_header
              _
            $region507: #{tpu_custom_call.1} parent=504 // loop_header
              %s938 = sphi 0, %s942
              %p939 = scmp.ge.s32.totalorder %s938, 1
              %s943 = sphi %s933, %s933
              %s944 = sphi %s935, %s935
            $region508: #{tpu_custom_call.1} parent=504 // loop_header_branch
              %941 = sbr.rel (%p939) target = $region512
            $region509: #{tpu_custom_call.1} parent=504 // loop_body
              %v945 = vld [vmem:[%s943] sm:%s936]
              %946 = vst [vmem:[%s944] sm:%s936] %v945
            $region510: #{tpu_custom_call.1} parent=504 // loop_footer
              %s942 = sadd.s32 1, %s938
            $region511: #{tpu_custom_call.1} parent=504 // loop_footer_branch
              %937 = sbr.rel target = $region507
            $region512: #{tpu_custom_call.1} parent=504 // loop_exit
              _
          $region505: #{tpu_custom_call.1} parent=489 // pred_fallthru
            _
        $region490: #{tpu_custom_call.1} parent=35 // pred_fallthru
          _
        // Predicated region
        $region491: #{tpu_custom_call.1} parent=35 // pred_check
          %p912 = pneg %p908
        $region492: #{tpu_custom_call.1} parent=35 // pred_check_branch
          %914 = sbr.rel (%p912) target = $region494
        $region493: #{tpu_custom_call.1} parent=35 // pred_region
          %s915 = sshllo.u32 0, 1
          loop: start=0, step=1, limit=1
          $region495: #{tpu_custom_call.1} parent=493 // loop_pre_header
            _
          $region496: #{tpu_custom_call.1} parent=493 // loop_header
            %s917 = sphi 0, %s921
            %p918 = scmp.ge.s32.totalorder %s917, 1
            %s922 = sphi %s905, %s905
            %s923 = sphi %s906, %s906
          $region497: #{tpu_custom_call.1} parent=493 // loop_header_branch
            %920 = sbr.rel (%p918) target = $region501
          $region498: #{tpu_custom_call.1} parent=493 // loop_body
            %v924 = vld [vmem:[%s922] sm:%s915]
            %925 = vst [vmem:[%s923] sm:%s915] %v924
          $region499: #{tpu_custom_call.1} parent=493 // loop_footer
            %s921 = sadd.s32 1, %s917
          $region500: #{tpu_custom_call.1} parent=493 // loop_footer_branch
            %916 = sbr.rel target = $region496
          $region501: #{tpu_custom_call.1} parent=493 // loop_exit
            _
        $region494: #{tpu_custom_call.1} parent=35 // pred_fallthru
          _
        // Predicated region
        $region513: #{tpu_custom_call.1} parent=35 // pred_check
          _
        $region514: #{tpu_custom_call.1} parent=35 // pred_check_branch
          %949 = sbr.rel (0) target = $region516
        $region515: #{tpu_custom_call.1} parent=35 // pred_region
          %950 = vsyncadd [#allocation3], 16
        $region516: #{tpu_custom_call.1} parent=35 // pred_fallthru
          _
        %s951 = sadd.s32 %s184, 16
        %s952 = sld [smem:[#allocation5 + %s951]]
        %s953 = scalar_lea.vmem %s1, %s952
        %s954 = scalar_lea.vmem [#allocation2], 2
        %p956 = scmp.lt.u32.totalorder 1, 8
        %p957 = pneg %p956
        // Predicated region
        $region517: #{tpu_custom_call.1} parent=35 // pred_check
          _
        $region518: #{tpu_custom_call.1} parent=35 // pred_check_branch
          %959 = sbr.rel (%p956) target = $region520
        $region519: #{tpu_custom_call.1} parent=35 // pred_region
          %s974 = sand.u32 1, 7
          %p975 = scmp.eq.s32.totalorder %s974, 0
          %p976 = pneg %p975
          // Predicated region
          $region532: #{tpu_custom_call.1} parent=519 // pred_check
            _
          $region533: #{tpu_custom_call.1} parent=519 // pred_check_branch
            %978 = sbr.rel (%p975) target = $region535
          $region534: #{tpu_custom_call.1} parent=519 // pred_region
            %s979 = sand.u32 1, 7
            %s980 = ssub.s32 1, %s979
            %s981 = scalar_lea.vmem %s953, %s980
            %s982 = ssub.s32 1, %s979
            %s983 = scalar_lea.vmem %s954, %s982 [#allocation2]
            %s984 = sshllo.u32 0, %s979
            loop: start=0, step=1, limit=1
            $region536: #{tpu_custom_call.1} parent=534 // loop_pre_header
              _
            $region537: #{tpu_custom_call.1} parent=534 // loop_header
              %s986 = sphi 0, %s990
              %p987 = scmp.ge.s32.totalorder %s986, 1
              %s991 = sphi %s981, %s981
              %s992 = sphi %s983, %s983
            $region538: #{tpu_custom_call.1} parent=534 // loop_header_branch
              %989 = sbr.rel (%p987) target = $region542
            $region539: #{tpu_custom_call.1} parent=534 // loop_body
              %v993 = vld [vmem:[%s991] sm:%s984]
              %994 = vst [vmem:[%s992] sm:%s984] %v993
            $region540: #{tpu_custom_call.1} parent=534 // loop_footer
              %s990 = sadd.s32 1, %s986
            $region541: #{tpu_custom_call.1} parent=534 // loop_footer_branch
              %985 = sbr.rel target = $region537
            $region542: #{tpu_custom_call.1} parent=534 // loop_exit
              _
          $region535: #{tpu_custom_call.1} parent=519 // pred_fallthru
            _
        $region520: #{tpu_custom_call.1} parent=35 // pred_fallthru
          _
        // Predicated region
        $region521: #{tpu_custom_call.1} parent=35 // pred_check
          %p960 = pneg %p956
        $region522: #{tpu_custom_call.1} parent=35 // pred_check_branch
          %962 = sbr.rel (%p960) target = $region524
        $region523: #{tpu_custom_call.1} parent=35 // pred_region
          %s963 = sshllo.u32 0, 1
          loop: start=0, step=1, limit=1
          $region525: #{tpu_custom_call.1} parent=523 // loop_pre_header
            _
          $region526: #{tpu_custom_call.1} parent=523 // loop_header
            %s965 = sphi 0, %s969
            %p966 = scmp.ge.s32.totalorder %s965, 1
            %s970 = sphi %s953, %s953
            %s971 = sphi %s954, %s954
          $region527: #{tpu_custom_call.1} parent=523 // loop_header_branch
            %968 = sbr.rel (%p966) target = $region531
          $region528: #{tpu_custom_call.1} parent=523 // loop_body
            %v972 = vld [vmem:[%s970] sm:%s963]
            %973 = vst [vmem:[%s971] sm:%s963] %v972
          $region529: #{tpu_custom_call.1} parent=523 // loop_footer
            %s969 = sadd.s32 1, %s965
          $region530: #{tpu_custom_call.1} parent=523 // loop_footer_branch
            %964 = sbr.rel target = $region526
          $region531: #{tpu_custom_call.1} parent=523 // loop_exit
            _
        $region524: #{tpu_custom_call.1} parent=35 // pred_fallthru
          _
        // Predicated region
        $region543: #{tpu_custom_call.1} parent=35 // pred_check
          _
        $region544: #{tpu_custom_call.1} parent=35 // pred_check_branch
          %997 = sbr.rel (0) target = $region546
        $region545: #{tpu_custom_call.1} parent=35 // pred_region
          %998 = vsyncadd [#allocation3], 16
        $region546: #{tpu_custom_call.1} parent=35 // pred_fallthru
          _
        %s999 = sadd.s32 %s184, 17
        %s1000 = sld [smem:[#allocation5 + %s999]]
        %s1001 = scalar_lea.vmem %s1, %s1000
        %s1002 = scalar_lea.vmem [#allocation2], 10
        %p1004 = scmp.lt.u32.totalorder 1, 8
        %p1005 = pneg %p1004
        // Predicated region
        $region547: #{tpu_custom_call.1} parent=35 // pred_check
          _
        $region548: #{tpu_custom_call.1} parent=35 // pred_check_branch
          %1007 = sbr.rel (%p1004) target = $region550
        $region549: #{tpu_custom_call.1} parent=35 // pred_region
          %s1022 = sand.u32 1, 7
          %p1023 = scmp.eq.s32.totalorder %s1022, 0
          %p1024 = pneg %p1023
          // Predicated region
          $region562: #{tpu_custom_call.1} parent=549 // pred_check
            _
          $region563: #{tpu_custom_call.1} parent=549 // pred_check_branch
            %1026 = sbr.rel (%p1023) target = $region565
          $region564: #{tpu_custom_call.1} parent=549 // pred_region
            %s1027 = sand.u32 1, 7
            %s1028 = ssub.s32 1, %s1027
            %s1029 = scalar_lea.vmem %s1001, %s1028
            %s1030 = ssub.s32 1, %s1027
            %s1031 = scalar_lea.vmem %s1002, %s1030 [#allocation2]
            %s1032 = sshllo.u32 0, %s1027
            loop: start=0, step=1, limit=1
            $region566: #{tpu_custom_call.1} parent=564 // loop_pre_header
              _
            $region567: #{tpu_custom_call.1} parent=564 // loop_header
              %s1034 = sphi 0, %s1038
              %p1035 = scmp.ge.s32.totalorder %s1034, 1
              %s1039 = sphi %s1029, %s1029
              %s1040 = sphi %s1031, %s1031
            $region568: #{tpu_custom_call.1} parent=564 // loop_header_branch
              %1037 = sbr.rel (%p1035) target = $region572
            $region569: #{tpu_custom_call.1} parent=564 // loop_body
              %v1041 = vld [vmem:[%s1039] sm:%s1032]
              %1042 = vst [vmem:[%s1040] sm:%s1032] %v1041
            $region570: #{tpu_custom_call.1} parent=564 // loop_footer
              %s1038 = sadd.s32 1, %s1034
            $region571: #{tpu_custom_call.1} parent=564 // loop_footer_branch
              %1033 = sbr.rel target = $region567
            $region572: #{tpu_custom_call.1} parent=564 // loop_exit
              _
          $region565: #{tpu_custom_call.1} parent=549 // pred_fallthru
            _
        $region550: #{tpu_custom_call.1} parent=35 // pred_fallthru
          _
        // Predicated region
        $region551: #{tpu_custom_call.1} parent=35 // pred_check
          %p1008 = pneg %p1004
        $region552: #{tpu_custom_call.1} parent=35 // pred_check_branch
          %1010 = sbr.rel (%p1008) target = $region554
        $region553: #{tpu_custom_call.1} parent=35 // pred_region
          %s1011 = sshllo.u32 0, 1
          loop: start=0, step=1, limit=1
          $region555: #{tpu_custom_call.1} parent=553 // loop_pre_header
            _
          $region556: #{tpu_custom_call.1} parent=553 // loop_header
            %s1013 = sphi 0, %s1017
            %p1014 = scmp.ge.s32.totalorder %s1013, 1
            %s1018 = sphi %s1001, %s1001
            %s1019 = sphi %s1002, %s1002
          $region557: #{tpu_custom_call.1} parent=553 // loop_header_branch
            %1016 = sbr.rel (%p1014) target = $region561
          $region558: #{tpu_custom_call.1} parent=553 // loop_body
            %v1020 = vld [vmem:[%s1018] sm:%s1011]
            %1021 = vst [vmem:[%s1019] sm:%s1011] %v1020
          $region559: #{tpu_custom_call.1} parent=553 // loop_footer
            %s1017 = sadd.s32 1, %s1013
          $region560: #{tpu_custom_call.1} parent=553 // loop_footer_branch
            %1012 = sbr.rel target = $region556
          $region561: #{tpu_custom_call.1} parent=553 // loop_exit
            _
        $region554: #{tpu_custom_call.1} parent=35 // pred_fallthru
          _
        // Predicated region
        $region573: #{tpu_custom_call.1} parent=35 // pred_check
          _
        $region574: #{tpu_custom_call.1} parent=35 // pred_check_branch
          %1045 = sbr.rel (0) target = $region576
        $region575: #{tpu_custom_call.1} parent=35 // pred_region
          %1046 = vsyncadd [#allocation3], 16
        $region576: #{tpu_custom_call.1} parent=35 // pred_fallthru
          _
        %s1047 = sadd.s32 %s184, 18
        %s1048 = sld [smem:[#allocation5 + %s1047]]
        %s1049 = scalar_lea.vmem %s1, %s1048
        %s1050 = scalar_lea.vmem [#allocation2], 18
        %p1052 = scmp.lt.u32.totalorder 1, 8
        %p1053 = pneg %p1052
        // Predicated region
        $region577: #{tpu_custom_call.1} parent=35 // pred_check
          _
        $region578: #{tpu_custom_call.1} parent=35 // pred_check_branch
          %1055 = sbr.rel (%p1052) target = $region580
        $region579: #{tpu_custom_call.1} parent=35 // pred_region
          %s1070 = sand.u32 1, 7
          %p1071 = scmp.eq.s32.totalorder %s1070, 0
          %p1072 = pneg %p1071
          // Predicated region
          $region592: #{tpu_custom_call.1} parent=579 // pred_check
            _
          $region593: #{tpu_custom_call.1} parent=579 // pred_check_branch
            %1074 = sbr.rel (%p1071) target = $region595
          $region594: #{tpu_custom_call.1} parent=579 // pred_region
            %s1075 = sand.u32 1, 7
            %s1076 = ssub.s32 1, %s1075
            %s1077 = scalar_lea.vmem %s1049, %s1076
            %s1078 = ssub.s32 1, %s1075
            %s1079 = scalar_lea.vmem %s1050, %s1078 [#allocation2]
            %s1080 = sshllo.u32 0, %s1075
            loop: start=0, step=1, limit=1
            $region596: #{tpu_custom_call.1} parent=594 // loop_pre_header
              _
            $region597: #{tpu_custom_call.1} parent=594 // loop_header
              %s1082 = sphi 0, %s1086
              %p1083 = scmp.ge.s32.totalorder %s1082, 1
              %s1087 = sphi %s1077, %s1077
              %s1088 = sphi %s1079, %s1079
            $region598: #{tpu_custom_call.1} parent=594 // loop_header_branch
              %1085 = sbr.rel (%p1083) target = $region602
            $region599: #{tpu_custom_call.1} parent=594 // loop_body
              %v1089 = vld [vmem:[%s1087] sm:%s1080]
              %1090 = vst [vmem:[%s1088] sm:%s1080] %v1089
            $region600: #{tpu_custom_call.1} parent=594 // loop_footer
              %s1086 = sadd.s32 1, %s1082
            $region601: #{tpu_custom_call.1} parent=594 // loop_footer_branch
              %1081 = sbr.rel target = $region597
            $region602: #{tpu_custom_call.1} parent=594 // loop_exit
              _
          $region595: #{tpu_custom_call.1} parent=579 // pred_fallthru
            _
        $region580: #{tpu_custom_call.1} parent=35 // pred_fallthru
          _
        // Predicated region
        $region581: #{tpu_custom_call.1} parent=35 // pred_check
          %p1056 = pneg %p1052
        $region582: #{tpu_custom_call.1} parent=35 // pred_check_branch
          %1058 = sbr.rel (%p1056) target = $region584
        $region583: #{tpu_custom_call.1} parent=35 // pred_region
          %s1059 = sshllo.u32 0, 1
          loop: start=0, step=1, limit=1
          $region585: #{tpu_custom_call.1} parent=583 // loop_pre_header
            _
          $region586: #{tpu_custom_call.1} parent=583 // loop_header
            %s1061 = sphi 0, %s1065
            %p1062 = scmp.ge.s32.totalorder %s1061, 1
            %s1066 = sphi %s1049, %s1049
            %s1067 = sphi %s1050, %s1050
          $region587: #{tpu_custom_call.1} parent=583 // loop_header_branch
            %1064 = sbr.rel (%p1062) target = $region591
          $region588: #{tpu_custom_call.1} parent=583 // loop_body
            %v1068 = vld [vmem:[%s1066] sm:%s1059]
            %1069 = vst [vmem:[%s1067] sm:%s1059] %v1068
          $region589: #{tpu_custom_call.1} parent=583 // loop_footer
            %s1065 = sadd.s32 1, %s1061
          $region590: #{tpu_custom_call.1} parent=583 // loop_footer_branch
            %1060 = sbr.rel target = $region586
          $region591: #{tpu_custom_call.1} parent=583 // loop_exit
            _
        $region584: #{tpu_custom_call.1} parent=35 // pred_fallthru
          _
        // Predicated region
        $region603: #{tpu_custom_call.1} parent=35 // pred_check
          _
        $region604: #{tpu_custom_call.1} parent=35 // pred_check_branch
          %1093 = sbr.rel (0) target = $region606
        $region605: #{tpu_custom_call.1} parent=35 // pred_region
          %1094 = vsyncadd [#allocation3], 16
        $region606: #{tpu_custom_call.1} parent=35 // pred_fallthru
          _
        %s1095 = sadd.s32 %s184, 19
        %s1096 = sld [smem:[#allocation5 + %s1095]]
        %s1097 = scalar_lea.vmem %s1, %s1096
        %s1098 = scalar_lea.vmem [#allocation2], 26
        %p1100 = scmp.lt.u32.totalorder 1, 8
        %p1101 = pneg %p1100
        // Predicated region
        $region607: #{tpu_custom_call.1} parent=35 // pred_check
          _
        $region608: #{tpu_custom_call.1} parent=35 // pred_check_branch
          %1103 = sbr.rel (%p1100) target = $region610
        $region609: #{tpu_custom_call.1} parent=35 // pred_region
          %s1118 = sand.u32 1, 7
          %p1119 = scmp.eq.s32.totalorder %s1118, 0
          %p1120 = pneg %p1119
          // Predicated region
          $region622: #{tpu_custom_call.1} parent=609 // pred_check
            _
          $region623: #{tpu_custom_call.1} parent=609 // pred_check_branch
            %1122 = sbr.rel (%p1119) target = $region625
          $region624: #{tpu_custom_call.1} parent=609 // pred_region
            %s1123 = sand.u32 1, 7
            %s1124 = ssub.s32 1, %s1123
            %s1125 = scalar_lea.vmem %s1097, %s1124
            %s1126 = ssub.s32 1, %s1123
            %s1127 = scalar_lea.vmem %s1098, %s1126 [#allocation2]
            %s1128 = sshllo.u32 0, %s1123
            loop: start=0, step=1, limit=1
            $region626: #{tpu_custom_call.1} parent=624 // loop_pre_header
              _
            $region627: #{tpu_custom_call.1} parent=624 // loop_header
              %s1130 = sphi 0, %s1134
              %p1131 = scmp.ge.s32.totalorder %s1130, 1
              %s1135 = sphi %s1125, %s1125
              %s1136 = sphi %s1127, %s1127
            $region628: #{tpu_custom_call.1} parent=624 // loop_header_branch
              %1133 = sbr.rel (%p1131) target = $region632
            $region629: #{tpu_custom_call.1} parent=624 // loop_body
              %v1137 = vld [vmem:[%s1135] sm:%s1128]
              %1138 = vst [vmem:[%s1136] sm:%s1128] %v1137
            $region630: #{tpu_custom_call.1} parent=624 // loop_footer
              %s1134 = sadd.s32 1, %s1130
            $region631: #{tpu_custom_call.1} parent=624 // loop_footer_branch
              %1129 = sbr.rel target = $region627
            $region632: #{tpu_custom_call.1} parent=624 // loop_exit
              _
          $region625: #{tpu_custom_call.1} parent=609 // pred_fallthru
            _
        $region610: #{tpu_custom_call.1} parent=35 // pred_fallthru
          _
        // Predicated region
        $region611: #{tpu_custom_call.1} parent=35 // pred_check
          %p1104 = pneg %p1100
        $region612: #{tpu_custom_call.1} parent=35 // pred_check_branch
          %1106 = sbr.rel (%p1104) target = $region614
        $region613: #{tpu_custom_call.1} parent=35 // pred_region
          %s1107 = sshllo.u32 0, 1
          loop: start=0, step=1, limit=1
          $region615: #{tpu_custom_call.1} parent=613 // loop_pre_header
            _
          $region616: #{tpu_custom_call.1} parent=613 // loop_header
            %s1109 = sphi 0, %s1113
            %p1110 = scmp.ge.s32.totalorder %s1109, 1
            %s1114 = sphi %s1097, %s1097
            %s1115 = sphi %s1098, %s1098
          $region617: #{tpu_custom_call.1} parent=613 // loop_header_branch
            %1112 = sbr.rel (%p1110) target = $region621
          $region618: #{tpu_custom_call.1} parent=613 // loop_body
            %v1116 = vld [vmem:[%s1114] sm:%s1107]
            %1117 = vst [vmem:[%s1115] sm:%s1107] %v1116
          $region619: #{tpu_custom_call.1} parent=613 // loop_footer
            %s1113 = sadd.s32 1, %s1109
          $region620: #{tpu_custom_call.1} parent=613 // loop_footer_branch
            %1108 = sbr.rel target = $region616
          $region621: #{tpu_custom_call.1} parent=613 // loop_exit
            _
        $region614: #{tpu_custom_call.1} parent=35 // pred_fallthru
          _
        // Predicated region
        $region633: #{tpu_custom_call.1} parent=35 // pred_check
          _
        $region634: #{tpu_custom_call.1} parent=35 // pred_check_branch
          %1141 = sbr.rel (0) target = $region636
        $region635: #{tpu_custom_call.1} parent=35 // pred_region
          %1142 = vsyncadd [#allocation3], 16
        $region636: #{tpu_custom_call.1} parent=35 // pred_fallthru
          _
        %s1143 = sadd.s32 %s184, 20
        %s1144 = sld [smem:[#allocation5 + %s1143]]
        %s1145 = scalar_lea.vmem %s1, %s1144
        %s1146 = scalar_lea.vmem [#allocation2], 34
        %p1148 = scmp.lt.u32.totalorder 1, 8
        %p1149 = pneg %p1148
        // Predicated region
        $region637: #{tpu_custom_call.1} parent=35 // pred_check
          _
        $region638: #{tpu_custom_call.1} parent=35 // pred_check_branch
          %1151 = sbr.rel (%p1148) target = $region640
        $region639: #{tpu_custom_call.1} parent=35 // pred_region
          %s1166 = sand.u32 1, 7
          %p1167 = scmp.eq.s32.totalorder %s1166, 0
          %p1168 = pneg %p1167
          // Predicated region
          $region652: #{tpu_custom_call.1} parent=639 // pred_check
            _
          $region653: #{tpu_custom_call.1} parent=639 // pred_check_branch
            %1170 = sbr.rel (%p1167) target = $region655
          $region654: #{tpu_custom_call.1} parent=639 // pred_region
            %s1171 = sand.u32 1, 7
            %s1172 = ssub.s32 1, %s1171
            %s1173 = scalar_lea.vmem %s1145, %s1172
            %s1174 = ssub.s32 1, %s1171
            %s1175 = scalar_lea.vmem %s1146, %s1174 [#allocation2]
            %s1176 = sshllo.u32 0, %s1171
            loop: start=0, step=1, limit=1
            $region656: #{tpu_custom_call.1} parent=654 // loop_pre_header
              _
            $region657: #{tpu_custom_call.1} parent=654 // loop_header
              %s1178 = sphi 0, %s1182
              %p1179 = scmp.ge.s32.totalorder %s1178, 1
              %s1183 = sphi %s1173, %s1173
              %s1184 = sphi %s1175, %s1175
            $region658: #{tpu_custom_call.1} parent=654 // loop_header_branch
              %1181 = sbr.rel (%p1179) target = $region662
            $region659: #{tpu_custom_call.1} parent=654 // loop_body
              %v1185 = vld [vmem:[%s1183] sm:%s1176]
              %1186 = vst [vmem:[%s1184] sm:%s1176] %v1185
            $region660: #{tpu_custom_call.1} parent=654 // loop_footer
              %s1182 = sadd.s32 1, %s1178
            $region661: #{tpu_custom_call.1} parent=654 // loop_footer_branch
              %1177 = sbr.rel target = $region657
            $region662: #{tpu_custom_call.1} parent=654 // loop_exit
              _
          $region655: #{tpu_custom_call.1} parent=639 // pred_fallthru
            _
        $region640: #{tpu_custom_call.1} parent=35 // pred_fallthru
          _
        // Predicated region
        $region641: #{tpu_custom_call.1} parent=35 // pred_check
          %p1152 = pneg %p1148
        $region642: #{tpu_custom_call.1} parent=35 // pred_check_branch
          %1154 = sbr.rel (%p1152) target = $region644
        $region643: #{tpu_custom_call.1} parent=35 // pred_region
          %s1155 = sshllo.u32 0, 1
          loop: start=0, step=1, limit=1
          $region645: #{tpu_custom_call.1} parent=643 // loop_pre_header
            _
          $region646: #{tpu_custom_call.1} parent=643 // loop_header
            %s1157 = sphi 0, %s1161
            %p1158 = scmp.ge.s32.totalorder %s1157, 1
            %s1162 = sphi %s1145, %s1145
            %s1163 = sphi %s1146, %s1146
          $region647: #{tpu_custom_call.1} parent=643 // loop_header_branch
            %1160 = sbr.rel (%p1158) target = $region651
          $region648: #{tpu_custom_call.1} parent=643 // loop_body
            %v1164 = vld [vmem:[%s1162] sm:%s1155]
            %1165 = vst [vmem:[%s1163] sm:%s1155] %v1164
          $region649: #{tpu_custom_call.1} parent=643 // loop_footer
            %s1161 = sadd.s32 1, %s1157
          $region650: #{tpu_custom_call.1} parent=643 // loop_footer_branch
            %1156 = sbr.rel target = $region646
          $region651: #{tpu_custom_call.1} parent=643 // loop_exit
            _
        $region644: #{tpu_custom_call.1} parent=35 // pred_fallthru
          _
        // Predicated region
        $region663: #{tpu_custom_call.1} parent=35 // pred_check
          _
        $region664: #{tpu_custom_call.1} parent=35 // pred_check_branch
          %1189 = sbr.rel (0) target = $region666
        $region665: #{tpu_custom_call.1} parent=35 // pred_region
          %1190 = vsyncadd [#allocation3], 16
        $region666: #{tpu_custom_call.1} parent=35 // pred_fallthru
          _
        %s1191 = sadd.s32 %s184, 21
        %s1192 = sld [smem:[#allocation5 + %s1191]]
        %s1193 = scalar_lea.vmem %s1, %s1192
        %s1194 = scalar_lea.vmem [#allocation2], 42
        %p1196 = scmp.lt.u32.totalorder 1, 8
        %p1197 = pneg %p1196
        // Predicated region
        $region667: #{tpu_custom_call.1} parent=35 // pred_check
          _
        $region668: #{tpu_custom_call.1} parent=35 // pred_check_branch
          %1199 = sbr.rel (%p1196) target = $region670
        $region669: #{tpu_custom_call.1} parent=35 // pred_region
          %s1214 = sand.u32 1, 7
          %p1215 = scmp.eq.s32.totalorder %s1214, 0
          %p1216 = pneg %p1215
          // Predicated region
          $region682: #{tpu_custom_call.1} parent=669 // pred_check
            _
          $region683: #{tpu_custom_call.1} parent=669 // pred_check_branch
            %1218 = sbr.rel (%p1215) target = $region685
          $region684: #{tpu_custom_call.1} parent=669 // pred_region
            %s1219 = sand.u32 1, 7
            %s1220 = ssub.s32 1, %s1219
            %s1221 = scalar_lea.vmem %s1193, %s1220
            %s1222 = ssub.s32 1, %s1219
            %s1223 = scalar_lea.vmem %s1194, %s1222 [#allocation2]
            %s1224 = sshllo.u32 0, %s1219
            loop: start=0, step=1, limit=1
            $region686: #{tpu_custom_call.1} parent=684 // loop_pre_header
              _
            $region687: #{tpu_custom_call.1} parent=684 // loop_header
              %s1226 = sphi 0, %s1230
              %p1227 = scmp.ge.s32.totalorder %s1226, 1
              %s1231 = sphi %s1221, %s1221
              %s1232 = sphi %s1223, %s1223
            $region688: #{tpu_custom_call.1} parent=684 // loop_header_branch
              %1229 = sbr.rel (%p1227) target = $region692
            $region689: #{tpu_custom_call.1} parent=684 // loop_body
              %v1233 = vld [vmem:[%s1231] sm:%s1224]
              %1234 = vst [vmem:[%s1232] sm:%s1224] %v1233
            $region690: #{tpu_custom_call.1} parent=684 // loop_footer
              %s1230 = sadd.s32 1, %s1226
            $region691: #{tpu_custom_call.1} parent=684 // loop_footer_branch
              %1225 = sbr.rel target = $region687
            $region692: #{tpu_custom_call.1} parent=684 // loop_exit
              _
          $region685: #{tpu_custom_call.1} parent=669 // pred_fallthru
            _
        $region670: #{tpu_custom_call.1} parent=35 // pred_fallthru
          _
        // Predicated region
        $region671: #{tpu_custom_call.1} parent=35 // pred_check
          %p1200 = pneg %p1196
        $region672: #{tpu_custom_call.1} parent=35 // pred_check_branch
          %1202 = sbr.rel (%p1200) target = $region674
        $region673: #{tpu_custom_call.1} parent=35 // pred_region
          %s1203 = sshllo.u32 0, 1
          loop: start=0, step=1, limit=1
          $region675: #{tpu_custom_call.1} parent=673 // loop_pre_header
            _
          $region676: #{tpu_custom_call.1} parent=673 // loop_header
            %s1205 = sphi 0, %s1209
            %p1206 = scmp.ge.s32.totalorder %s1205, 1
            %s1210 = sphi %s1193, %s1193
            %s1211 = sphi %s1194, %s1194
          $region677: #{tpu_custom_call.1} parent=673 // loop_header_branch
            %1208 = sbr.rel (%p1206) target = $region681
          $region678: #{tpu_custom_call.1} parent=673 // loop_body
            %v1212 = vld [vmem:[%s1210] sm:%s1203]
            %1213 = vst [vmem:[%s1211] sm:%s1203] %v1212
          $region679: #{tpu_custom_call.1} parent=673 // loop_footer
            %s1209 = sadd.s32 1, %s1205
          $region680: #{tpu_custom_call.1} parent=673 // loop_footer_branch
            %1204 = sbr.rel target = $region676
          $region681: #{tpu_custom_call.1} parent=673 // loop_exit
            _
        $region674: #{tpu_custom_call.1} parent=35 // pred_fallthru
          _
        // Predicated region
        $region693: #{tpu_custom_call.1} parent=35 // pred_check
          _
        $region694: #{tpu_custom_call.1} parent=35 // pred_check_branch
          %1237 = sbr.rel (0) target = $region696
        $region695: #{tpu_custom_call.1} parent=35 // pred_region
          %1238 = vsyncadd [#allocation3], 16
        $region696: #{tpu_custom_call.1} parent=35 // pred_fallthru
          _
        %s1239 = sadd.s32 %s184, 22
        %s1240 = sld [smem:[#allocation5 + %s1239]]
        %s1241 = scalar_lea.vmem %s1, %s1240
        %s1242 = scalar_lea.vmem [#allocation2], 50
        %p1244 = scmp.lt.u32.totalorder 1, 8
        %p1245 = pneg %p1244
        // Predicated region
        $region697: #{tpu_custom_call.1} parent=35 // pred_check
          _
        $region698: #{tpu_custom_call.1} parent=35 // pred_check_branch
          %1247 = sbr.rel (%p1244) target = $region700
        $region699: #{tpu_custom_call.1} parent=35 // pred_region
          %s1262 = sand.u32 1, 7
          %p1263 = scmp.eq.s32.totalorder %s1262, 0
          %p1264 = pneg %p1263
          // Predicated region
          $region712: #{tpu_custom_call.1} parent=699 // pred_check
            _
          $region713: #{tpu_custom_call.1} parent=699 // pred_check_branch
            %1266 = sbr.rel (%p1263) target = $region715
          $region714: #{tpu_custom_call.1} parent=699 // pred_region
            %s1267 = sand.u32 1, 7
            %s1268 = ssub.s32 1, %s1267
            %s1269 = scalar_lea.vmem %s1241, %s1268
            %s1270 = ssub.s32 1, %s1267
            %s1271 = scalar_lea.vmem %s1242, %s1270 [#allocation2]
            %s1272 = sshllo.u32 0, %s1267
            loop: start=0, step=1, limit=1
            $region716: #{tpu_custom_call.1} parent=714 // loop_pre_header
              _
            $region717: #{tpu_custom_call.1} parent=714 // loop_header
              %s1274 = sphi 0, %s1278
              %p1275 = scmp.ge.s32.totalorder %s1274, 1
              %s1279 = sphi %s1269, %s1269
              %s1280 = sphi %s1271, %s1271
            $region718: #{tpu_custom_call.1} parent=714 // loop_header_branch
              %1277 = sbr.rel (%p1275) target = $region722
            $region719: #{tpu_custom_call.1} parent=714 // loop_body
              %v1281 = vld [vmem:[%s1279] sm:%s1272]
              %1282 = vst [vmem:[%s1280] sm:%s1272] %v1281
            $region720: #{tpu_custom_call.1} parent=714 // loop_footer
              %s1278 = sadd.s32 1, %s1274
            $region721: #{tpu_custom_call.1} parent=714 // loop_footer_branch
              %1273 = sbr.rel target = $region717
            $region722: #{tpu_custom_call.1} parent=714 // loop_exit
              _
          $region715: #{tpu_custom_call.1} parent=699 // pred_fallthru
            _
        $region700: #{tpu_custom_call.1} parent=35 // pred_fallthru
          _
        // Predicated region
        $region701: #{tpu_custom_call.1} parent=35 // pred_check
          %p1248 = pneg %p1244
        $region702: #{tpu_custom_call.1} parent=35 // pred_check_branch
          %1250 = sbr.rel (%p1248) target = $region704
        $region703: #{tpu_custom_call.1} parent=35 // pred_region
          %s1251 = sshllo.u32 0, 1
          loop: start=0, step=1, limit=1
          $region705: #{tpu_custom_call.1} parent=703 // loop_pre_header
            _
          $region706: #{tpu_custom_call.1} parent=703 // loop_header
            %s1253 = sphi 0, %s1257
            %p1254 = scmp.ge.s32.totalorder %s1253, 1
            %s1258 = sphi %s1241, %s1241
            %s1259 = sphi %s1242, %s1242
          $region707: #{tpu_custom_call.1} parent=703 // loop_header_branch
            %1256 = sbr.rel (%p1254) target = $region711
          $region708: #{tpu_custom_call.1} parent=703 // loop_body
            %v1260 = vld [vmem:[%s1258] sm:%s1251]
            %1261 = vst [vmem:[%s1259] sm:%s1251] %v1260
          $region709: #{tpu_custom_call.1} parent=703 // loop_footer
            %s1257 = sadd.s32 1, %s1253
          $region710: #{tpu_custom_call.1} parent=703 // loop_footer_branch
            %1252 = sbr.rel target = $region706
          $region711: #{tpu_custom_call.1} parent=703 // loop_exit
            _
        $region704: #{tpu_custom_call.1} parent=35 // pred_fallthru
          _
        // Predicated region
        $region723: #{tpu_custom_call.1} parent=35 // pred_check
          _
        $region724: #{tpu_custom_call.1} parent=35 // pred_check_branch
          %1285 = sbr.rel (0) target = $region726
        $region725: #{tpu_custom_call.1} parent=35 // pred_region
          %1286 = vsyncadd [#allocation3], 16
        $region726: #{tpu_custom_call.1} parent=35 // pred_fallthru
          _
        %s1287 = sadd.s32 %s184, 23
        %s1288 = sld [smem:[#allocation5 + %s1287]]
        %s1289 = scalar_lea.vmem %s1, %s1288
        %s1290 = scalar_lea.vmem [#allocation2], 58
        %p1292 = scmp.lt.u32.totalorder 1, 8
        %p1293 = pneg %p1292
        // Predicated region
        $region727: #{tpu_custom_call.1} parent=35 // pred_check
          _
        $region728: #{tpu_custom_call.1} parent=35 // pred_check_branch
          %1295 = sbr.rel (%p1292) target = $region730
        $region729: #{tpu_custom_call.1} parent=35 // pred_region
          %s1310 = sand.u32 1, 7
          %p1311 = scmp.eq.s32.totalorder %s1310, 0
          %p1312 = pneg %p1311
          // Predicated region
          $region742: #{tpu_custom_call.1} parent=729 // pred_check
            _
          $region743: #{tpu_custom_call.1} parent=729 // pred_check_branch
            %1314 = sbr.rel (%p1311) target = $region745
          $region744: #{tpu_custom_call.1} parent=729 // pred_region
            %s1315 = sand.u32 1, 7
            %s1316 = ssub.s32 1, %s1315
            %s1317 = scalar_lea.vmem %s1289, %s1316
            %s1318 = ssub.s32 1, %s1315
            %s1319 = scalar_lea.vmem %s1290, %s1318 [#allocation2]
            %s1320 = sshllo.u32 0, %s1315
            loop: start=0, step=1, limit=1
            $region746: #{tpu_custom_call.1} parent=744 // loop_pre_header
              _
            $region747: #{tpu_custom_call.1} parent=744 // loop_header
              %s1322 = sphi 0, %s1326
              %p1323 = scmp.ge.s32.totalorder %s1322, 1
              %s1327 = sphi %s1317, %s1317
              %s1328 = sphi %s1319, %s1319
            $region748: #{tpu_custom_call.1} parent=744 // loop_header_branch
              %1325 = sbr.rel (%p1323) target = $region752
            $region749: #{tpu_custom_call.1} parent=744 // loop_body
              %v1329 = vld [vmem:[%s1327] sm:%s1320]
              %1330 = vst [vmem:[%s1328] sm:%s1320] %v1329
            $region750: #{tpu_custom_call.1} parent=744 // loop_footer
              %s1326 = sadd.s32 1, %s1322
            $region751: #{tpu_custom_call.1} parent=744 // loop_footer_branch
              %1321 = sbr.rel target = $region747
            $region752: #{tpu_custom_call.1} parent=744 // loop_exit
              _
          $region745: #{tpu_custom_call.1} parent=729 // pred_fallthru
            _
        $region730: #{tpu_custom_call.1} parent=35 // pred_fallthru
          _
        // Predicated region
        $region731: #{tpu_custom_call.1} parent=35 // pred_check
          %p1296 = pneg %p1292
        $region732: #{tpu_custom_call.1} parent=35 // pred_check_branch
          %1298 = sbr.rel (%p1296) target = $region734
        $region733: #{tpu_custom_call.1} parent=35 // pred_region
          %s1299 = sshllo.u32 0, 1
          loop: start=0, step=1, limit=1
          $region735: #{tpu_custom_call.1} parent=733 // loop_pre_header
            _
          $region736: #{tpu_custom_call.1} parent=733 // loop_header
            %s1301 = sphi 0, %s1305
            %p1302 = scmp.ge.s32.totalorder %s1301, 1
            %s1306 = sphi %s1289, %s1289
            %s1307 = sphi %s1290, %s1290
          $region737: #{tpu_custom_call.1} parent=733 // loop_header_branch
            %1304 = sbr.rel (%p1302) target = $region741
          $region738: #{tpu_custom_call.1} parent=733 // loop_body
            %v1308 = vld [vmem:[%s1306] sm:%s1299]
            %1309 = vst [vmem:[%s1307] sm:%s1299] %v1308
          $region739: #{tpu_custom_call.1} parent=733 // loop_footer
            %s1305 = sadd.s32 1, %s1301
          $region740: #{tpu_custom_call.1} parent=733 // loop_footer_branch
            %1300 = sbr.rel target = $region736
          $region741: #{tpu_custom_call.1} parent=733 // loop_exit
            _
        $region734: #{tpu_custom_call.1} parent=35 // pred_fallthru
          _
        // Predicated region
        $region753: #{tpu_custom_call.1} parent=35 // pred_check
          _
        $region754: #{tpu_custom_call.1} parent=35 // pred_check_branch
          %1333 = sbr.rel (0) target = $region756
        $region755: #{tpu_custom_call.1} parent=35 // pred_region
          %1334 = vsyncadd [#allocation3], 16
        $region756: #{tpu_custom_call.1} parent=35 // pred_fallthru
          _
        %s1335 = sadd.s32 %s184, 24
        %s1336 = sld [smem:[#allocation5 + %s1335]]
        %s1337 = scalar_lea.vmem %s1, %s1336
        %s1338 = scalar_lea.vmem [#allocation2], 3
        %p1340 = scmp.lt.u32.totalorder 1, 8
        %p1341 = pneg %p1340
        // Predicated region
        $region757: #{tpu_custom_call.1} parent=35 // pred_check
          _
        $region758: #{tpu_custom_call.1} parent=35 // pred_check_branch
          %1343 = sbr.rel (%p1340) target = $region760
        $region759: #{tpu_custom_call.1} parent=35 // pred_region
          %s1358 = sand.u32 1, 7
          %p1359 = scmp.eq.s32.totalorder %s1358, 0
          %p1360 = pneg %p1359
          // Predicated region
          $region772: #{tpu_custom_call.1} parent=759 // pred_check
            _
          $region773: #{tpu_custom_call.1} parent=759 // pred_check_branch
            %1362 = sbr.rel (%p1359) target = $region775
          $region774: #{tpu_custom_call.1} parent=759 // pred_region
            %s1363 = sand.u32 1, 7
            %s1364 = ssub.s32 1, %s1363
            %s1365 = scalar_lea.vmem %s1337, %s1364
            %s1366 = ssub.s32 1, %s1363
            %s1367 = scalar_lea.vmem %s1338, %s1366 [#allocation2]
            %s1368 = sshllo.u32 0, %s1363
            loop: start=0, step=1, limit=1
            $region776: #{tpu_custom_call.1} parent=774 // loop_pre_header
              _
            $region777: #{tpu_custom_call.1} parent=774 // loop_header
              %s1370 = sphi 0, %s1374
              %p1371 = scmp.ge.s32.totalorder %s1370, 1
              %s1375 = sphi %s1365, %s1365
              %s1376 = sphi %s1367, %s1367
            $region778: #{tpu_custom_call.1} parent=774 // loop_header_branch
              %1373 = sbr.rel (%p1371) target = $region782
            $region779: #{tpu_custom_call.1} parent=774 // loop_body
              %v1377 = vld [vmem:[%s1375] sm:%s1368]
              %1378 = vst [vmem:[%s1376] sm:%s1368] %v1377
            $region780: #{tpu_custom_call.1} parent=774 // loop_footer
              %s1374 = sadd.s32 1, %s1370
            $region781: #{tpu_custom_call.1} parent=774 // loop_footer_branch
              %1369 = sbr.rel target = $region777
            $region782: #{tpu_custom_call.1} parent=774 // loop_exit
              _
          $region775: #{tpu_custom_call.1} parent=759 // pred_fallthru
            _
        $region760: #{tpu_custom_call.1} parent=35 // pred_fallthru
          _
        // Predicated region
        $region761: #{tpu_custom_call.1} parent=35 // pred_check
          %p1344 = pneg %p1340
        $region762: #{tpu_custom_call.1} parent=35 // pred_check_branch
          %1346 = sbr.rel (%p1344) target = $region764
        $region763: #{tpu_custom_call.1} parent=35 // pred_region
          %s1347 = sshllo.u32 0, 1
          loop: start=0, step=1, limit=1
          $region765: #{tpu_custom_call.1} parent=763 // loop_pre_header
            _
          $region766: #{tpu_custom_call.1} parent=763 // loop_header
            %s1349 = sphi 0, %s1353
            %p1350 = scmp.ge.s32.totalorder %s1349, 1
            %s1354 = sphi %s1337, %s1337
            %s1355 = sphi %s1338, %s1338
          $region767: #{tpu_custom_call.1} parent=763 // loop_header_branch
            %1352 = sbr.rel (%p1350) target = $region771
          $region768: #{tpu_custom_call.1} parent=763 // loop_body
            %v1356 = vld [vmem:[%s1354] sm:%s1347]
            %1357 = vst [vmem:[%s1355] sm:%s1347] %v1356
          $region769: #{tpu_custom_call.1} parent=763 // loop_footer
            %s1353 = sadd.s32 1, %s1349
          $region770: #{tpu_custom_call.1} parent=763 // loop_footer_branch
            %1348 = sbr.rel target = $region766
          $region771: #{tpu_custom_call.1} parent=763 // loop_exit
            _
        $region764: #{tpu_custom_call.1} parent=35 // pred_fallthru
          _
        // Predicated region
        $region783: #{tpu_custom_call.1} parent=35 // pred_check
          _
        $region784: #{tpu_custom_call.1} parent=35 // pred_check_branch
          %1381 = sbr.rel (0) target = $region786
        $region785: #{tpu_custom_call.1} parent=35 // pred_region
          %1382 = vsyncadd [#allocation3], 16
        $region786: #{tpu_custom_call.1} parent=35 // pred_fallthru
          _
        %s1383 = sadd.s32 %s184, 25
        %s1384 = sld [smem:[#allocation5 + %s1383]]
        %s1385 = scalar_lea.vmem %s1, %s1384
        %s1386 = scalar_lea.vmem [#allocation2], 11
        %p1388 = scmp.lt.u32.totalorder 1, 8
        %p1389 = pneg %p1388
        // Predicated region
        $region787: #{tpu_custom_call.1} parent=35 // pred_check
          _
        $region788: #{tpu_custom_call.1} parent=35 // pred_check_branch
          %1391 = sbr.rel (%p1388) target = $region790
        $region789: #{tpu_custom_call.1} parent=35 // pred_region
          %s1406 = sand.u32 1, 7
          %p1407 = scmp.eq.s32.totalorder %s1406, 0
          %p1408 = pneg %p1407
          // Predicated region
          $region802: #{tpu_custom_call.1} parent=789 // pred_check
            _
          $region803: #{tpu_custom_call.1} parent=789 // pred_check_branch
            %1410 = sbr.rel (%p1407) target = $region805
          $region804: #{tpu_custom_call.1} parent=789 // pred_region
            %s1411 = sand.u32 1, 7
            %s1412 = ssub.s32 1, %s1411
            %s1413 = scalar_lea.vmem %s1385, %s1412
            %s1414 = ssub.s32 1, %s1411
            %s1415 = scalar_lea.vmem %s1386, %s1414 [#allocation2]
            %s1416 = sshllo.u32 0, %s1411
            loop: start=0, step=1, limit=1
            $region806: #{tpu_custom_call.1} parent=804 // loop_pre_header
              _
            $region807: #{tpu_custom_call.1} parent=804 // loop_header
              %s1418 = sphi 0, %s1422
              %p1419 = scmp.ge.s32.totalorder %s1418, 1
              %s1423 = sphi %s1413, %s1413
              %s1424 = sphi %s1415, %s1415
            $region808: #{tpu_custom_call.1} parent=804 // loop_header_branch
              %1421 = sbr.rel (%p1419) target = $region812
            $region809: #{tpu_custom_call.1} parent=804 // loop_body
              %v1425 = vld [vmem:[%s1423] sm:%s1416]
              %1426 = vst [vmem:[%s1424] sm:%s1416] %v1425
            $region810: #{tpu_custom_call.1} parent=804 // loop_footer
              %s1422 = sadd.s32 1, %s1418
            $region811: #{tpu_custom_call.1} parent=804 // loop_footer_branch
              %1417 = sbr.rel target = $region807
            $region812: #{tpu_custom_call.1} parent=804 // loop_exit
              _
          $region805: #{tpu_custom_call.1} parent=789 // pred_fallthru
            _
        $region790: #{tpu_custom_call.1} parent=35 // pred_fallthru
          _
        // Predicated region
        $region791: #{tpu_custom_call.1} parent=35 // pred_check
          %p1392 = pneg %p1388
        $region792: #{tpu_custom_call.1} parent=35 // pred_check_branch
          %1394 = sbr.rel (%p1392) target = $region794
        $region793: #{tpu_custom_call.1} parent=35 // pred_region
          %s1395 = sshllo.u32 0, 1
          loop: start=0, step=1, limit=1
          $region795: #{tpu_custom_call.1} parent=793 // loop_pre_header
            _
          $region796: #{tpu_custom_call.1} parent=793 // loop_header
            %s1397 = sphi 0, %s1401
            %p1398 = scmp.ge.s32.totalorder %s1397, 1
            %s1402 = sphi %s1385, %s1385
            %s1403 = sphi %s1386, %s1386
          $region797: #{tpu_custom_call.1} parent=793 // loop_header_branch
            %1400 = sbr.rel (%p1398) target = $region801
          $region798: #{tpu_custom_call.1} parent=793 // loop_body
            %v1404 = vld [vmem:[%s1402] sm:%s1395]
            %1405 = vst [vmem:[%s1403] sm:%s1395] %v1404
          $region799: #{tpu_custom_call.1} parent=793 // loop_footer
            %s1401 = sadd.s32 1, %s1397
          $region800: #{tpu_custom_call.1} parent=793 // loop_footer_branch
            %1396 = sbr.rel target = $region796
          $region801: #{tpu_custom_call.1} parent=793 // loop_exit
            _
        $region794: #{tpu_custom_call.1} parent=35 // pred_fallthru
          _
        // Predicated region
        $region813: #{tpu_custom_call.1} parent=35 // pred_check
          _
        $region814: #{tpu_custom_call.1} parent=35 // pred_check_branch
          %1429 = sbr.rel (0) target = $region816
        $region815: #{tpu_custom_call.1} parent=35 // pred_region
          %1430 = vsyncadd [#allocation3], 16
        $region816: #{tpu_custom_call.1} parent=35 // pred_fallthru
          _
        %s1431 = sadd.s32 %s184, 26
        %s1432 = sld [smem:[#allocation5 + %s1431]]
        %s1433 = scalar_lea.vmem %s1, %s1432
        %s1434 = scalar_lea.vmem [#allocation2], 19
        %p1436 = scmp.lt.u32.totalorder 1, 8
        %p1437 = pneg %p1436
        // Predicated region
        $region817: #{tpu_custom_call.1} parent=35 // pred_check
          _
        $region818: #{tpu_custom_call.1} parent=35 // pred_check_branch
          %1439 = sbr.rel (%p1436) target = $region820
        $region819: #{tpu_custom_call.1} parent=35 // pred_region
          %s1454 = sand.u32 1, 7
          %p1455 = scmp.eq.s32.totalorder %s1454, 0
          %p1456 = pneg %p1455
          // Predicated region
          $region832: #{tpu_custom_call.1} parent=819 // pred_check
            _
          $region833: #{tpu_custom_call.1} parent=819 // pred_check_branch
            %1458 = sbr.rel (%p1455) target = $region835
          $region834: #{tpu_custom_call.1} parent=819 // pred_region
            %s1459 = sand.u32 1, 7
            %s1460 = ssub.s32 1, %s1459
            %s1461 = scalar_lea.vmem %s1433, %s1460
            %s1462 = ssub.s32 1, %s1459
            %s1463 = scalar_lea.vmem %s1434, %s1462 [#allocation2]
            %s1464 = sshllo.u32 0, %s1459
            loop: start=0, step=1, limit=1
            $region836: #{tpu_custom_call.1} parent=834 // loop_pre_header
              _
            $region837: #{tpu_custom_call.1} parent=834 // loop_header
              %s1466 = sphi 0, %s1470
              %p1467 = scmp.ge.s32.totalorder %s1466, 1
              %s1471 = sphi %s1461, %s1461
              %s1472 = sphi %s1463, %s1463
            $region838: #{tpu_custom_call.1} parent=834 // loop_header_branch
              %1469 = sbr.rel (%p1467) target = $region842
            $region839: #{tpu_custom_call.1} parent=834 // loop_body
              %v1473 = vld [vmem:[%s1471] sm:%s1464]
              %1474 = vst [vmem:[%s1472] sm:%s1464] %v1473
            $region840: #{tpu_custom_call.1} parent=834 // loop_footer
              %s1470 = sadd.s32 1, %s1466
            $region841: #{tpu_custom_call.1} parent=834 // loop_footer_branch
              %1465 = sbr.rel target = $region837
            $region842: #{tpu_custom_call.1} parent=834 // loop_exit
              _
          $region835: #{tpu_custom_call.1} parent=819 // pred_fallthru
            _
        $region820: #{tpu_custom_call.1} parent=35 // pred_fallthru
          _
        // Predicated region
        $region821: #{tpu_custom_call.1} parent=35 // pred_check
          %p1440 = pneg %p1436
        $region822: #{tpu_custom_call.1} parent=35 // pred_check_branch
          %1442 = sbr.rel (%p1440) target = $region824
        $region823: #{tpu_custom_call.1} parent=35 // pred_region
          %s1443 = sshllo.u32 0, 1
          loop: start=0, step=1, limit=1
          $region825: #{tpu_custom_call.1} parent=823 // loop_pre_header
            _
          $region826: #{tpu_custom_call.1} parent=823 // loop_header
            %s1445 = sphi 0, %s1449
            %p1446 = scmp.ge.s32.totalorder %s1445, 1
            %s1450 = sphi %s1433, %s1433
            %s1451 = sphi %s1434, %s1434
          $region827: #{tpu_custom_call.1} parent=823 // loop_header_branch
            %1448 = sbr.rel (%p1446) target = $region831
          $region828: #{tpu_custom_call.1} parent=823 // loop_body
            %v1452 = vld [vmem:[%s1450] sm:%s1443]
            %1453 = vst [vmem:[%s1451] sm:%s1443] %v1452
          $region829: #{tpu_custom_call.1} parent=823 // loop_footer
            %s1449 = sadd.s32 1, %s1445
          $region830: #{tpu_custom_call.1} parent=823 // loop_footer_branch
            %1444 = sbr.rel target = $region826
          $region831: #{tpu_custom_call.1} parent=823 // loop_exit
            _
        $region824: #{tpu_custom_call.1} parent=35 // pred_fallthru
          _
        // Predicated region
        $region843: #{tpu_custom_call.1} parent=35 // pred_check
          _
        $region844: #{tpu_custom_call.1} parent=35 // pred_check_branch
          %1477 = sbr.rel (0) target = $region846
        $region845: #{tpu_custom_call.1} parent=35 // pred_region
          %1478 = vsyncadd [#allocation3], 16
        $region846: #{tpu_custom_call.1} parent=35 // pred_fallthru
          _
        %s1479 = sadd.s32 %s184, 27
        %s1480 = sld [smem:[#allocation5 + %s1479]]
        %s1481 = scalar_lea.vmem %s1, %s1480
        %s1482 = scalar_lea.vmem [#allocation2], 27
        %p1484 = scmp.lt.u32.totalorder 1, 8
        %p1485 = pneg %p1484
        // Predicated region
        $region847: #{tpu_custom_call.1} parent=35 // pred_check
          _
        $region848: #{tpu_custom_call.1} parent=35 // pred_check_branch
          %1487 = sbr.rel (%p1484) target = $region850
        $region849: #{tpu_custom_call.1} parent=35 // pred_region
          %s1502 = sand.u32 1, 7
          %p1503 = scmp.eq.s32.totalorder %s1502, 0
          %p1504 = pneg %p1503
          // Predicated region
          $region862: #{tpu_custom_call.1} parent=849 // pred_check
            _
          $region863: #{tpu_custom_call.1} parent=849 // pred_check_branch
            %1506 = sbr.rel (%p1503) target = $region865
          $region864: #{tpu_custom_call.1} parent=849 // pred_region
            %s1507 = sand.u32 1, 7
            %s1508 = ssub.s32 1, %s1507
            %s1509 = scalar_lea.vmem %s1481, %s1508
            %s1510 = ssub.s32 1, %s1507
            %s1511 = scalar_lea.vmem %s1482, %s1510 [#allocation2]
            %s1512 = sshllo.u32 0, %s1507
            loop: start=0, step=1, limit=1
            $region866: #{tpu_custom_call.1} parent=864 // loop_pre_header
              _
            $region867: #{tpu_custom_call.1} parent=864 // loop_header
              %s1514 = sphi 0, %s1518
              %p1515 = scmp.ge.s32.totalorder %s1514, 1
              %s1519 = sphi %s1509, %s1509
              %s1520 = sphi %s1511, %s1511
            $region868: #{tpu_custom_call.1} parent=864 // loop_header_branch
              %1517 = sbr.rel (%p1515) target = $region872
            $region869: #{tpu_custom_call.1} parent=864 // loop_body
              %v1521 = vld [vmem:[%s1519] sm:%s1512]
              %1522 = vst [vmem:[%s1520] sm:%s1512] %v1521
            $region870: #{tpu_custom_call.1} parent=864 // loop_footer
              %s1518 = sadd.s32 1, %s1514
            $region871: #{tpu_custom_call.1} parent=864 // loop_footer_branch
              %1513 = sbr.rel target = $region867
            $region872: #{tpu_custom_call.1} parent=864 // loop_exit
              _
          $region865: #{tpu_custom_call.1} parent=849 // pred_fallthru
            _
        $region850: #{tpu_custom_call.1} parent=35 // pred_fallthru
          _
        // Predicated region
        $region851: #{tpu_custom_call.1} parent=35 // pred_check
          %p1488 = pneg %p1484
        $region852: #{tpu_custom_call.1} parent=35 // pred_check_branch
          %1490 = sbr.rel (%p1488) target = $region854
        $region853: #{tpu_custom_call.1} parent=35 // pred_region
          %s1491 = sshllo.u32 0, 1
          loop: start=0, step=1, limit=1
          $region855: #{tpu_custom_call.1} parent=853 // loop_pre_header
            _
          $region856: #{tpu_custom_call.1} parent=853 // loop_header
            %s1493 = sphi 0, %s1497
            %p1494 = scmp.ge.s32.totalorder %s1493, 1
            %s1498 = sphi %s1481, %s1481
            %s1499 = sphi %s1482, %s1482
          $region857: #{tpu_custom_call.1} parent=853 // loop_header_branch
            %1496 = sbr.rel (%p1494) target = $region861
          $region858: #{tpu_custom_call.1} parent=853 // loop_body
            %v1500 = vld [vmem:[%s1498] sm:%s1491]
            %1501 = vst [vmem:[%s1499] sm:%s1491] %v1500
          $region859: #{tpu_custom_call.1} parent=853 // loop_footer
            %s1497 = sadd.s32 1, %s1493
          $region860: #{tpu_custom_call.1} parent=853 // loop_footer_branch
            %1492 = sbr.rel target = $region856
          $region861: #{tpu_custom_call.1} parent=853 // loop_exit
            _
        $region854: #{tpu_custom_call.1} parent=35 // pred_fallthru
          _
        // Predicated region
        $region873: #{tpu_custom_call.1} parent=35 // pred_check
          _
        $region874: #{tpu_custom_call.1} parent=35 // pred_check_branch
          %1525 = sbr.rel (0) target = $region876
        $region875: #{tpu_custom_call.1} parent=35 // pred_region
          %1526 = vsyncadd [#allocation3], 16
        $region876: #{tpu_custom_call.1} parent=35 // pred_fallthru
          _
        %s1527 = sadd.s32 %s184, 28
        %s1528 = sld [smem:[#allocation5 + %s1527]]
        %s1529 = scalar_lea.vmem %s1, %s1528
        %s1530 = scalar_lea.vmem [#allocation2], 35
        %p1532 = scmp.lt.u32.totalorder 1, 8
        %p1533 = pneg %p1532
        // Predicated region
        $region877: #{tpu_custom_call.1} parent=35 // pred_check
          _
        $region878: #{tpu_custom_call.1} parent=35 // pred_check_branch
          %1535 = sbr.rel (%p1532) target = $region880
        $region879: #{tpu_custom_call.1} parent=35 // pred_region
          %s1550 = sand.u32 1, 7
          %p1551 = scmp.eq.s32.totalorder %s1550, 0
          %p1552 = pneg %p1551
          // Predicated region
          $region892: #{tpu_custom_call.1} parent=879 // pred_check
            _
          $region893: #{tpu_custom_call.1} parent=879 // pred_check_branch
            %1554 = sbr.rel (%p1551) target = $region895
          $region894: #{tpu_custom_call.1} parent=879 // pred_region
            %s1555 = sand.u32 1, 7
            %s1556 = ssub.s32 1, %s1555
            %s1557 = scalar_lea.vmem %s1529, %s1556
            %s1558 = ssub.s32 1, %s1555
            %s1559 = scalar_lea.vmem %s1530, %s1558 [#allocation2]
            %s1560 = sshllo.u32 0, %s1555
            loop: start=0, step=1, limit=1
            $region896: #{tpu_custom_call.1} parent=894 // loop_pre_header
              _
            $region897: #{tpu_custom_call.1} parent=894 // loop_header
              %s1562 = sphi 0, %s1566
              %p1563 = scmp.ge.s32.totalorder %s1562, 1
              %s1567 = sphi %s1557, %s1557
              %s1568 = sphi %s1559, %s1559
            $region898: #{tpu_custom_call.1} parent=894 // loop_header_branch
              %1565 = sbr.rel (%p1563) target = $region902
            $region899: #{tpu_custom_call.1} parent=894 // loop_body
              %v1569 = vld [vmem:[%s1567] sm:%s1560]
              %1570 = vst [vmem:[%s1568] sm:%s1560] %v1569
            $region900: #{tpu_custom_call.1} parent=894 // loop_footer
              %s1566 = sadd.s32 1, %s1562
            $region901: #{tpu_custom_call.1} parent=894 // loop_footer_branch
              %1561 = sbr.rel target = $region897
            $region902: #{tpu_custom_call.1} parent=894 // loop_exit
              _
          $region895: #{tpu_custom_call.1} parent=879 // pred_fallthru
            _
        $region880: #{tpu_custom_call.1} parent=35 // pred_fallthru
          _
        // Predicated region
        $region881: #{tpu_custom_call.1} parent=35 // pred_check
          %p1536 = pneg %p1532
        $region882: #{tpu_custom_call.1} parent=35 // pred_check_branch
          %1538 = sbr.rel (%p1536) target = $region884
        $region883: #{tpu_custom_call.1} parent=35 // pred_region
          %s1539 = sshllo.u32 0, 1
          loop: start=0, step=1, limit=1
          $region885: #{tpu_custom_call.1} parent=883 // loop_pre_header
            _
          $region886: #{tpu_custom_call.1} parent=883 // loop_header
            %s1541 = sphi 0, %s1545
            %p1542 = scmp.ge.s32.totalorder %s1541, 1
            %s1546 = sphi %s1529, %s1529
            %s1547 = sphi %s1530, %s1530
          $region887: #{tpu_custom_call.1} parent=883 // loop_header_branch
            %1544 = sbr.rel (%p1542) target = $region891
          $region888: #{tpu_custom_call.1} parent=883 // loop_body
            %v1548 = vld [vmem:[%s1546] sm:%s1539]
            %1549 = vst [vmem:[%s1547] sm:%s1539] %v1548
          $region889: #{tpu_custom_call.1} parent=883 // loop_footer
            %s1545 = sadd.s32 1, %s1541
          $region890: #{tpu_custom_call.1} parent=883 // loop_footer_branch
            %1540 = sbr.rel target = $region886
          $region891: #{tpu_custom_call.1} parent=883 // loop_exit
            _
        $region884: #{tpu_custom_call.1} parent=35 // pred_fallthru
          _
        // Predicated region
        $region903: #{tpu_custom_call.1} parent=35 // pred_check
          _
        $region904: #{tpu_custom_call.1} parent=35 // pred_check_branch
          %1573 = sbr.rel (0) target = $region906
        $region905: #{tpu_custom_call.1} parent=35 // pred_region
          %1574 = vsyncadd [#allocation3], 16
        $region906: #{tpu_custom_call.1} parent=35 // pred_fallthru
          _
        %s1575 = sadd.s32 %s184, 29
        %s1576 = sld [smem:[#allocation5 + %s1575]]
        %s1577 = scalar_lea.vmem %s1, %s1576
        %s1578 = scalar_lea.vmem [#allocation2], 43
        %p1580 = scmp.lt.u32.totalorder 1, 8
        %p1581 = pneg %p1580
        // Predicated region
        $region907: #{tpu_custom_call.1} parent=35 // pred_check
          _
        $region908: #{tpu_custom_call.1} parent=35 // pred_check_branch
          %1583 = sbr.rel (%p1580) target = $region910
        $region909: #{tpu_custom_call.1} parent=35 // pred_region
          %s1598 = sand.u32 1, 7
          %p1599 = scmp.eq.s32.totalorder %s1598, 0
          %p1600 = pneg %p1599
          // Predicated region
          $region922: #{tpu_custom_call.1} parent=909 // pred_check
            _
          $region923: #{tpu_custom_call.1} parent=909 // pred_check_branch
            %1602 = sbr.rel (%p1599) target = $region925
          $region924: #{tpu_custom_call.1} parent=909 // pred_region
            %s1603 = sand.u32 1, 7
            %s1604 = ssub.s32 1, %s1603
            %s1605 = scalar_lea.vmem %s1577, %s1604
            %s1606 = ssub.s32 1, %s1603
            %s1607 = scalar_lea.vmem %s1578, %s1606 [#allocation2]
            %s1608 = sshllo.u32 0, %s1603
            loop: start=0, step=1, limit=1
            $region926: #{tpu_custom_call.1} parent=924 // loop_pre_header
              _
            $region927: #{tpu_custom_call.1} parent=924 // loop_header
              %s1610 = sphi 0, %s1614
              %p1611 = scmp.ge.s32.totalorder %s1610, 1
              %s1615 = sphi %s1605, %s1605
              %s1616 = sphi %s1607, %s1607
            $region928: #{tpu_custom_call.1} parent=924 // loop_header_branch
              %1613 = sbr.rel (%p1611) target = $region932
            $region929: #{tpu_custom_call.1} parent=924 // loop_body
              %v1617 = vld [vmem:[%s1615] sm:%s1608]
              %1618 = vst [vmem:[%s1616] sm:%s1608] %v1617
            $region930: #{tpu_custom_call.1} parent=924 // loop_footer
              %s1614 = sadd.s32 1, %s1610
            $region931: #{tpu_custom_call.1} parent=924 // loop_footer_branch
              %1609 = sbr.rel target = $region927
            $region932: #{tpu_custom_call.1} parent=924 // loop_exit
              _
          $region925: #{tpu_custom_call.1} parent=909 // pred_fallthru
            _
        $region910: #{tpu_custom_call.1} parent=35 // pred_fallthru
          _
        // Predicated region
        $region911: #{tpu_custom_call.1} parent=35 // pred_check
          %p1584 = pneg %p1580
        $region912: #{tpu_custom_call.1} parent=35 // pred_check_branch
          %1586 = sbr.rel (%p1584) target = $region914
        $region913: #{tpu_custom_call.1} parent=35 // pred_region
          %s1587 = sshllo.u32 0, 1
          loop: start=0, step=1, limit=1
          $region915: #{tpu_custom_call.1} parent=913 // loop_pre_header
            _
          $region916: #{tpu_custom_call.1} parent=913 // loop_header
            %s1589 = sphi 0, %s1593
            %p1590 = scmp.ge.s32.totalorder %s1589, 1
            %s1594 = sphi %s1577, %s1577
            %s1595 = sphi %s1578, %s1578
          $region917: #{tpu_custom_call.1} parent=913 // loop_header_branch
            %1592 = sbr.rel (%p1590) target = $region921
          $region918: #{tpu_custom_call.1} parent=913 // loop_body
            %v1596 = vld [vmem:[%s1594] sm:%s1587]
            %1597 = vst [vmem:[%s1595] sm:%s1587] %v1596
          $region919: #{tpu_custom_call.1} parent=913 // loop_footer
            %s1593 = sadd.s32 1, %s1589
          $region920: #{tpu_custom_call.1} parent=913 // loop_footer_branch
            %1588 = sbr.rel target = $region916
          $region921: #{tpu_custom_call.1} parent=913 // loop_exit
            _
        $region914: #{tpu_custom_call.1} parent=35 // pred_fallthru
          _
        // Predicated region
        $region933: #{tpu_custom_call.1} parent=35 // pred_check
          _
        $region934: #{tpu_custom_call.1} parent=35 // pred_check_branch
          %1621 = sbr.rel (0) target = $region936
        $region935: #{tpu_custom_call.1} parent=35 // pred_region
          %1622 = vsyncadd [#allocation3], 16
        $region936: #{tpu_custom_call.1} parent=35 // pred_fallthru
          _
        %s1623 = sadd.s32 %s184, 30
        %s1624 = sld [smem:[#allocation5 + %s1623]]
        %s1625 = scalar_lea.vmem %s1, %s1624
        %s1626 = scalar_lea.vmem [#allocation2], 51
        %p1628 = scmp.lt.u32.totalorder 1, 8
        %p1629 = pneg %p1628
        // Predicated region
        $region937: #{tpu_custom_call.1} parent=35 // pred_check
          _
        $region938: #{tpu_custom_call.1} parent=35 // pred_check_branch
          %1631 = sbr.rel (%p1628) target = $region940
        $region939: #{tpu_custom_call.1} parent=35 // pred_region
          %s1646 = sand.u32 1, 7
          %p1647 = scmp.eq.s32.totalorder %s1646, 0
          %p1648 = pneg %p1647
          // Predicated region
          $region952: #{tpu_custom_call.1} parent=939 // pred_check
            _
          $region953: #{tpu_custom_call.1} parent=939 // pred_check_branch
            %1650 = sbr.rel (%p1647) target = $region955
          $region954: #{tpu_custom_call.1} parent=939 // pred_region
            %s1651 = sand.u32 1, 7
            %s1652 = ssub.s32 1, %s1651
            %s1653 = scalar_lea.vmem %s1625, %s1652
            %s1654 = ssub.s32 1, %s1651
            %s1655 = scalar_lea.vmem %s1626, %s1654 [#allocation2]
            %s1656 = sshllo.u32 0, %s1651
            loop: start=0, step=1, limit=1
            $region956: #{tpu_custom_call.1} parent=954 // loop_pre_header
              _
            $region957: #{tpu_custom_call.1} parent=954 // loop_header
              %s1658 = sphi 0, %s1662
              %p1659 = scmp.ge.s32.totalorder %s1658, 1
              %s1663 = sphi %s1653, %s1653
              %s1664 = sphi %s1655, %s1655
            $region958: #{tpu_custom_call.1} parent=954 // loop_header_branch
              %1661 = sbr.rel (%p1659) target = $region962
            $region959: #{tpu_custom_call.1} parent=954 // loop_body
              %v1665 = vld [vmem:[%s1663] sm:%s1656]
              %1666 = vst [vmem:[%s1664] sm:%s1656] %v1665
            $region960: #{tpu_custom_call.1} parent=954 // loop_footer
              %s1662 = sadd.s32 1, %s1658
            $region961: #{tpu_custom_call.1} parent=954 // loop_footer_branch
              %1657 = sbr.rel target = $region957
            $region962: #{tpu_custom_call.1} parent=954 // loop_exit
              _
          $region955: #{tpu_custom_call.1} parent=939 // pred_fallthru
            _
        $region940: #{tpu_custom_call.1} parent=35 // pred_fallthru
          _
        // Predicated region
        $region941: #{tpu_custom_call.1} parent=35 // pred_check
          %p1632 = pneg %p1628
        $region942: #{tpu_custom_call.1} parent=35 // pred_check_branch
          %1634 = sbr.rel (%p1632) target = $region944
        $region943: #{tpu_custom_call.1} parent=35 // pred_region
          %s1635 = sshllo.u32 0, 1
          loop: start=0, step=1, limit=1
          $region945: #{tpu_custom_call.1} parent=943 // loop_pre_header
            _
          $region946: #{tpu_custom_call.1} parent=943 // loop_header
            %s1637 = sphi 0, %s1641
            %p1638 = scmp.ge.s32.totalorder %s1637, 1
            %s1642 = sphi %s1625, %s1625
            %s1643 = sphi %s1626, %s1626
          $region947: #{tpu_custom_call.1} parent=943 // loop_header_branch
            %1640 = sbr.rel (%p1638) target = $region951
          $region948: #{tpu_custom_call.1} parent=943 // loop_body
            %v1644 = vld [vmem:[%s1642] sm:%s1635]
            %1645 = vst [vmem:[%s1643] sm:%s1635] %v1644
          $region949: #{tpu_custom_call.1} parent=943 // loop_footer
            %s1641 = sadd.s32 1, %s1637
          $region950: #{tpu_custom_call.1} parent=943 // loop_footer_branch
            %1636 = sbr.rel target = $region946
          $region951: #{tpu_custom_call.1} parent=943 // loop_exit
            _
        $region944: #{tpu_custom_call.1} parent=35 // pred_fallthru
          _
        // Predicated region
        $region963: #{tpu_custom_call.1} parent=35 // pred_check
          _
        $region964: #{tpu_custom_call.1} parent=35 // pred_check_branch
          %1669 = sbr.rel (0) target = $region966
        $region965: #{tpu_custom_call.1} parent=35 // pred_region
          %1670 = vsyncadd [#allocation3], 16
        $region966: #{tpu_custom_call.1} parent=35 // pred_fallthru
          _
        %s1671 = sadd.s32 %s184, 31
        %s1672 = sld [smem:[#allocation5 + %s1671]]
        %s1673 = scalar_lea.vmem %s1, %s1672
        %s1674 = scalar_lea.vmem [#allocation2], 59
        %p1676 = scmp.lt.u32.totalorder 1, 8
        %p1677 = pneg %p1676
        // Predicated region
        $region967: #{tpu_custom_call.1} parent=35 // pred_check
          _
        $region968: #{tpu_custom_call.1} parent=35 // pred_check_branch
          %1679 = sbr.rel (%p1676) target = $region970
        $region969: #{tpu_custom_call.1} parent=35 // pred_region
          %s1694 = sand.u32 1, 7
          %p1695 = scmp.eq.s32.totalorder %s1694, 0
          %p1696 = pneg %p1695
          // Predicated region
          $region982: #{tpu_custom_call.1} parent=969 // pred_check
            _
          $region983: #{tpu_custom_call.1} parent=969 // pred_check_branch
            %1698 = sbr.rel (%p1695) target = $region985
          $region984: #{tpu_custom_call.1} parent=969 // pred_region
            %s1699 = sand.u32 1, 7
            %s1700 = ssub.s32 1, %s1699
            %s1701 = scalar_lea.vmem %s1673, %s1700
            %s1702 = ssub.s32 1, %s1699
            %s1703 = scalar_lea.vmem %s1674, %s1702 [#allocation2]
            %s1704 = sshllo.u32 0, %s1699
            loop: start=0, step=1, limit=1
            $region986: #{tpu_custom_call.1} parent=984 // loop_pre_header
              _
            $region987: #{tpu_custom_call.1} parent=984 // loop_header
              %s1706 = sphi 0, %s1710
              %p1707 = scmp.ge.s32.totalorder %s1706, 1
              %s1711 = sphi %s1701, %s1701
              %s1712 = sphi %s1703, %s1703
            $region988: #{tpu_custom_call.1} parent=984 // loop_header_branch
              %1709 = sbr.rel (%p1707) target = $region992
            $region989: #{tpu_custom_call.1} parent=984 // loop_body
              %v1713 = vld [vmem:[%s1711] sm:%s1704]
              %1714 = vst [vmem:[%s1712] sm:%s1704] %v1713
            $region990: #{tpu_custom_call.1} parent=984 // loop_footer
              %s1710 = sadd.s32 1, %s1706
            $region991: #{tpu_custom_call.1} parent=984 // loop_footer_branch
              %1705 = sbr.rel target = $region987
            $region992: #{tpu_custom_call.1} parent=984 // loop_exit
              _
          $region985: #{tpu_custom_call.1} parent=969 // pred_fallthru
            _
        $region970: #{tpu_custom_call.1} parent=35 // pred_fallthru
          _
        // Predicated region
        $region971: #{tpu_custom_call.1} parent=35 // pred_check
          %p1680 = pneg %p1676
        $region972: #{tpu_custom_call.1} parent=35 // pred_check_branch
          %1682 = sbr.rel (%p1680) target = $region974
        $region973: #{tpu_custom_call.1} parent=35 // pred_region
          %s1683 = sshllo.u32 0, 1
          loop: start=0, step=1, limit=1
          $region975: #{tpu_custom_call.1} parent=973 // loop_pre_header
            _
          $region976: #{tpu_custom_call.1} parent=973 // loop_header
            %s1685 = sphi 0, %s1689
            %p1686 = scmp.ge.s32.totalorder %s1685, 1
            %s1690 = sphi %s1673, %s1673
            %s1691 = sphi %s1674, %s1674
          $region977: #{tpu_custom_call.1} parent=973 // loop_header_branch
            %1688 = sbr.rel (%p1686) target = $region981
          $region978: #{tpu_custom_call.1} parent=973 // loop_body
            %v1692 = vld [vmem:[%s1690] sm:%s1683]
            %1693 = vst [vmem:[%s1691] sm:%s1683] %v1692
          $region979: #{tpu_custom_call.1} parent=973 // loop_footer
            %s1689 = sadd.s32 1, %s1685
          $region980: #{tpu_custom_call.1} parent=973 // loop_footer_branch
            %1684 = sbr.rel target = $region976
          $region981: #{tpu_custom_call.1} parent=973 // loop_exit
            _
        $region974: #{tpu_custom_call.1} parent=35 // pred_fallthru
          _
        // Predicated region
        $region993: #{tpu_custom_call.1} parent=35 // pred_check
          _
        $region994: #{tpu_custom_call.1} parent=35 // pred_check_branch
          %1717 = sbr.rel (0) target = $region996
        $region995: #{tpu_custom_call.1} parent=35 // pred_region
          %1718 = vsyncadd [#allocation3], 16
        $region996: #{tpu_custom_call.1} parent=35 // pred_fallthru
          _
        %s1719 = sadd.s32 %s184, 32
        %s1720 = sld [smem:[#allocation5 + %s1719]]
        %s1721 = scalar_lea.vmem %s1, %s1720
        %s1722 = scalar_lea.vmem [#allocation2], 4
        %p1724 = scmp.lt.u32.totalorder 1, 8
        %p1725 = pneg %p1724
        // Predicated region
        $region997: #{tpu_custom_call.1} parent=35 // pred_check
          _
        $region998: #{tpu_custom_call.1} parent=35 // pred_check_branch
          %1727 = sbr.rel (%p1724) target = $region1000
        $region999: #{tpu_custom_call.1} parent=35 // pred_region
          %s1742 = sand.u32 1, 7
          %p1743 = scmp.eq.s32.totalorder %s1742, 0
          %p1744 = pneg %p1743
          // Predicated region
          $region1012: #{tpu_custom_call.1} parent=999 // pred_check
            _
          $region1013: #{tpu_custom_call.1} parent=999 // pred_check_branch
            %1746 = sbr.rel (%p1743) target = $region1015
          $region1014: #{tpu_custom_call.1} parent=999 // pred_region
            %s1747 = sand.u32 1, 7
            %s1748 = ssub.s32 1, %s1747
            %s1749 = scalar_lea.vmem %s1721, %s1748
            %s1750 = ssub.s32 1, %s1747
            %s1751 = scalar_lea.vmem %s1722, %s1750 [#allocation2]
            %s1752 = sshllo.u32 0, %s1747
            loop: start=0, step=1, limit=1
            $region1016: #{tpu_custom_call.1} parent=1014 // loop_pre_header
              _
            $region1017: #{tpu_custom_call.1} parent=1014 // loop_header
              %s1754 = sphi 0, %s1758
              %p1755 = scmp.ge.s32.totalorder %s1754, 1
              %s1759 = sphi %s1749, %s1749
              %s1760 = sphi %s1751, %s1751
            $region1018: #{tpu_custom_call.1} parent=1014 // loop_header_branch
              %1757 = sbr.rel (%p1755) target = $region1022
            $region1019: #{tpu_custom_call.1} parent=1014 // loop_body
              %v1761 = vld [vmem:[%s1759] sm:%s1752]
              %1762 = vst [vmem:[%s1760] sm:%s1752] %v1761
            $region1020: #{tpu_custom_call.1} parent=1014 // loop_footer
              %s1758 = sadd.s32 1, %s1754
            $region1021: #{tpu_custom_call.1} parent=1014 // loop_footer_branch
              %1753 = sbr.rel target = $region1017
            $region1022: #{tpu_custom_call.1} parent=1014 // loop_exit
              _
          $region1015: #{tpu_custom_call.1} parent=999 // pred_fallthru
            _
        $region1000: #{tpu_custom_call.1} parent=35 // pred_fallthru
          _
        // Predicated region
        $region1001: #{tpu_custom_call.1} parent=35 // pred_check
          %p1728 = pneg %p1724
        $region1002: #{tpu_custom_call.1} parent=35 // pred_check_branch
          %1730 = sbr.rel (%p1728) target = $region1004
        $region1003: #{tpu_custom_call.1} parent=35 // pred_region
          %s1731 = sshllo.u32 0, 1
          loop: start=0, step=1, limit=1
          $region1005: #{tpu_custom_call.1} parent=1003 // loop_pre_header
            _
          $region1006: #{tpu_custom_call.1} parent=1003 // loop_header
            %s1733 = sphi 0, %s1737
            %p1734 = scmp.ge.s32.totalorder %s1733, 1
            %s1738 = sphi %s1721, %s1721
            %s1739 = sphi %s1722, %s1722
          $region1007: #{tpu_custom_call.1} parent=1003 // loop_header_branch
            %1736 = sbr.rel (%p1734) target = $region1011
          $region1008: #{tpu_custom_call.1} parent=1003 // loop_body
            %v1740 = vld [vmem:[%s1738] sm:%s1731]
            %1741 = vst [vmem:[%s1739] sm:%s1731] %v1740
          $region1009: #{tpu_custom_call.1} parent=1003 // loop_footer
            %s1737 = sadd.s32 1, %s1733
          $region1010: #{tpu_custom_call.1} parent=1003 // loop_footer_branch
            %1732 = sbr.rel target = $region1006
          $region1011: #{tpu_custom_call.1} parent=1003 // loop_exit
            _
        $region1004: #{tpu_custom_call.1} parent=35 // pred_fallthru
          _
        // Predicated region
        $region1023: #{tpu_custom_call.1} parent=35 // pred_check
          _
        $region1024: #{tpu_custom_call.1} parent=35 // pred_check_branch
          %1765 = sbr.rel (0) target = $region1026
        $region1025: #{tpu_custom_call.1} parent=35 // pred_region
          %1766 = vsyncadd [#allocation3], 16
        $region1026: #{tpu_custom_call.1} parent=35 // pred_fallthru
          _
        %s1767 = sadd.s32 %s184, 33
        %s1768 = sld [smem:[#allocation5 + %s1767]]
        %s1769 = scalar_lea.vmem %s1, %s1768
        %s1770 = scalar_lea.vmem [#allocation2], 12
        %p1772 = scmp.lt.u32.totalorder 1, 8
        %p1773 = pneg %p1772
        // Predicated region
        $region1027: #{tpu_custom_call.1} parent=35 // pred_check
          _
        $region1028: #{tpu_custom_call.1} parent=35 // pred_check_branch
          %1775 = sbr.rel (%p1772) target = $region1030
        $region1029: #{tpu_custom_call.1} parent=35 // pred_region
          %s1790 = sand.u32 1, 7
          %p1791 = scmp.eq.s32.totalorder %s1790, 0
          %p1792 = pneg %p1791
          // Predicated region
          $region1042: #{tpu_custom_call.1} parent=1029 // pred_check
            _
          $region1043: #{tpu_custom_call.1} parent=1029 // pred_check_branch
            %1794 = sbr.rel (%p1791) target = $region1045
          $region1044: #{tpu_custom_call.1} parent=1029 // pred_region
            %s1795 = sand.u32 1, 7
            %s1796 = ssub.s32 1, %s1795
            %s1797 = scalar_lea.vmem %s1769, %s1796
            %s1798 = ssub.s32 1, %s1795
            %s1799 = scalar_lea.vmem %s1770, %s1798 [#allocation2]
            %s1800 = sshllo.u32 0, %s1795
            loop: start=0, step=1, limit=1
            $region1046: #{tpu_custom_call.1} parent=1044 // loop_pre_header
              _
            $region1047: #{tpu_custom_call.1} parent=1044 // loop_header
              %s1802 = sphi 0, %s1806
              %p1803 = scmp.ge.s32.totalorder %s1802, 1
              %s1807 = sphi %s1797, %s1797
              %s1808 = sphi %s1799, %s1799
            $region1048: #{tpu_custom_call.1} parent=1044 // loop_header_branch
              %1805 = sbr.rel (%p1803) target = $region1052
            $region1049: #{tpu_custom_call.1} parent=1044 // loop_body
              %v1809 = vld [vmem:[%s1807] sm:%s1800]
              %1810 = vst [vmem:[%s1808] sm:%s1800] %v1809
            $region1050: #{tpu_custom_call.1} parent=1044 // loop_footer
              %s1806 = sadd.s32 1, %s1802
            $region1051: #{tpu_custom_call.1} parent=1044 // loop_footer_branch
              %1801 = sbr.rel target = $region1047
            $region1052: #{tpu_custom_call.1} parent=1044 // loop_exit
              _
          $region1045: #{tpu_custom_call.1} parent=1029 // pred_fallthru
            _
        $region1030: #{tpu_custom_call.1} parent=35 // pred_fallthru
          _
        // Predicated region
        $region1031: #{tpu_custom_call.1} parent=35 // pred_check
          %p1776 = pneg %p1772
        $region1032: #{tpu_custom_call.1} parent=35 // pred_check_branch
          %1778 = sbr.rel (%p1776) target = $region1034
        $region1033: #{tpu_custom_call.1} parent=35 // pred_region
          %s1779 = sshllo.u32 0, 1
          loop: start=0, step=1, limit=1
          $region1035: #{tpu_custom_call.1} parent=1033 // loop_pre_header
            _
          $region1036: #{tpu_custom_call.1} parent=1033 // loop_header
            %s1781 = sphi 0, %s1785
            %p1782 = scmp.ge.s32.totalorder %s1781, 1
            %s1786 = sphi %s1769, %s1769
            %s1787 = sphi %s1770, %s1770
          $region1037: #{tpu_custom_call.1} parent=1033 // loop_header_branch
            %1784 = sbr.rel (%p1782) target = $region1041
          $region1038: #{tpu_custom_call.1} parent=1033 // loop_body
            %v1788 = vld [vmem:[%s1786] sm:%s1779]
            %1789 = vst [vmem:[%s1787] sm:%s1779] %v1788
          $region1039: #{tpu_custom_call.1} parent=1033 // loop_footer
            %s1785 = sadd.s32 1, %s1781
          $region1040: #{tpu_custom_call.1} parent=1033 // loop_footer_branch
            %1780 = sbr.rel target = $region1036
          $region1041: #{tpu_custom_call.1} parent=1033 // loop_exit
            _
        $region1034: #{tpu_custom_call.1} parent=35 // pred_fallthru
          _
        // Predicated region
        $region1053: #{tpu_custom_call.1} parent=35 // pred_check
          _
        $region1054: #{tpu_custom_call.1} parent=35 // pred_check_branch
          %1813 = sbr.rel (0) target = $region1056
        $region1055: #{tpu_custom_call.1} parent=35 // pred_region
          %1814 = vsyncadd [#allocation3], 16
        $region1056: #{tpu_custom_call.1} parent=35 // pred_fallthru
          _
        %s1815 = sadd.s32 %s184, 34
        %s1816 = sld [smem:[#allocation5 + %s1815]]
        %s1817 = scalar_lea.vmem %s1, %s1816
        %s1818 = scalar_lea.vmem [#allocation2], 20
        %p1820 = scmp.lt.u32.totalorder 1, 8
        %p1821 = pneg %p1820
        // Predicated region
        $region1057: #{tpu_custom_call.1} parent=35 // pred_check
          _
        $region1058: #{tpu_custom_call.1} parent=35 // pred_check_branch
          %1823 = sbr.rel (%p1820) target = $region1060
        $region1059: #{tpu_custom_call.1} parent=35 // pred_region
          %s1838 = sand.u32 1, 7
          %p1839 = scmp.eq.s32.totalorder %s1838, 0
          %p1840 = pneg %p1839
          // Predicated region
          $region1072: #{tpu_custom_call.1} parent=1059 // pred_check
            _
          $region1073: #{tpu_custom_call.1} parent=1059 // pred_check_branch
            %1842 = sbr.rel (%p1839) target = $region1075
          $region1074: #{tpu_custom_call.1} parent=1059 // pred_region
            %s1843 = sand.u32 1, 7
            %s1844 = ssub.s32 1, %s1843
            %s1845 = scalar_lea.vmem %s1817, %s1844
            %s1846 = ssub.s32 1, %s1843
            %s1847 = scalar_lea.vmem %s1818, %s1846 [#allocation2]
            %s1848 = sshllo.u32 0, %s1843
            loop: start=0, step=1, limit=1
            $region1076: #{tpu_custom_call.1} parent=1074 // loop_pre_header
              _
            $region1077: #{tpu_custom_call.1} parent=1074 // loop_header
              %s1850 = sphi 0, %s1854
              %p1851 = scmp.ge.s32.totalorder %s1850, 1
              %s1855 = sphi %s1845, %s1845
              %s1856 = sphi %s1847, %s1847
            $region1078: #{tpu_custom_call.1} parent=1074 // loop_header_branch
              %1853 = sbr.rel (%p1851) target = $region1082
            $region1079: #{tpu_custom_call.1} parent=1074 // loop_body
              %v1857 = vld [vmem:[%s1855] sm:%s1848]
              %1858 = vst [vmem:[%s1856] sm:%s1848] %v1857
            $region1080: #{tpu_custom_call.1} parent=1074 // loop_footer
              %s1854 = sadd.s32 1, %s1850
            $region1081: #{tpu_custom_call.1} parent=1074 // loop_footer_branch
              %1849 = sbr.rel target = $region1077
            $region1082: #{tpu_custom_call.1} parent=1074 // loop_exit
              _
          $region1075: #{tpu_custom_call.1} parent=1059 // pred_fallthru
            _
        $region1060: #{tpu_custom_call.1} parent=35 // pred_fallthru
          _
        // Predicated region
        $region1061: #{tpu_custom_call.1} parent=35 // pred_check
          %p1824 = pneg %p1820
        $region1062: #{tpu_custom_call.1} parent=35 // pred_check_branch
          %1826 = sbr.rel (%p1824) target = $region1064
        $region1063: #{tpu_custom_call.1} parent=35 // pred_region
          %s1827 = sshllo.u32 0, 1
          loop: start=0, step=1, limit=1
          $region1065: #{tpu_custom_call.1} parent=1063 // loop_pre_header
            _
          $region1066: #{tpu_custom_call.1} parent=1063 // loop_header
            %s1829 = sphi 0, %s1833
            %p1830 = scmp.ge.s32.totalorder %s1829, 1
            %s1834 = sphi %s1817, %s1817
            %s1835 = sphi %s1818, %s1818
          $region1067: #{tpu_custom_call.1} parent=1063 // loop_header_branch
            %1832 = sbr.rel (%p1830) target = $region1071
          $region1068: #{tpu_custom_call.1} parent=1063 // loop_body
            %v1836 = vld [vmem:[%s1834] sm:%s1827]
            %1837 = vst [vmem:[%s1835] sm:%s1827] %v1836
          $region1069: #{tpu_custom_call.1} parent=1063 // loop_footer
            %s1833 = sadd.s32 1, %s1829
          $region1070: #{tpu_custom_call.1} parent=1063 // loop_footer_branch
            %1828 = sbr.rel target = $region1066
          $region1071: #{tpu_custom_call.1} parent=1063 // loop_exit
            _
        $region1064: #{tpu_custom_call.1} parent=35 // pred_fallthru
          _
        // Predicated region
        $region1083: #{tpu_custom_call.1} parent=35 // pred_check
          _
        $region1084: #{tpu_custom_call.1} parent=35 // pred_check_branch
          %1861 = sbr.rel (0) target = $region1086
        $region1085: #{tpu_custom_call.1} parent=35 // pred_region
          %1862 = vsyncadd [#allocation3], 16
        $region1086: #{tpu_custom_call.1} parent=35 // pred_fallthru
          _
        %s1863 = sadd.s32 %s184, 35
        %s1864 = sld [smem:[#allocation5 + %s1863]]
        %s1865 = scalar_lea.vmem %s1, %s1864
        %s1866 = scalar_lea.vmem [#allocation2], 28
        %p1868 = scmp.lt.u32.totalorder 1, 8
        %p1869 = pneg %p1868
        // Predicated region
        $region1087: #{tpu_custom_call.1} parent=35 // pred_check
          _
        $region1088: #{tpu_custom_call.1} parent=35 // pred_check_branch
          %1871 = sbr.rel (%p1868) target = $region1090
        $region1089: #{tpu_custom_call.1} parent=35 // pred_region
          %s1886 = sand.u32 1, 7
          %p1887 = scmp.eq.s32.totalorder %s1886, 0
          %p1888 = pneg %p1887
          // Predicated region
          $region1102: #{tpu_custom_call.1} parent=1089 // pred_check
            _
          $region1103: #{tpu_custom_call.1} parent=1089 // pred_check_branch
            %1890 = sbr.rel (%p1887) target = $region1105
          $region1104: #{tpu_custom_call.1} parent=1089 // pred_region
            %s1891 = sand.u32 1, 7
            %s1892 = ssub.s32 1, %s1891
            %s1893 = scalar_lea.vmem %s1865, %s1892
            %s1894 = ssub.s32 1, %s1891
            %s1895 = scalar_lea.vmem %s1866, %s1894 [#allocation2]
            %s1896 = sshllo.u32 0, %s1891
            loop: start=0, step=1, limit=1
            $region1106: #{tpu_custom_call.1} parent=1104 // loop_pre_header
              _
            $region1107: #{tpu_custom_call.1} parent=1104 // loop_header
              %s1898 = sphi 0, %s1902
              %p1899 = scmp.ge.s32.totalorder %s1898, 1
              %s1903 = sphi %s1893, %s1893
              %s1904 = sphi %s1895, %s1895
            $region1108: #{tpu_custom_call.1} parent=1104 // loop_header_branch
              %1901 = sbr.rel (%p1899) target = $region1112
            $region1109: #{tpu_custom_call.1} parent=1104 // loop_body
              %v1905 = vld [vmem:[%s1903] sm:%s1896]
              %1906 = vst [vmem:[%s1904] sm:%s1896] %v1905
            $region1110: #{tpu_custom_call.1} parent=1104 // loop_footer
              %s1902 = sadd.s32 1, %s1898
            $region1111: #{tpu_custom_call.1} parent=1104 // loop_footer_branch
              %1897 = sbr.rel target = $region1107
            $region1112: #{tpu_custom_call.1} parent=1104 // loop_exit
              _
          $region1105: #{tpu_custom_call.1} parent=1089 // pred_fallthru
            _
        $region1090: #{tpu_custom_call.1} parent=35 // pred_fallthru
          _
        // Predicated region
        $region1091: #{tpu_custom_call.1} parent=35 // pred_check
          %p1872 = pneg %p1868
        $region1092: #{tpu_custom_call.1} parent=35 // pred_check_branch
          %1874 = sbr.rel (%p1872) target = $region1094
        $region1093: #{tpu_custom_call.1} parent=35 // pred_region
          %s1875 = sshllo.u32 0, 1
          loop: start=0, step=1, limit=1
          $region1095: #{tpu_custom_call.1} parent=1093 // loop_pre_header
            _
          $region1096: #{tpu_custom_call.1} parent=1093 // loop_header
            %s1877 = sphi 0, %s1881
            %p1878 = scmp.ge.s32.totalorder %s1877, 1
            %s1882 = sphi %s1865, %s1865
            %s1883 = sphi %s1866, %s1866
          $region1097: #{tpu_custom_call.1} parent=1093 // loop_header_branch
            %1880 = sbr.rel (%p1878) target = $region1101
          $region1098: #{tpu_custom_call.1} parent=1093 // loop_body
            %v1884 = vld [vmem:[%s1882] sm:%s1875]
            %1885 = vst [vmem:[%s1883] sm:%s1875] %v1884
          $region1099: #{tpu_custom_call.1} parent=1093 // loop_footer
            %s1881 = sadd.s32 1, %s1877
          $region1100: #{tpu_custom_call.1} parent=1093 // loop_footer_branch
            %1876 = sbr.rel target = $region1096
          $region1101: #{tpu_custom_call.1} parent=1093 // loop_exit
            _
        $region1094: #{tpu_custom_call.1} parent=35 // pred_fallthru
          _
        // Predicated region
        $region1113: #{tpu_custom_call.1} parent=35 // pred_check
          _
        $region1114: #{tpu_custom_call.1} parent=35 // pred_check_branch
          %1909 = sbr.rel (0) target = $region1116
        $region1115: #{tpu_custom_call.1} parent=35 // pred_region
          %1910 = vsyncadd [#allocation3], 16
        $region1116: #{tpu_custom_call.1} parent=35 // pred_fallthru
          _
        %s1911 = sadd.s32 %s184, 36
        %s1912 = sld [smem:[#allocation5 + %s1911]]
        %s1913 = scalar_lea.vmem %s1, %s1912
        %s1914 = scalar_lea.vmem [#allocation2], 36
        %p1916 = scmp.lt.u32.totalorder 1, 8
        %p1917 = pneg %p1916
        // Predicated region
        $region1117: #{tpu_custom_call.1} parent=35 // pred_check
          _
        $region1118: #{tpu_custom_call.1} parent=35 // pred_check_branch
          %1919 = sbr.rel (%p1916) target = $region1120
        $region1119: #{tpu_custom_call.1} parent=35 // pred_region
          %s1934 = sand.u32 1, 7
          %p1935 = scmp.eq.s32.totalorder %s1934, 0
          %p1936 = pneg %p1935
          // Predicated region
          $region1132: #{tpu_custom_call.1} parent=1119 // pred_check
            _
          $region1133: #{tpu_custom_call.1} parent=1119 // pred_check_branch
            %1938 = sbr.rel (%p1935) target = $region1135
          $region1134: #{tpu_custom_call.1} parent=1119 // pred_region
            %s1939 = sand.u32 1, 7
            %s1940 = ssub.s32 1, %s1939
            %s1941 = scalar_lea.vmem %s1913, %s1940
            %s1942 = ssub.s32 1, %s1939
            %s1943 = scalar_lea.vmem %s1914, %s1942 [#allocation2]
            %s1944 = sshllo.u32 0, %s1939
            loop: start=0, step=1, limit=1
            $region1136: #{tpu_custom_call.1} parent=1134 // loop_pre_header
              _
            $region1137: #{tpu_custom_call.1} parent=1134 // loop_header
              %s1946 = sphi 0, %s1950
              %p1947 = scmp.ge.s32.totalorder %s1946, 1
              %s1951 = sphi %s1941, %s1941
              %s1952 = sphi %s1943, %s1943
            $region1138: #{tpu_custom_call.1} parent=1134 // loop_header_branch
              %1949 = sbr.rel (%p1947) target = $region1142
            $region1139: #{tpu_custom_call.1} parent=1134 // loop_body
              %v1953 = vld [vmem:[%s1951] sm:%s1944]
              %1954 = vst [vmem:[%s1952] sm:%s1944] %v1953
            $region1140: #{tpu_custom_call.1} parent=1134 // loop_footer
              %s1950 = sadd.s32 1, %s1946
            $region1141: #{tpu_custom_call.1} parent=1134 // loop_footer_branch
              %1945 = sbr.rel target = $region1137
            $region1142: #{tpu_custom_call.1} parent=1134 // loop_exit
              _
          $region1135: #{tpu_custom_call.1} parent=1119 // pred_fallthru
            _
        $region1120: #{tpu_custom_call.1} parent=35 // pred_fallthru
          _
        // Predicated region
        $region1121: #{tpu_custom_call.1} parent=35 // pred_check
          %p1920 = pneg %p1916
        $region1122: #{tpu_custom_call.1} parent=35 // pred_check_branch
          %1922 = sbr.rel (%p1920) target = $region1124
        $region1123: #{tpu_custom_call.1} parent=35 // pred_region
          %s1923 = sshllo.u32 0, 1
          loop: start=0, step=1, limit=1
          $region1125: #{tpu_custom_call.1} parent=1123 // loop_pre_header
            _
          $region1126: #{tpu_custom_call.1} parent=1123 // loop_header
            %s1925 = sphi 0, %s1929
            %p1926 = scmp.ge.s32.totalorder %s1925, 1
            %s1930 = sphi %s1913, %s1913
            %s1931 = sphi %s1914, %s1914
          $region1127: #{tpu_custom_call.1} parent=1123 // loop_header_branch
            %1928 = sbr.rel (%p1926) target = $region1131
          $region1128: #{tpu_custom_call.1} parent=1123 // loop_body
            %v1932 = vld [vmem:[%s1930] sm:%s1923]
            %1933 = vst [vmem:[%s1931] sm:%s1923] %v1932
          $region1129: #{tpu_custom_call.1} parent=1123 // loop_footer
            %s1929 = sadd.s32 1, %s1925
          $region1130: #{tpu_custom_call.1} parent=1123 // loop_footer_branch
            %1924 = sbr.rel target = $region1126
          $region1131: #{tpu_custom_call.1} parent=1123 // loop_exit
            _
        $region1124: #{tpu_custom_call.1} parent=35 // pred_fallthru
          _
        // Predicated region
        $region1143: #{tpu_custom_call.1} parent=35 // pred_check
          _
        $region1144: #{tpu_custom_call.1} parent=35 // pred_check_branch
          %1957 = sbr.rel (0) target = $region1146
        $region1145: #{tpu_custom_call.1} parent=35 // pred_region
          %1958 = vsyncadd [#allocation3], 16
        $region1146: #{tpu_custom_call.1} parent=35 // pred_fallthru
          _
        %s1959 = sadd.s32 %s184, 37
        %s1960 = sld [smem:[#allocation5 + %s1959]]
        %s1961 = scalar_lea.vmem %s1, %s1960
        %s1962 = scalar_lea.vmem [#allocation2], 44
        %p1964 = scmp.lt.u32.totalorder 1, 8
        %p1965 = pneg %p1964
        // Predicated region
        $region1147: #{tpu_custom_call.1} parent=35 // pred_check
          _
        $region1148: #{tpu_custom_call.1} parent=35 // pred_check_branch
          %1967 = sbr.rel (%p1964) target = $region1150
        $region1149: #{tpu_custom_call.1} parent=35 // pred_region
          %s1982 = sand.u32 1, 7
          %p1983 = scmp.eq.s32.totalorder %s1982, 0
          %p1984 = pneg %p1983
          // Predicated region
          $region1162: #{tpu_custom_call.1} parent=1149 // pred_check
            _
          $region1163: #{tpu_custom_call.1} parent=1149 // pred_check_branch
            %1986 = sbr.rel (%p1983) target = $region1165
          $region1164: #{tpu_custom_call.1} parent=1149 // pred_region
            %s1987 = sand.u32 1, 7
            %s1988 = ssub.s32 1, %s1987
            %s1989 = scalar_lea.vmem %s1961, %s1988
            %s1990 = ssub.s32 1, %s1987
            %s1991 = scalar_lea.vmem %s1962, %s1990 [#allocation2]
            %s1992 = sshllo.u32 0, %s1987
            loop: start=0, step=1, limit=1
            $region1166: #{tpu_custom_call.1} parent=1164 // loop_pre_header
              _
            $region1167: #{tpu_custom_call.1} parent=1164 // loop_header
              %s1994 = sphi 0, %s1998
              %p1995 = scmp.ge.s32.totalorder %s1994, 1
              %s1999 = sphi %s1989, %s1989
              %s2000 = sphi %s1991, %s1991
            $region1168: #{tpu_custom_call.1} parent=1164 // loop_header_branch
              %1997 = sbr.rel (%p1995) target = $region1172
            $region1169: #{tpu_custom_call.1} parent=1164 // loop_body
              %v2001 = vld [vmem:[%s1999] sm:%s1992]
              %2002 = vst [vmem:[%s2000] sm:%s1992] %v2001
            $region1170: #{tpu_custom_call.1} parent=1164 // loop_footer
              %s1998 = sadd.s32 1, %s1994
            $region1171: #{tpu_custom_call.1} parent=1164 // loop_footer_branch
              %1993 = sbr.rel target = $region1167
            $region1172: #{tpu_custom_call.1} parent=1164 // loop_exit
              _
          $region1165: #{tpu_custom_call.1} parent=1149 // pred_fallthru
            _
        $region1150: #{tpu_custom_call.1} parent=35 // pred_fallthru
          _
        // Predicated region
        $region1151: #{tpu_custom_call.1} parent=35 // pred_check
          %p1968 = pneg %p1964
        $region1152: #{tpu_custom_call.1} parent=35 // pred_check_branch
          %1970 = sbr.rel (%p1968) target = $region1154
        $region1153: #{tpu_custom_call.1} parent=35 // pred_region
          %s1971 = sshllo.u32 0, 1
          loop: start=0, step=1, limit=1
          $region1155: #{tpu_custom_call.1} parent=1153 // loop_pre_header
            _
          $region1156: #{tpu_custom_call.1} parent=1153 // loop_header
            %s1973 = sphi 0, %s1977
            %p1974 = scmp.ge.s32.totalorder %s1973, 1
            %s1978 = sphi %s1961, %s1961
            %s1979 = sphi %s1962, %s1962
          $region1157: #{tpu_custom_call.1} parent=1153 // loop_header_branch
            %1976 = sbr.rel (%p1974) target = $region1161
          $region1158: #{tpu_custom_call.1} parent=1153 // loop_body
            %v1980 = vld [vmem:[%s1978] sm:%s1971]
            %1981 = vst [vmem:[%s1979] sm:%s1971] %v1980
          $region1159: #{tpu_custom_call.1} parent=1153 // loop_footer
            %s1977 = sadd.s32 1, %s1973
          $region1160: #{tpu_custom_call.1} parent=1153 // loop_footer_branch
            %1972 = sbr.rel target = $region1156
          $region1161: #{tpu_custom_call.1} parent=1153 // loop_exit
            _
        $region1154: #{tpu_custom_call.1} parent=35 // pred_fallthru
          _
        // Predicated region
        $region1173: #{tpu_custom_call.1} parent=35 // pred_check
          _
        $region1174: #{tpu_custom_call.1} parent=35 // pred_check_branch
          %2005 = sbr.rel (0) target = $region1176
        $region1175: #{tpu_custom_call.1} parent=35 // pred_region
          %2006 = vsyncadd [#allocation3], 16
        $region1176: #{tpu_custom_call.1} parent=35 // pred_fallthru
          _
        %s2007 = sadd.s32 %s184, 38
        %s2008 = sld [smem:[#allocation5 + %s2007]]
        %s2009 = scalar_lea.vmem %s1, %s2008
        %s2010 = scalar_lea.vmem [#allocation2], 52
        %p2012 = scmp.lt.u32.totalorder 1, 8
        %p2013 = pneg %p2012
        // Predicated region
        $region1177: #{tpu_custom_call.1} parent=35 // pred_check
          _
        $region1178: #{tpu_custom_call.1} parent=35 // pred_check_branch
          %2015 = sbr.rel (%p2012) target = $region1180
        $region1179: #{tpu_custom_call.1} parent=35 // pred_region
          %s2030 = sand.u32 1, 7
          %p2031 = scmp.eq.s32.totalorder %s2030, 0
          %p2032 = pneg %p2031
          // Predicated region
          $region1192: #{tpu_custom_call.1} parent=1179 // pred_check
            _
          $region1193: #{tpu_custom_call.1} parent=1179 // pred_check_branch
            %2034 = sbr.rel (%p2031) target = $region1195
          $region1194: #{tpu_custom_call.1} parent=1179 // pred_region
            %s2035 = sand.u32 1, 7
            %s2036 = ssub.s32 1, %s2035
            %s2037 = scalar_lea.vmem %s2009, %s2036
            %s2038 = ssub.s32 1, %s2035
            %s2039 = scalar_lea.vmem %s2010, %s2038 [#allocation2]
            %s2040 = sshllo.u32 0, %s2035
            loop: start=0, step=1, limit=1
            $region1196: #{tpu_custom_call.1} parent=1194 // loop_pre_header
              _
            $region1197: #{tpu_custom_call.1} parent=1194 // loop_header
              %s2042 = sphi 0, %s2046
              %p2043 = scmp.ge.s32.totalorder %s2042, 1
              %s2047 = sphi %s2037, %s2037
              %s2048 = sphi %s2039, %s2039
            $region1198: #{tpu_custom_call.1} parent=1194 // loop_header_branch
              %2045 = sbr.rel (%p2043) target = $region1202
            $region1199: #{tpu_custom_call.1} parent=1194 // loop_body
              %v2049 = vld [vmem:[%s2047] sm:%s2040]
              %2050 = vst [vmem:[%s2048] sm:%s2040] %v2049
            $region1200: #{tpu_custom_call.1} parent=1194 // loop_footer
              %s2046 = sadd.s32 1, %s2042
            $region1201: #{tpu_custom_call.1} parent=1194 // loop_footer_branch
              %2041 = sbr.rel target = $region1197
            $region1202: #{tpu_custom_call.1} parent=1194 // loop_exit
              _
          $region1195: #{tpu_custom_call.1} parent=1179 // pred_fallthru
            _
        $region1180: #{tpu_custom_call.1} parent=35 // pred_fallthru
          _
        // Predicated region
        $region1181: #{tpu_custom_call.1} parent=35 // pred_check
          %p2016 = pneg %p2012
        $region1182: #{tpu_custom_call.1} parent=35 // pred_check_branch
          %2018 = sbr.rel (%p2016) target = $region1184
        $region1183: #{tpu_custom_call.1} parent=35 // pred_region
          %s2019 = sshllo.u32 0, 1
          loop: start=0, step=1, limit=1
          $region1185: #{tpu_custom_call.1} parent=1183 // loop_pre_header
            _
          $region1186: #{tpu_custom_call.1} parent=1183 // loop_header
            %s2021 = sphi 0, %s2025
            %p2022 = scmp.ge.s32.totalorder %s2021, 1
            %s2026 = sphi %s2009, %s2009
            %s2027 = sphi %s2010, %s2010
          $region1187: #{tpu_custom_call.1} parent=1183 // loop_header_branch
            %2024 = sbr.rel (%p2022) target = $region1191
          $region1188: #{tpu_custom_call.1} parent=1183 // loop_body
            %v2028 = vld [vmem:[%s2026] sm:%s2019]
            %2029 = vst [vmem:[%s2027] sm:%s2019] %v2028
          $region1189: #{tpu_custom_call.1} parent=1183 // loop_footer
            %s2025 = sadd.s32 1, %s2021
          $region1190: #{tpu_custom_call.1} parent=1183 // loop_footer_branch
            %2020 = sbr.rel target = $region1186
          $region1191: #{tpu_custom_call.1} parent=1183 // loop_exit
            _
        $region1184: #{tpu_custom_call.1} parent=35 // pred_fallthru
          _
        // Predicated region
        $region1203: #{tpu_custom_call.1} parent=35 // pred_check
          _
        $region1204: #{tpu_custom_call.1} parent=35 // pred_check_branch
          %2053 = sbr.rel (0) target = $region1206
        $region1205: #{tpu_custom_call.1} parent=35 // pred_region
          %2054 = vsyncadd [#allocation3], 16
        $region1206: #{tpu_custom_call.1} parent=35 // pred_fallthru
          _
        %s2055 = sadd.s32 %s184, 39
        %s2056 = sld [smem:[#allocation5 + %s2055]]
        %s2057 = scalar_lea.vmem %s1, %s2056
        %s2058 = scalar_lea.vmem [#allocation2], 60
        %p2060 = scmp.lt.u32.totalorder 1, 8
        %p2061 = pneg %p2060
        // Predicated region
        $region1207: #{tpu_custom_call.1} parent=35 // pred_check
          _
        $region1208: #{tpu_custom_call.1} parent=35 // pred_check_branch
          %2063 = sbr.rel (%p2060) target = $region1210
        $region1209: #{tpu_custom_call.1} parent=35 // pred_region
          %s2078 = sand.u32 1, 7
          %p2079 = scmp.eq.s32.totalorder %s2078, 0
          %p2080 = pneg %p2079
          // Predicated region
          $region1222: #{tpu_custom_call.1} parent=1209 // pred_check
            _
          $region1223: #{tpu_custom_call.1} parent=1209 // pred_check_branch
            %2082 = sbr.rel (%p2079) target = $region1225
          $region1224: #{tpu_custom_call.1} parent=1209 // pred_region
            %s2083 = sand.u32 1, 7
            %s2084 = ssub.s32 1, %s2083
            %s2085 = scalar_lea.vmem %s2057, %s2084
            %s2086 = ssub.s32 1, %s2083
            %s2087 = scalar_lea.vmem %s2058, %s2086 [#allocation2]
            %s2088 = sshllo.u32 0, %s2083
            loop: start=0, step=1, limit=1
            $region1226: #{tpu_custom_call.1} parent=1224 // loop_pre_header
              _
            $region1227: #{tpu_custom_call.1} parent=1224 // loop_header
              %s2090 = sphi 0, %s2094
              %p2091 = scmp.ge.s32.totalorder %s2090, 1
              %s2095 = sphi %s2085, %s2085
              %s2096 = sphi %s2087, %s2087
            $region1228: #{tpu_custom_call.1} parent=1224 // loop_header_branch
              %2093 = sbr.rel (%p2091) target = $region1232
            $region1229: #{tpu_custom_call.1} parent=1224 // loop_body
              %v2097 = vld [vmem:[%s2095] sm:%s2088]
              %2098 = vst [vmem:[%s2096] sm:%s2088] %v2097
            $region1230: #{tpu_custom_call.1} parent=1224 // loop_footer
              %s2094 = sadd.s32 1, %s2090
            $region1231: #{tpu_custom_call.1} parent=1224 // loop_footer_branch
              %2089 = sbr.rel target = $region1227
            $region1232: #{tpu_custom_call.1} parent=1224 // loop_exit
              _
          $region1225: #{tpu_custom_call.1} parent=1209 // pred_fallthru
            _
        $region1210: #{tpu_custom_call.1} parent=35 // pred_fallthru
          _
        // Predicated region
        $region1211: #{tpu_custom_call.1} parent=35 // pred_check
          %p2064 = pneg %p2060
        $region1212: #{tpu_custom_call.1} parent=35 // pred_check_branch
          %2066 = sbr.rel (%p2064) target = $region1214
        $region1213: #{tpu_custom_call.1} parent=35 // pred_region
          %s2067 = sshllo.u32 0, 1
          loop: start=0, step=1, limit=1
          $region1215: #{tpu_custom_call.1} parent=1213 // loop_pre_header
            _
          $region1216: #{tpu_custom_call.1} parent=1213 // loop_header
            %s2069 = sphi 0, %s2073
            %p2070 = scmp.ge.s32.totalorder %s2069, 1
            %s2074 = sphi %s2057, %s2057
            %s2075 = sphi %s2058, %s2058
          $region1217: #{tpu_custom_call.1} parent=1213 // loop_header_branch
            %2072 = sbr.rel (%p2070) target = $region1221
          $region1218: #{tpu_custom_call.1} parent=1213 // loop_body
            %v2076 = vld [vmem:[%s2074] sm:%s2067]
            %2077 = vst [vmem:[%s2075] sm:%s2067] %v2076
          $region1219: #{tpu_custom_call.1} parent=1213 // loop_footer
            %s2073 = sadd.s32 1, %s2069
          $region1220: #{tpu_custom_call.1} parent=1213 // loop_footer_branch
            %2068 = sbr.rel target = $region1216
          $region1221: #{tpu_custom_call.1} parent=1213 // loop_exit
            _
        $region1214: #{tpu_custom_call.1} parent=35 // pred_fallthru
          _
        // Predicated region
        $region1233: #{tpu_custom_call.1} parent=35 // pred_check
          _
        $region1234: #{tpu_custom_call.1} parent=35 // pred_check_branch
          %2101 = sbr.rel (0) target = $region1236
        $region1235: #{tpu_custom_call.1} parent=35 // pred_region
          %2102 = vsyncadd [#allocation3], 16
        $region1236: #{tpu_custom_call.1} parent=35 // pred_fallthru
          _
        %s2103 = sadd.s32 %s184, 40
        %s2104 = sld [smem:[#allocation5 + %s2103]]
        %s2105 = scalar_lea.vmem %s1, %s2104
        %s2106 = scalar_lea.vmem [#allocation2], 5
        %p2108 = scmp.lt.u32.totalorder 1, 8
        %p2109 = pneg %p2108
        // Predicated region
        $region1237: #{tpu_custom_call.1} parent=35 // pred_check
          _
        $region1238: #{tpu_custom_call.1} parent=35 // pred_check_branch
          %2111 = sbr.rel (%p2108) target = $region1240
        $region1239: #{tpu_custom_call.1} parent=35 // pred_region
          %s2126 = sand.u32 1, 7
          %p2127 = scmp.eq.s32.totalorder %s2126, 0
          %p2128 = pneg %p2127
          // Predicated region
          $region1252: #{tpu_custom_call.1} parent=1239 // pred_check
            _
          $region1253: #{tpu_custom_call.1} parent=1239 // pred_check_branch
            %2130 = sbr.rel (%p2127) target = $region1255
          $region1254: #{tpu_custom_call.1} parent=1239 // pred_region
            %s2131 = sand.u32 1, 7
            %s2132 = ssub.s32 1, %s2131
            %s2133 = scalar_lea.vmem %s2105, %s2132
            %s2134 = ssub.s32 1, %s2131
            %s2135 = scalar_lea.vmem %s2106, %s2134 [#allocation2]
            %s2136 = sshllo.u32 0, %s2131
            loop: start=0, step=1, limit=1
            $region1256: #{tpu_custom_call.1} parent=1254 // loop_pre_header
              _
            $region1257: #{tpu_custom_call.1} parent=1254 // loop_header
              %s2138 = sphi 0, %s2142
              %p2139 = scmp.ge.s32.totalorder %s2138, 1
              %s2143 = sphi %s2133, %s2133
              %s2144 = sphi %s2135, %s2135
            $region1258: #{tpu_custom_call.1} parent=1254 // loop_header_branch
              %2141 = sbr.rel (%p2139) target = $region1262
            $region1259: #{tpu_custom_call.1} parent=1254 // loop_body
              %v2145 = vld [vmem:[%s2143] sm:%s2136]
              %2146 = vst [vmem:[%s2144] sm:%s2136] %v2145
            $region1260: #{tpu_custom_call.1} parent=1254 // loop_footer
              %s2142 = sadd.s32 1, %s2138
            $region1261: #{tpu_custom_call.1} parent=1254 // loop_footer_branch
              %2137 = sbr.rel target = $region1257
            $region1262: #{tpu_custom_call.1} parent=1254 // loop_exit
              _
          $region1255: #{tpu_custom_call.1} parent=1239 // pred_fallthru
            _
        $region1240: #{tpu_custom_call.1} parent=35 // pred_fallthru
          _
        // Predicated region
        $region1241: #{tpu_custom_call.1} parent=35 // pred_check
          %p2112 = pneg %p2108
        $region1242: #{tpu_custom_call.1} parent=35 // pred_check_branch
          %2114 = sbr.rel (%p2112) target = $region1244
        $region1243: #{tpu_custom_call.1} parent=35 // pred_region
          %s2115 = sshllo.u32 0, 1
          loop: start=0, step=1, limit=1
          $region1245: #{tpu_custom_call.1} parent=1243 // loop_pre_header
            _
          $region1246: #{tpu_custom_call.1} parent=1243 // loop_header
            %s2117 = sphi 0, %s2121
            %p2118 = scmp.ge.s32.totalorder %s2117, 1
            %s2122 = sphi %s2105, %s2105
            %s2123 = sphi %s2106, %s2106
          $region1247: #{tpu_custom_call.1} parent=1243 // loop_header_branch
            %2120 = sbr.rel (%p2118) target = $region1251
          $region1248: #{tpu_custom_call.1} parent=1243 // loop_body
            %v2124 = vld [vmem:[%s2122] sm:%s2115]
            %2125 = vst [vmem:[%s2123] sm:%s2115] %v2124
          $region1249: #{tpu_custom_call.1} parent=1243 // loop_footer
            %s2121 = sadd.s32 1, %s2117
          $region1250: #{tpu_custom_call.1} parent=1243 // loop_footer_branch
            %2116 = sbr.rel target = $region1246
          $region1251: #{tpu_custom_call.1} parent=1243 // loop_exit
            _
        $region1244: #{tpu_custom_call.1} parent=35 // pred_fallthru
          _
        // Predicated region
        $region1263: #{tpu_custom_call.1} parent=35 // pred_check
          _
        $region1264: #{tpu_custom_call.1} parent=35 // pred_check_branch
          %2149 = sbr.rel (0) target = $region1266
        $region1265: #{tpu_custom_call.1} parent=35 // pred_region
          %2150 = vsyncadd [#allocation3], 16
        $region1266: #{tpu_custom_call.1} parent=35 // pred_fallthru
          _
        %s2151 = sadd.s32 %s184, 41
        %s2152 = sld [smem:[#allocation5 + %s2151]]
        %s2153 = scalar_lea.vmem %s1, %s2152
        %s2154 = scalar_lea.vmem [#allocation2], 13
        %p2156 = scmp.lt.u32.totalorder 1, 8
        %p2157 = pneg %p2156
        // Predicated region
        $region1267: #{tpu_custom_call.1} parent=35 // pred_check
          _
        $region1268: #{tpu_custom_call.1} parent=35 // pred_check_branch
          %2159 = sbr.rel (%p2156) target = $region1270
        $region1269: #{tpu_custom_call.1} parent=35 // pred_region
          %s2174 = sand.u32 1, 7
          %p2175 = scmp.eq.s32.totalorder %s2174, 0
          %p2176 = pneg %p2175
          // Predicated region
          $region1282: #{tpu_custom_call.1} parent=1269 // pred_check
            _
          $region1283: #{tpu_custom_call.1} parent=1269 // pred_check_branch
            %2178 = sbr.rel (%p2175) target = $region1285
          $region1284: #{tpu_custom_call.1} parent=1269 // pred_region
            %s2179 = sand.u32 1, 7
            %s2180 = ssub.s32 1, %s2179
            %s2181 = scalar_lea.vmem %s2153, %s2180
            %s2182 = ssub.s32 1, %s2179
            %s2183 = scalar_lea.vmem %s2154, %s2182 [#allocation2]
            %s2184 = sshllo.u32 0, %s2179
            loop: start=0, step=1, limit=1
            $region1286: #{tpu_custom_call.1} parent=1284 // loop_pre_header
              _
            $region1287: #{tpu_custom_call.1} parent=1284 // loop_header
              %s2186 = sphi 0, %s2190
              %p2187 = scmp.ge.s32.totalorder %s2186, 1
              %s2191 = sphi %s2181, %s2181
              %s2192 = sphi %s2183, %s2183
            $region1288: #{tpu_custom_call.1} parent=1284 // loop_header_branch
              %2189 = sbr.rel (%p2187) target = $region1292
            $region1289: #{tpu_custom_call.1} parent=1284 // loop_body
              %v2193 = vld [vmem:[%s2191] sm:%s2184]
              %2194 = vst [vmem:[%s2192] sm:%s2184] %v2193
            $region1290: #{tpu_custom_call.1} parent=1284 // loop_footer
              %s2190 = sadd.s32 1, %s2186
            $region1291: #{tpu_custom_call.1} parent=1284 // loop_footer_branch
              %2185 = sbr.rel target = $region1287
            $region1292: #{tpu_custom_call.1} parent=1284 // loop_exit
              _
          $region1285: #{tpu_custom_call.1} parent=1269 // pred_fallthru
            _
        $region1270: #{tpu_custom_call.1} parent=35 // pred_fallthru
          _
        // Predicated region
        $region1271: #{tpu_custom_call.1} parent=35 // pred_check
          %p2160 = pneg %p2156
        $region1272: #{tpu_custom_call.1} parent=35 // pred_check_branch
          %2162 = sbr.rel (%p2160) target = $region1274
        $region1273: #{tpu_custom_call.1} parent=35 // pred_region
          %s2163 = sshllo.u32 0, 1
          loop: start=0, step=1, limit=1
          $region1275: #{tpu_custom_call.1} parent=1273 // loop_pre_header
            _
          $region1276: #{tpu_custom_call.1} parent=1273 // loop_header
            %s2165 = sphi 0, %s2169
            %p2166 = scmp.ge.s32.totalorder %s2165, 1
            %s2170 = sphi %s2153, %s2153
            %s2171 = sphi %s2154, %s2154
          $region1277: #{tpu_custom_call.1} parent=1273 // loop_header_branch
            %2168 = sbr.rel (%p2166) target = $region1281
          $region1278: #{tpu_custom_call.1} parent=1273 // loop_body
            %v2172 = vld [vmem:[%s2170] sm:%s2163]
            %2173 = vst [vmem:[%s2171] sm:%s2163] %v2172
          $region1279: #{tpu_custom_call.1} parent=1273 // loop_footer
            %s2169 = sadd.s32 1, %s2165
          $region1280: #{tpu_custom_call.1} parent=1273 // loop_footer_branch
            %2164 = sbr.rel target = $region1276
          $region1281: #{tpu_custom_call.1} parent=1273 // loop_exit
            _
        $region1274: #{tpu_custom_call.1} parent=35 // pred_fallthru
          _
        // Predicated region
        $region1293: #{tpu_custom_call.1} parent=35 // pred_check
          _
        $region1294: #{tpu_custom_call.1} parent=35 // pred_check_branch
          %2197 = sbr.rel (0) target = $region1296
        $region1295: #{tpu_custom_call.1} parent=35 // pred_region
          %2198 = vsyncadd [#allocation3], 16
        $region1296: #{tpu_custom_call.1} parent=35 // pred_fallthru
          _
        %s2199 = sadd.s32 %s184, 42
        %s2200 = sld [smem:[#allocation5 + %s2199]]
        %s2201 = scalar_lea.vmem %s1, %s2200
        %s2202 = scalar_lea.vmem [#allocation2], 21
        %p2204 = scmp.lt.u32.totalorder 1, 8
        %p2205 = pneg %p2204
        // Predicated region
        $region1297: #{tpu_custom_call.1} parent=35 // pred_check
          _
        $region1298: #{tpu_custom_call.1} parent=35 // pred_check_branch
          %2207 = sbr.rel (%p2204) target = $region1300
        $region1299: #{tpu_custom_call.1} parent=35 // pred_region
          %s2222 = sand.u32 1, 7
          %p2223 = scmp.eq.s32.totalorder %s2222, 0
          %p2224 = pneg %p2223
          // Predicated region
          $region1312: #{tpu_custom_call.1} parent=1299 // pred_check
            _
          $region1313: #{tpu_custom_call.1} parent=1299 // pred_check_branch
            %2226 = sbr.rel (%p2223) target = $region1315
          $region1314: #{tpu_custom_call.1} parent=1299 // pred_region
            %s2227 = sand.u32 1, 7
            %s2228 = ssub.s32 1, %s2227
            %s2229 = scalar_lea.vmem %s2201, %s2228
            %s2230 = ssub.s32 1, %s2227
            %s2231 = scalar_lea.vmem %s2202, %s2230 [#allocation2]
            %s2232 = sshllo.u32 0, %s2227
            loop: start=0, step=1, limit=1
            $region1316: #{tpu_custom_call.1} parent=1314 // loop_pre_header
              _
            $region1317: #{tpu_custom_call.1} parent=1314 // loop_header
              %s2234 = sphi 0, %s2238
              %p2235 = scmp.ge.s32.totalorder %s2234, 1
              %s2239 = sphi %s2229, %s2229
              %s2240 = sphi %s2231, %s2231
            $region1318: #{tpu_custom_call.1} parent=1314 // loop_header_branch
              %2237 = sbr.rel (%p2235) target = $region1322
            $region1319: #{tpu_custom_call.1} parent=1314 // loop_body
              %v2241 = vld [vmem:[%s2239] sm:%s2232]
              %2242 = vst [vmem:[%s2240] sm:%s2232] %v2241
            $region1320: #{tpu_custom_call.1} parent=1314 // loop_footer
              %s2238 = sadd.s32 1, %s2234
            $region1321: #{tpu_custom_call.1} parent=1314 // loop_footer_branch
              %2233 = sbr.rel target = $region1317
            $region1322: #{tpu_custom_call.1} parent=1314 // loop_exit
              _
          $region1315: #{tpu_custom_call.1} parent=1299 // pred_fallthru
            _
        $region1300: #{tpu_custom_call.1} parent=35 // pred_fallthru
          _
        // Predicated region
        $region1301: #{tpu_custom_call.1} parent=35 // pred_check
          %p2208 = pneg %p2204
        $region1302: #{tpu_custom_call.1} parent=35 // pred_check_branch
          %2210 = sbr.rel (%p2208) target = $region1304
        $region1303: #{tpu_custom_call.1} parent=35 // pred_region
          %s2211 = sshllo.u32 0, 1
          loop: start=0, step=1, limit=1
          $region1305: #{tpu_custom_call.1} parent=1303 // loop_pre_header
            _
          $region1306: #{tpu_custom_call.1} parent=1303 // loop_header
            %s2213 = sphi 0, %s2217
            %p2214 = scmp.ge.s32.totalorder %s2213, 1
            %s2218 = sphi %s2201, %s2201
            %s2219 = sphi %s2202, %s2202
          $region1307: #{tpu_custom_call.1} parent=1303 // loop_header_branch
            %2216 = sbr.rel (%p2214) target = $region1311
          $region1308: #{tpu_custom_call.1} parent=1303 // loop_body
            %v2220 = vld [vmem:[%s2218] sm:%s2211]
            %2221 = vst [vmem:[%s2219] sm:%s2211] %v2220
          $region1309: #{tpu_custom_call.1} parent=1303 // loop_footer
            %s2217 = sadd.s32 1, %s2213
          $region1310: #{tpu_custom_call.1} parent=1303 // loop_footer_branch
            %2212 = sbr.rel target = $region1306
          $region1311: #{tpu_custom_call.1} parent=1303 // loop_exit
            _
        $region1304: #{tpu_custom_call.1} parent=35 // pred_fallthru
          _
        // Predicated region
        $region1323: #{tpu_custom_call.1} parent=35 // pred_check
          _
        $region1324: #{tpu_custom_call.1} parent=35 // pred_check_branch
          %2245 = sbr.rel (0) target = $region1326
        $region1325: #{tpu_custom_call.1} parent=35 // pred_region
          %2246 = vsyncadd [#allocation3], 16
        $region1326: #{tpu_custom_call.1} parent=35 // pred_fallthru
          _
        %s2247 = sadd.s32 %s184, 43
        %s2248 = sld [smem:[#allocation5 + %s2247]]
        %s2249 = scalar_lea.vmem %s1, %s2248
        %s2250 = scalar_lea.vmem [#allocation2], 29
        %p2252 = scmp.lt.u32.totalorder 1, 8
        %p2253 = pneg %p2252
        // Predicated region
        $region1327: #{tpu_custom_call.1} parent=35 // pred_check
          _
        $region1328: #{tpu_custom_call.1} parent=35 // pred_check_branch
          %2255 = sbr.rel (%p2252) target = $region1330
        $region1329: #{tpu_custom_call.1} parent=35 // pred_region
          %s2270 = sand.u32 1, 7
          %p2271 = scmp.eq.s32.totalorder %s2270, 0
          %p2272 = pneg %p2271
          // Predicated region
          $region1342: #{tpu_custom_call.1} parent=1329 // pred_check
            _
          $region1343: #{tpu_custom_call.1} parent=1329 // pred_check_branch
            %2274 = sbr.rel (%p2271) target = $region1345
          $region1344: #{tpu_custom_call.1} parent=1329 // pred_region
            %s2275 = sand.u32 1, 7
            %s2276 = ssub.s32 1, %s2275
            %s2277 = scalar_lea.vmem %s2249, %s2276
            %s2278 = ssub.s32 1, %s2275
            %s2279 = scalar_lea.vmem %s2250, %s2278 [#allocation2]
            %s2280 = sshllo.u32 0, %s2275
            loop: start=0, step=1, limit=1
            $region1346: #{tpu_custom_call.1} parent=1344 // loop_pre_header
              _
            $region1347: #{tpu_custom_call.1} parent=1344 // loop_header
              %s2282 = sphi 0, %s2286
              %p2283 = scmp.ge.s32.totalorder %s2282, 1
              %s2287 = sphi %s2277, %s2277
              %s2288 = sphi %s2279, %s2279
            $region1348: #{tpu_custom_call.1} parent=1344 // loop_header_branch
              %2285 = sbr.rel (%p2283) target = $region1352
            $region1349: #{tpu_custom_call.1} parent=1344 // loop_body
              %v2289 = vld [vmem:[%s2287] sm:%s2280]
              %2290 = vst [vmem:[%s2288] sm:%s2280] %v2289
            $region1350: #{tpu_custom_call.1} parent=1344 // loop_footer
              %s2286 = sadd.s32 1, %s2282
            $region1351: #{tpu_custom_call.1} parent=1344 // loop_footer_branch
              %2281 = sbr.rel target = $region1347
            $region1352: #{tpu_custom_call.1} parent=1344 // loop_exit
              _
          $region1345: #{tpu_custom_call.1} parent=1329 // pred_fallthru
            _
        $region1330: #{tpu_custom_call.1} parent=35 // pred_fallthru
          _
        // Predicated region
        $region1331: #{tpu_custom_call.1} parent=35 // pred_check
          %p2256 = pneg %p2252
        $region1332: #{tpu_custom_call.1} parent=35 // pred_check_branch
          %2258 = sbr.rel (%p2256) target = $region1334
        $region1333: #{tpu_custom_call.1} parent=35 // pred_region
          %s2259 = sshllo.u32 0, 1
          loop: start=0, step=1, limit=1
          $region1335: #{tpu_custom_call.1} parent=1333 // loop_pre_header
            _
          $region1336: #{tpu_custom_call.1} parent=1333 // loop_header
            %s2261 = sphi 0, %s2265
            %p2262 = scmp.ge.s32.totalorder %s2261, 1
            %s2266 = sphi %s2249, %s2249
            %s2267 = sphi %s2250, %s2250
          $region1337: #{tpu_custom_call.1} parent=1333 // loop_header_branch
            %2264 = sbr.rel (%p2262) target = $region1341
          $region1338: #{tpu_custom_call.1} parent=1333 // loop_body
            %v2268 = vld [vmem:[%s2266] sm:%s2259]
            %2269 = vst [vmem:[%s2267] sm:%s2259] %v2268
          $region1339: #{tpu_custom_call.1} parent=1333 // loop_footer
            %s2265 = sadd.s32 1, %s2261
          $region1340: #{tpu_custom_call.1} parent=1333 // loop_footer_branch
            %2260 = sbr.rel target = $region1336
          $region1341: #{tpu_custom_call.1} parent=1333 // loop_exit
            _
        $region1334: #{tpu_custom_call.1} parent=35 // pred_fallthru
          _
        // Predicated region
        $region1353: #{tpu_custom_call.1} parent=35 // pred_check
          _
        $region1354: #{tpu_custom_call.1} parent=35 // pred_check_branch
          %2293 = sbr.rel (0) target = $region1356
        $region1355: #{tpu_custom_call.1} parent=35 // pred_region
          %2294 = vsyncadd [#allocation3], 16
        $region1356: #{tpu_custom_call.1} parent=35 // pred_fallthru
          _
        %s2295 = sadd.s32 %s184, 44
        %s2296 = sld [smem:[#allocation5 + %s2295]]
        %s2297 = scalar_lea.vmem %s1, %s2296
        %s2298 = scalar_lea.vmem [#allocation2], 37
        %p2300 = scmp.lt.u32.totalorder 1, 8
        %p2301 = pneg %p2300
        // Predicated region
        $region1357: #{tpu_custom_call.1} parent=35 // pred_check
          _
        $region1358: #{tpu_custom_call.1} parent=35 // pred_check_branch
          %2303 = sbr.rel (%p2300) target = $region1360
        $region1359: #{tpu_custom_call.1} parent=35 // pred_region
          %s2318 = sand.u32 1, 7
          %p2319 = scmp.eq.s32.totalorder %s2318, 0
          %p2320 = pneg %p2319
          // Predicated region
          $region1372: #{tpu_custom_call.1} parent=1359 // pred_check
            _
          $region1373: #{tpu_custom_call.1} parent=1359 // pred_check_branch
            %2322 = sbr.rel (%p2319) target = $region1375
          $region1374: #{tpu_custom_call.1} parent=1359 // pred_region
            %s2323 = sand.u32 1, 7
            %s2324 = ssub.s32 1, %s2323
            %s2325 = scalar_lea.vmem %s2297, %s2324
            %s2326 = ssub.s32 1, %s2323
            %s2327 = scalar_lea.vmem %s2298, %s2326 [#allocation2]
            %s2328 = sshllo.u32 0, %s2323
            loop: start=0, step=1, limit=1
            $region1376: #{tpu_custom_call.1} parent=1374 // loop_pre_header
              _
            $region1377: #{tpu_custom_call.1} parent=1374 // loop_header
              %s2330 = sphi 0, %s2334
              %p2331 = scmp.ge.s32.totalorder %s2330, 1
              %s2335 = sphi %s2325, %s2325
              %s2336 = sphi %s2327, %s2327
            $region1378: #{tpu_custom_call.1} parent=1374 // loop_header_branch
              %2333 = sbr.rel (%p2331) target = $region1382
            $region1379: #{tpu_custom_call.1} parent=1374 // loop_body
              %v2337 = vld [vmem:[%s2335] sm:%s2328]
              %2338 = vst [vmem:[%s2336] sm:%s2328] %v2337
            $region1380: #{tpu_custom_call.1} parent=1374 // loop_footer
              %s2334 = sadd.s32 1, %s2330
            $region1381: #{tpu_custom_call.1} parent=1374 // loop_footer_branch
              %2329 = sbr.rel target = $region1377
            $region1382: #{tpu_custom_call.1} parent=1374 // loop_exit
              _
          $region1375: #{tpu_custom_call.1} parent=1359 // pred_fallthru
            _
        $region1360: #{tpu_custom_call.1} parent=35 // pred_fallthru
          _
        // Predicated region
        $region1361: #{tpu_custom_call.1} parent=35 // pred_check
          %p2304 = pneg %p2300
        $region1362: #{tpu_custom_call.1} parent=35 // pred_check_branch
          %2306 = sbr.rel (%p2304) target = $region1364
        $region1363: #{tpu_custom_call.1} parent=35 // pred_region
          %s2307 = sshllo.u32 0, 1
          loop: start=0, step=1, limit=1
          $region1365: #{tpu_custom_call.1} parent=1363 // loop_pre_header
            _
          $region1366: #{tpu_custom_call.1} parent=1363 // loop_header
            %s2309 = sphi 0, %s2313
            %p2310 = scmp.ge.s32.totalorder %s2309, 1
            %s2314 = sphi %s2297, %s2297
            %s2315 = sphi %s2298, %s2298
          $region1367: #{tpu_custom_call.1} parent=1363 // loop_header_branch
            %2312 = sbr.rel (%p2310) target = $region1371
          $region1368: #{tpu_custom_call.1} parent=1363 // loop_body
            %v2316 = vld [vmem:[%s2314] sm:%s2307]
            %2317 = vst [vmem:[%s2315] sm:%s2307] %v2316
          $region1369: #{tpu_custom_call.1} parent=1363 // loop_footer
            %s2313 = sadd.s32 1, %s2309
          $region1370: #{tpu_custom_call.1} parent=1363 // loop_footer_branch
            %2308 = sbr.rel target = $region1366
          $region1371: #{tpu_custom_call.1} parent=1363 // loop_exit
            _
        $region1364: #{tpu_custom_call.1} parent=35 // pred_fallthru
          _
        // Predicated region
        $region1383: #{tpu_custom_call.1} parent=35 // pred_check
          _
        $region1384: #{tpu_custom_call.1} parent=35 // pred_check_branch
          %2341 = sbr.rel (0) target = $region1386
        $region1385: #{tpu_custom_call.1} parent=35 // pred_region
          %2342 = vsyncadd [#allocation3], 16
        $region1386: #{tpu_custom_call.1} parent=35 // pred_fallthru
          _
        %s2343 = sadd.s32 %s184, 45
        %s2344 = sld [smem:[#allocation5 + %s2343]]
        %s2345 = scalar_lea.vmem %s1, %s2344
        %s2346 = scalar_lea.vmem [#allocation2], 45
        %p2348 = scmp.lt.u32.totalorder 1, 8
        %p2349 = pneg %p2348
        // Predicated region
        $region1387: #{tpu_custom_call.1} parent=35 // pred_check
          _
        $region1388: #{tpu_custom_call.1} parent=35 // pred_check_branch
          %2351 = sbr.rel (%p2348) target = $region1390
        $region1389: #{tpu_custom_call.1} parent=35 // pred_region
          %s2366 = sand.u32 1, 7
          %p2367 = scmp.eq.s32.totalorder %s2366, 0
          %p2368 = pneg %p2367
          // Predicated region
          $region1402: #{tpu_custom_call.1} parent=1389 // pred_check
            _
          $region1403: #{tpu_custom_call.1} parent=1389 // pred_check_branch
            %2370 = sbr.rel (%p2367) target = $region1405
          $region1404: #{tpu_custom_call.1} parent=1389 // pred_region
            %s2371 = sand.u32 1, 7
            %s2372 = ssub.s32 1, %s2371
            %s2373 = scalar_lea.vmem %s2345, %s2372
            %s2374 = ssub.s32 1, %s2371
            %s2375 = scalar_lea.vmem %s2346, %s2374 [#allocation2]
            %s2376 = sshllo.u32 0, %s2371
            loop: start=0, step=1, limit=1
            $region1406: #{tpu_custom_call.1} parent=1404 // loop_pre_header
              _
            $region1407: #{tpu_custom_call.1} parent=1404 // loop_header
              %s2378 = sphi 0, %s2382
              %p2379 = scmp.ge.s32.totalorder %s2378, 1
              %s2383 = sphi %s2373, %s2373
              %s2384 = sphi %s2375, %s2375
            $region1408: #{tpu_custom_call.1} parent=1404 // loop_header_branch
              %2381 = sbr.rel (%p2379) target = $region1412
            $region1409: #{tpu_custom_call.1} parent=1404 // loop_body
              %v2385 = vld [vmem:[%s2383] sm:%s2376]
              %2386 = vst [vmem:[%s2384] sm:%s2376] %v2385
            $region1410: #{tpu_custom_call.1} parent=1404 // loop_footer
              %s2382 = sadd.s32 1, %s2378
            $region1411: #{tpu_custom_call.1} parent=1404 // loop_footer_branch
              %2377 = sbr.rel target = $region1407
            $region1412: #{tpu_custom_call.1} parent=1404 // loop_exit
              _
          $region1405: #{tpu_custom_call.1} parent=1389 // pred_fallthru
            _
        $region1390: #{tpu_custom_call.1} parent=35 // pred_fallthru
          _
        // Predicated region
        $region1391: #{tpu_custom_call.1} parent=35 // pred_check
          %p2352 = pneg %p2348
        $region1392: #{tpu_custom_call.1} parent=35 // pred_check_branch
          %2354 = sbr.rel (%p2352) target = $region1394
        $region1393: #{tpu_custom_call.1} parent=35 // pred_region
          %s2355 = sshllo.u32 0, 1
          loop: start=0, step=1, limit=1
          $region1395: #{tpu_custom_call.1} parent=1393 // loop_pre_header
            _
          $region1396: #{tpu_custom_call.1} parent=1393 // loop_header
            %s2357 = sphi 0, %s2361
            %p2358 = scmp.ge.s32.totalorder %s2357, 1
            %s2362 = sphi %s2345, %s2345
            %s2363 = sphi %s2346, %s2346
          $region1397: #{tpu_custom_call.1} parent=1393 // loop_header_branch
            %2360 = sbr.rel (%p2358) target = $region1401
          $region1398: #{tpu_custom_call.1} parent=1393 // loop_body
            %v2364 = vld [vmem:[%s2362] sm:%s2355]
            %2365 = vst [vmem:[%s2363] sm:%s2355] %v2364
          $region1399: #{tpu_custom_call.1} parent=1393 // loop_footer
            %s2361 = sadd.s32 1, %s2357
          $region1400: #{tpu_custom_call.1} parent=1393 // loop_footer_branch
            %2356 = sbr.rel target = $region1396
          $region1401: #{tpu_custom_call.1} parent=1393 // loop_exit
            _
        $region1394: #{tpu_custom_call.1} parent=35 // pred_fallthru
          _
        // Predicated region
        $region1413: #{tpu_custom_call.1} parent=35 // pred_check
          _
        $region1414: #{tpu_custom_call.1} parent=35 // pred_check_branch
          %2389 = sbr.rel (0) target = $region1416
        $region1415: #{tpu_custom_call.1} parent=35 // pred_region
          %2390 = vsyncadd [#allocation3], 16
        $region1416: #{tpu_custom_call.1} parent=35 // pred_fallthru
          _
        %s2391 = sadd.s32 %s184, 46
        %s2392 = sld [smem:[#allocation5 + %s2391]]
        %s2393 = scalar_lea.vmem %s1, %s2392
        %s2394 = scalar_lea.vmem [#allocation2], 53
        %p2396 = scmp.lt.u32.totalorder 1, 8
        %p2397 = pneg %p2396
        // Predicated region
        $region1417: #{tpu_custom_call.1} parent=35 // pred_check
          _
        $region1418: #{tpu_custom_call.1} parent=35 // pred_check_branch
          %2399 = sbr.rel (%p2396) target = $region1420
        $region1419: #{tpu_custom_call.1} parent=35 // pred_region
          %s2414 = sand.u32 1, 7
          %p2415 = scmp.eq.s32.totalorder %s2414, 0
          %p2416 = pneg %p2415
          // Predicated region
          $region1432: #{tpu_custom_call.1} parent=1419 // pred_check
            _
          $region1433: #{tpu_custom_call.1} parent=1419 // pred_check_branch
            %2418 = sbr.rel (%p2415) target = $region1435
          $region1434: #{tpu_custom_call.1} parent=1419 // pred_region
            %s2419 = sand.u32 1, 7
            %s2420 = ssub.s32 1, %s2419
            %s2421 = scalar_lea.vmem %s2393, %s2420
            %s2422 = ssub.s32 1, %s2419
            %s2423 = scalar_lea.vmem %s2394, %s2422 [#allocation2]
            %s2424 = sshllo.u32 0, %s2419
            loop: start=0, step=1, limit=1
            $region1436: #{tpu_custom_call.1} parent=1434 // loop_pre_header
              _
            $region1437: #{tpu_custom_call.1} parent=1434 // loop_header
              %s2426 = sphi 0, %s2430
              %p2427 = scmp.ge.s32.totalorder %s2426, 1
              %s2431 = sphi %s2421, %s2421
              %s2432 = sphi %s2423, %s2423
            $region1438: #{tpu_custom_call.1} parent=1434 // loop_header_branch
              %2429 = sbr.rel (%p2427) target = $region1442
            $region1439: #{tpu_custom_call.1} parent=1434 // loop_body
              %v2433 = vld [vmem:[%s2431] sm:%s2424]
              %2434 = vst [vmem:[%s2432] sm:%s2424] %v2433
            $region1440: #{tpu_custom_call.1} parent=1434 // loop_footer
              %s2430 = sadd.s32 1, %s2426
            $region1441: #{tpu_custom_call.1} parent=1434 // loop_footer_branch
              %2425 = sbr.rel target = $region1437
            $region1442: #{tpu_custom_call.1} parent=1434 // loop_exit
              _
          $region1435: #{tpu_custom_call.1} parent=1419 // pred_fallthru
            _
        $region1420: #{tpu_custom_call.1} parent=35 // pred_fallthru
          _
        // Predicated region
        $region1421: #{tpu_custom_call.1} parent=35 // pred_check
          %p2400 = pneg %p2396
        $region1422: #{tpu_custom_call.1} parent=35 // pred_check_branch
          %2402 = sbr.rel (%p2400) target = $region1424
        $region1423: #{tpu_custom_call.1} parent=35 // pred_region
          %s2403 = sshllo.u32 0, 1
          loop: start=0, step=1, limit=1
          $region1425: #{tpu_custom_call.1} parent=1423 // loop_pre_header
            _
          $region1426: #{tpu_custom_call.1} parent=1423 // loop_header
            %s2405 = sphi 0, %s2409
            %p2406 = scmp.ge.s32.totalorder %s2405, 1
            %s2410 = sphi %s2393, %s2393
            %s2411 = sphi %s2394, %s2394
          $region1427: #{tpu_custom_call.1} parent=1423 // loop_header_branch
            %2408 = sbr.rel (%p2406) target = $region1431
          $region1428: #{tpu_custom_call.1} parent=1423 // loop_body
            %v2412 = vld [vmem:[%s2410] sm:%s2403]
            %2413 = vst [vmem:[%s2411] sm:%s2403] %v2412
          $region1429: #{tpu_custom_call.1} parent=1423 // loop_footer
            %s2409 = sadd.s32 1, %s2405
          $region1430: #{tpu_custom_call.1} parent=1423 // loop_footer_branch
            %2404 = sbr.rel target = $region1426
          $region1431: #{tpu_custom_call.1} parent=1423 // loop_exit
            _
        $region1424: #{tpu_custom_call.1} parent=35 // pred_fallthru
          _
        // Predicated region
        $region1443: #{tpu_custom_call.1} parent=35 // pred_check
          _
        $region1444: #{tpu_custom_call.1} parent=35 // pred_check_branch
          %2437 = sbr.rel (0) target = $region1446
        $region1445: #{tpu_custom_call.1} parent=35 // pred_region
          %2438 = vsyncadd [#allocation3], 16
        $region1446: #{tpu_custom_call.1} parent=35 // pred_fallthru
          _
        %s2439 = sadd.s32 %s184, 47
        %s2440 = sld [smem:[#allocation5 + %s2439]]
        %s2441 = scalar_lea.vmem %s1, %s2440
        %s2442 = scalar_lea.vmem [#allocation2], 61
        %p2444 = scmp.lt.u32.totalorder 1, 8
        %p2445 = pneg %p2444
        // Predicated region
        $region1447: #{tpu_custom_call.1} parent=35 // pred_check
          _
        $region1448: #{tpu_custom_call.1} parent=35 // pred_check_branch
          %2447 = sbr.rel (%p2444) target = $region1450
        $region1449: #{tpu_custom_call.1} parent=35 // pred_region
          %s2462 = sand.u32 1, 7
          %p2463 = scmp.eq.s32.totalorder %s2462, 0
          %p2464 = pneg %p2463
          // Predicated region
          $region1462: #{tpu_custom_call.1} parent=1449 // pred_check
            _
          $region1463: #{tpu_custom_call.1} parent=1449 // pred_check_branch
            %2466 = sbr.rel (%p2463) target = $region1465
          $region1464: #{tpu_custom_call.1} parent=1449 // pred_region
            %s2467 = sand.u32 1, 7
            %s2468 = ssub.s32 1, %s2467
            %s2469 = scalar_lea.vmem %s2441, %s2468
            %s2470 = ssub.s32 1, %s2467
            %s2471 = scalar_lea.vmem %s2442, %s2470 [#allocation2]
            %s2472 = sshllo.u32 0, %s2467
            loop: start=0, step=1, limit=1
            $region1466: #{tpu_custom_call.1} parent=1464 // loop_pre_header
              _
            $region1467: #{tpu_custom_call.1} parent=1464 // loop_header
              %s2474 = sphi 0, %s2478
              %p2475 = scmp.ge.s32.totalorder %s2474, 1
              %s2479 = sphi %s2469, %s2469
              %s2480 = sphi %s2471, %s2471
            $region1468: #{tpu_custom_call.1} parent=1464 // loop_header_branch
              %2477 = sbr.rel (%p2475) target = $region1472
            $region1469: #{tpu_custom_call.1} parent=1464 // loop_body
              %v2481 = vld [vmem:[%s2479] sm:%s2472]
              %2482 = vst [vmem:[%s2480] sm:%s2472] %v2481
            $region1470: #{tpu_custom_call.1} parent=1464 // loop_footer
              %s2478 = sadd.s32 1, %s2474
            $region1471: #{tpu_custom_call.1} parent=1464 // loop_footer_branch
              %2473 = sbr.rel target = $region1467
            $region1472: #{tpu_custom_call.1} parent=1464 // loop_exit
              _
          $region1465: #{tpu_custom_call.1} parent=1449 // pred_fallthru
            _
        $region1450: #{tpu_custom_call.1} parent=35 // pred_fallthru
          _
        // Predicated region
        $region1451: #{tpu_custom_call.1} parent=35 // pred_check
          %p2448 = pneg %p2444
        $region1452: #{tpu_custom_call.1} parent=35 // pred_check_branch
          %2450 = sbr.rel (%p2448) target = $region1454
        $region1453: #{tpu_custom_call.1} parent=35 // pred_region
          %s2451 = sshllo.u32 0, 1
          loop: start=0, step=1, limit=1
          $region1455: #{tpu_custom_call.1} parent=1453 // loop_pre_header
            _
          $region1456: #{tpu_custom_call.1} parent=1453 // loop_header
            %s2453 = sphi 0, %s2457
            %p2454 = scmp.ge.s32.totalorder %s2453, 1
            %s2458 = sphi %s2441, %s2441
            %s2459 = sphi %s2442, %s2442
          $region1457: #{tpu_custom_call.1} parent=1453 // loop_header_branch
            %2456 = sbr.rel (%p2454) target = $region1461
          $region1458: #{tpu_custom_call.1} parent=1453 // loop_body
            %v2460 = vld [vmem:[%s2458] sm:%s2451]
            %2461 = vst [vmem:[%s2459] sm:%s2451] %v2460
          $region1459: #{tpu_custom_call.1} parent=1453 // loop_footer
            %s2457 = sadd.s32 1, %s2453
          $region1460: #{tpu_custom_call.1} parent=1453 // loop_footer_branch
            %2452 = sbr.rel target = $region1456
          $region1461: #{tpu_custom_call.1} parent=1453 // loop_exit
            _
        $region1454: #{tpu_custom_call.1} parent=35 // pred_fallthru
          _
        // Predicated region
        $region1473: #{tpu_custom_call.1} parent=35 // pred_check
          _
        $region1474: #{tpu_custom_call.1} parent=35 // pred_check_branch
          %2485 = sbr.rel (0) target = $region1476
        $region1475: #{tpu_custom_call.1} parent=35 // pred_region
          %2486 = vsyncadd [#allocation3], 16
        $region1476: #{tpu_custom_call.1} parent=35 // pred_fallthru
          _
        %s2487 = sadd.s32 %s184, 48
        %s2488 = sld [smem:[#allocation5 + %s2487]]
        %s2489 = scalar_lea.vmem %s1, %s2488
        %s2490 = scalar_lea.vmem [#allocation2], 6
        %p2492 = scmp.lt.u32.totalorder 1, 8
        %p2493 = pneg %p2492
        // Predicated region
        $region1477: #{tpu_custom_call.1} parent=35 // pred_check
          _
        $region1478: #{tpu_custom_call.1} parent=35 // pred_check_branch
          %2495 = sbr.rel (%p2492) target = $region1480
        $region1479: #{tpu_custom_call.1} parent=35 // pred_region
          %s2510 = sand.u32 1, 7
          %p2511 = scmp.eq.s32.totalorder %s2510, 0
          %p2512 = pneg %p2511
          // Predicated region
          $region1492: #{tpu_custom_call.1} parent=1479 // pred_check
            _
          $region1493: #{tpu_custom_call.1} parent=1479 // pred_check_branch
            %2514 = sbr.rel (%p2511) target = $region1495
          $region1494: #{tpu_custom_call.1} parent=1479 // pred_region
            %s2515 = sand.u32 1, 7
            %s2516 = ssub.s32 1, %s2515
            %s2517 = scalar_lea.vmem %s2489, %s2516
            %s2518 = ssub.s32 1, %s2515
            %s2519 = scalar_lea.vmem %s2490, %s2518 [#allocation2]
            %s2520 = sshllo.u32 0, %s2515
            loop: start=0, step=1, limit=1
            $region1496: #{tpu_custom_call.1} parent=1494 // loop_pre_header
              _
            $region1497: #{tpu_custom_call.1} parent=1494 // loop_header
              %s2522 = sphi 0, %s2526
              %p2523 = scmp.ge.s32.totalorder %s2522, 1
              %s2527 = sphi %s2517, %s2517
              %s2528 = sphi %s2519, %s2519
            $region1498: #{tpu_custom_call.1} parent=1494 // loop_header_branch
              %2525 = sbr.rel (%p2523) target = $region1502
            $region1499: #{tpu_custom_call.1} parent=1494 // loop_body
              %v2529 = vld [vmem:[%s2527] sm:%s2520]
              %2530 = vst [vmem:[%s2528] sm:%s2520] %v2529
            $region1500: #{tpu_custom_call.1} parent=1494 // loop_footer
              %s2526 = sadd.s32 1, %s2522
            $region1501: #{tpu_custom_call.1} parent=1494 // loop_footer_branch
              %2521 = sbr.rel target = $region1497
            $region1502: #{tpu_custom_call.1} parent=1494 // loop_exit
              _
          $region1495: #{tpu_custom_call.1} parent=1479 // pred_fallthru
            _
        $region1480: #{tpu_custom_call.1} parent=35 // pred_fallthru
          _
        // Predicated region
        $region1481: #{tpu_custom_call.1} parent=35 // pred_check
          %p2496 = pneg %p2492
        $region1482: #{tpu_custom_call.1} parent=35 // pred_check_branch
          %2498 = sbr.rel (%p2496) target = $region1484
        $region1483: #{tpu_custom_call.1} parent=35 // pred_region
          %s2499 = sshllo.u32 0, 1
          loop: start=0, step=1, limit=1
          $region1485: #{tpu_custom_call.1} parent=1483 // loop_pre_header
            _
          $region1486: #{tpu_custom_call.1} parent=1483 // loop_header
            %s2501 = sphi 0, %s2505
            %p2502 = scmp.ge.s32.totalorder %s2501, 1
            %s2506 = sphi %s2489, %s2489
            %s2507 = sphi %s2490, %s2490
          $region1487: #{tpu_custom_call.1} parent=1483 // loop_header_branch
            %2504 = sbr.rel (%p2502) target = $region1491
          $region1488: #{tpu_custom_call.1} parent=1483 // loop_body
            %v2508 = vld [vmem:[%s2506] sm:%s2499]
            %2509 = vst [vmem:[%s2507] sm:%s2499] %v2508
          $region1489: #{tpu_custom_call.1} parent=1483 // loop_footer
            %s2505 = sadd.s32 1, %s2501
          $region1490: #{tpu_custom_call.1} parent=1483 // loop_footer_branch
            %2500 = sbr.rel target = $region1486
          $region1491: #{tpu_custom_call.1} parent=1483 // loop_exit
            _
        $region1484: #{tpu_custom_call.1} parent=35 // pred_fallthru
          _
        // Predicated region
        $region1503: #{tpu_custom_call.1} parent=35 // pred_check
          _
        $region1504: #{tpu_custom_call.1} parent=35 // pred_check_branch
          %2533 = sbr.rel (0) target = $region1506
        $region1505: #{tpu_custom_call.1} parent=35 // pred_region
          %2534 = vsyncadd [#allocation3], 16
        $region1506: #{tpu_custom_call.1} parent=35 // pred_fallthru
          _
        %s2535 = sadd.s32 %s184, 49
        %s2536 = sld [smem:[#allocation5 + %s2535]]
        %s2537 = scalar_lea.vmem %s1, %s2536
        %s2538 = scalar_lea.vmem [#allocation2], 14
        %p2540 = scmp.lt.u32.totalorder 1, 8
        %p2541 = pneg %p2540
        // Predicated region
        $region1507: #{tpu_custom_call.1} parent=35 // pred_check
          _
        $region1508: #{tpu_custom_call.1} parent=35 // pred_check_branch
          %2543 = sbr.rel (%p2540) target = $region1510
        $region1509: #{tpu_custom_call.1} parent=35 // pred_region
          %s2558 = sand.u32 1, 7
          %p2559 = scmp.eq.s32.totalorder %s2558, 0
          %p2560 = pneg %p2559
          // Predicated region
          $region1522: #{tpu_custom_call.1} parent=1509 // pred_check
            _
          $region1523: #{tpu_custom_call.1} parent=1509 // pred_check_branch
            %2562 = sbr.rel (%p2559) target = $region1525
          $region1524: #{tpu_custom_call.1} parent=1509 // pred_region
            %s2563 = sand.u32 1, 7
            %s2564 = ssub.s32 1, %s2563
            %s2565 = scalar_lea.vmem %s2537, %s2564
            %s2566 = ssub.s32 1, %s2563
            %s2567 = scalar_lea.vmem %s2538, %s2566 [#allocation2]
            %s2568 = sshllo.u32 0, %s2563
            loop: start=0, step=1, limit=1
            $region1526: #{tpu_custom_call.1} parent=1524 // loop_pre_header
              _
            $region1527: #{tpu_custom_call.1} parent=1524 // loop_header
              %s2570 = sphi 0, %s2574
              %p2571 = scmp.ge.s32.totalorder %s2570, 1
              %s2575 = sphi %s2565, %s2565
              %s2576 = sphi %s2567, %s2567
            $region1528: #{tpu_custom_call.1} parent=1524 // loop_header_branch
              %2573 = sbr.rel (%p2571) target = $region1532
            $region1529: #{tpu_custom_call.1} parent=1524 // loop_body
              %v2577 = vld [vmem:[%s2575] sm:%s2568]
              %2578 = vst [vmem:[%s2576] sm:%s2568] %v2577
            $region1530: #{tpu_custom_call.1} parent=1524 // loop_footer
              %s2574 = sadd.s32 1, %s2570
            $region1531: #{tpu_custom_call.1} parent=1524 // loop_footer_branch
              %2569 = sbr.rel target = $region1527
            $region1532: #{tpu_custom_call.1} parent=1524 // loop_exit
              _
          $region1525: #{tpu_custom_call.1} parent=1509 // pred_fallthru
            _
        $region1510: #{tpu_custom_call.1} parent=35 // pred_fallthru
          _
        // Predicated region
        $region1511: #{tpu_custom_call.1} parent=35 // pred_check
          %p2544 = pneg %p2540
        $region1512: #{tpu_custom_call.1} parent=35 // pred_check_branch
          %2546 = sbr.rel (%p2544) target = $region1514
        $region1513: #{tpu_custom_call.1} parent=35 // pred_region
          %s2547 = sshllo.u32 0, 1
          loop: start=0, step=1, limit=1
          $region1515: #{tpu_custom_call.1} parent=1513 // loop_pre_header
            _
          $region1516: #{tpu_custom_call.1} parent=1513 // loop_header
            %s2549 = sphi 0, %s2553
            %p2550 = scmp.ge.s32.totalorder %s2549, 1
            %s2554 = sphi %s2537, %s2537
            %s2555 = sphi %s2538, %s2538
          $region1517: #{tpu_custom_call.1} parent=1513 // loop_header_branch
            %2552 = sbr.rel (%p2550) target = $region1521
          $region1518: #{tpu_custom_call.1} parent=1513 // loop_body
            %v2556 = vld [vmem:[%s2554] sm:%s2547]
            %2557 = vst [vmem:[%s2555] sm:%s2547] %v2556
          $region1519: #{tpu_custom_call.1} parent=1513 // loop_footer
            %s2553 = sadd.s32 1, %s2549
          $region1520: #{tpu_custom_call.1} parent=1513 // loop_footer_branch
            %2548 = sbr.rel target = $region1516
          $region1521: #{tpu_custom_call.1} parent=1513 // loop_exit
            _
        $region1514: #{tpu_custom_call.1} parent=35 // pred_fallthru
          _
        // Predicated region
        $region1533: #{tpu_custom_call.1} parent=35 // pred_check
          _
        $region1534: #{tpu_custom_call.1} parent=35 // pred_check_branch
          %2581 = sbr.rel (0) target = $region1536
        $region1535: #{tpu_custom_call.1} parent=35 // pred_region
          %2582 = vsyncadd [#allocation3], 16
        $region1536: #{tpu_custom_call.1} parent=35 // pred_fallthru
          _
        %s2583 = sadd.s32 %s184, 50
        %s2584 = sld [smem:[#allocation5 + %s2583]]
        %s2585 = scalar_lea.vmem %s1, %s2584
        %s2586 = scalar_lea.vmem [#allocation2], 22
        %p2588 = scmp.lt.u32.totalorder 1, 8
        %p2589 = pneg %p2588
        // Predicated region
        $region1537: #{tpu_custom_call.1} parent=35 // pred_check
          _
        $region1538: #{tpu_custom_call.1} parent=35 // pred_check_branch
          %2591 = sbr.rel (%p2588) target = $region1540
        $region1539: #{tpu_custom_call.1} parent=35 // pred_region
          %s2606 = sand.u32 1, 7
          %p2607 = scmp.eq.s32.totalorder %s2606, 0
          %p2608 = pneg %p2607
          // Predicated region
          $region1552: #{tpu_custom_call.1} parent=1539 // pred_check
            _
          $region1553: #{tpu_custom_call.1} parent=1539 // pred_check_branch
            %2610 = sbr.rel (%p2607) target = $region1555
          $region1554: #{tpu_custom_call.1} parent=1539 // pred_region
            %s2611 = sand.u32 1, 7
            %s2612 = ssub.s32 1, %s2611
            %s2613 = scalar_lea.vmem %s2585, %s2612
            %s2614 = ssub.s32 1, %s2611
            %s2615 = scalar_lea.vmem %s2586, %s2614 [#allocation2]
            %s2616 = sshllo.u32 0, %s2611
            loop: start=0, step=1, limit=1
            $region1556: #{tpu_custom_call.1} parent=1554 // loop_pre_header
              _
            $region1557: #{tpu_custom_call.1} parent=1554 // loop_header
              %s2618 = sphi 0, %s2622
              %p2619 = scmp.ge.s32.totalorder %s2618, 1
              %s2623 = sphi %s2613, %s2613
              %s2624 = sphi %s2615, %s2615
            $region1558: #{tpu_custom_call.1} parent=1554 // loop_header_branch
              %2621 = sbr.rel (%p2619) target = $region1562
            $region1559: #{tpu_custom_call.1} parent=1554 // loop_body
              %v2625 = vld [vmem:[%s2623] sm:%s2616]
              %2626 = vst [vmem:[%s2624] sm:%s2616] %v2625
            $region1560: #{tpu_custom_call.1} parent=1554 // loop_footer
              %s2622 = sadd.s32 1, %s2618
            $region1561: #{tpu_custom_call.1} parent=1554 // loop_footer_branch
              %2617 = sbr.rel target = $region1557
            $region1562: #{tpu_custom_call.1} parent=1554 // loop_exit
              _
          $region1555: #{tpu_custom_call.1} parent=1539 // pred_fallthru
            _
        $region1540: #{tpu_custom_call.1} parent=35 // pred_fallthru
          _
        // Predicated region
        $region1541: #{tpu_custom_call.1} parent=35 // pred_check
          %p2592 = pneg %p2588
        $region1542: #{tpu_custom_call.1} parent=35 // pred_check_branch
          %2594 = sbr.rel (%p2592) target = $region1544
        $region1543: #{tpu_custom_call.1} parent=35 // pred_region
          %s2595 = sshllo.u32 0, 1
          loop: start=0, step=1, limit=1
          $region1545: #{tpu_custom_call.1} parent=1543 // loop_pre_header
            _
          $region1546: #{tpu_custom_call.1} parent=1543 // loop_header
            %s2597 = sphi 0, %s2601
            %p2598 = scmp.ge.s32.totalorder %s2597, 1
            %s2602 = sphi %s2585, %s2585
            %s2603 = sphi %s2586, %s2586
          $region1547: #{tpu_custom_call.1} parent=1543 // loop_header_branch
            %2600 = sbr.rel (%p2598) target = $region1551
          $region1548: #{tpu_custom_call.1} parent=1543 // loop_body
            %v2604 = vld [vmem:[%s2602] sm:%s2595]
            %2605 = vst [vmem:[%s2603] sm:%s2595] %v2604
          $region1549: #{tpu_custom_call.1} parent=1543 // loop_footer
            %s2601 = sadd.s32 1, %s2597
          $region1550: #{tpu_custom_call.1} parent=1543 // loop_footer_branch
            %2596 = sbr.rel target = $region1546
          $region1551: #{tpu_custom_call.1} parent=1543 // loop_exit
            _
        $region1544: #{tpu_custom_call.1} parent=35 // pred_fallthru
          _
        // Predicated region
        $region1563: #{tpu_custom_call.1} parent=35 // pred_check
          _
        $region1564: #{tpu_custom_call.1} parent=35 // pred_check_branch
          %2629 = sbr.rel (0) target = $region1566
        $region1565: #{tpu_custom_call.1} parent=35 // pred_region
          %2630 = vsyncadd [#allocation3], 16
        $region1566: #{tpu_custom_call.1} parent=35 // pred_fallthru
          _
        %s2631 = sadd.s32 %s184, 51
        %s2632 = sld [smem:[#allocation5 + %s2631]]
        %s2633 = scalar_lea.vmem %s1, %s2632
        %s2634 = scalar_lea.vmem [#allocation2], 30
        %p2636 = scmp.lt.u32.totalorder 1, 8
        %p2637 = pneg %p2636
        // Predicated region
        $region1567: #{tpu_custom_call.1} parent=35 // pred_check
          _
        $region1568: #{tpu_custom_call.1} parent=35 // pred_check_branch
          %2639 = sbr.rel (%p2636) target = $region1570
        $region1569: #{tpu_custom_call.1} parent=35 // pred_region
          %s2654 = sand.u32 1, 7
          %p2655 = scmp.eq.s32.totalorder %s2654, 0
          %p2656 = pneg %p2655
          // Predicated region
          $region1582: #{tpu_custom_call.1} parent=1569 // pred_check
            _
          $region1583: #{tpu_custom_call.1} parent=1569 // pred_check_branch
            %2658 = sbr.rel (%p2655) target = $region1585
          $region1584: #{tpu_custom_call.1} parent=1569 // pred_region
            %s2659 = sand.u32 1, 7
            %s2660 = ssub.s32 1, %s2659
            %s2661 = scalar_lea.vmem %s2633, %s2660
            %s2662 = ssub.s32 1, %s2659
            %s2663 = scalar_lea.vmem %s2634, %s2662 [#allocation2]
            %s2664 = sshllo.u32 0, %s2659
            loop: start=0, step=1, limit=1
            $region1586: #{tpu_custom_call.1} parent=1584 // loop_pre_header
              _
            $region1587: #{tpu_custom_call.1} parent=1584 // loop_header
              %s2666 = sphi 0, %s2670
              %p2667 = scmp.ge.s32.totalorder %s2666, 1
              %s2671 = sphi %s2661, %s2661
              %s2672 = sphi %s2663, %s2663
            $region1588: #{tpu_custom_call.1} parent=1584 // loop_header_branch
              %2669 = sbr.rel (%p2667) target = $region1592
            $region1589: #{tpu_custom_call.1} parent=1584 // loop_body
              %v2673 = vld [vmem:[%s2671] sm:%s2664]
              %2674 = vst [vmem:[%s2672] sm:%s2664] %v2673
            $region1590: #{tpu_custom_call.1} parent=1584 // loop_footer
              %s2670 = sadd.s32 1, %s2666
            $region1591: #{tpu_custom_call.1} parent=1584 // loop_footer_branch
              %2665 = sbr.rel target = $region1587
            $region1592: #{tpu_custom_call.1} parent=1584 // loop_exit
              _
          $region1585: #{tpu_custom_call.1} parent=1569 // pred_fallthru
            _
        $region1570: #{tpu_custom_call.1} parent=35 // pred_fallthru
          _
        // Predicated region
        $region1571: #{tpu_custom_call.1} parent=35 // pred_check
          %p2640 = pneg %p2636
        $region1572: #{tpu_custom_call.1} parent=35 // pred_check_branch
          %2642 = sbr.rel (%p2640) target = $region1574
        $region1573: #{tpu_custom_call.1} parent=35 // pred_region
          %s2643 = sshllo.u32 0, 1
          loop: start=0, step=1, limit=1
          $region1575: #{tpu_custom_call.1} parent=1573 // loop_pre_header
            _
          $region1576: #{tpu_custom_call.1} parent=1573 // loop_header
            %s2645 = sphi 0, %s2649
            %p2646 = scmp.ge.s32.totalorder %s2645, 1
            %s2650 = sphi %s2633, %s2633
            %s2651 = sphi %s2634, %s2634
          $region1577: #{tpu_custom_call.1} parent=1573 // loop_header_branch
            %2648 = sbr.rel (%p2646) target = $region1581
          $region1578: #{tpu_custom_call.1} parent=1573 // loop_body
            %v2652 = vld [vmem:[%s2650] sm:%s2643]
            %2653 = vst [vmem:[%s2651] sm:%s2643] %v2652
          $region1579: #{tpu_custom_call.1} parent=1573 // loop_footer
            %s2649 = sadd.s32 1, %s2645
          $region1580: #{tpu_custom_call.1} parent=1573 // loop_footer_branch
            %2644 = sbr.rel target = $region1576
          $region1581: #{tpu_custom_call.1} parent=1573 // loop_exit
            _
        $region1574: #{tpu_custom_call.1} parent=35 // pred_fallthru
          _
        // Predicated region
        $region1593: #{tpu_custom_call.1} parent=35 // pred_check
          _
        $region1594: #{tpu_custom_call.1} parent=35 // pred_check_branch
          %2677 = sbr.rel (0) target = $region1596
        $region1595: #{tpu_custom_call.1} parent=35 // pred_region
          %2678 = vsyncadd [#allocation3], 16
        $region1596: #{tpu_custom_call.1} parent=35 // pred_fallthru
          _
        %s2679 = sadd.s32 %s184, 52
        %s2680 = sld [smem:[#allocation5 + %s2679]]
        %s2681 = scalar_lea.vmem %s1, %s2680
        %s2682 = scalar_lea.vmem [#allocation2], 38
        %p2684 = scmp.lt.u32.totalorder 1, 8
        %p2685 = pneg %p2684
        // Predicated region
        $region1597: #{tpu_custom_call.1} parent=35 // pred_check
          _
        $region1598: #{tpu_custom_call.1} parent=35 // pred_check_branch
          %2687 = sbr.rel (%p2684) target = $region1600
        $region1599: #{tpu_custom_call.1} parent=35 // pred_region
          %s2702 = sand.u32 1, 7
          %p2703 = scmp.eq.s32.totalorder %s2702, 0
          %p2704 = pneg %p2703
          // Predicated region
          $region1612: #{tpu_custom_call.1} parent=1599 // pred_check
            _
          $region1613: #{tpu_custom_call.1} parent=1599 // pred_check_branch
            %2706 = sbr.rel (%p2703) target = $region1615
          $region1614: #{tpu_custom_call.1} parent=1599 // pred_region
            %s2707 = sand.u32 1, 7
            %s2708 = ssub.s32 1, %s2707
            %s2709 = scalar_lea.vmem %s2681, %s2708
            %s2710 = ssub.s32 1, %s2707
            %s2711 = scalar_lea.vmem %s2682, %s2710 [#allocation2]
            %s2712 = sshllo.u32 0, %s2707
            loop: start=0, step=1, limit=1
            $region1616: #{tpu_custom_call.1} parent=1614 // loop_pre_header
              _
            $region1617: #{tpu_custom_call.1} parent=1614 // loop_header
              %s2714 = sphi 0, %s2718
              %p2715 = scmp.ge.s32.totalorder %s2714, 1
              %s2719 = sphi %s2709, %s2709
              %s2720 = sphi %s2711, %s2711
            $region1618: #{tpu_custom_call.1} parent=1614 // loop_header_branch
              %2717 = sbr.rel (%p2715) target = $region1622
            $region1619: #{tpu_custom_call.1} parent=1614 // loop_body
              %v2721 = vld [vmem:[%s2719] sm:%s2712]
              %2722 = vst [vmem:[%s2720] sm:%s2712] %v2721
            $region1620: #{tpu_custom_call.1} parent=1614 // loop_footer
              %s2718 = sadd.s32 1, %s2714
            $region1621: #{tpu_custom_call.1} parent=1614 // loop_footer_branch
              %2713 = sbr.rel target = $region1617
            $region1622: #{tpu_custom_call.1} parent=1614 // loop_exit
              _
          $region1615: #{tpu_custom_call.1} parent=1599 // pred_fallthru
            _
        $region1600: #{tpu_custom_call.1} parent=35 // pred_fallthru
          _
        // Predicated region
        $region1601: #{tpu_custom_call.1} parent=35 // pred_check
          %p2688 = pneg %p2684
        $region1602: #{tpu_custom_call.1} parent=35 // pred_check_branch
          %2690 = sbr.rel (%p2688) target = $region1604
        $region1603: #{tpu_custom_call.1} parent=35 // pred_region
          %s2691 = sshllo.u32 0, 1
          loop: start=0, step=1, limit=1
          $region1605: #{tpu_custom_call.1} parent=1603 // loop_pre_header
            _
          $region1606: #{tpu_custom_call.1} parent=1603 // loop_header
            %s2693 = sphi 0, %s2697
            %p2694 = scmp.ge.s32.totalorder %s2693, 1
            %s2698 = sphi %s2681, %s2681
            %s2699 = sphi %s2682, %s2682
          $region1607: #{tpu_custom_call.1} parent=1603 // loop_header_branch
            %2696 = sbr.rel (%p2694) target = $region1611
          $region1608: #{tpu_custom_call.1} parent=1603 // loop_body
            %v2700 = vld [vmem:[%s2698] sm:%s2691]
            %2701 = vst [vmem:[%s2699] sm:%s2691] %v2700
          $region1609: #{tpu_custom_call.1} parent=1603 // loop_footer
            %s2697 = sadd.s32 1, %s2693
          $region1610: #{tpu_custom_call.1} parent=1603 // loop_footer_branch
            %2692 = sbr.rel target = $region1606
          $region1611: #{tpu_custom_call.1} parent=1603 // loop_exit
            _
        $region1604: #{tpu_custom_call.1} parent=35 // pred_fallthru
          _
        // Predicated region
        $region1623: #{tpu_custom_call.1} parent=35 // pred_check
          _
        $region1624: #{tpu_custom_call.1} parent=35 // pred_check_branch
          %2725 = sbr.rel (0) target = $region1626
        $region1625: #{tpu_custom_call.1} parent=35 // pred_region
          %2726 = vsyncadd [#allocation3], 16
        $region1626: #{tpu_custom_call.1} parent=35 // pred_fallthru
          _
        %s2727 = sadd.s32 %s184, 53
        %s2728 = sld [smem:[#allocation5 + %s2727]]
        %s2729 = scalar_lea.vmem %s1, %s2728
        %s2730 = scalar_lea.vmem [#allocation2], 46
        %p2732 = scmp.lt.u32.totalorder 1, 8
        %p2733 = pneg %p2732
        // Predicated region
        $region1627: #{tpu_custom_call.1} parent=35 // pred_check
          _
        $region1628: #{tpu_custom_call.1} parent=35 // pred_check_branch
          %2735 = sbr.rel (%p2732) target = $region1630
        $region1629: #{tpu_custom_call.1} parent=35 // pred_region
          %s2750 = sand.u32 1, 7
          %p2751 = scmp.eq.s32.totalorder %s2750, 0
          %p2752 = pneg %p2751
          // Predicated region
          $region1642: #{tpu_custom_call.1} parent=1629 // pred_check
            _
          $region1643: #{tpu_custom_call.1} parent=1629 // pred_check_branch
            %2754 = sbr.rel (%p2751) target = $region1645
          $region1644: #{tpu_custom_call.1} parent=1629 // pred_region
            %s2755 = sand.u32 1, 7
            %s2756 = ssub.s32 1, %s2755
            %s2757 = scalar_lea.vmem %s2729, %s2756
            %s2758 = ssub.s32 1, %s2755
            %s2759 = scalar_lea.vmem %s2730, %s2758 [#allocation2]
            %s2760 = sshllo.u32 0, %s2755
            loop: start=0, step=1, limit=1
            $region1646: #{tpu_custom_call.1} parent=1644 // loop_pre_header
              _
            $region1647: #{tpu_custom_call.1} parent=1644 // loop_header
              %s2762 = sphi 0, %s2766
              %p2763 = scmp.ge.s32.totalorder %s2762, 1
              %s2767 = sphi %s2757, %s2757
              %s2768 = sphi %s2759, %s2759
            $region1648: #{tpu_custom_call.1} parent=1644 // loop_header_branch
              %2765 = sbr.rel (%p2763) target = $region1652
            $region1649: #{tpu_custom_call.1} parent=1644 // loop_body
              %v2769 = vld [vmem:[%s2767] sm:%s2760]
              %2770 = vst [vmem:[%s2768] sm:%s2760] %v2769
            $region1650: #{tpu_custom_call.1} parent=1644 // loop_footer
              %s2766 = sadd.s32 1, %s2762
            $region1651: #{tpu_custom_call.1} parent=1644 // loop_footer_branch
              %2761 = sbr.rel target = $region1647
            $region1652: #{tpu_custom_call.1} parent=1644 // loop_exit
              _
          $region1645: #{tpu_custom_call.1} parent=1629 // pred_fallthru
            _
        $region1630: #{tpu_custom_call.1} parent=35 // pred_fallthru
          _
        // Predicated region
        $region1631: #{tpu_custom_call.1} parent=35 // pred_check
          %p2736 = pneg %p2732
        $region1632: #{tpu_custom_call.1} parent=35 // pred_check_branch
          %2738 = sbr.rel (%p2736) target = $region1634
        $region1633: #{tpu_custom_call.1} parent=35 // pred_region
          %s2739 = sshllo.u32 0, 1
          loop: start=0, step=1, limit=1
          $region1635: #{tpu_custom_call.1} parent=1633 // loop_pre_header
            _
          $region1636: #{tpu_custom_call.1} parent=1633 // loop_header
            %s2741 = sphi 0, %s2745
            %p2742 = scmp.ge.s32.totalorder %s2741, 1
            %s2746 = sphi %s2729, %s2729
            %s2747 = sphi %s2730, %s2730
          $region1637: #{tpu_custom_call.1} parent=1633 // loop_header_branch
            %2744 = sbr.rel (%p2742) target = $region1641
          $region1638: #{tpu_custom_call.1} parent=1633 // loop_body
            %v2748 = vld [vmem:[%s2746] sm:%s2739]
            %2749 = vst [vmem:[%s2747] sm:%s2739] %v2748
          $region1639: #{tpu_custom_call.1} parent=1633 // loop_footer
            %s2745 = sadd.s32 1, %s2741
          $region1640: #{tpu_custom_call.1} parent=1633 // loop_footer_branch
            %2740 = sbr.rel target = $region1636
          $region1641: #{tpu_custom_call.1} parent=1633 // loop_exit
            _
        $region1634: #{tpu_custom_call.1} parent=35 // pred_fallthru
          _
        // Predicated region
        $region1653: #{tpu_custom_call.1} parent=35 // pred_check
          _
        $region1654: #{tpu_custom_call.1} parent=35 // pred_check_branch
          %2773 = sbr.rel (0) target = $region1656
        $region1655: #{tpu_custom_call.1} parent=35 // pred_region
          %2774 = vsyncadd [#allocation3], 16
        $region1656: #{tpu_custom_call.1} parent=35 // pred_fallthru
          _
        %s2775 = sadd.s32 %s184, 54
        %s2776 = sld [smem:[#allocation5 + %s2775]]
        %s2777 = scalar_lea.vmem %s1, %s2776
        %s2778 = scalar_lea.vmem [#allocation2], 54
        %p2780 = scmp.lt.u32.totalorder 1, 8
        %p2781 = pneg %p2780
        // Predicated region
        $region1657: #{tpu_custom_call.1} parent=35 // pred_check
          _
        $region1658: #{tpu_custom_call.1} parent=35 // pred_check_branch
          %2783 = sbr.rel (%p2780) target = $region1660
        $region1659: #{tpu_custom_call.1} parent=35 // pred_region
          %s2798 = sand.u32 1, 7
          %p2799 = scmp.eq.s32.totalorder %s2798, 0
          %p2800 = pneg %p2799
          // Predicated region
          $region1672: #{tpu_custom_call.1} parent=1659 // pred_check
            _
          $region1673: #{tpu_custom_call.1} parent=1659 // pred_check_branch
            %2802 = sbr.rel (%p2799) target = $region1675
          $region1674: #{tpu_custom_call.1} parent=1659 // pred_region
            %s2803 = sand.u32 1, 7
            %s2804 = ssub.s32 1, %s2803
            %s2805 = scalar_lea.vmem %s2777, %s2804
            %s2806 = ssub.s32 1, %s2803
            %s2807 = scalar_lea.vmem %s2778, %s2806 [#allocation2]
            %s2808 = sshllo.u32 0, %s2803
            loop: start=0, step=1, limit=1
            $region1676: #{tpu_custom_call.1} parent=1674 // loop_pre_header
              _
            $region1677: #{tpu_custom_call.1} parent=1674 // loop_header
              %s2810 = sphi 0, %s2814
              %p2811 = scmp.ge.s32.totalorder %s2810, 1
              %s2815 = sphi %s2805, %s2805
              %s2816 = sphi %s2807, %s2807
            $region1678: #{tpu_custom_call.1} parent=1674 // loop_header_branch
              %2813 = sbr.rel (%p2811) target = $region1682
            $region1679: #{tpu_custom_call.1} parent=1674 // loop_body
              %v2817 = vld [vmem:[%s2815] sm:%s2808]
              %2818 = vst [vmem:[%s2816] sm:%s2808] %v2817
            $region1680: #{tpu_custom_call.1} parent=1674 // loop_footer
              %s2814 = sadd.s32 1, %s2810
            $region1681: #{tpu_custom_call.1} parent=1674 // loop_footer_branch
              %2809 = sbr.rel target = $region1677
            $region1682: #{tpu_custom_call.1} parent=1674 // loop_exit
              _
          $region1675: #{tpu_custom_call.1} parent=1659 // pred_fallthru
            _
        $region1660: #{tpu_custom_call.1} parent=35 // pred_fallthru
          _
        // Predicated region
        $region1661: #{tpu_custom_call.1} parent=35 // pred_check
          %p2784 = pneg %p2780
        $region1662: #{tpu_custom_call.1} parent=35 // pred_check_branch
          %2786 = sbr.rel (%p2784) target = $region1664
        $region1663: #{tpu_custom_call.1} parent=35 // pred_region
          %s2787 = sshllo.u32 0, 1
          loop: start=0, step=1, limit=1
          $region1665: #{tpu_custom_call.1} parent=1663 // loop_pre_header
            _
          $region1666: #{tpu_custom_call.1} parent=1663 // loop_header
            %s2789 = sphi 0, %s2793
            %p2790 = scmp.ge.s32.totalorder %s2789, 1
            %s2794 = sphi %s2777, %s2777
            %s2795 = sphi %s2778, %s2778
          $region1667: #{tpu_custom_call.1} parent=1663 // loop_header_branch
            %2792 = sbr.rel (%p2790) target = $region1671
          $region1668: #{tpu_custom_call.1} parent=1663 // loop_body
            %v2796 = vld [vmem:[%s2794] sm:%s2787]
            %2797 = vst [vmem:[%s2795] sm:%s2787] %v2796
          $region1669: #{tpu_custom_call.1} parent=1663 // loop_footer
            %s2793 = sadd.s32 1, %s2789
          $region1670: #{tpu_custom_call.1} parent=1663 // loop_footer_branch
            %2788 = sbr.rel target = $region1666
          $region1671: #{tpu_custom_call.1} parent=1663 // loop_exit
            _
        $region1664: #{tpu_custom_call.1} parent=35 // pred_fallthru
          _
        // Predicated region
        $region1683: #{tpu_custom_call.1} parent=35 // pred_check
          _
        $region1684: #{tpu_custom_call.1} parent=35 // pred_check_branch
          %2821 = sbr.rel (0) target = $region1686
        $region1685: #{tpu_custom_call.1} parent=35 // pred_region
          %2822 = vsyncadd [#allocation3], 16
        $region1686: #{tpu_custom_call.1} parent=35 // pred_fallthru
          _
        %s2823 = sadd.s32 %s184, 55
        %s2824 = sld [smem:[#allocation5 + %s2823]]
        %s2825 = scalar_lea.vmem %s1, %s2824
        %s2826 = scalar_lea.vmem [#allocation2], 62
        %p2828 = scmp.lt.u32.totalorder 1, 8
        %p2829 = pneg %p2828
        // Predicated region
        $region1687: #{tpu_custom_call.1} parent=35 // pred_check
          _
        $region1688: #{tpu_custom_call.1} parent=35 // pred_check_branch
          %2831 = sbr.rel (%p2828) target = $region1690
        $region1689: #{tpu_custom_call.1} parent=35 // pred_region
          %s2846 = sand.u32 1, 7
          %p2847 = scmp.eq.s32.totalorder %s2846, 0
          %p2848 = pneg %p2847
          // Predicated region
          $region1702: #{tpu_custom_call.1} parent=1689 // pred_check
            _
          $region1703: #{tpu_custom_call.1} parent=1689 // pred_check_branch
            %2850 = sbr.rel (%p2847) target = $region1705
          $region1704: #{tpu_custom_call.1} parent=1689 // pred_region
            %s2851 = sand.u32 1, 7
            %s2852 = ssub.s32 1, %s2851
            %s2853 = scalar_lea.vmem %s2825, %s2852
            %s2854 = ssub.s32 1, %s2851
            %s2855 = scalar_lea.vmem %s2826, %s2854 [#allocation2]
            %s2856 = sshllo.u32 0, %s2851
            loop: start=0, step=1, limit=1
            $region1706: #{tpu_custom_call.1} parent=1704 // loop_pre_header
              _
            $region1707: #{tpu_custom_call.1} parent=1704 // loop_header
              %s2858 = sphi 0, %s2862
              %p2859 = scmp.ge.s32.totalorder %s2858, 1
              %s2863 = sphi %s2853, %s2853
              %s2864 = sphi %s2855, %s2855
            $region1708: #{tpu_custom_call.1} parent=1704 // loop_header_branch
              %2861 = sbr.rel (%p2859) target = $region1712
            $region1709: #{tpu_custom_call.1} parent=1704 // loop_body
              %v2865 = vld [vmem:[%s2863] sm:%s2856]
              %2866 = vst [vmem:[%s2864] sm:%s2856] %v2865
            $region1710: #{tpu_custom_call.1} parent=1704 // loop_footer
              %s2862 = sadd.s32 1, %s2858
            $region1711: #{tpu_custom_call.1} parent=1704 // loop_footer_branch
              %2857 = sbr.rel target = $region1707
            $region1712: #{tpu_custom_call.1} parent=1704 // loop_exit
              _
          $region1705: #{tpu_custom_call.1} parent=1689 // pred_fallthru
            _
        $region1690: #{tpu_custom_call.1} parent=35 // pred_fallthru
          _
        // Predicated region
        $region1691: #{tpu_custom_call.1} parent=35 // pred_check
          %p2832 = pneg %p2828
        $region1692: #{tpu_custom_call.1} parent=35 // pred_check_branch
          %2834 = sbr.rel (%p2832) target = $region1694
        $region1693: #{tpu_custom_call.1} parent=35 // pred_region
          %s2835 = sshllo.u32 0, 1
          loop: start=0, step=1, limit=1
          $region1695: #{tpu_custom_call.1} parent=1693 // loop_pre_header
            _
          $region1696: #{tpu_custom_call.1} parent=1693 // loop_header
            %s2837 = sphi 0, %s2841
            %p2838 = scmp.ge.s32.totalorder %s2837, 1
            %s2842 = sphi %s2825, %s2825
            %s2843 = sphi %s2826, %s2826
          $region1697: #{tpu_custom_call.1} parent=1693 // loop_header_branch
            %2840 = sbr.rel (%p2838) target = $region1701
          $region1698: #{tpu_custom_call.1} parent=1693 // loop_body
            %v2844 = vld [vmem:[%s2842] sm:%s2835]
            %2845 = vst [vmem:[%s2843] sm:%s2835] %v2844
          $region1699: #{tpu_custom_call.1} parent=1693 // loop_footer
            %s2841 = sadd.s32 1, %s2837
          $region1700: #{tpu_custom_call.1} parent=1693 // loop_footer_branch
            %2836 = sbr.rel target = $region1696
          $region1701: #{tpu_custom_call.1} parent=1693 // loop_exit
            _
        $region1694: #{tpu_custom_call.1} parent=35 // pred_fallthru
          _
        // Predicated region
        $region1713: #{tpu_custom_call.1} parent=35 // pred_check
          _
        $region1714: #{tpu_custom_call.1} parent=35 // pred_check_branch
          %2869 = sbr.rel (0) target = $region1716
        $region1715: #{tpu_custom_call.1} parent=35 // pred_region
          %2870 = vsyncadd [#allocation3], 16
        $region1716: #{tpu_custom_call.1} parent=35 // pred_fallthru
          _
        %s2871 = sadd.s32 %s184, 56
        %s2872 = sld [smem:[#allocation5 + %s2871]]
        %s2873 = scalar_lea.vmem %s1, %s2872
        %s2874 = scalar_lea.vmem [#allocation2], 7
        %p2876 = scmp.lt.u32.totalorder 1, 8
        %p2877 = pneg %p2876
        // Predicated region
        $region1717: #{tpu_custom_call.1} parent=35 // pred_check
          _
        $region1718: #{tpu_custom_call.1} parent=35 // pred_check_branch
          %2879 = sbr.rel (%p2876) target = $region1720
        $region1719: #{tpu_custom_call.1} parent=35 // pred_region
          %s2894 = sand.u32 1, 7
          %p2895 = scmp.eq.s32.totalorder %s2894, 0
          %p2896 = pneg %p2895
          // Predicated region
          $region1732: #{tpu_custom_call.1} parent=1719 // pred_check
            _
          $region1733: #{tpu_custom_call.1} parent=1719 // pred_check_branch
            %2898 = sbr.rel (%p2895) target = $region1735
          $region1734: #{tpu_custom_call.1} parent=1719 // pred_region
            %s2899 = sand.u32 1, 7
            %s2900 = ssub.s32 1, %s2899
            %s2901 = scalar_lea.vmem %s2873, %s2900
            %s2902 = ssub.s32 1, %s2899
            %s2903 = scalar_lea.vmem %s2874, %s2902 [#allocation2]
            %s2904 = sshllo.u32 0, %s2899
            loop: start=0, step=1, limit=1
            $region1736: #{tpu_custom_call.1} parent=1734 // loop_pre_header
              _
            $region1737: #{tpu_custom_call.1} parent=1734 // loop_header
              %s2906 = sphi 0, %s2910
              %p2907 = scmp.ge.s32.totalorder %s2906, 1
              %s2911 = sphi %s2901, %s2901
              %s2912 = sphi %s2903, %s2903
            $region1738: #{tpu_custom_call.1} parent=1734 // loop_header_branch
              %2909 = sbr.rel (%p2907) target = $region1742
            $region1739: #{tpu_custom_call.1} parent=1734 // loop_body
              %v2913 = vld [vmem:[%s2911] sm:%s2904]
              %2914 = vst [vmem:[%s2912] sm:%s2904] %v2913
            $region1740: #{tpu_custom_call.1} parent=1734 // loop_footer
              %s2910 = sadd.s32 1, %s2906
            $region1741: #{tpu_custom_call.1} parent=1734 // loop_footer_branch
              %2905 = sbr.rel target = $region1737
            $region1742: #{tpu_custom_call.1} parent=1734 // loop_exit
              _
          $region1735: #{tpu_custom_call.1} parent=1719 // pred_fallthru
            _
        $region1720: #{tpu_custom_call.1} parent=35 // pred_fallthru
          _
        // Predicated region
        $region1721: #{tpu_custom_call.1} parent=35 // pred_check
          %p2880 = pneg %p2876
        $region1722: #{tpu_custom_call.1} parent=35 // pred_check_branch
          %2882 = sbr.rel (%p2880) target = $region1724
        $region1723: #{tpu_custom_call.1} parent=35 // pred_region
          %s2883 = sshllo.u32 0, 1
          loop: start=0, step=1, limit=1
          $region1725: #{tpu_custom_call.1} parent=1723 // loop_pre_header
            _
          $region1726: #{tpu_custom_call.1} parent=1723 // loop_header
            %s2885 = sphi 0, %s2889
            %p2886 = scmp.ge.s32.totalorder %s2885, 1
            %s2890 = sphi %s2873, %s2873
            %s2891 = sphi %s2874, %s2874
          $region1727: #{tpu_custom_call.1} parent=1723 // loop_header_branch
            %2888 = sbr.rel (%p2886) target = $region1731
          $region1728: #{tpu_custom_call.1} parent=1723 // loop_body
            %v2892 = vld [vmem:[%s2890] sm:%s2883]
            %2893 = vst [vmem:[%s2891] sm:%s2883] %v2892
          $region1729: #{tpu_custom_call.1} parent=1723 // loop_footer
            %s2889 = sadd.s32 1, %s2885
          $region1730: #{tpu_custom_call.1} parent=1723 // loop_footer_branch
            %2884 = sbr.rel target = $region1726
          $region1731: #{tpu_custom_call.1} parent=1723 // loop_exit
            _
        $region1724: #{tpu_custom_call.1} parent=35 // pred_fallthru
          _
        // Predicated region
        $region1743: #{tpu_custom_call.1} parent=35 // pred_check
          _
        $region1744: #{tpu_custom_call.1} parent=35 // pred_check_branch
          %2917 = sbr.rel (0) target = $region1746
        $region1745: #{tpu_custom_call.1} parent=35 // pred_region
          %2918 = vsyncadd [#allocation3], 16
        $region1746: #{tpu_custom_call.1} parent=35 // pred_fallthru
          _
        %s2919 = sadd.s32 %s184, 57
        %s2920 = sld [smem:[#allocation5 + %s2919]]
        %s2921 = scalar_lea.vmem %s1, %s2920
        %s2922 = scalar_lea.vmem [#allocation2], 15
        %p2924 = scmp.lt.u32.totalorder 1, 8
        %p2925 = pneg %p2924
        // Predicated region
        $region1747: #{tpu_custom_call.1} parent=35 // pred_check
          _
        $region1748: #{tpu_custom_call.1} parent=35 // pred_check_branch
          %2927 = sbr.rel (%p2924) target = $region1750
        $region1749: #{tpu_custom_call.1} parent=35 // pred_region
          %s2942 = sand.u32 1, 7
          %p2943 = scmp.eq.s32.totalorder %s2942, 0
          %p2944 = pneg %p2943
          // Predicated region
          $region1762: #{tpu_custom_call.1} parent=1749 // pred_check
            _
          $region1763: #{tpu_custom_call.1} parent=1749 // pred_check_branch
            %2946 = sbr.rel (%p2943) target = $region1765
          $region1764: #{tpu_custom_call.1} parent=1749 // pred_region
            %s2947 = sand.u32 1, 7
            %s2948 = ssub.s32 1, %s2947
            %s2949 = scalar_lea.vmem %s2921, %s2948
            %s2950 = ssub.s32 1, %s2947
            %s2951 = scalar_lea.vmem %s2922, %s2950 [#allocation2]
            %s2952 = sshllo.u32 0, %s2947
            loop: start=0, step=1, limit=1
            $region1766: #{tpu_custom_call.1} parent=1764 // loop_pre_header
              _
            $region1767: #{tpu_custom_call.1} parent=1764 // loop_header
              %s2954 = sphi 0, %s2958
              %p2955 = scmp.ge.s32.totalorder %s2954, 1
              %s2959 = sphi %s2949, %s2949
              %s2960 = sphi %s2951, %s2951
            $region1768: #{tpu_custom_call.1} parent=1764 // loop_header_branch
              %2957 = sbr.rel (%p2955) target = $region1772
            $region1769: #{tpu_custom_call.1} parent=1764 // loop_body
              %v2961 = vld [vmem:[%s2959] sm:%s2952]
              %2962 = vst [vmem:[%s2960] sm:%s2952] %v2961
            $region1770: #{tpu_custom_call.1} parent=1764 // loop_footer
              %s2958 = sadd.s32 1, %s2954
            $region1771: #{tpu_custom_call.1} parent=1764 // loop_footer_branch
              %2953 = sbr.rel target = $region1767
            $region1772: #{tpu_custom_call.1} parent=1764 // loop_exit
              _
          $region1765: #{tpu_custom_call.1} parent=1749 // pred_fallthru
            _
        $region1750: #{tpu_custom_call.1} parent=35 // pred_fallthru
          _
        // Predicated region
        $region1751: #{tpu_custom_call.1} parent=35 // pred_check
          %p2928 = pneg %p2924
        $region1752: #{tpu_custom_call.1} parent=35 // pred_check_branch
          %2930 = sbr.rel (%p2928) target = $region1754
        $region1753: #{tpu_custom_call.1} parent=35 // pred_region
          %s2931 = sshllo.u32 0, 1
          loop: start=0, step=1, limit=1
          $region1755: #{tpu_custom_call.1} parent=1753 // loop_pre_header
            _
          $region1756: #{tpu_custom_call.1} parent=1753 // loop_header
            %s2933 = sphi 0, %s2937
            %p2934 = scmp.ge.s32.totalorder %s2933, 1
            %s2938 = sphi %s2921, %s2921
            %s2939 = sphi %s2922, %s2922
          $region1757: #{tpu_custom_call.1} parent=1753 // loop_header_branch
            %2936 = sbr.rel (%p2934) target = $region1761
          $region1758: #{tpu_custom_call.1} parent=1753 // loop_body
            %v2940 = vld [vmem:[%s2938] sm:%s2931]
            %2941 = vst [vmem:[%s2939] sm:%s2931] %v2940
          $region1759: #{tpu_custom_call.1} parent=1753 // loop_footer
            %s2937 = sadd.s32 1, %s2933
          $region1760: #{tpu_custom_call.1} parent=1753 // loop_footer_branch
            %2932 = sbr.rel target = $region1756
          $region1761: #{tpu_custom_call.1} parent=1753 // loop_exit
            _
        $region1754: #{tpu_custom_call.1} parent=35 // pred_fallthru
          _
        // Predicated region
        $region1773: #{tpu_custom_call.1} parent=35 // pred_check
          _
        $region1774: #{tpu_custom_call.1} parent=35 // pred_check_branch
          %2965 = sbr.rel (0) target = $region1776
        $region1775: #{tpu_custom_call.1} parent=35 // pred_region
          %2966 = vsyncadd [#allocation3], 16
        $region1776: #{tpu_custom_call.1} parent=35 // pred_fallthru
          _
        %s2967 = sadd.s32 %s184, 58
        %s2968 = sld [smem:[#allocation5 + %s2967]]
        %s2969 = scalar_lea.vmem %s1, %s2968
        %s2970 = scalar_lea.vmem [#allocation2], 23
        %p2972 = scmp.lt.u32.totalorder 1, 8
        %p2973 = pneg %p2972
        // Predicated region
        $region1777: #{tpu_custom_call.1} parent=35 // pred_check
          _
        $region1778: #{tpu_custom_call.1} parent=35 // pred_check_branch
          %2975 = sbr.rel (%p2972) target = $region1780
        $region1779: #{tpu_custom_call.1} parent=35 // pred_region
          %s2990 = sand.u32 1, 7
          %p2991 = scmp.eq.s32.totalorder %s2990, 0
          %p2992 = pneg %p2991
          // Predicated region
          $region1792: #{tpu_custom_call.1} parent=1779 // pred_check
            _
          $region1793: #{tpu_custom_call.1} parent=1779 // pred_check_branch
            %2994 = sbr.rel (%p2991) target = $region1795
          $region1794: #{tpu_custom_call.1} parent=1779 // pred_region
            %s2995 = sand.u32 1, 7
            %s2996 = ssub.s32 1, %s2995
            %s2997 = scalar_lea.vmem %s2969, %s2996
            %s2998 = ssub.s32 1, %s2995
            %s2999 = scalar_lea.vmem %s2970, %s2998 [#allocation2]
            %s3000 = sshllo.u32 0, %s2995
            loop: start=0, step=1, limit=1
            $region1796: #{tpu_custom_call.1} parent=1794 // loop_pre_header
              _
            $region1797: #{tpu_custom_call.1} parent=1794 // loop_header
              %s3002 = sphi 0, %s3006
              %p3003 = scmp.ge.s32.totalorder %s3002, 1
              %s3007 = sphi %s2997, %s2997
              %s3008 = sphi %s2999, %s2999
            $region1798: #{tpu_custom_call.1} parent=1794 // loop_header_branch
              %3005 = sbr.rel (%p3003) target = $region1802
            $region1799: #{tpu_custom_call.1} parent=1794 // loop_body
              %v3009 = vld [vmem:[%s3007] sm:%s3000]
              %3010 = vst [vmem:[%s3008] sm:%s3000] %v3009
            $region1800: #{tpu_custom_call.1} parent=1794 // loop_footer
              %s3006 = sadd.s32 1, %s3002
            $region1801: #{tpu_custom_call.1} parent=1794 // loop_footer_branch
              %3001 = sbr.rel target = $region1797
            $region1802: #{tpu_custom_call.1} parent=1794 // loop_exit
              _
          $region1795: #{tpu_custom_call.1} parent=1779 // pred_fallthru
            _
        $region1780: #{tpu_custom_call.1} parent=35 // pred_fallthru
          _
        // Predicated region
        $region1781: #{tpu_custom_call.1} parent=35 // pred_check
          %p2976 = pneg %p2972
        $region1782: #{tpu_custom_call.1} parent=35 // pred_check_branch
          %2978 = sbr.rel (%p2976) target = $region1784
        $region1783: #{tpu_custom_call.1} parent=35 // pred_region
          %s2979 = sshllo.u32 0, 1
          loop: start=0, step=1, limit=1
          $region1785: #{tpu_custom_call.1} parent=1783 // loop_pre_header
            _
          $region1786: #{tpu_custom_call.1} parent=1783 // loop_header
            %s2981 = sphi 0, %s2985
            %p2982 = scmp.ge.s32.totalorder %s2981, 1
            %s2986 = sphi %s2969, %s2969
            %s2987 = sphi %s2970, %s2970
          $region1787: #{tpu_custom_call.1} parent=1783 // loop_header_branch
            %2984 = sbr.rel (%p2982) target = $region1791
          $region1788: #{tpu_custom_call.1} parent=1783 // loop_body
            %v2988 = vld [vmem:[%s2986] sm:%s2979]
            %2989 = vst [vmem:[%s2987] sm:%s2979] %v2988
          $region1789: #{tpu_custom_call.1} parent=1783 // loop_footer
            %s2985 = sadd.s32 1, %s2981
          $region1790: #{tpu_custom_call.1} parent=1783 // loop_footer_branch
            %2980 = sbr.rel target = $region1786
          $region1791: #{tpu_custom_call.1} parent=1783 // loop_exit
            _
        $region1784: #{tpu_custom_call.1} parent=35 // pred_fallthru
          _
        // Predicated region
        $region1803: #{tpu_custom_call.1} parent=35 // pred_check
          _
        $region1804: #{tpu_custom_call.1} parent=35 // pred_check_branch
          %3013 = sbr.rel (0) target = $region1806
        $region1805: #{tpu_custom_call.1} parent=35 // pred_region
          %3014 = vsyncadd [#allocation3], 16
        $region1806: #{tpu_custom_call.1} parent=35 // pred_fallthru
          _
        %s3015 = sadd.s32 %s184, 59
        %s3016 = sld [smem:[#allocation5 + %s3015]]
        %s3017 = scalar_lea.vmem %s1, %s3016
        %s3018 = scalar_lea.vmem [#allocation2], 31
        %p3020 = scmp.lt.u32.totalorder 1, 8
        %p3021 = pneg %p3020
        // Predicated region
        $region1807: #{tpu_custom_call.1} parent=35 // pred_check
          _
        $region1808: #{tpu_custom_call.1} parent=35 // pred_check_branch
          %3023 = sbr.rel (%p3020) target = $region1810
        $region1809: #{tpu_custom_call.1} parent=35 // pred_region
          %s3038 = sand.u32 1, 7
          %p3039 = scmp.eq.s32.totalorder %s3038, 0
          %p3040 = pneg %p3039
          // Predicated region
          $region1822: #{tpu_custom_call.1} parent=1809 // pred_check
            _
          $region1823: #{tpu_custom_call.1} parent=1809 // pred_check_branch
            %3042 = sbr.rel (%p3039) target = $region1825
          $region1824: #{tpu_custom_call.1} parent=1809 // pred_region
            %s3043 = sand.u32 1, 7
            %s3044 = ssub.s32 1, %s3043
            %s3045 = scalar_lea.vmem %s3017, %s3044
            %s3046 = ssub.s32 1, %s3043
            %s3047 = scalar_lea.vmem %s3018, %s3046 [#allocation2]
            %s3048 = sshllo.u32 0, %s3043
            loop: start=0, step=1, limit=1
            $region1826: #{tpu_custom_call.1} parent=1824 // loop_pre_header
              _
            $region1827: #{tpu_custom_call.1} parent=1824 // loop_header
              %s3050 = sphi 0, %s3054
              %p3051 = scmp.ge.s32.totalorder %s3050, 1
              %s3055 = sphi %s3045, %s3045
              %s3056 = sphi %s3047, %s3047
            $region1828: #{tpu_custom_call.1} parent=1824 // loop_header_branch
              %3053 = sbr.rel (%p3051) target = $region1832
            $region1829: #{tpu_custom_call.1} parent=1824 // loop_body
              %v3057 = vld [vmem:[%s3055] sm:%s3048]
              %3058 = vst [vmem:[%s3056] sm:%s3048] %v3057
            $region1830: #{tpu_custom_call.1} parent=1824 // loop_footer
              %s3054 = sadd.s32 1, %s3050
            $region1831: #{tpu_custom_call.1} parent=1824 // loop_footer_branch
              %3049 = sbr.rel target = $region1827
            $region1832: #{tpu_custom_call.1} parent=1824 // loop_exit
              _
          $region1825: #{tpu_custom_call.1} parent=1809 // pred_fallthru
            _
        $region1810: #{tpu_custom_call.1} parent=35 // pred_fallthru
          _
        // Predicated region
        $region1811: #{tpu_custom_call.1} parent=35 // pred_check
          %p3024 = pneg %p3020
        $region1812: #{tpu_custom_call.1} parent=35 // pred_check_branch
          %3026 = sbr.rel (%p3024) target = $region1814
        $region1813: #{tpu_custom_call.1} parent=35 // pred_region
          %s3027 = sshllo.u32 0, 1
          loop: start=0, step=1, limit=1
          $region1815: #{tpu_custom_call.1} parent=1813 // loop_pre_header
            _
          $region1816: #{tpu_custom_call.1} parent=1813 // loop_header
            %s3029 = sphi 0, %s3033
            %p3030 = scmp.ge.s32.totalorder %s3029, 1
            %s3034 = sphi %s3017, %s3017
            %s3035 = sphi %s3018, %s3018
          $region1817: #{tpu_custom_call.1} parent=1813 // loop_header_branch
            %3032 = sbr.rel (%p3030) target = $region1821
          $region1818: #{tpu_custom_call.1} parent=1813 // loop_body
            %v3036 = vld [vmem:[%s3034] sm:%s3027]
            %3037 = vst [vmem:[%s3035] sm:%s3027] %v3036
          $region1819: #{tpu_custom_call.1} parent=1813 // loop_footer
            %s3033 = sadd.s32 1, %s3029
          $region1820: #{tpu_custom_call.1} parent=1813 // loop_footer_branch
            %3028 = sbr.rel target = $region1816
          $region1821: #{tpu_custom_call.1} parent=1813 // loop_exit
            _
        $region1814: #{tpu_custom_call.1} parent=35 // pred_fallthru
          _
        // Predicated region
        $region1833: #{tpu_custom_call.1} parent=35 // pred_check
          _
        $region1834: #{tpu_custom_call.1} parent=35 // pred_check_branch
          %3061 = sbr.rel (0) target = $region1836
        $region1835: #{tpu_custom_call.1} parent=35 // pred_region
          %3062 = vsyncadd [#allocation3], 16
        $region1836: #{tpu_custom_call.1} parent=35 // pred_fallthru
          _
        %s3063 = sadd.s32 %s184, 60
        %s3064 = sld [smem:[#allocation5 + %s3063]]
        %s3065 = scalar_lea.vmem %s1, %s3064
        %s3066 = scalar_lea.vmem [#allocation2], 39
        %p3068 = scmp.lt.u32.totalorder 1, 8
        %p3069 = pneg %p3068
        // Predicated region
        $region1837: #{tpu_custom_call.1} parent=35 // pred_check
          _
        $region1838: #{tpu_custom_call.1} parent=35 // pred_check_branch
          %3071 = sbr.rel (%p3068) target = $region1840
        $region1839: #{tpu_custom_call.1} parent=35 // pred_region
          %s3086 = sand.u32 1, 7
          %p3087 = scmp.eq.s32.totalorder %s3086, 0
          %p3088 = pneg %p3087
          // Predicated region
          $region1852: #{tpu_custom_call.1} parent=1839 // pred_check
            _
          $region1853: #{tpu_custom_call.1} parent=1839 // pred_check_branch
            %3090 = sbr.rel (%p3087) target = $region1855
          $region1854: #{tpu_custom_call.1} parent=1839 // pred_region
            %s3091 = sand.u32 1, 7
            %s3092 = ssub.s32 1, %s3091
            %s3093 = scalar_lea.vmem %s3065, %s3092
            %s3094 = ssub.s32 1, %s3091
            %s3095 = scalar_lea.vmem %s3066, %s3094 [#allocation2]
            %s3096 = sshllo.u32 0, %s3091
            loop: start=0, step=1, limit=1
            $region1856: #{tpu_custom_call.1} parent=1854 // loop_pre_header
              _
            $region1857: #{tpu_custom_call.1} parent=1854 // loop_header
              %s3098 = sphi 0, %s3102
              %p3099 = scmp.ge.s32.totalorder %s3098, 1
              %s3103 = sphi %s3093, %s3093
              %s3104 = sphi %s3095, %s3095
            $region1858: #{tpu_custom_call.1} parent=1854 // loop_header_branch
              %3101 = sbr.rel (%p3099) target = $region1862
            $region1859: #{tpu_custom_call.1} parent=1854 // loop_body
              %v3105 = vld [vmem:[%s3103] sm:%s3096]
              %3106 = vst [vmem:[%s3104] sm:%s3096] %v3105
            $region1860: #{tpu_custom_call.1} parent=1854 // loop_footer
              %s3102 = sadd.s32 1, %s3098
            $region1861: #{tpu_custom_call.1} parent=1854 // loop_footer_branch
              %3097 = sbr.rel target = $region1857
            $region1862: #{tpu_custom_call.1} parent=1854 // loop_exit
              _
          $region1855: #{tpu_custom_call.1} parent=1839 // pred_fallthru
            _
        $region1840: #{tpu_custom_call.1} parent=35 // pred_fallthru
          _
        // Predicated region
        $region1841: #{tpu_custom_call.1} parent=35 // pred_check
          %p3072 = pneg %p3068
        $region1842: #{tpu_custom_call.1} parent=35 // pred_check_branch
          %3074 = sbr.rel (%p3072) target = $region1844
        $region1843: #{tpu_custom_call.1} parent=35 // pred_region
          %s3075 = sshllo.u32 0, 1
          loop: start=0, step=1, limit=1
          $region1845: #{tpu_custom_call.1} parent=1843 // loop_pre_header
            _
          $region1846: #{tpu_custom_call.1} parent=1843 // loop_header
            %s3077 = sphi 0, %s3081
            %p3078 = scmp.ge.s32.totalorder %s3077, 1
            %s3082 = sphi %s3065, %s3065
            %s3083 = sphi %s3066, %s3066
          $region1847: #{tpu_custom_call.1} parent=1843 // loop_header_branch
            %3080 = sbr.rel (%p3078) target = $region1851
          $region1848: #{tpu_custom_call.1} parent=1843 // loop_body
            %v3084 = vld [vmem:[%s3082] sm:%s3075]
            %3085 = vst [vmem:[%s3083] sm:%s3075] %v3084
          $region1849: #{tpu_custom_call.1} parent=1843 // loop_footer
            %s3081 = sadd.s32 1, %s3077
          $region1850: #{tpu_custom_call.1} parent=1843 // loop_footer_branch
            %3076 = sbr.rel target = $region1846
          $region1851: #{tpu_custom_call.1} parent=1843 // loop_exit
            _
        $region1844: #{tpu_custom_call.1} parent=35 // pred_fallthru
          _
        // Predicated region
        $region1863: #{tpu_custom_call.1} parent=35 // pred_check
          _
        $region1864: #{tpu_custom_call.1} parent=35 // pred_check_branch
          %3109 = sbr.rel (0) target = $region1866
        $region1865: #{tpu_custom_call.1} parent=35 // pred_region
          %3110 = vsyncadd [#allocation3], 16
        $region1866: #{tpu_custom_call.1} parent=35 // pred_fallthru
          _
        %s3111 = sadd.s32 %s184, 61
        %s3112 = sld [smem:[#allocation5 + %s3111]]
        %s3113 = scalar_lea.vmem %s1, %s3112
        %s3114 = scalar_lea.vmem [#allocation2], 47
        %p3116 = scmp.lt.u32.totalorder 1, 8
        %p3117 = pneg %p3116
        // Predicated region
        $region1867: #{tpu_custom_call.1} parent=35 // pred_check
          _
        $region1868: #{tpu_custom_call.1} parent=35 // pred_check_branch
          %3119 = sbr.rel (%p3116) target = $region1870
        $region1869: #{tpu_custom_call.1} parent=35 // pred_region
          %s3134 = sand.u32 1, 7
          %p3135 = scmp.eq.s32.totalorder %s3134, 0
          %p3136 = pneg %p3135
          // Predicated region
          $region1882: #{tpu_custom_call.1} parent=1869 // pred_check
            _
          $region1883: #{tpu_custom_call.1} parent=1869 // pred_check_branch
            %3138 = sbr.rel (%p3135) target = $region1885
          $region1884: #{tpu_custom_call.1} parent=1869 // pred_region
            %s3139 = sand.u32 1, 7
            %s3140 = ssub.s32 1, %s3139
            %s3141 = scalar_lea.vmem %s3113, %s3140
            %s3142 = ssub.s32 1, %s3139
            %s3143 = scalar_lea.vmem %s3114, %s3142 [#allocation2]
            %s3144 = sshllo.u32 0, %s3139
            loop: start=0, step=1, limit=1
            $region1886: #{tpu_custom_call.1} parent=1884 // loop_pre_header
              _
            $region1887: #{tpu_custom_call.1} parent=1884 // loop_header
              %s3146 = sphi 0, %s3150
              %p3147 = scmp.ge.s32.totalorder %s3146, 1
              %s3151 = sphi %s3141, %s3141
              %s3152 = sphi %s3143, %s3143
            $region1888: #{tpu_custom_call.1} parent=1884 // loop_header_branch
              %3149 = sbr.rel (%p3147) target = $region1892
            $region1889: #{tpu_custom_call.1} parent=1884 // loop_body
              %v3153 = vld [vmem:[%s3151] sm:%s3144]
              %3154 = vst [vmem:[%s3152] sm:%s3144] %v3153
            $region1890: #{tpu_custom_call.1} parent=1884 // loop_footer
              %s3150 = sadd.s32 1, %s3146
            $region1891: #{tpu_custom_call.1} parent=1884 // loop_footer_branch
              %3145 = sbr.rel target = $region1887
            $region1892: #{tpu_custom_call.1} parent=1884 // loop_exit
              _
          $region1885: #{tpu_custom_call.1} parent=1869 // pred_fallthru
            _
        $region1870: #{tpu_custom_call.1} parent=35 // pred_fallthru
          _
        // Predicated region
        $region1871: #{tpu_custom_call.1} parent=35 // pred_check
          %p3120 = pneg %p3116
        $region1872: #{tpu_custom_call.1} parent=35 // pred_check_branch
          %3122 = sbr.rel (%p3120) target = $region1874
        $region1873: #{tpu_custom_call.1} parent=35 // pred_region
          %s3123 = sshllo.u32 0, 1
          loop: start=0, step=1, limit=1
          $region1875: #{tpu_custom_call.1} parent=1873 // loop_pre_header
            _
          $region1876: #{tpu_custom_call.1} parent=1873 // loop_header
            %s3125 = sphi 0, %s3129
            %p3126 = scmp.ge.s32.totalorder %s3125, 1
            %s3130 = sphi %s3113, %s3113
            %s3131 = sphi %s3114, %s3114
          $region1877: #{tpu_custom_call.1} parent=1873 // loop_header_branch
            %3128 = sbr.rel (%p3126) target = $region1881
          $region1878: #{tpu_custom_call.1} parent=1873 // loop_body
            %v3132 = vld [vmem:[%s3130] sm:%s3123]
            %3133 = vst [vmem:[%s3131] sm:%s3123] %v3132
          $region1879: #{tpu_custom_call.1} parent=1873 // loop_footer
            %s3129 = sadd.s32 1, %s3125
          $region1880: #{tpu_custom_call.1} parent=1873 // loop_footer_branch
            %3124 = sbr.rel target = $region1876
          $region1881: #{tpu_custom_call.1} parent=1873 // loop_exit
            _
        $region1874: #{tpu_custom_call.1} parent=35 // pred_fallthru
          _
        // Predicated region
        $region1893: #{tpu_custom_call.1} parent=35 // pred_check
          _
        $region1894: #{tpu_custom_call.1} parent=35 // pred_check_branch
          %3157 = sbr.rel (0) target = $region1896
        $region1895: #{tpu_custom_call.1} parent=35 // pred_region
          %3158 = vsyncadd [#allocation3], 16
        $region1896: #{tpu_custom_call.1} parent=35 // pred_fallthru
          _
        %s3159 = sadd.s32 %s184, 62
        %s3160 = sld [smem:[#allocation5 + %s3159]]
        %s3161 = scalar_lea.vmem %s1, %s3160
        %s3162 = scalar_lea.vmem [#allocation2], 55
        %p3164 = scmp.lt.u32.totalorder 1, 8
        %p3165 = pneg %p3164
        // Predicated region
        $region1897: #{tpu_custom_call.1} parent=35 // pred_check
          _
        $region1898: #{tpu_custom_call.1} parent=35 // pred_check_branch
          %3167 = sbr.rel (%p3164) target = $region1900
        $region1899: #{tpu_custom_call.1} parent=35 // pred_region
          %s3182 = sand.u32 1, 7
          %p3183 = scmp.eq.s32.totalorder %s3182, 0
          %p3184 = pneg %p3183
          // Predicated region
          $region1912: #{tpu_custom_call.1} parent=1899 // pred_check
            _
          $region1913: #{tpu_custom_call.1} parent=1899 // pred_check_branch
            %3186 = sbr.rel (%p3183) target = $region1915
          $region1914: #{tpu_custom_call.1} parent=1899 // pred_region
            %s3187 = sand.u32 1, 7
            %s3188 = ssub.s32 1, %s3187
            %s3189 = scalar_lea.vmem %s3161, %s3188
            %s3190 = ssub.s32 1, %s3187
            %s3191 = scalar_lea.vmem %s3162, %s3190 [#allocation2]
            %s3192 = sshllo.u32 0, %s3187
            loop: start=0, step=1, limit=1
            $region1916: #{tpu_custom_call.1} parent=1914 // loop_pre_header
              _
            $region1917: #{tpu_custom_call.1} parent=1914 // loop_header
              %s3194 = sphi 0, %s3198
              %p3195 = scmp.ge.s32.totalorder %s3194, 1
              %s3199 = sphi %s3189, %s3189
              %s3200 = sphi %s3191, %s3191
            $region1918: #{tpu_custom_call.1} parent=1914 // loop_header_branch
              %3197 = sbr.rel (%p3195) target = $region1922
            $region1919: #{tpu_custom_call.1} parent=1914 // loop_body
              %v3201 = vld [vmem:[%s3199] sm:%s3192]
              %3202 = vst [vmem:[%s3200] sm:%s3192] %v3201
            $region1920: #{tpu_custom_call.1} parent=1914 // loop_footer
              %s3198 = sadd.s32 1, %s3194
            $region1921: #{tpu_custom_call.1} parent=1914 // loop_footer_branch
              %3193 = sbr.rel target = $region1917
            $region1922: #{tpu_custom_call.1} parent=1914 // loop_exit
              _
          $region1915: #{tpu_custom_call.1} parent=1899 // pred_fallthru
            _
        $region1900: #{tpu_custom_call.1} parent=35 // pred_fallthru
          _
        // Predicated region
        $region1901: #{tpu_custom_call.1} parent=35 // pred_check
          %p3168 = pneg %p3164
        $region1902: #{tpu_custom_call.1} parent=35 // pred_check_branch
          %3170 = sbr.rel (%p3168) target = $region1904
        $region1903: #{tpu_custom_call.1} parent=35 // pred_region
          %s3171 = sshllo.u32 0, 1
          loop: start=0, step=1, limit=1
          $region1905: #{tpu_custom_call.1} parent=1903 // loop_pre_header
            _
          $region1906: #{tpu_custom_call.1} parent=1903 // loop_header
            %s3173 = sphi 0, %s3177
            %p3174 = scmp.ge.s32.totalorder %s3173, 1
            %s3178 = sphi %s3161, %s3161
            %s3179 = sphi %s3162, %s3162
          $region1907: #{tpu_custom_call.1} parent=1903 // loop_header_branch
            %3176 = sbr.rel (%p3174) target = $region1911
          $region1908: #{tpu_custom_call.1} parent=1903 // loop_body
            %v3180 = vld [vmem:[%s3178] sm:%s3171]
            %3181 = vst [vmem:[%s3179] sm:%s3171] %v3180
          $region1909: #{tpu_custom_call.1} parent=1903 // loop_footer
            %s3177 = sadd.s32 1, %s3173
          $region1910: #{tpu_custom_call.1} parent=1903 // loop_footer_branch
            %3172 = sbr.rel target = $region1906
          $region1911: #{tpu_custom_call.1} parent=1903 // loop_exit
            _
        $region1904: #{tpu_custom_call.1} parent=35 // pred_fallthru
          _
        // Predicated region
        $region1923: #{tpu_custom_call.1} parent=35 // pred_check
          _
        $region1924: #{tpu_custom_call.1} parent=35 // pred_check_branch
          %3205 = sbr.rel (0) target = $region1926
        $region1925: #{tpu_custom_call.1} parent=35 // pred_region
          %3206 = vsyncadd [#allocation3], 16
        $region1926: #{tpu_custom_call.1} parent=35 // pred_fallthru
          _
        %s3207 = sadd.s32 %s184, 63
        %s3208 = sld [smem:[#allocation5 + %s3207]]
        %s3209 = scalar_lea.vmem %s1, %s3208
        %s3210 = scalar_lea.vmem [#allocation2], 63
        %p3212 = scmp.lt.u32.totalorder 1, 8
        %p3213 = pneg %p3212
        // Predicated region
        $region1927: #{tpu_custom_call.1} parent=35 // pred_check
          _
        $region1928: #{tpu_custom_call.1} parent=35 // pred_check_branch
          %3215 = sbr.rel (%p3212) target = $region1930
        $region1929: #{tpu_custom_call.1} parent=35 // pred_region
          %s3230 = sand.u32 1, 7
          %p3231 = scmp.eq.s32.totalorder %s3230, 0
          %p3232 = pneg %p3231
          // Predicated region
          $region1942: #{tpu_custom_call.1} parent=1929 // pred_check
            _
          $region1943: #{tpu_custom_call.1} parent=1929 // pred_check_branch
            %3234 = sbr.rel (%p3231) target = $region1945
          $region1944: #{tpu_custom_call.1} parent=1929 // pred_region
            %s3235 = sand.u32 1, 7
            %s3236 = ssub.s32 1, %s3235
            %s3237 = scalar_lea.vmem %s3209, %s3236
            %s3238 = ssub.s32 1, %s3235
            %s3239 = scalar_lea.vmem %s3210, %s3238 [#allocation2]
            %s3240 = sshllo.u32 0, %s3235
            loop: start=0, step=1, limit=1
            $region1946: #{tpu_custom_call.1} parent=1944 // loop_pre_header
              _
            $region1947: #{tpu_custom_call.1} parent=1944 // loop_header
              %s3242 = sphi 0, %s3246
              %p3243 = scmp.ge.s32.totalorder %s3242, 1
              %s3247 = sphi %s3237, %s3237
              %s3248 = sphi %s3239, %s3239
            $region1948: #{tpu_custom_call.1} parent=1944 // loop_header_branch
              %3245 = sbr.rel (%p3243) target = $region1952
            $region1949: #{tpu_custom_call.1} parent=1944 // loop_body
              %v3249 = vld [vmem:[%s3247] sm:%s3240]
              %3250 = vst [vmem:[%s3248] sm:%s3240] %v3249
            $region1950: #{tpu_custom_call.1} parent=1944 // loop_footer
              %s3246 = sadd.s32 1, %s3242
            $region1951: #{tpu_custom_call.1} parent=1944 // loop_footer_branch
              %3241 = sbr.rel target = $region1947
            $region1952: #{tpu_custom_call.1} parent=1944 // loop_exit
              _
          $region1945: #{tpu_custom_call.1} parent=1929 // pred_fallthru
            _
        $region1930: #{tpu_custom_call.1} parent=35 // pred_fallthru
          _
        // Predicated region
        $region1931: #{tpu_custom_call.1} parent=35 // pred_check
          %p3216 = pneg %p3212
        $region1932: #{tpu_custom_call.1} parent=35 // pred_check_branch
          %3218 = sbr.rel (%p3216) target = $region1934
        $region1933: #{tpu_custom_call.1} parent=35 // pred_region
          %s3219 = sshllo.u32 0, 1
          loop: start=0, step=1, limit=1
          $region1935: #{tpu_custom_call.1} parent=1933 // loop_pre_header
            _
          $region1936: #{tpu_custom_call.1} parent=1933 // loop_header
            %s3221 = sphi 0, %s3225
            %p3222 = scmp.ge.s32.totalorder %s3221, 1
            %s3226 = sphi %s3209, %s3209
            %s3227 = sphi %s3210, %s3210
          $region1937: #{tpu_custom_call.1} parent=1933 // loop_header_branch
            %3224 = sbr.rel (%p3222) target = $region1941
          $region1938: #{tpu_custom_call.1} parent=1933 // loop_body
            %v3228 = vld [vmem:[%s3226] sm:%s3219]
            %3229 = vst [vmem:[%s3227] sm:%s3219] %v3228
          $region1939: #{tpu_custom_call.1} parent=1933 // loop_footer
            %s3225 = sadd.s32 1, %s3221
          $region1940: #{tpu_custom_call.1} parent=1933 // loop_footer_branch
            %3220 = sbr.rel target = $region1936
          $region1941: #{tpu_custom_call.1} parent=1933 // loop_exit
            _
        $region1934: #{tpu_custom_call.1} parent=35 // pred_fallthru
          _
        // Predicated region
        $region1953: #{tpu_custom_call.1} parent=35 // pred_check
          _
        $region1954: #{tpu_custom_call.1} parent=35 // pred_check_branch
          %3253 = sbr.rel (0) target = $region1956
        $region1955: #{tpu_custom_call.1} parent=35 // pred_region
          %3254 = vsyncadd [#allocation3], 16
        $region1956: #{tpu_custom_call.1} parent=35 // pred_fallthru
          _
        %s3255 = smul.u32 1, 1
        %s3256 = sshll.u32 %s3255, 4
        %3257 = dma.done [#allocation3], %s3256
        %s3258 = sshll.u32 %s3255, 4
        %3259 = dma.done [#allocation3], %s3258
        %s3260 = sshll.u32 %s3255, 4
        %3261 = dma.done [#allocation3], %s3260
        %s3262 = sshll.u32 %s3255, 4
        %3263 = dma.done [#allocation3], %s3262
        %s3264 = sshll.u32 %s3255, 4
        %3265 = dma.done [#allocation3], %s3264
        %s3266 = sshll.u32 %s3255, 4
        %3267 = dma.done [#allocation3], %s3266
        %s3268 = sshll.u32 %s3255, 4
        %3269 = dma.done [#allocation3], %s3268
        %s3270 = sshll.u32 %s3255, 4
        %3271 = dma.done [#allocation3], %s3270
        %s3272 = sshll.u32 %s3255, 4
        %3273 = dma.done [#allocation3], %s3272
        %s3274 = sshll.u32 %s3255, 4
        %3275 = dma.done [#allocation3], %s3274
        %s3276 = sshll.u32 %s3255, 4
        %3277 = dma.done [#allocation3], %s3276
        %s3278 = sshll.u32 %s3255, 4
        %3279 = dma.done [#allocation3], %s3278
        %s3280 = sshll.u32 %s3255, 4
        %3281 = dma.done [#allocation3], %s3280
        %s3282 = sshll.u32 %s3255, 4
        %3283 = dma.done [#allocation3], %s3282
        %s3284 = sshll.u32 %s3255, 4
        %3285 = dma.done [#allocation3], %s3284
        %s3286 = sshll.u32 %s3255, 4
        %3287 = dma.done [#allocation3], %s3286
        %s3288 = sshll.u32 %s3255, 4
        %3289 = dma.done [#allocation3], %s3288
        %s3290 = sshll.u32 %s3255, 4
        %3291 = dma.done [#allocation3], %s3290
        %s3292 = sshll.u32 %s3255, 4
        %3293 = dma.done [#allocation3], %s3292
        %s3294 = sshll.u32 %s3255, 4
        %3295 = dma.done [#allocation3], %s3294
        %s3296 = sshll.u32 %s3255, 4
        %3297 = dma.done [#allocation3], %s3296
        %s3298 = sshll.u32 %s3255, 4
        %3299 = dma.done [#allocation3], %s3298
        %s3300 = sshll.u32 %s3255, 4
        %3301 = dma.done [#allocation3], %s3300
        %s3302 = sshll.u32 %s3255, 4
        %3303 = dma.done [#allocation3], %s3302
        %s3304 = sshll.u32 %s3255, 4
        %3305 = dma.done [#allocation3], %s3304
        %s3306 = sshll.u32 %s3255, 4
        %3307 = dma.done [#allocation3], %s3306
        %s3308 = sshll.u32 %s3255, 4
        %3309 = dma.done [#allocation3], %s3308
        %s3310 = sshll.u32 %s3255, 4
        %3311 = dma.done [#allocation3], %s3310
        %s3312 = sshll.u32 %s3255, 4
        %3313 = dma.done [#allocation3], %s3312
        %s3314 = sshll.u32 %s3255, 4
        %3315 = dma.done [#allocation3], %s3314
        %s3316 = sshll.u32 %s3255, 4
        %3317 = dma.done [#allocation3], %s3316
        %s3318 = sshll.u32 %s3255, 4
        %3319 = dma.done [#allocation3], %s3318
        %s3320 = sshll.u32 %s3255, 4
        %3321 = dma.done [#allocation3], %s3320
        %s3322 = sshll.u32 %s3255, 4
        %3323 = dma.done [#allocation3], %s3322
        %s3324 = sshll.u32 %s3255, 4
        %3325 = dma.done [#allocation3], %s3324
        %s3326 = sshll.u32 %s3255, 4
        %3327 = dma.done [#allocation3], %s3326
        %s3328 = sshll.u32 %s3255, 4
        %3329 = dma.done [#allocation3], %s3328
        %s3330 = sshll.u32 %s3255, 4
        %3331 = dma.done [#allocation3], %s3330
        %s3332 = sshll.u32 %s3255, 4
        %3333 = dma.done [#allocation3], %s3332
        %s3334 = sshll.u32 %s3255, 4
        %3335 = dma.done [#allocation3], %s3334
        %s3336 = sshll.u32 %s3255, 4
        %3337 = dma.done [#allocation3], %s3336
        %s3338 = sshll.u32 %s3255, 4
        %3339 = dma.done [#allocation3], %s3338
        %s3340 = sshll.u32 %s3255, 4
        %3341 = dma.done [#allocation3], %s3340
        %s3342 = sshll.u32 %s3255, 4
        %3343 = dma.done [#allocation3], %s3342
        %s3344 = sshll.u32 %s3255, 4
        %3345 = dma.done [#allocation3], %s3344
        %s3346 = sshll.u32 %s3255, 4
        %3347 = dma.done [#allocation3], %s3346
        %s3348 = sshll.u32 %s3255, 4
        %3349 = dma.done [#allocation3], %s3348
        %s3350 = sshll.u32 %s3255, 4
        %3351 = dma.done [#allocation3], %s3350
        %s3352 = sshll.u32 %s3255, 4
        %3353 = dma.done [#allocation3], %s3352
        %s3354 = sshll.u32 %s3255, 4
        %3355 = dma.done [#allocation3], %s3354
        %s3356 = sshll.u32 %s3255, 4
        %3357 = dma.done [#allocation3], %s3356
        %s3358 = sshll.u32 %s3255, 4
        %3359 = dma.done [#allocation3], %s3358
        %s3360 = sshll.u32 %s3255, 4
        %3361 = dma.done [#allocation3], %s3360
        %s3362 = sshll.u32 %s3255, 4
        %3363 = dma.done [#allocation3], %s3362
        %s3364 = sshll.u32 %s3255, 4
        %3365 = dma.done [#allocation3], %s3364
        %s3366 = sshll.u32 %s3255, 4
        %3367 = dma.done [#allocation3], %s3366
        %s3368 = sshll.u32 %s3255, 4
        %3369 = dma.done [#allocation3], %s3368
        %s3370 = sshll.u32 %s3255, 4
        %3371 = dma.done [#allocation3], %s3370
        %s3372 = sshll.u32 %s3255, 4
        %3373 = dma.done [#allocation3], %s3372
        %s3374 = sshll.u32 %s3255, 4
        %3375 = dma.done [#allocation3], %s3374
        %s3376 = sshll.u32 %s3255, 4
        %3377 = dma.done [#allocation3], %s3376
        %s3378 = sshll.u32 %s3255, 4
        %3379 = dma.done [#allocation3], %s3378
        %s3380 = sshll.u32 %s3255, 4
        %3381 = dma.done [#allocation3], %s3380
        %s3382 = sshll.u32 %s3255, 4
        %3383 = dma.done [#allocation3], %s3382
        %v3384 = vld [vmem:[#allocation2] sm:$0xff]
        %v3385 = vld [vmem:[#allocation2 + $0x8] sm:$0xff]
        %v3386 = vld [vmem:[#allocation2 + $0x10] sm:$0xff]
        %v3387 = vld [vmem:[#allocation2 + $0x18] sm:$0xff]
        %v3388 = vld [vmem:[#allocation2 + $0x20] sm:$0xff]
        %v3389 = vld [vmem:[#allocation2 + $0x28] sm:$0xff]
        %v3390 = vld [vmem:[#allocation2 + $0x30] sm:$0xff]
        %v3391 = vld [vmem:[#allocation2 + $0x38] sm:$0xff]
        %v3392 = vadd.f32 %v3384, %v3385
        %v3393 = vadd.f32 %v3392, %v3386
        %v3394 = vadd.f32 %v3393, %v3387
        %v3395 = vadd.f32 %v3394, %v3388
        %v3396 = vadd.f32 %v3395, %v3389
        %v3397 = vadd.f32 %v3396, %v3390
        %v3398 = vadd.f32 %v3397, %v3391
        %v3399 = vmul.f32 %v3398, 0.125
        %v3400 = vld [vmem:[%s2] sm:$0xff]
        %v3401 = vld [vmem:[%s2 + $0x8] sm:$0xff]
        %v3402 = vld [vmem:[%s2 + $0x10] sm:$0xff]
        %v3403 = vld [vmem:[%s2 + $0x18] sm:$0xff]
        %v3404 = vld [vmem:[%s2 + $0x20] sm:$0xff]
        %v3405 = vld [vmem:[%s2 + $0x28] sm:$0xff]
        %v3406 = vld [vmem:[%s2 + $0x30] sm:$0xff]
        %v3407 = vld [vmem:[%s2 + $0x38] sm:$0xff]
        %v3408 = vld [vmem:[%s2 + $0x40] sm:$0xff]
        %v3409 = vld [vmem:[%s2 + $0x48] sm:$0xff]
        %v3410 = vld [vmem:[%s2 + $0x50] sm:$0xff]
        %v3411 = vld [vmem:[%s2 + $0x58] sm:$0xff]
        %v3412 = vld [vmem:[%s2 + $0x60] sm:$0xff]
        %v3413 = vld [vmem:[%s2 + $0x68] sm:$0xff]
        %v3414 = vld [vmem:[%s2 + $0x70] sm:$0xff]
        %v3415 = vld [vmem:[%s2 + $0x78] sm:$0xff]
        %v3416 = vld [vmem:[%s3] sm:$0x1]
        %v3418 = vlaneseq
        %v3419 = vshrl.u32 %v3418, 7
        %v3420 = vsub.s32 0, %v3419
        %v3421 = vrot.slane %v3416, %v3420
        %3423 = vmatprep.subr.mxu0 0.0
        %3424 = vmatpush1.msra.mxu0 %v3400
        %3425 = vmatprep.subr.mxu0 0.0
        %3426 = vmatpush1.msra.mxu0 %v3401
        %3427 = vmatprep.subr.mxu0 0.0
        %3428 = vmatpush1.msra.mxu0 %v3402
        %3429 = vmatprep.subr.mxu0 0.0
        %3430 = vmatpush1.msra.mxu0 %v3403
        %3431 = vmatprep.subr.mxu0 0.0
        %3432 = vmatpush1.msra.mxu0 %v3404
        %3433 = vmatprep.subr.mxu0 0.0
        %3434 = vmatpush1.msra.mxu0 %v3405
        %3435 = vmatprep.subr.mxu0 0.0
        %3436 = vmatpush1.msra.mxu0 %v3406
        %3437 = vmatprep.subr.mxu0 0.0
        %3438 = vmatpush1.msra.mxu0 %v3407
        %3439 = vmatprep.subr.mxu0 0.0
        %3440 = vmatpush1.msra.mxu0 %v3408
        %3441 = vmatprep.subr.mxu0 0.0
        %3442 = vmatpush1.msra.mxu0 %v3409
        %3443 = vmatprep.subr.mxu0 0.0
        %3444 = vmatpush1.msra.mxu0 %v3410
        %3445 = vmatprep.subr.mxu0 0.0
        %3446 = vmatpush1.msra.mxu0 %v3411
        %3447 = vmatprep.subr.mxu0 0.0
        %3448 = vmatpush1.msra.mxu0 %v3412
        %3449 = vmatprep.subr.mxu0 0.0
        %3450 = vmatpush1.msra.mxu0 %v3413
        %3451 = vmatprep.subr.mxu0 0.0
        %3452 = vmatpush1.msra.mxu0 %v3414
        %3453 = vmatprep.subr.mxu0 0.0
        %3454 = vmatpush1.msra.mxu0 %v3415
        %3455 = vmatprep.subr.mxu0 0.0
        %3456 = vmatpush1.msra.mxu0 0.0
        %3457 = vmatprep.subr.mxu0 0.0
        %3458 = vmatpush1.msra.mxu0 0.0
        %3459 = vmatprep.subr.mxu0 0.0
        %3460 = vmatpush1.msra.mxu0 0.0
        %3461 = vmatprep.subr.mxu0 0.0
        %3462 = vmatpush1.msra.mxu0 0.0
        %3463 = vmatprep.subr.mxu0 0.0
        %3464 = vmatpush1.msra.mxu0 0.0
        %3465 = vmatprep.subr.mxu0 0.0
        %3466 = vmatpush1.msra.mxu0 0.0
        %3467 = vmatprep.subr.mxu0 0.0
        %3468 = vmatpush1.msra.mxu0 0.0
        %3469 = vmatprep.subr.mxu0 0.0
        %3470 = vmatpush1.msra.mxu0 0.0
        %3471 = vmatprep.subr.mxu0 0.0
        %3472 = vmatpush1.msra.mxu0 0.0
        %3473 = vmatprep.subr.mxu0 0.0
        %3474 = vmatpush1.msra.mxu0 0.0
        %3475 = vmatprep.subr.mxu0 0.0
        %3476 = vmatpush1.msra.mxu0 0.0
        %3477 = vmatprep.subr.mxu0 0.0
        %3478 = vmatpush1.msra.mxu0 0.0
        %3479 = vmatprep.subr.mxu0 0.0
        %3480 = vmatpush1.msra.mxu0 0.0
        %3481 = vmatprep.subr.mxu0 0.0
        %3482 = vmatpush1.msra.mxu0 0.0
        %3483 = vmatprep.subr.mxu0 0.0
        %3484 = vmatpush1.msra.mxu0 0.0
        %3485 = vmatprep.subr.mxu0 0.0
        %3486 = vmatpush1.msra.mxu0 0.0
        %3487 = vmatprep.mubr.f32.mxu0 0.0
        %3488 = vmatmul.mubr.f32.gmra.mrb[0].mxu0 %v3399
        %v3489 = vpop.f32.mrb[0].mxu0
        %v3490 = vadd.f32 %v3421, %v3489
        %v3491 = vpop.f32.mrb[0].mxu0
        %3492 = vdwg.mxu0
        %v3493 = vmax.f32 %v3490, 0.0
        %v3494 = vld [vmem:[%s4] sm:$0xff]
        %v3495 = vld [vmem:[%s4 + $0x8] sm:$0xff]
        %v3496 = vld [vmem:[%s4 + $0x10] sm:$0xff]
        %v3497 = vld [vmem:[%s4 + $0x18] sm:$0xff]
        %v3498 = vld [vmem:[%s5] sm:$0x1]
        %v3500 = vlaneseq
        %v3501 = vshrl.u32 %v3500, 7
        %v3502 = vsub.s32 0, %v3501
        %v3503 = vrot.slane %v3498, %v3502
        %vm3505 = vcmask 261120
        %v3507 = vsel %vm3505, %v3493, 0
        %3509 = vmatprep.subr.mxu0 0.0
        %3510 = vmatpush1.msra.mxu0 %v3494
        %3511 = vmatprep.subr.mxu0 0.0
        %3512 = vmatpush1.msra.mxu0 %v3495
        %3513 = vmatprep.subr.mxu0 0.0
        %3514 = vmatpush1.msra.mxu0 %v3496
        %3515 = vmatprep.subr.mxu0 0.0
        %3516 = vmatpush1.msra.mxu0 %v3497
        %3517 = vmatprep.subr.mxu0 0.0
        %3518 = vmatpush1.msra.mxu0 0.0
        %3519 = vmatprep.subr.mxu0 0.0
        %3520 = vmatpush1.msra.mxu0 0.0
        %3521 = vmatprep.subr.mxu0 0.0
        %3522 = vmatpush1.msra.mxu0 0.0
        %3523 = vmatprep.subr.mxu0 0.0
        %3524 = vmatpush1.msra.mxu0 0.0
        %3525 = vmatprep.subr.mxu0 0.0
        %3526 = vmatpush1.msra.mxu0 0.0
        %3527 = vmatprep.subr.mxu0 0.0
        %3528 = vmatpush1.msra.mxu0 0.0
        %3529 = vmatprep.subr.mxu0 0.0
        %3530 = vmatpush1.msra.mxu0 0.0
        %3531 = vmatprep.subr.mxu0 0.0
        %3532 = vmatpush1.msra.mxu0 0.0
        %3533 = vmatprep.subr.mxu0 0.0
        %3534 = vmatpush1.msra.mxu0 0.0
        %3535 = vmatprep.subr.mxu0 0.0
        %3536 = vmatpush1.msra.mxu0 0.0
        %3537 = vmatprep.subr.mxu0 0.0
        %3538 = vmatpush1.msra.mxu0 0.0
        %3539 = vmatprep.subr.mxu0 0.0
        %3540 = vmatpush1.msra.mxu0 0.0
        %3541 = vmatprep.subr.mxu0 0.0
        %3542 = vmatpush1.msra.mxu0 0.0
        %3543 = vmatprep.subr.mxu0 0.0
        %3544 = vmatpush1.msra.mxu0 0.0
        %3545 = vmatprep.subr.mxu0 0.0
        %3546 = vmatpush1.msra.mxu0 0.0
        %3547 = vmatprep.subr.mxu0 0.0
        %3548 = vmatpush1.msra.mxu0 0.0
        %3549 = vmatprep.subr.mxu0 0.0
        %3550 = vmatpush1.msra.mxu0 0.0
        %3551 = vmatprep.subr.mxu0 0.0
        %3552 = vmatpush1.msra.mxu0 0.0
        %3553 = vmatprep.subr.mxu0 0.0
        %3554 = vmatpush1.msra.mxu0 0.0
        %3555 = vmatprep.subr.mxu0 0.0
        %3556 = vmatpush1.msra.mxu0 0.0
        %3557 = vmatprep.subr.mxu0 0.0
        %3558 = vmatpush1.msra.mxu0 0.0
        %3559 = vmatprep.subr.mxu0 0.0
        %3560 = vmatpush1.msra.mxu0 0.0
        %3561 = vmatprep.subr.mxu0 0.0
        %3562 = vmatpush1.msra.mxu0 0.0
        %3563 = vmatprep.subr.mxu0 0.0
        %3564 = vmatpush1.msra.mxu0 0.0
        %3565 = vmatprep.subr.mxu0 0.0
        %3566 = vmatpush1.msra.mxu0 0.0
        %3567 = vmatprep.subr.mxu0 0.0
        %3568 = vmatpush1.msra.mxu0 0.0
        %3569 = vmatprep.subr.mxu0 0.0
        %3570 = vmatpush1.msra.mxu0 0.0
        %3571 = vmatprep.subr.mxu0 0.0
        %3572 = vmatpush1.msra.mxu0 0.0
        %3573 = vmatprep.mubr.f32.mxu0 0.0
        %3574 = vmatmul.mubr.f32.gmra.mrb[0].mxu0 %v3507
        %v3575 = vpop.f32.mrb[0].mxu0
        %v3576 = vadd.f32 %v3503, %v3575
        %v3577 = vpop.f32.mrb[0].mxu0
        %3578 = vdwg.mxu0
        %3579 = vmax.xlane.f32.xlu0 %v3576
        %v3580 = vpop.xlane.xlu0 %3579
        %v3581 = vsub.f32 %v3576, %v3580
        %v3582 = vmul.f32 %v3581, 1.442695
        %v3583 = vpow.pop %v3582
        %3584 = vadd.xlane.f32.xlu0 %v3583
        %v3585 = vpop.xlane.xlu0 %3584
        %v3586 = vlog2.pop %v3585
        %v3587 = vmul.f32 %v3586, 0.6931472
        %v3588 = vsub.f32 %v3581, %v3587
        %3589 = vst [vmem:[%s183] sm:$0xff] %v3588
        %s3590 = sand.u32 %s118, 1
        %s3591 = scalar_lea.sflag [#allocation7], %s3590
        %s3592 = sand.u32 %s118, 1
        %s3593 = smul.addr %s3592, 8
        %s3594 = scalar_lea.vmem [#allocation6], %s3593
        // Predicated region
        $region1957: #{tpu_custom_call.1} parent=35 // pred_check
          %p3595 = pneg %p128
        $region1958: #{tpu_custom_call.1} parent=35 // pred_check_branch
          %3597 = sbr.rel (%p3595) target = $region1960
        $region1959: #{tpu_custom_call.1} parent=35 // pred_region
          %s3599 = ssub.s32 128, 128
          %3600 = vsyncadd %s3591, %s3599
          %s3601 = smul.addr %s26, 128
          %s3602 = scalar_lea.hbm %s6, %s3601
          %s3604 = sshll.u32 %s3594, 4
          %s3605 = int_to_ptr.vmem [resolvable:$true] %s3604
          %3607 = dma.vmem_to_hbm [thread:$0]  %s3605, 128, %s3602, %s3591
        $region1960: #{tpu_custom_call.1} parent=35 // pred_fallthru
          _
      $region36: #{tpu_custom_call.1} parent=5 // pred_fallthru
        _
      %p3608 = scmp.le.s32.totalorder 2, %s21
      // Predicated region
      $region1961: #{tpu_custom_call.1} parent=5 // pred_check
        %p3609 = pneg %p3608
      $region1962: #{tpu_custom_call.1} parent=5 // pred_check_branch
        %3611 = sbr.rel (%p3609) target = $region1964
      $region1963: #{tpu_custom_call.1} parent=5 // pred_region
        %s3612 = ssub.s32 %s21, 2
        // Predicated region
        $region1965: #{tpu_custom_call.1} parent=1963 // pred_check
          %p3613 = pneg %p134
        $region1966: #{tpu_custom_call.1} parent=1963 // pred_check_branch
          %3615 = sbr.rel (%p3613) target = $region1968
        $region1967: #{tpu_custom_call.1} parent=1963 // pred_region
          %s3616 = sand.u32 %s119, 1
          %s3617 = scalar_lea.sflag [#allocation7], %s3616
          %s3618 = sand.u32 %s119, 1
          %s3619 = smul.addr %s3618, 8
          %s3620 = scalar_lea.vmem [#allocation6], %s3619
          %3621 = dma.done %s3617, 128
        $region1968: #{tpu_custom_call.1} parent=1963 // pred_fallthru
          _
      $region1964: #{tpu_custom_call.1} parent=5 // pred_fallthru
        _
    $region6: #{tpu_custom_call.1} parent=1 // loop_footer
      %s25 = sadd.s32 1, %s21
    $region7: #{tpu_custom_call.1} parent=1 // loop_footer_branch
      %20 = sbr.rel target = $region3
    $region8: #{tpu_custom_call.1} parent=1 // loop_exit
      _
    %3622 = vsyncpa [#allocation7], 1
    %s3623 = scalar_lea.sflag [#allocation7], 1
    %3624 = vsyncpa %s3623, 1
  %3625 = vsyncmov [#allocation3]
  %s3626 = vpop.sfrf %3625
  %p3627 = scmp.eq.s32.totalorder %s3626, 0
  %p3628 = pneg %p3627
  %3630 = shalt.err (%p3628)

</llo_original>
